<compile_context>
chip_gen: v7x
topology: tpu7x:2x2x1
jax: 0.10.0
libtpu: 0.0.40
codegen_flags: <defaults>
</compile_context>

<pallas_src>
import functools

import jax
import jax.numpy as jnp
import numpy as np
from jax import lax
from jax.experimental import pallas as pl
from jax.experimental.pallas import tpu as pltpu

EPS = 1e-5
LANE = 128


def _round_up(v, m):
    return (v + m - 1) // m * m


# ------------------------------ Pallas kernel ------------------------------ #

def _residual_block_kernel(xp1_ref, xpd_ref, w1_ref, w2_ref, wd_ref,
                           t1_ref, t2_ref, o_ref, y1s_ref, *,
                           bt, h1, h2, wp, cop):
    """relu(bn2(conv2(relu(bn1(conv1(x))))) + downsample(x)) for `bt` images.

    xp1_ref : (bt*h1*wp, 128) bf16  conv1 tap-packed patches (lane = ky*3*Cin+kx*Cin+ci)
    xpd_ref : (bt*h2*wp, 128) bf16  5x5 downsample tap-packed patches
    w1_ref  : (128, cop)      bf16  conv1 packed weights (BN1 scale folded)
    w2_ref  : (9, cop, cop)   bf16  conv2 per-tap weights (BN2 scale folded)
    wd_ref  : (128, cop)      bf16  downsample packed weights
    t*_ref  : (1, cop)        f32   folded bias + BN shift (+ downsample bias in t2)
    o_ref   : (bt*h2*wp, cop) bf16  flat, lane-dense output rows
    y1s_ref : (3, h1, wp, cop) bf16 VMEM scratch: stage-1 activation, W-pre-shifted by kx
    """
    m1 = h1 * wp                       # stage-1 rows per image (wp % 8 == 0)
    m2 = h2 * wp                       # stage-2 rows per image

    for b in range(bt):
        # ---- stage 1: tap-packed conv1 (+folded BN1) + shift + ReLU, one matmul ----
        a1 = jnp.dot(xp1_ref[b * m1:(b + 1) * m1, :], w1_ref[...],
                     preferred_element_type=jnp.float32)           # (m1, cop)
        y1 = jnp.maximum(a1 + t1_ref[...], 0.0)                    # f32 epilogue
        # Three W-shifted bf16 copies so every conv2 tap is an aligned, dense load.
        # Wrapped / cross-row rows only ever land in padded (w >= W2) output columns.
        for kx in range(3):
            sh = y1 if kx == 0 else pltpu.roll(y1, shift=m1 - kx, axis=0)
            y1s_ref[kx] = sh.astype(jnp.bfloat16).reshape(h1, wp, cop)

        # ---- stage 2: downsample(x) + conv2(y1) into ONE f32 accumulator ----
        acc = jnp.dot(xpd_ref[b * m2:(b + 1) * m2, :], wd_ref[...],
                      preferred_element_type=jnp.float32)          # (m2, cop)
        for ky in range(3):
            for kx in range(3):
                # Outer-dim ref slice + layout-free reshape (wp % 8 == 0): no relayout.
                lhs = y1s_ref[kx, ky:ky + h2].reshape(m2, cop)
                acc = acc + jnp.dot(lhs, w2_ref[3 * ky + kx],
                                    preferred_element_type=jnp.float32)
        out = jnp.maximum(acc + t2_ref[...], 0.0)                  # f32 epilogue
        o_ref[b * m2:(b + 1) * m2, :] = out.astype(o_ref.dtype)    # aligned dense store


# ------------------------------- JAX wrapper -------------------------------- #

def _fold_bn(gamma, beta, mean, var):
    s = gamma / jnp.sqrt(var + EPS)
    return s.astype(jnp.float32), (beta - mean * s).astype(jnp.float32)


def residual_block_forward(x_nchw, params, *, batch_tile=None):
    N, Cin, H, W = x_nchw.shape
    Cout = params["conv1_w"].shape[0]
    H1, W1 = H - 2, W - 2              # after conv1 (3x3 VALID)
    H2, W2 = H - 4, W - 4              # after conv2 / downsample
    Wp = _round_up(W1, 8)              # shared sublane-dense row width
    Cop = _round_up(Cout, LANE)        # lane-dense output channels
    assert 9 * Cin <= LANE and 25 * Cin <= LANE, \
        "tap-packed reduction needs 9*Cin and 25*Cin <= 128"

    Bt = batch_tile or next(bt for bt in (8, 4, 2, 1) if N % bt == 0)

    s1, t1 = _fold_bn(params["bn1_gamma"], params["bn1_beta"],
                      params["bn1_mean"], params["bn1_var"])
    s2, t2 = _fold_bn(params["bn2_gamma"], params["bn2_beta"],
                      params["bn2_mean"], params["bn2_var"])

    def pack_weight(w_oihw, scale):
        # OIHW -> ((ky,kx,ci), co), BN scale folded, padded to (128, Cop), bf16.
        o, i, kh, kw = w_oihw.shape
        w = jnp.transpose(w_oihw, (2, 3, 1, 0)).reshape(kh * kw * i, o).astype(jnp.float32)
        if scale is not None:
            w = w * scale[None, :]
        w = jnp.pad(w, ((0, LANE - kh * kw * i), (0, Cop - o)))
        return w.astype(jnp.bfloat16)

    def per_tap_weight(w_oihw, scale):
        # OIHW -> (Kh*Kw, Cop, Cop), BN scale folded, bf16 (conv2 stays per-tap).
        o, i, kh, kw = w_oihw.shape
        w = jnp.transpose(w_oihw, (2, 3, 1, 0)).reshape(kh * kw, i, o).astype(jnp.float32)
        w = w * scale[None, None, :]
        w = jnp.pad(w, ((0, 0), (0, Cop - i), (0, Cop - o)))
        return w.astype(jnp.bfloat16)

    w1p = pack_weight(params["conv1_w"], s1)      # (128, Cop)
    wdp = pack_weight(params["down_w"], None)     # (128, Cop)
    w2t = per_tap_weight(params["conv2_w"], s2)   # (9, Cop, Cop)

    t1p = jnp.pad(s1 * params["conv1_b"] + t1,
                  (0, Cop - Cout)).reshape(1, Cop).astype(jnp.float32)
    t2p = jnp.pad(s2 * params["conv2_b"] + t2 + params["down_b"],
                  (0, Cop - Cout)).reshape(1, Cop).astype(jnp.float32)

    # bf16 BEFORE the layout shuffles / packing (halves XLA-side traffic).
    x = jnp.transpose(x_nchw.astype(jnp.bfloat16), (0, 2, 3, 1))    # (N, H, W, Cin)

    def pack_patches(kh, kw, Ho, Wo):
        # (N, Ho, Wo, kh*kw*Cin) patches; width padded to Wp, lanes to 128; flat rows.
        p = jnp.concatenate(
            [x[:, ky:ky + Ho, kx:kx + Wo, :] for ky in range(kh) for kx in range(kw)],
            axis=-1)
        p = jnp.pad(p, ((0, 0), (0, 0), (0, Wp - Wo), (0, LANE - kh * kw * Cin)))
        return p.reshape(N * Ho * Wp, LANE)

    xp1 = pack_patches(3, 3, H1, W1)   # (N*H1*Wp, 128) conv1 patches
    xpd = pack_patches(5, 5, H2, W2)   # (N*H2*Wp, 128) downsample patches

    m1, m2 = H1 * Wp, H2 * Wp
    flops = 2 * N * (m1 * LANE * Cop + m2 * LANE * Cop + 9 * m2 * Cop * Cop)
    bytes_accessed = ((xp1.size + xpd.size + w1p.size + wdp.size + w2t.size) * 2
                      + (t1p.size + t2p.size) * 4 + N * m2 * Cop * 2)

    kernel = functools.partial(_residual_block_kernel,
                               bt=Bt, h1=H1, h2=H2, wp=Wp, cop=Cop)

    out_flat = pl.pallas_call(
        kernel,
        out_shape=jax.ShapeDtypeStruct((N * m2, Cop), jnp.bfloat16),
        grid_spec=pltpu.PrefetchScalarGridSpec(
            num_scalar_prefetch=0,
            grid=(N // Bt,),
            in_specs=[
                pl.BlockSpec((Bt * m1, LANE), lambda g: (g, 0)),
                pl.BlockSpec((Bt * m2, LANE), lambda g: (g, 0)),
                pl.BlockSpec((LANE, Cop), lambda g: (0, 0)),
                pl.BlockSpec((9, Cop, Cop), lambda g: (0, 0, 0)),
                pl.BlockSpec((LANE, Cop), lambda g: (0, 0)),
                pl.BlockSpec((1, Cop), lambda g: (0, 0)),
                pl.BlockSpec((1, Cop), lambda g: (0, 0)),
            ],
            out_specs=pl.BlockSpec((Bt * m2, Cop), lambda g: (g, 0)),
            scratch_shapes=[pltpu.VMEM((3, H1, Wp, Cop), jnp.bfloat16)],
        ),
        compiler_params=pltpu.CompilerParams(
            dimension_semantics=("parallel",),
            vmem_limit_bytes=32 * 1024 * 1024,
        ),
        cost_estimate=pl.CostEstimate(flops=flops, transcendentals=0,
                                      bytes_accessed=bytes_accessed),
    )(xp1, xpd, w1p, w2t, wdp, t1p, t2p)

    out = out_flat.reshape(N, H2, Wp, Cop)[:, :, :W2, :Cout].astype(jnp.float32)
    return jnp.transpose(out, (0, 3, 1, 2))        # NHWC -> NCHW


# ------------------------- pure-JAX reference check ------------------------ #

def reference_forward(x_nchw, params):
    def conv(x, w, b):
        y = lax.conv_general_dilated(x, w, window_strides=(1, 1), padding="VALID",
                                     dimension_numbers=("NCHW", "OIHW", "NCHW"))
        return y + b.reshape(1, -1, 1, 1)

    def bn(x, g, be, m, v):
        c = lambda a: a.reshape(1, -1, 1, 1)
        return (x - c(m)) / jnp.sqrt(c(v) + EPS) * c(g) + c(be)

    out = conv(x_nchw, params["conv1_w"], params["conv1_b"])
    out = jnp.maximum(bn(out, params["bn1_gamma"], params["bn1_beta"],
                         params["bn1_mean"], params["bn1_var"]), 0.0)
    out = conv(out, params["conv2_w"], params["conv2_b"])
    out = bn(out, params["bn2_gamma"], params["bn2_beta"],
             params["bn2_mean"], params["bn2_var"])
    residual = conv(x_nchw, params["down_w"], params["down_b"])
    return jnp.maximum(out + residual, 0.0)


# ---------------------------------- main ----------------------------------- #

if __name__ == "__main__":
    key = jax.random.PRNGKey(0)
    N, Cin, Cout, H, W = 2, 4, 8, 16, 16
    keys = jax.random.split(key, 16)

    def u(k, shape, fan_in):
        bound = 1.0 / np.sqrt(fan_in)
        return jax.random.uniform(k, shape, jnp.float32, -bound, bound)

    params = dict(
        conv1_w=u(keys[0], (Cout, Cin, 3, 3), Cin * 9),
        conv1_b=u(keys[1], (Cout,), Cin * 9),
        bn1_gamma=jax.random.uniform(keys[2], (Cout,), jnp.float32, 0.5, 1.5),
        bn1_beta=0.1 * jax.random.normal(keys[3], (Cout,), jnp.float32),
        bn1_mean=0.1 * jax.random.normal(keys[4], (Cout,), jnp.float32),
        bn1_var=jax.random.uniform(keys[5], (Cout,), jnp.float32, 0.5, 1.5),
        conv2_w=u(keys[6], (Cout, Cout, 3, 3), Cout * 9),
        conv2_b=u(keys[7], (Cout,), Cout * 9),
        bn2_gamma=jax.random.uniform(keys[8], (Cout,), jnp.float32, 0.5, 1.5),
        bn2_beta=0.1 * jax.random.normal(keys[9], (Cout,), jnp.float32),
        bn2_mean=0.1 * jax.random.normal(keys[10], (Cout,), jnp.float32),
        bn2_var=jax.random.uniform(keys[11], (Cout,), jnp.float32, 0.5, 1.5),
        down_w=u(keys[12], (Cout, Cin, 5, 5), Cin * 25),   # the supplied `downsample` conv
        down_b=u(keys[13], (Cout,), Cin * 25),
    )

    x = jax.random.normal(keys[14], (N, Cin, H, W), jnp.float32)

    out = jax.block_until_ready(residual_block_forward(x, params))
    ref = jax.block_until_ready(reference_forward(x, params))

    assert out.shape == (N, Cout, H - 4, W - 4), out.shape
    err = float(np.max(np.abs(np.asarray(out) - np.asarray(ref))))
    assert np.allclose(np.asarray(out), np.asarray(ref), atol=3e-2, rtol=3e-2), err
    print("KERNEL_OK")
</pallas_src>

<mosaic_0001>
module attributes {stable_mosaic.version = 11 : i64} {
  func.func @_residual_block_kernel(%arg0: i32, %arg1: memref<448x128xbf16, #tpu.memory_space<vmem>>, %arg2: memref<384x128xbf16, #tpu.memory_space<vmem>>, %arg3: memref<128x128xbf16, #tpu.memory_space<vmem>>, %arg4: memref<9x128x128xbf16, #tpu.memory_space<vmem>>, %arg5: memref<128x128xbf16, #tpu.memory_space<vmem>>, %arg6: memref<1x128xf32, #tpu.memory_space<vmem>>, %arg7: memref<1x128xf32, #tpu.memory_space<vmem>>, %arg8: memref<384x128xbf16, #tpu.memory_space<vmem>>, %arg9: memref<3x14x16x128xbf16, #tpu.memory_space<vmem>>) attributes {dimension_semantics = [#tpu.dimension_semantics<parallel>], iteration_bounds = array<i64: 1>, scalar_prefetch = 0 : i64, scratch_operands = 1 : i64, tpu.core_type = #tpu.core_type<tc>, window_params = [{transform_indices = @transform_0, window_bounds = array<i64: 448, 128>}, {transform_indices = @transform_1, window_bounds = array<i64: 384, 128>}, {pipeline_mode = #tpu.pipeline_mode<synchronous>, transform_indices = @transform_2, window_bounds = array<i64: 128, 128>}, {pipeline_mode = #tpu.pipeline_mode<synchronous>, transform_indices = @transform_3, window_bounds = array<i64: 9, 128, 128>}, {pipeline_mode = #tpu.pipeline_mode<synchronous>, transform_indices = @transform_4, window_bounds = array<i64: 128, 128>}, {pipeline_mode = #tpu.pipeline_mode<synchronous>, transform_indices = @transform_5, window_bounds = array<i64: 1, 128>}, {pipeline_mode = #tpu.pipeline_mode<synchronous>, transform_indices = @transform_6, window_bounds = array<i64: 1, 128>}, {transform_indices = @transform_7, window_bounds = array<i64: 384, 128>}]} {
    %c0 = arith.constant 0 : index
    %c0_0 = arith.constant 0 : index
    %0 = vector.load %arg1[%c0, %c0_0] : memref<448x128xbf16, #tpu.memory_space<vmem>>, vector<224x128xbf16>
    %c0_1 = arith.constant 0 : index
    %c0_2 = arith.constant 0 : index
    %1 = vector.load %arg3[%c0_1, %c0_2] : memref<128x128xbf16, #tpu.memory_space<vmem>>, vector<128x128xbf16>
    %cst = arith.constant dense<0.000000e+00> : vector<224x128xf32>
    %2 = tpu.matmul %0, %1, %cst {dimension_numbers = #tpu.dot_dimension_numbers<[1], [0], [0], [1], [0, 0, 1, 1], [], []>} : vector<224x128xbf16>, vector<128x128xbf16>, vector<224x128xf32> -> vector<224x128xf32>
    %c0_3 = arith.constant 0 : index
    %c0_4 = arith.constant 0 : index
    %3 = vector.load %arg6[%c0_3, %c0_4] : memref<1x128xf32, #tpu.memory_space<vmem>>, vector<1x128xf32>
    %4 = vector.broadcast %3 : vector<1x128xf32> to vector<224x128xf32>
    %5 = arith.addf %2, %4 : vector<224x128xf32>
    %cst_5 = arith.constant 0.000000e+00 : f32
    %6 = vector.broadcast %cst_5 : f32 to vector<224x128xf32>
    %7 = arith.maximumf %5, %6 : vector<224x128xf32>
    %8 = arith.truncf %7 : vector<224x128xf32> to vector<224x128xbf16>
    %9 = vector.shape_cast %8 : vector<224x128xbf16> to vector<14x16x128xbf16>
    %c0_6 = arith.constant 0 : index
    %c0_7 = arith.constant 0 : index
    %c0_8 = arith.constant 0 : index
    %c0_9 = arith.constant 0 : index
    %10 = vector.load %arg9[%c0_6, %c0_7, %c0_8, %c0_9] : memref<3x14x16x128xbf16, #tpu.memory_space<vmem>>, vector<1x14x16x128xbf16>
    %11 = vector.shape_cast %10 : vector<1x14x16x128xbf16> to vector<14x16x128xbf16>
    %12 = vector.shape_cast %9 : vector<14x16x128xbf16> to vector<1x14x16x128xbf16>
    tpu.vector_store %arg9[%c0_6, %c0_7, %c0_8, %c0_9], %12 {strides = array<i32>} : memref<3x14x16x128xbf16, #tpu.memory_space<vmem>>, vector<1x14x16x128xbf16>,
    %c223_i32 = arith.constant 223 : i32
    %13 = tpu.dynamic_rotate %7 by %c223_i32 dim 0 : vector<224x128xf32>, i32 -> vector<224x128xf32>
    %14 = arith.truncf %13 : vector<224x128xf32> to vector<224x128xbf16>
    %15 = vector.shape_cast %14 : vector<224x128xbf16> to vector<14x16x128xbf16>
    %c1 = arith.constant 1 : index
    %c0_10 = arith.constant 0 : index
    %c0_11 = arith.constant 0 : index
    %c0_12 = arith.constant 0 : index
    %16 = vector.load %arg9[%c1, %c0_10, %c0_11, %c0_12] : memref<3x14x16x128xbf16, #tpu.memory_space<vmem>>, vector<1x14x16x128xbf16>
    %17 = vector.shape_cast %16 : vector<1x14x16x128xbf16> to vector<14x16x128xbf16>
    %18 = vector.shape_cast %15 : vector<14x16x128xbf16> to vector<1x14x16x128xbf16>
    tpu.vector_store %arg9[%c1, %c0_10, %c0_11, %c0_12], %18 {strides = array<i32>} : memref<3x14x16x128xbf16, #tpu.memory_space<vmem>>, vector<1x14x16x128xbf16>,
    %c222_i32 = arith.constant 222 : i32
    %19 = tpu.dynamic_rotate %7 by %c222_i32 dim 0 : vector<224x128xf32>, i32 -> vector<224x128xf32>
    %20 = arith.truncf %19 : vector<224x128xf32> to vector<224x128xbf16>
    %21 = vector.shape_cast %20 : vector<224x128xbf16> to vector<14x16x128xbf16>
    %c2 = arith.constant 2 : index
    %c0_13 = arith.constant 0 : index
    %c0_14 = arith.constant 0 : index
    %c0_15 = arith.constant 0 : index
    %22 = vector.load %arg9[%c2, %c0_13, %c0_14, %c0_15] : memref<3x14x16x128xbf16, #tpu.memory_space<vmem>>, vector<1x14x16x128xbf16>
    %23 = vector.shape_cast %22 : vector<1x14x16x128xbf16> to vector<14x16x128xbf16>
    %24 = vector.shape_cast %21 : vector<14x16x128xbf16> to vector<1x14x16x128xbf16>
    tpu.vector_store %arg9[%c2, %c0_13, %c0_14, %c0_15], %24 {strides = array<i32>} : memref<3x14x16x128xbf16, #tpu.memory_space<vmem>>, vector<1x14x16x128xbf16>,
    %c0_16 = arith.constant 0 : index
    %c0_17 = arith.constant 0 : index
    %25 = vector.load %arg2[%c0_16, %c0_17] : memref<384x128xbf16, #tpu.memory_space<vmem>>, vector<192x128xbf16>
    %c0_18 = arith.constant 0 : index
    %c0_19 = arith.constant 0 : index
    %26 = vector.load %arg5[%c0_18, %c0_19] : memref<128x128xbf16, #tpu.memory_space<vmem>>, vector<128x128xbf16>
    %cst_20 = arith.constant dense<0.000000e+00> : vector<192x128xf32>
    %27 = tpu.matmul %25, %26, %cst_20 {dimension_numbers = #tpu.dot_dimension_numbers<[1], [0], [0], [1], [0, 0, 1, 1], [], []>} : vector<192x128xbf16>, vector<128x128xbf16>, vector<192x128xf32> -> vector<192x128xf32>
    %c0_21 = arith.constant 0 : index
    %c0_22 = arith.constant 0 : index
    %c0_23 = arith.constant 0 : index
    %c0_24 = arith.constant 0 : index
    %28 = vector.load %arg9[%c0_21, %c0_22, %c0_23, %c0_24] : memref<3x14x16x128xbf16, #tpu.memory_space<vmem>>, vector<1x12x16x128xbf16>
    %29 = vector.shape_cast %28 : vector<1x12x16x128xbf16> to vector<12x16x128xbf16>
    %30 = vector.shape_cast %29 : vector<12x16x128xbf16> to vector<192x128xbf16>
    %c0_25 = arith.constant 0 : index
    %c0_26 = arith.constant 0 : index
    %c0_27 = arith.constant 0 : index
    %31 = vector.load %arg4[%c0_25, %c0_26, %c0_27] : memref<9x128x128xbf16, #tpu.memory_space<vmem>>, vector<1x128x128xbf16>
    %32 = vector.shape_cast %31 : vector<1x128x128xbf16> to vector<128x128xbf16>
    %cst_28 = arith.constant dense<0.000000e+00> : vector<192x128xf32>
    %33 = tpu.matmul %30, %32, %cst_28 {dimension_numbers = #tpu.dot_dimension_numbers<[1], [0], [0], [1], [0, 0, 1, 1], [], []>} : vector<192x128xbf16>, vector<128x128xbf16>, vector<192x128xf32> -> vector<192x128xf32>
    %34 = arith.addf %27, %33 : vector<192x128xf32>
    %c1_29 = arith.constant 1 : index
    %c0_30 = arith.constant 0 : index
    %c0_31 = arith.constant 0 : index
    %c0_32 = arith.constant 0 : index
    %35 = vector.load %arg9[%c1_29, %c0_30, %c0_31, %c0_32] : memref<3x14x16x128xbf16, #tpu.memory_space<vmem>>, vector<1x12x16x128xbf16>
    %36 = vector.shape_cast %35 : vector<1x12x16x128xbf16> to vector<12x16x128xbf16>
    %37 = vector.shape_cast %36 : vector<12x16x128xbf16> to vector<192x128xbf16>
    %c1_33 = arith.constant 1 : index
    %c0_34 = arith.constant 0 : index
    %c0_35 = arith.constant 0 : index
    %38 = vector.load %arg4[%c1_33, %c0_34, %c0_35] : memref<9x128x128xbf16, #tpu.memory_space<vmem>>, vector<1x128x128xbf16>
    %39 = vector.shape_cast %38 : vector<1x128x128xbf16> to vector<128x128xbf16>
    %cst_36 = arith.constant dense<0.000000e+00> : vector<192x128xf32>
    %40 = tpu.matmul %37, %39, %cst_36 {dimension_numbers = #tpu.dot_dimension_numbers<[1], [0], [0], [1], [0, 0, 1, 1], [], []>} : vector<192x128xbf16>, vector<128x128xbf16>, vector<192x128xf32> -> vector<192x128xf32>
    %41 = arith.addf %34, %40 : vector<192x128xf32>
    %c2_37 = arith.constant 2 : index
    %c0_38 = arith.constant 0 : index
    %c0_39 = arith.constant 0 : index
    %c0_40 = arith.constant 0 : index
    %42 = vector.load %arg9[%c2_37, %c0_38, %c0_39, %c0_40] : memref<3x14x16x128xbf16, #tpu.memory_space<vmem>>, vector<1x12x16x128xbf16>
    %43 = vector.shape_cast %42 : vector<1x12x16x128xbf16> to vector<12x16x128xbf16>
    %44 = vector.shape_cast %43 : vector<12x16x128xbf16> to vector<192x128xbf16>
    %c2_41 = arith.constant 2 : index
    %c0_42 = arith.constant 0 : index
    %c0_43 = arith.constant 0 : index
    %45 = vector.load %arg4[%c2_41, %c0_42, %c0_43] : memref<9x128x128xbf16, #tpu.memory_space<vmem>>, vector<1x128x128xbf16>
    %46 = vector.shape_cast %45 : vector<1x128x128xbf16> to vector<128x128xbf16>
    %cst_44 = arith.constant dense<0.000000e+00> : vector<192x128xf32>
    %47 = tpu.matmul %44, %46, %cst_44 {dimension_numbers = #tpu.dot_dimension_numbers<[1], [0], [0], [1], [0, 0, 1, 1], [], []>} : vector<192x128xbf16>, vector<128x128xbf16>, vector<192x128xf32> -> vector<192x128xf32>
    %48 = arith.addf %41, %47 : vector<192x128xf32>
    %c0_45 = arith.constant 0 : index
    %c1_46 = arith.constant 1 : index
    %c0_47 = arith.constant 0 : index
    %c0_48 = arith.constant 0 : index
    %49 = vector.load %arg9[%c0_45, %c1_46, %c0_47, %c0_48] : memref<3x14x16x128xbf16, #tpu.memory_space<vmem>>, vector<1x12x16x128xbf16>
    %50 = vector.shape_cast %49 : vector<1x12x16x128xbf16> to vector<12x16x128xbf16>
    %51 = vector.shape_cast %50 : vector<12x16x128xbf16> to vector<192x128xbf16>
    %c3 = arith.constant 3 : index
    %c0_49 = arith.constant 0 : index
    %c0_50 = arith.constant 0 : index
    %52 = vector.load %arg4[%c3, %c0_49, %c0_50] : memref<9x128x128xbf16, #tpu.memory_space<vmem>>, vector<1x128x128xbf16>
    %53 = vector.shape_cast %52 : vector<1x128x128xbf16> to vector<128x128xbf16>
    %cst_51 = arith.constant dense<0.000000e+00> : vector<192x128xf32>
    %54 = tpu.matmul %51, %53, %cst_51 {dimension_numbers = #tpu.dot_dimension_numbers<[1], [0], [0], [1], [0, 0, 1, 1], [], []>} : vector<192x128xbf16>, vector<128x128xbf16>, vector<192x128xf32> -> vector<192x128xf32>
    %55 = arith.addf %48, %54 : vector<192x128xf32>
    %c1_52 = arith.constant 1 : index
    %c1_53 = arith.constant 1 : index
    %c0_54 = arith.constant 0 : index
    %c0_55 = arith.constant 0 : index
    %56 = vector.load %arg9[%c1_52, %c1_53, %c0_54, %c0_55] : memref<3x14x16x128xbf16, #tpu.memory_space<vmem>>, vector<1x12x16x128xbf16>
    %57 = vector.shape_cast %56 : vector<1x12x16x128xbf16> to vector<12x16x128xbf16>
    %58 = vector.shape_cast %57 : vector<12x16x128xbf16> to vector<192x128xbf16>
    %c4 = arith.constant 4 : index
    %c0_56 = arith.constant 0 : index
    %c0_57 = arith.constant 0 : index
    %59 = vector.load %arg4[%c4, %c0_56, %c0_57] : memref<9x128x128xbf16, #tpu.memory_space<vmem>>, vector<1x128x128xbf16>
    %60 = vector.shape_cast %59 : vector<1x128x128xbf16> to vector<128x128xbf16>
    %cst_58 = arith.constant dense<0.000000e+00> : vector<192x128xf32>
    %61 = tpu.matmul %58, %60, %cst_58 {dimension_numbers = #tpu.dot_dimension_numbers<[1], [0], [0], [1], [0, 0, 1, 1], [], []>} : vector<192x128xbf16>, vector<128x128xbf16>, vector<192x128xf32> -> vector<192x128xf32>
    %62 = arith.addf %55, %61 : vector<192x128xf32>
    %c2_59 = arith.constant 2 : index
    %c1_60 = arith.constant 1 : index
    %c0_61 = arith.constant 0 : index
    %c0_62 = arith.constant 0 : index
    %63 = vector.load %arg9[%c2_59, %c1_60, %c0_61, %c0_62] : memref<3x14x16x128xbf16, #tpu.memory_space<vmem>>, vector<1x12x16x128xbf16>
    %64 = vector.shape_cast %63 : vector<1x12x16x128xbf16> to vector<12x16x128xbf16>
    %65 = vector.shape_cast %64 : vector<12x16x128xbf16> to vector<192x128xbf16>
    %c5 = arith.constant 5 : index
    %c0_63 = arith.constant 0 : index
    %c0_64 = arith.constant 0 : index
    %66 = vector.load %arg4[%c5, %c0_63, %c0_64] : memref<9x128x128xbf16, #tpu.memory_space<vmem>>, vector<1x128x128xbf16>
    %67 = vector.shape_cast %66 : vector<1x128x128xbf16> to vector<128x128xbf16>
    %cst_65 = arith.constant dense<0.000000e+00> : vector<192x128xf32>
    %68 = tpu.matmul %65, %67, %cst_65 {dimension_numbers = #tpu.dot_dimension_numbers<[1], [0], [0], [1], [0, 0, 1, 1], [], []>} : vector<192x128xbf16>, vector<128x128xbf16>, vector<192x128xf32> -> vector<192x128xf32>
    %69 = arith.addf %62, %68 : vector<192x128xf32>
    %c0_66 = arith.constant 0 : index
    %c2_67 = arith.constant 2 : index
    %c0_68 = arith.constant 0 : index
    %c0_69 = arith.constant 0 : index
    %70 = vector.load %arg9[%c0_66, %c2_67, %c0_68, %c0_69] : memref<3x14x16x128xbf16, #tpu.memory_space<vmem>>, vector<1x12x16x128xbf16>
    %71 = vector.shape_cast %70 : vector<1x12x16x128xbf16> to vector<12x16x128xbf16>
    %72 = vector.shape_cast %71 : vector<12x16x128xbf16> to vector<192x128xbf16>
    %c6 = arith.constant 6 : index
    %c0_70 = arith.constant 0 : index
    %c0_71 = arith.constant 0 : index
    %73 = vector.load %arg4[%c6, %c0_70, %c0_71] : memref<9x128x128xbf16, #tpu.memory_space<vmem>>, vector<1x128x128xbf16>
    %74 = vector.shape_cast %73 : vector<1x128x128xbf16> to vector<128x128xbf16>
    %cst_72 = arith.constant dense<0.000000e+00> : vector<192x128xf32>
    %75 = tpu.matmul %72, %74, %cst_72 {dimension_numbers = #tpu.dot_dimension_numbers<[1], [0], [0], [1], [0, 0, 1, 1], [], []>} : vector<192x128xbf16>, vector<128x128xbf16>, vector<192x128xf32> -> vector<192x128xf32>
    %76 = arith.addf %69, %75 : vector<192x128xf32>
    %c1_73 = arith.constant 1 : index
    %c2_74 = arith.constant 2 : index
    %c0_75 = arith.constant 0 : index
    %c0_76 = arith.constant 0 : index
    %77 = vector.load %arg9[%c1_73, %c2_74, %c0_75, %c0_76] : memref<3x14x16x128xbf16, #tpu.memory_space<vmem>>, vector<1x12x16x128xbf16>
    %78 = vector.shape_cast %77 : vector<1x12x16x128xbf16> to vector<12x16x128xbf16>
    %79 = vector.shape_cast %78 : vector<12x16x128xbf16> to vector<192x128xbf16>
    %c7 = arith.constant 7 : index
    %c0_77 = arith.constant 0 : index
    %c0_78 = arith.constant 0 : index
    %80 = vector.load %arg4[%c7, %c0_77, %c0_78] : memref<9x128x128xbf16, #tpu.memory_space<vmem>>, vector<1x128x128xbf16>
    %81 = vector.shape_cast %80 : vector<1x128x128xbf16> to vector<128x128xbf16>
    %cst_79 = arith.constant dense<0.000000e+00> : vector<192x128xf32>
    %82 = tpu.matmul %79, %81, %cst_79 {dimension_numbers = #tpu.dot_dimension_numbers<[1], [0], [0], [1], [0, 0, 1, 1], [], []>} : vector<192x128xbf16>, vector<128x128xbf16>, vector<192x128xf32> -> vector<192x128xf32>
    %83 = arith.addf %76, %82 : vector<192x128xf32>
    %c2_80 = arith.constant 2 : index
    %c2_81 = arith.constant 2 : index
    %c0_82 = arith.constant 0 : index
    %c0_83 = arith.constant 0 : index
    %84 = vector.load %arg9[%c2_80, %c2_81, %c0_82, %c0_83] : memref<3x14x16x128xbf16, #tpu.memory_space<vmem>>, vector<1x12x16x128xbf16>
    %85 = vector.shape_cast %84 : vector<1x12x16x128xbf16> to vector<12x16x128xbf16>
    %86 = vector.shape_cast %85 : vector<12x16x128xbf16> to vector<192x128xbf16>
    %c8 = arith.constant 8 : index
    %c0_84 = arith.constant 0 : index
    %c0_85 = arith.constant 0 : index
    %87 = vector.load %arg4[%c8, %c0_84, %c0_85] : memref<9x128x128xbf16, #tpu.memory_space<vmem>>, vector<1x128x128xbf16>
    %88 = vector.shape_cast %87 : vector<1x128x128xbf16> to vector<128x128xbf16>
    %cst_86 = arith.constant dense<0.000000e+00> : vector<192x128xf32>
    %89 = tpu.matmul %86, %88, %cst_86 {dimension_numbers = #tpu.dot_dimension_numbers<[1], [0], [0], [1], [0, 0, 1, 1], [], []>} : vector<192x128xbf16>, vector<128x128xbf16>, vector<192x128xf32> -> vector<192x128xf32>
    %90 = arith.addf %83, %89 : vector<192x128xf32>
    %c0_87 = arith.constant 0 : index
    %c0_88 = arith.constant 0 : index
    %91 = vector.load %arg7[%c0_87, %c0_88] : memref<1x128xf32, #tpu.memory_space<vmem>>, vector<1x128xf32>
    %92 = vector.broadcast %91 : vector<1x128xf32> to vector<192x128xf32>
    %93 = arith.addf %90, %92 : vector<192x128xf32>
    %cst_89 = arith.constant 0.000000e+00 : f32
    %94 = vector.broadcast %cst_89 : f32 to vector<192x128xf32>
    %95 = arith.maximumf %93, %94 : vector<192x128xf32>
    %96 = arith.truncf %95 : vector<192x128xf32> to vector<192x128xbf16>
    %c0_90 = arith.constant 0 : index
    %c0_91 = arith.constant 0 : index
    %97 = vector.load %arg8[%c0_90, %c0_91] : memref<384x128xbf16, #tpu.memory_space<vmem>>, vector<192x128xbf16>
    tpu.vector_store %arg8[%c0_90, %c0_91], %96 {strides = array<i32>} : memref<384x128xbf16, #tpu.memory_space<vmem>>, vector<192x128xbf16>,
    %c224 = arith.constant 224 : index
    %c0_92 = arith.constant 0 : index
    %98 = vector.load %arg1[%c224, %c0_92] : memref<448x128xbf16, #tpu.memory_space<vmem>>, vector<224x128xbf16>
    %c0_93 = arith.constant 0 : index
    %c0_94 = arith.constant 0 : index
    %99 = vector.load %arg3[%c0_93, %c0_94] : memref<128x128xbf16, #tpu.memory_space<vmem>>, vector<128x128xbf16>
    %cst_95 = arith.constant dense<0.000000e+00> : vector<224x128xf32>
    %100 = tpu.matmul %98, %99, %cst_95 {dimension_numbers = #tpu.dot_dimension_numbers<[1], [0], [0], [1], [0, 0, 1, 1], [], []>} : vector<224x128xbf16>, vector<128x128xbf16>, vector<224x128xf32> -> vector<224x128xf32>
    %c0_96 = arith.constant 0 : index
    %c0_97 = arith.constant 0 : index
    %101 = vector.load %arg6[%c0_96, %c0_97] : memref<1x128xf32, #tpu.memory_space<vmem>>, vector<1x128xf32>
    %102 = vector.broadcast %101 : vector<1x128xf32> to vector<224x128xf32>
    %103 = arith.addf %100, %102 : vector<224x128xf32>
    %cst_98 = arith.constant 0.000000e+00 : f32
    %104 = vector.broadcast %cst_98 : f32 to vector<224x128xf32>
    %105 = arith.maximumf %103, %104 : vector<224x128xf32>
    %106 = arith.truncf %105 : vector<224x128xf32> to vector<224x128xbf16>
    %107 = vector.shape_cast %106 : vector<224x128xbf16> to vector<14x16x128xbf16>
    %c0_99 = arith.constant 0 : index
    %c0_100 = arith.constant 0 : index
    %c0_101 = arith.constant 0 : index
    %c0_102 = arith.constant 0 : index
    %108 = vector.load %arg9[%c0_99, %c0_100, %c0_101, %c0_102] : memref<3x14x16x128xbf16, #tpu.memory_space<vmem>>, vector<1x14x16x128xbf16>
    %109 = vector.shape_cast %108 : vector<1x14x16x128xbf16> to vector<14x16x128xbf16>
    %110 = vector.shape_cast %107 : vector<14x16x128xbf16> to vector<1x14x16x128xbf16>
    tpu.vector_store %arg9[%c0_99, %c0_100, %c0_101, %c0_102], %110 {strides = array<i32>} : memref<3x14x16x128xbf16, #tpu.memory_space<vmem>>, vector<1x14x16x128xbf16>,
    %c223_i32_103 = arith.constant 223 : i32
    %111 = tpu.dynamic_rotate %105 by %c223_i32_103 dim 0 : vector<224x128xf32>, i32 -> vector<224x128xf32>
    %112 = arith.truncf %111 : vector<224x128xf32> to vector<224x128xbf16>
    %113 = vector.shape_cast %112 : vector<224x128xbf16> to vector<14x16x128xbf16>
    %c1_104 = arith.constant 1 : index
    %c0_105 = arith.constant 0 : index
    %c0_106 = arith.constant 0 : index
    %c0_107 = arith.constant 0 : index
    %114 = vector.load %arg9[%c1_104, %c0_105, %c0_106, %c0_107] : memref<3x14x16x128xbf16, #tpu.memory_space<vmem>>, vector<1x14x16x128xbf16>
    %115 = vector.shape_cast %114 : vector<1x14x16x128xbf16> to vector<14x16x128xbf16>
    %116 = vector.shape_cast %113 : vector<14x16x128xbf16> to vector<1x14x16x128xbf16>
    tpu.vector_store %arg9[%c1_104, %c0_105, %c0_106, %c0_107], %116 {strides = array<i32>} : memref<3x14x16x128xbf16, #tpu.memory_space<vmem>>, vector<1x14x16x128xbf16>,
    %c222_i32_108 = arith.constant 222 : i32
    %117 = tpu.dynamic_rotate %105 by %c222_i32_108 dim 0 : vector<224x128xf32>, i32 -> vector<224x128xf32>
    %118 = arith.truncf %117 : vector<224x128xf32> to vector<224x128xbf16>
    %119 = vector.shape_cast %118 : vector<224x128xbf16> to vector<14x16x128xbf16>
    %c2_109 = arith.constant 2 : index
    %c0_110 = arith.constant 0 : index
    %c0_111 = arith.constant 0 : index
    %c0_112 = arith.constant 0 : index
    %120 = vector.load %arg9[%c2_109, %c0_110, %c0_111, %c0_112] : memref<3x14x16x128xbf16, #tpu.memory_space<vmem>>, vector<1x14x16x128xbf16>
    %121 = vector.shape_cast %120 : vector<1x14x16x128xbf16> to vector<14x16x128xbf16>
    %122 = vector.shape_cast %119 : vector<14x16x128xbf16> to vector<1x14x16x128xbf16>
    tpu.vector_store %arg9[%c2_109, %c0_110, %c0_111, %c0_112], %122 {strides = array<i32>} : memref<3x14x16x128xbf16, #tpu.memory_space<vmem>>, vector<1x14x16x128xbf16>,
    %c192 = arith.constant 192 : index
    %c0_113 = arith.constant 0 : index
    %123 = vector.load %arg2[%c192, %c0_113] : memref<384x128xbf16, #tpu.memory_space<vmem>>, vector<192x128xbf16>
    %c0_114 = arith.constant 0 : index
    %c0_115 = arith.constant 0 : index
    %124 = vector.load %arg5[%c0_114, %c0_115] : memref<128x128xbf16, #tpu.memory_space<vmem>>, vector<128x128xbf16>
    %cst_116 = arith.constant dense<0.000000e+00> : vector<192x128xf32>
    %125 = tpu.matmul %123, %124, %cst_116 {dimension_numbers = #tpu.dot_dimension_numbers<[1], [0], [0], [1], [0, 0, 1, 1], [], []>} : vector<192x128xbf16>, vector<128x128xbf16>, vector<192x128xf32> -> vector<192x128xf32>
    %c0_117 = arith.constant 0 : index
    %c0_118 = arith.constant 0 : index
    %c0_119 = arith.constant 0 : index
    %c0_120 = arith.constant 0 : index
    %126 = vector.load %arg9[%c0_117, %c0_118, %c0_119, %c0_120] : memref<3x14x16x128xbf16, #tpu.memory_space<vmem>>, vector<1x12x16x128xbf16>
    %127 = vector.shape_cast %126 : vector<1x12x16x128xbf16> to vector<12x16x128xbf16>
    %128 = vector.shape_cast %127 : vector<12x16x128xbf16> to vector<192x128xbf16>
    %c0_121 = arith.constant 0 : index
    %c0_122 = arith.constant 0 : index
    %c0_123 = arith.constant 0 : index
    %129 = vector.load %arg4[%c0_121, %c0_122, %c0_123] : memref<9x128x128xbf16, #tpu.memory_space<vmem>>, vector<1x128x128xbf16>
    %130 = vector.shape_cast %129 : vector<1x128x128xbf16> to vector<128x128xbf16>
    %cst_124 = arith.constant dense<0.000000e+00> : vector<192x128xf32>
    %131 = tpu.matmul %128, %130, %cst_124 {dimension_numbers = #tpu.dot_dimension_numbers<[1], [0], [0], [1], [0, 0, 1, 1], [], []>} : vector<192x128xbf16>, vector<128x128xbf16>, vector<192x128xf32> -> vector<192x128xf32>
    %132 = arith.addf %125, %131 : vector<192x128xf32>
    %c1_125 = arith.constant 1 : index
    %c0_126 = arith.constant 0 : index
    %c0_127 = arith.constant 0 : index
    %c0_128 = arith.constant 0 : index
    %133 = vector.load %arg9[%c1_125, %c0_126, %c0_127, %c0_128] : memref<3x14x16x128xbf16, #tpu.memory_space<vmem>>, vector<1x12x16x128xbf16>
    %134 = vector.shape_cast %133 : vector<1x12x16x128xbf16> to vector<12x16x128xbf16>
    %135 = vector.shape_cast %134 : vector<12x16x128xbf16> to vector<192x128xbf16>
    %c1_129 = arith.constant 1 : index
    %c0_130 = arith.constant 0 : index
    %c0_131 = arith.constant 0 : index
    %136 = vector.load %arg4[%c1_129, %c0_130, %c0_131] : memref<9x128x128xbf16, #tpu.memory_space<vmem>>, vector<1x128x128xbf16>
    %137 = vector.shape_cast %136 : vector<1x128x128xbf16> to vector<128x128xbf16>
    %cst_132 = arith.constant dense<0.000000e+00> : vector<192x128xf32>
    %138 = tpu.matmul %135, %137, %cst_132 {dimension_numbers = #tpu.dot_dimension_numbers<[1], [0], [0], [1], [0, 0, 1, 1], [], []>} : vector<192x128xbf16>, vector<128x128xbf16>, vector<192x128xf32> -> vector<192x128xf32>
    %139 = arith.addf %132, %138 : vector<192x128xf32>
    %c2_133 = arith.constant 2 : index
    %c0_134 = arith.constant 0 : index
    %c0_135 = arith.constant 0 : index
    %c0_136 = arith.constant 0 : index
    %140 = vector.load %arg9[%c2_133, %c0_134, %c0_135, %c0_136] : memref<3x14x16x128xbf16, #tpu.memory_space<vmem>>, vector<1x12x16x128xbf16>
    %141 = vector.shape_cast %140 : vector<1x12x16x128xbf16> to vector<12x16x128xbf16>
    %142 = vector.shape_cast %141 : vector<12x16x128xbf16> to vector<192x128xbf16>
    %c2_137 = arith.constant 2 : index
    %c0_138 = arith.constant 0 : index
    %c0_139 = arith.constant 0 : index
    %143 = vector.load %arg4[%c2_137, %c0_138, %c0_139] : memref<9x128x128xbf16, #tpu.memory_space<vmem>>, vector<1x128x128xbf16>
    %144 = vector.shape_cast %143 : vector<1x128x128xbf16> to vector<128x128xbf16>
    %cst_140 = arith.constant dense<0.000000e+00> : vector<192x128xf32>
    %145 = tpu.matmul %142, %144, %cst_140 {dimension_numbers = #tpu.dot_dimension_numbers<[1], [0], [0], [1], [0, 0, 1, 1], [], []>} : vector<192x128xbf16>, vector<128x128xbf16>, vector<192x128xf32> -> vector<192x128xf32>
    %146 = arith.addf %139, %145 : vector<192x128xf32>
    %c0_141 = arith.constant 0 : index
    %c1_142 = arith.constant 1 : index
    %c0_143 = arith.constant 0 : index
    %c0_144 = arith.constant 0 : index
    %147 = vector.load %arg9[%c0_141, %c1_142, %c0_143, %c0_144] : memref<3x14x16x128xbf16, #tpu.memory_space<vmem>>, vector<1x12x16x128xbf16>
    %148 = vector.shape_cast %147 : vector<1x12x16x128xbf16> to vector<12x16x128xbf16>
    %149 = vector.shape_cast %148 : vector<12x16x128xbf16> to vector<192x128xbf16>
    %c3_145 = arith.constant 3 : index
    %c0_146 = arith.constant 0 : index
    %c0_147 = arith.constant 0 : index
    %150 = vector.load %arg4[%c3_145, %c0_146, %c0_147] : memref<9x128x128xbf16, #tpu.memory_space<vmem>>, vector<1x128x128xbf16>
    %151 = vector.shape_cast %150 : vector<1x128x128xbf16> to vector<128x128xbf16>
    %cst_148 = arith.constant dense<0.000000e+00> : vector<192x128xf32>
    %152 = tpu.matmul %149, %151, %cst_148 {dimension_numbers = #tpu.dot_dimension_numbers<[1], [0], [0], [1], [0, 0, 1, 1], [], []>} : vector<192x128xbf16>, vector<128x128xbf16>, vector<192x128xf32> -> vector<192x128xf32>
    %153 = arith.addf %146, %152 : vector<192x128xf32>
    %c1_149 = arith.constant 1 : index
    %c1_150 = arith.constant 1 : index
    %c0_151 = arith.constant 0 : index
    %c0_152 = arith.constant 0 : index
    %154 = vector.load %arg9[%c1_149, %c1_150, %c0_151, %c0_152] : memref<3x14x16x128xbf16, #tpu.memory_space<vmem>>, vector<1x12x16x128xbf16>
    %155 = vector.shape_cast %154 : vector<1x12x16x128xbf16> to vector<12x16x128xbf16>
    %156 = vector.shape_cast %155 : vector<12x16x128xbf16> to vector<192x128xbf16>
    %c4_153 = arith.constant 4 : index
    %c0_154 = arith.constant 0 : index
    %c0_155 = arith.constant 0 : index
    %157 = vector.load %arg4[%c4_153, %c0_154, %c0_155] : memref<9x128x128xbf16, #tpu.memory_space<vmem>>, vector<1x128x128xbf16>
    %158 = vector.shape_cast %157 : vector<1x128x128xbf16> to vector<128x128xbf16>
    %cst_156 = arith.constant dense<0.000000e+00> : vector<192x128xf32>
    %159 = tpu.matmul %156, %158, %cst_156 {dimension_numbers = #tpu.dot_dimension_numbers<[1], [0], [0], [1], [0, 0, 1, 1], [], []>} : vector<192x128xbf16>, vector<128x128xbf16>, vector<192x128xf32> -> vector<192x128xf32>
    %160 = arith.addf %153, %159 : vector<192x128xf32>
    %c2_157 = arith.constant 2 : index
    %c1_158 = arith.constant 1 : index
    %c0_159 = arith.constant 0 : index
    %c0_160 = arith.constant 0 : index
    %161 = vector.load %arg9[%c2_157, %c1_158, %c0_159, %c0_160] : memref<3x14x16x128xbf16, #tpu.memory_space<vmem>>, vector<1x12x16x128xbf16>
    %162 = vector.shape_cast %161 : vector<1x12x16x128xbf16> to vector<12x16x128xbf16>
    %163 = vector.shape_cast %162 : vector<12x16x128xbf16> to vector<192x128xbf16>
    %c5_161 = arith.constant 5 : index
    %c0_162 = arith.constant 0 : index
    %c0_163 = arith.constant 0 : index
    %164 = vector.load %arg4[%c5_161, %c0_162, %c0_163] : memref<9x128x128xbf16, #tpu.memory_space<vmem>>, vector<1x128x128xbf16>
    %165 = vector.shape_cast %164 : vector<1x128x128xbf16> to vector<128x128xbf16>
    %cst_164 = arith.constant dense<0.000000e+00> : vector<192x128xf32>
    %166 = tpu.matmul %163, %165, %cst_164 {dimension_numbers = #tpu.dot_dimension_numbers<[1], [0], [0], [1], [0, 0, 1, 1], [], []>} : vector<192x128xbf16>, vector<128x128xbf16>, vector<192x128xf32> -> vector<192x128xf32>
    %167 = arith.addf %160, %166 : vector<192x128xf32>
    %c0_165 = arith.constant 0 : index
    %c2_166 = arith.constant 2 : index
    %c0_167 = arith.constant 0 : index
    %c0_168 = arith.constant 0 : index
    %168 = vector.load %arg9[%c0_165, %c2_166, %c0_167, %c0_168] : memref<3x14x16x128xbf16, #tpu.memory_space<vmem>>, vector<1x12x16x128xbf16>
    %169 = vector.shape_cast %168 : vector<1x12x16x128xbf16> to vector<12x16x128xbf16>
    %170 = vector.shape_cast %169 : vector<12x16x128xbf16> to vector<192x128xbf16>
    %c6_169 = arith.constant 6 : index
    %c0_170 = arith.constant 0 : index
    %c0_171 = arith.constant 0 : index
    %171 = vector.load %arg4[%c6_169, %c0_170, %c0_171] : memref<9x128x128xbf16, #tpu.memory_space<vmem>>, vector<1x128x128xbf16>
    %172 = vector.shape_cast %171 : vector<1x128x128xbf16> to vector<128x128xbf16>
    %cst_172 = arith.constant dense<0.000000e+00> : vector<192x128xf32>
    %173 = tpu.matmul %170, %172, %cst_172 {dimension_numbers = #tpu.dot_dimension_numbers<[1], [0], [0], [1], [0, 0, 1, 1], [], []>} : vector<192x128xbf16>, vector<128x128xbf16>, vector<192x128xf32> -> vector<192x128xf32>
    %174 = arith.addf %167, %173 : vector<192x128xf32>
    %c1_173 = arith.constant 1 : index
    %c2_174 = arith.constant 2 : index
    %c0_175 = arith.constant 0 : index
    %c0_176 = arith.constant 0 : index
    %175 = vector.load %arg9[%c1_173, %c2_174, %c0_175, %c0_176] : memref<3x14x16x128xbf16, #tpu.memory_space<vmem>>, vector<1x12x16x128xbf16>
    %176 = vector.shape_cast %175 : vector<1x12x16x128xbf16> to vector<12x16x128xbf16>
    %177 = vector.shape_cast %176 : vector<12x16x128xbf16> to vector<192x128xbf16>
    %c7_177 = arith.constant 7 : index
    %c0_178 = arith.constant 0 : index
    %c0_179 = arith.constant 0 : index
    %178 = vector.load %arg4[%c7_177, %c0_178, %c0_179] : memref<9x128x128xbf16, #tpu.memory_space<vmem>>, vector<1x128x128xbf16>
    %179 = vector.shape_cast %178 : vector<1x128x128xbf16> to vector<128x128xbf16>
    %cst_180 = arith.constant dense<0.000000e+00> : vector<192x128xf32>
    %180 = tpu.matmul %177, %179, %cst_180 {dimension_numbers = #tpu.dot_dimension_numbers<[1], [0], [0], [1], [0, 0, 1, 1], [], []>} : vector<192x128xbf16>, vector<128x128xbf16>, vector<192x128xf32> -> vector<192x128xf32>
    %181 = arith.addf %174, %180 : vector<192x128xf32>
    %c2_181 = arith.constant 2 : index
    %c2_182 = arith.constant 2 : index
    %c0_183 = arith.constant 0 : index
    %c0_184 = arith.constant 0 : index
    %182 = vector.load %arg9[%c2_181, %c2_182, %c0_183, %c0_184] : memref<3x14x16x128xbf16, #tpu.memory_space<vmem>>, vector<1x12x16x128xbf16>
    %183 = vector.shape_cast %182 : vector<1x12x16x128xbf16> to vector<12x16x128xbf16>
    %184 = vector.shape_cast %183 : vector<12x16x128xbf16> to vector<192x128xbf16>
    %c8_185 = arith.constant 8 : index
    %c0_186 = arith.constant 0 : index
    %c0_187 = arith.constant 0 : index
    %185 = vector.load %arg4[%c8_185, %c0_186, %c0_187] : memref<9x128x128xbf16, #tpu.memory_space<vmem>>, vector<1x128x128xbf16>
    %186 = vector.shape_cast %185 : vector<1x128x128xbf16> to vector<128x128xbf16>
    %cst_188 = arith.constant dense<0.000000e+00> : vector<192x128xf32>
    %187 = tpu.matmul %184, %186, %cst_188 {dimension_numbers = #tpu.dot_dimension_numbers<[1], [0], [0], [1], [0, 0, 1, 1], [], []>} : vector<192x128xbf16>, vector<128x128xbf16>, vector<192x128xf32> -> vector<192x128xf32>
    %188 = arith.addf %181, %187 : vector<192x128xf32>
    %c0_189 = arith.constant 0 : index
    %c0_190 = arith.constant 0 : index
    %189 = vector.load %arg7[%c0_189, %c0_190] : memref<1x128xf32, #tpu.memory_space<vmem>>, vector<1x128xf32>
    %190 = vector.broadcast %189 : vector<1x128xf32> to vector<192x128xf32>
    %191 = arith.addf %188, %190 : vector<192x128xf32>
    %cst_191 = arith.constant 0.000000e+00 : f32
    %192 = vector.broadcast %cst_191 : f32 to vector<192x128xf32>
    %193 = arith.maximumf %191, %192 : vector<192x128xf32>
    %194 = arith.truncf %193 : vector<192x128xf32> to vector<192x128xbf16>
    %c192_192 = arith.constant 192 : index
    %c0_193 = arith.constant 0 : index
    %195 = vector.load %arg8[%c192_192, %c0_193] : memref<384x128xbf16, #tpu.memory_space<vmem>>, vector<192x128xbf16>
    tpu.vector_store %arg8[%c192_192, %c0_193], %194 {strides = array<i32>} : memref<384x128xbf16, #tpu.memory_space<vmem>>, vector<192x128xbf16>,
    return
  }
  func.func @transform_0(%arg0: i32) -> (i32, i32) {
    %c0_i32 = arith.constant 0 : i32
    %c0_i32_0 = arith.constant 0 : i32
    return %arg0, %c0_i32 : i32, i32
  }
  func.func @transform_1(%arg0: i32) -> (i32, i32) {
    %c0_i32 = arith.constant 0 : i32
    %c0_i32_0 = arith.constant 0 : i32
    return %arg0, %c0_i32 : i32, i32
  }
  func.func @transform_2(%arg0: i32) -> (i32, i32) {
    %c0_i32 = arith.constant 0 : i32
    %c0_i32_0 = arith.constant 0 : i32
    %c0_i32_1 = arith.constant 0 : i32
    return %c0_i32, %c0_i32_0 : i32, i32
  }
  func.func @transform_3(%arg0: i32) -> (i32, i32, i32) {
    %c0_i32 = arith.constant 0 : i32
    %c0_i32_0 = arith.constant 0 : i32
    %c0_i32_1 = arith.constant 0 : i32
    %c0_i32_2 = arith.constant 0 : i32
    return %c0_i32, %c0_i32_0, %c0_i32_1 : i32, i32, i32
  }
  func.func @transform_4(%arg0: i32) -> (i32, i32) {
    %c0_i32 = arith.constant 0 : i32
    %c0_i32_0 = arith.constant 0 : i32
    %c0_i32_1 = arith.constant 0 : i32
    return %c0_i32, %c0_i32_0 : i32, i32
  }
  func.func @transform_5(%arg0: i32) -> (i32, i32) {
    %c0_i32 = arith.constant 0 : i32
    %c0_i32_0 = arith.constant 0 : i32
    %c0_i32_1 = arith.constant 0 : i32
    return %c0_i32, %c0_i32_0 : i32, i32
  }
  func.func @transform_6(%arg0: i32) -> (i32, i32) {
    %c0_i32 = arith.constant 0 : i32
    %c0_i32_0 = arith.constant 0 : i32
    %c0_i32_1 = arith.constant 0 : i32
    return %c0_i32, %c0_i32_0 : i32, i32
  }
  func.func @transform_7(%arg0: i32) -> (i32, i32) {
    %c0_i32 = arith.constant 0 : i32
    %c0_i32_0 = arith.constant 0 : i32
    return %arg0, %c0_i32 : i32, i32
  }
}

</mosaic_0001>

<llo_original>
// kernel: tpu_custom_call.1
$region0: #{tpu_custom_call.1}
  #allocation0 [shape = 'u32[]', space=smem, size = 0x4, offset = 0x4, fixed_abs, tag = 'smem constant byte address 0x4 - core index']
  #allocation1 [shape = 'u32[144,128]{1,0:T(1,128)}', space=vmem, size = 0x12000, scoped, tag = 'internal scratch']
  #allocation2 [shape = 'bf16[3,14,16,128]{3,2,1,0:T(16,128)(2,1)}', space=vmem, size = 0x2a000, scoped, tag = 'scratch operand']
  %s0 = inlined_call_operand.hbm [shape: bf16[448,128], index: 0, kind: input, shape index: {}]
  %s1 = inlined_call_operand.hbm [shape: bf16[384,128], index: 1, kind: input, shape index: {}]
  %s2 = inlined_call_operand.hbm [shape: bf16[128,128], index: 2, kind: input, shape index: {}]
  %s3 = inlined_call_operand.hbm [shape: bf16[9,128,128], index: 3, kind: input, shape index: {}]
  %s4 = inlined_call_operand.hbm [shape: bf16[128,128], index: 4, kind: input, shape index: {}]
  %s5 = inlined_call_operand.vmem [shape: f32[1,128], index: 5, kind: input, shape index: {}]
  %s6 = inlined_call_operand.vmem [shape: f32[1,128], index: 6, kind: input, shape index: {}]
  %s7 = inlined_call_operand.hbm [shape: bf16[384,128], index: 7, kind: output, shape index: {}]
  %s8 = sld [smem:[#allocation0]]
  $region58: #{tpu_custom_call.1} parent=0
    _
  %s10 = ssub.s32 1, %s8
  %s11 = scalar_select 0, %s10, %s8
  $region1: #{tpu_custom_call.1} parent=0
    #allocation3 [shape = 'u8[114688]{0}', space=vmem, size = 0x1c000, scoped, tag = 'input window, operand 0, single buffered']
    #allocation4 [shape = 's32[1]{0}', space=sflag, size = 0x4, scoped, tag = 'scoped memory for tpu_custom_call.1']
    #allocation5 [shape = 's32[1]{0}', space=sflag, size = 0x4, scoped, tag = 'scoped memory for tpu_custom_call.1']
    #allocation6 [shape = 'u8[98304]{0}', space=vmem, size = 0x18000, scoped, tag = 'input window, operand 1, single buffered']
    #allocation7 [shape = 's32[1]{0}', space=sflag, size = 0x4, scoped, tag = 'scoped memory for tpu_custom_call.1']
    #allocation8 [shape = 'u8[32768]{0}', space=vmem, size = 0x8000, scoped, tag = 'input window, operand 2, single buffered']
    #allocation9 [shape = 'u8[294912]{0}', space=vmem, size = 0x48000, scoped, tag = 'input window, operand 3, single buffered']
    #allocation10 [shape = 's32[1]{0}', space=sflag, size = 0x4, scoped, tag = 'scoped memory for tpu_custom_call.1']
    #allocation11 [shape = 'u8[32768]{0}', space=vmem, size = 0x8000, scoped, tag = 'input window, operand 4, single buffered']
    #allocation12 [shape = 'u8[98304]{0}', space=vmem, size = 0x18000, scoped, tag = 'output window, operand 0, single buffered']
    %12 = vsyncpa [#allocation4], 0
    %13 = vsyncpa [#allocation7], 0
    %14 = vsyncpa [#allocation10], 0
    %15 = vsyncpa [#allocation5], 0
    // Predicated region
    $region2: #{tpu_custom_call.1} parent=1 // pred_check
      _
    $region3: #{tpu_custom_call.1} parent=1 // pred_check_branch
      %17 = sbr.rel (0) target = $region5
    $region4: #{tpu_custom_call.1} parent=1 // pred_region
      %s19 = ssub.s32 3584, 3584
      %20 = vsyncadd [#allocation4], %s19
      %s21 = sshll.u32 [#allocation3], 4
      %s22 = int_to_ptr.vmem [resolvable:$true] %s21
      %27 = dma.hbm_to_vmem [thread:$0]  %s0, 3584, %s22, [#allocation4], 64, 64, 4
    $region5: #{tpu_custom_call.1} parent=1 // pred_fallthru
      _
    // Predicated region
    $region6: #{tpu_custom_call.1} parent=1 // pred_check
      _
    $region7: #{tpu_custom_call.1} parent=1 // pred_check_branch
      %29 = sbr.rel (0) target = $region9
    $region8: #{tpu_custom_call.1} parent=1 // pred_region
      %s31 = ssub.s32 3072, 3072
      %32 = vsyncadd [#allocation7], %s31
      %s33 = sshll.u32 [#allocation6], 4
      %s34 = int_to_ptr.vmem [resolvable:$true] %s33
      %39 = dma.hbm_to_vmem [thread:$0]  %s1, 3072, %s34, [#allocation7], 64, 64, 4
    $region9: #{tpu_custom_call.1} parent=1 // pred_fallthru
      _
    // Predicated region
    $region10: #{tpu_custom_call.1} parent=1 // pred_check
      _
    $region11: #{tpu_custom_call.1} parent=1 // pred_check_branch
      %41 = sbr.rel (0) target = $region13
    $region12: #{tpu_custom_call.1} parent=1 // pred_region
      %s43 = ssub.s32 1024, 1024
      %44 = vsyncadd [#allocation7], %s43
      %s45 = sshll.u32 [#allocation8], 4
      %s46 = int_to_ptr.vmem [resolvable:$true] %s45
      %51 = dma.hbm_to_vmem [thread:$0]  %s2, 1024, %s46, [#allocation7], 64, 64, 4
    $region13: #{tpu_custom_call.1} parent=1 // pred_fallthru
      _
    // Predicated region
    $region14: #{tpu_custom_call.1} parent=1 // pred_check
      _
    $region15: #{tpu_custom_call.1} parent=1 // pred_check_branch
      %53 = sbr.rel (0) target = $region17
    $region16: #{tpu_custom_call.1} parent=1 // pred_region
      %s55 = ssub.s32 9216, 9216
      %56 = vsyncadd [#allocation10], %s55
      %s57 = sshll.u32 [#allocation9], 4
      %s58 = int_to_ptr.vmem [resolvable:$true] %s57
      %63 = dma.hbm_to_vmem [thread:$0]  %s3, 9216, %s58, [#allocation10], 64, 64, 4
    $region17: #{tpu_custom_call.1} parent=1 // pred_fallthru
      _
    // Predicated region
    $region18: #{tpu_custom_call.1} parent=1 // pred_check
      _
    $region19: #{tpu_custom_call.1} parent=1 // pred_check_branch
      %65 = sbr.rel (0) target = $region21
    $region20: #{tpu_custom_call.1} parent=1 // pred_region
      %s67 = ssub.s32 1024, 1024
      %68 = vsyncadd [#allocation10], %s67
      %s69 = sshll.u32 [#allocation11], 4
      %s70 = int_to_ptr.vmem [resolvable:$true] %s69
      %75 = dma.hbm_to_vmem [thread:$0]  %s4, 1024, %s70, [#allocation10], 64, 64, 4
    $region21: #{tpu_custom_call.1} parent=1 // pred_fallthru
      _
    // Predicated region
    $region22: #{tpu_custom_call.1} parent=1 // pred_check
      _
    $region23: #{tpu_custom_call.1} parent=1 // pred_check_branch
      %77 = sbr.rel (0) target = $region25
    $region24: #{tpu_custom_call.1} parent=1 // pred_region
      _
    $region25: #{tpu_custom_call.1} parent=1 // pred_fallthru
      _
    // Predicated region
    $region26: #{tpu_custom_call.1} parent=1 // pred_check
      _
    $region27: #{tpu_custom_call.1} parent=1 // pred_check_branch
      %79 = sbr.rel (0) target = $region29
    $region28: #{tpu_custom_call.1} parent=1 // pred_region
      _
    $region29: #{tpu_custom_call.1} parent=1 // pred_fallthru
      _
    // Predicated region
    $region30: #{tpu_custom_call.1} parent=1 // pred_check
      _
    $region31: #{tpu_custom_call.1} parent=1 // pred_check_branch
      %81 = sbr.rel (0) target = $region33
    $region32: #{tpu_custom_call.1} parent=1 // pred_region
      %82 = dma.done [#allocation4], 3584
    $region33: #{tpu_custom_call.1} parent=1 // pred_fallthru
      _
    // Predicated region
    $region34: #{tpu_custom_call.1} parent=1 // pred_check
      _
    $region35: #{tpu_custom_call.1} parent=1 // pred_check_branch
      %84 = sbr.rel (0) target = $region37
    $region36: #{tpu_custom_call.1} parent=1 // pred_region
      %85 = dma.done [#allocation7], 3072
    $region37: #{tpu_custom_call.1} parent=1 // pred_fallthru
      _
    // Predicated region
    $region38: #{tpu_custom_call.1} parent=1 // pred_check
      _
    $region39: #{tpu_custom_call.1} parent=1 // pred_check_branch
      %87 = sbr.rel (0) target = $region41
    $region40: #{tpu_custom_call.1} parent=1 // pred_region
      %88 = dma.done [#allocation7], 1024
    $region41: #{tpu_custom_call.1} parent=1 // pred_fallthru
      _
    // Predicated region
    $region42: #{tpu_custom_call.1} parent=1 // pred_check
      _
    $region43: #{tpu_custom_call.1} parent=1 // pred_check_branch
      %90 = sbr.rel (0) target = $region45
    $region44: #{tpu_custom_call.1} parent=1 // pred_region
      %91 = dma.done [#allocation10], 9216
    $region45: #{tpu_custom_call.1} parent=1 // pred_fallthru
      _
    // Predicated region
    $region46: #{tpu_custom_call.1} parent=1 // pred_check
      _
    $region47: #{tpu_custom_call.1} parent=1 // pred_check_branch
      %93 = sbr.rel (0) target = $region49
    $region48: #{tpu_custom_call.1} parent=1 // pred_region
      %94 = dma.done [#allocation10], 1024
    $region49: #{tpu_custom_call.1} parent=1 // pred_fallthru
      _
    %v96 = vld [vmem:[#allocation3] sm:$0xf]
    %v97 = vld [vmem:[#allocation3 + $0x4] sm:$0xf]
    %v98 = vld [vmem:[#allocation3 + $0x8] sm:$0xf]
    %v99 = vld [vmem:[#allocation3 + $0xc] sm:$0xf]
    %v100 = vld [vmem:[#allocation3 + $0x10] sm:$0xf]
    %v101 = vld [vmem:[#allocation3 + $0x14] sm:$0xf]
    %v102 = vld [vmem:[#allocation3 + $0x18] sm:$0xf]
    %v103 = vld [vmem:[#allocation3 + $0x1c] sm:$0xf]
    %v104 = vld [vmem:[#allocation3 + $0x20] sm:$0xf]
    %v105 = vld [vmem:[#allocation3 + $0x24] sm:$0xf]
    %v106 = vld [vmem:[#allocation3 + $0x28] sm:$0xf]
    %v107 = vld [vmem:[#allocation3 + $0x2c] sm:$0xf]
    %v108 = vld [vmem:[#allocation3 + $0x30] sm:$0xf]
    %v109 = vld [vmem:[#allocation3 + $0x34] sm:$0xf]
    %v110 = vld [vmem:[#allocation3 + $0x38] sm:$0xf]
    %v111 = vld [vmem:[#allocation3 + $0x3c] sm:$0xf]
    %v112 = vld [vmem:[#allocation3 + $0x40] sm:$0xf]
    %v113 = vld [vmem:[#allocation3 + $0x44] sm:$0xf]
    %v114 = vld [vmem:[#allocation3 + $0x48] sm:$0xf]
    %v115 = vld [vmem:[#allocation3 + $0x4c] sm:$0xf]
    %v116 = vld [vmem:[#allocation3 + $0x50] sm:$0xf]
    %v117 = vld [vmem:[#allocation3 + $0x54] sm:$0xf]
    %v118 = vld [vmem:[#allocation3 + $0x58] sm:$0xf]
    %v119 = vld [vmem:[#allocation3 + $0x5c] sm:$0xf]
    %v120 = vld [vmem:[#allocation3 + $0x60] sm:$0xf]
    %v121 = vld [vmem:[#allocation3 + $0x64] sm:$0xf]
    %v122 = vld [vmem:[#allocation3 + $0x68] sm:$0xf]
    %v123 = vld [vmem:[#allocation3 + $0x6c] sm:$0xf]
    %v124 = vld [vmem:[#allocation8] sm:$0xf]
    %v125 = vld [vmem:[#allocation8 + $0x4] sm:$0xf]
    %v126 = vld [vmem:[#allocation8 + $0x8] sm:$0xf]
    %v127 = vld [vmem:[#allocation8 + $0xc] sm:$0xf]
    %v128 = vld [vmem:[#allocation8 + $0x10] sm:$0xf]
    %v129 = vld [vmem:[#allocation8 + $0x14] sm:$0xf]
    %v130 = vld [vmem:[#allocation8 + $0x18] sm:$0xf]
    %v131 = vld [vmem:[#allocation8 + $0x1c] sm:$0xf]
    %v132 = vld [vmem:[#allocation8 + $0x20] sm:$0xf]
    %v133 = vld [vmem:[#allocation8 + $0x24] sm:$0xf]
    %v134 = vld [vmem:[#allocation8 + $0x28] sm:$0xf]
    %v135 = vld [vmem:[#allocation8 + $0x2c] sm:$0xf]
    %v136 = vld [vmem:[#allocation8 + $0x30] sm:$0xf]
    %v137 = vld [vmem:[#allocation8 + $0x34] sm:$0xf]
    %v138 = vld [vmem:[#allocation8 + $0x38] sm:$0xf]
    %v139 = vld [vmem:[#allocation8 + $0x3c] sm:$0xf]
    %v140 = vld [vmem:[%s5] sm:$0x1]
    %v142 = vlaneseq
    %v143 = vshrl.u32 %v142, 7
    %v144 = vsub.s32 0, %v143
    %v145 = vrot.slane %v140, %v144
    %v175 = vunpack.c.l.b16 %v96
    %v176 = vunpack.c.l.b16 %v97
    %v177 = vunpack.c.l.b16 %v98
    %v178 = vunpack.c.l.b16 %v99
    %v179 = vunpack.c.l.b16 %v100
    %v180 = vunpack.c.l.b16 %v101
    %v181 = vunpack.c.l.b16 %v102
    %v182 = vunpack.c.l.b16 %v103
    %v183 = vunpack.c.l.b16 %v104
    %v184 = vunpack.c.l.b16 %v105
    %v185 = vunpack.c.l.b16 %v106
    %v186 = vunpack.c.l.b16 %v107
    %v187 = vunpack.c.l.b16 %v108
    %v188 = vunpack.c.l.b16 %v109
    %v189 = vunpack.c.l.b16 %v110
    %v190 = vunpack.c.l.b16 %v111
    %v191 = vunpack.c.l.b16 %v112
    %v192 = vunpack.c.l.b16 %v113
    %v193 = vunpack.c.l.b16 %v114
    %v194 = vunpack.c.l.b16 %v115
    %v195 = vunpack.c.l.b16 %v116
    %v196 = vunpack.c.l.b16 %v117
    %v197 = vunpack.c.l.b16 %v118
    %v198 = vunpack.c.l.b16 %v119
    %v199 = vunpack.c.l.b16 %v120
    %v200 = vunpack.c.l.b16 %v121
    %v201 = vunpack.c.l.b16 %v122
    %v202 = vunpack.c.l.b16 %v123
    %v203 = vpack.c.b16 %v176, %v175
    %v204 = vpack.c.b16 %v178, %v177
    %v205 = vpack.c.b16 %v180, %v179
    %v206 = vpack.c.b16 %v182, %v181
    %v207 = vpack.c.b16 %v184, %v183
    %v208 = vpack.c.b16 %v186, %v185
    %v209 = vpack.c.b16 %v188, %v187
    %v210 = vpack.c.b16 %v190, %v189
    %v211 = vpack.c.b16 %v192, %v191
    %v212 = vpack.c.b16 %v194, %v193
    %v213 = vpack.c.b16 %v196, %v195
    %v214 = vpack.c.b16 %v198, %v197
    %v215 = vpack.c.b16 %v200, %v199
    %v216 = vpack.c.b16 %v202, %v201
    %v247 = vunpack.c.l.b16 %v124
    %v248 = vunpack.c.l.b16 %v125
    %v249 = vunpack.c.l.b16 %v126
    %v250 = vunpack.c.l.b16 %v127
    %v251 = vunpack.c.l.b16 %v128
    %v252 = vunpack.c.l.b16 %v129
    %v253 = vunpack.c.l.b16 %v130
    %v254 = vunpack.c.l.b16 %v131
    %v255 = vunpack.c.l.b16 %v132
    %v256 = vunpack.c.l.b16 %v133
    %v257 = vunpack.c.l.b16 %v134
    %v258 = vunpack.c.l.b16 %v135
    %v259 = vunpack.c.l.b16 %v136
    %v260 = vunpack.c.l.b16 %v137
    %v261 = vunpack.c.l.b16 %v138
    %v262 = vunpack.c.l.b16 %v139
    %v263 = vpack.c.b16 %v248, %v247
    %v264 = vpack.c.b16 %v250, %v249
    %v265 = vpack.c.b16 %v252, %v251
    %v266 = vpack.c.b16 %v254, %v253
    %v267 = vpack.c.b16 %v256, %v255
    %v268 = vpack.c.b16 %v258, %v257
    %v269 = vpack.c.b16 %v260, %v259
    %v270 = vpack.c.b16 %v262, %v261
    %279 = vmatprep.subr.bf16.mxu0 0
    %280 = vmatpush1.bf16.msra.mxu0 %v263
    %281 = vmatprep.subr.bf16.mxu0 0
    %282 = vmatpush1.bf16.msra.mxu0 %v264
    %283 = vmatprep.subr.bf16.mxu0 0
    %284 = vmatpush1.bf16.msra.mxu0 %v265
    %285 = vmatprep.subr.bf16.mxu0 0
    %286 = vmatpush1.bf16.msra.mxu0 %v266
    %287 = vmatprep.subr.bf16.mxu0 0
    %288 = vmatpush1.bf16.msra.mxu0 %v267
    %289 = vmatprep.subr.bf16.mxu0 0
    %290 = vmatpush1.bf16.msra.mxu0 %v268
    %291 = vmatprep.subr.bf16.mxu0 0
    %292 = vmatpush1.bf16.msra.mxu0 %v269
    %293 = vmatprep.subr.bf16.mxu0 0
    %294 = vmatpush1.bf16.msra.mxu0 %v270
    %295 = vmatprep.subr.bf16.mxu0 0
    %296 = vmatpush1.bf16.msra.mxu0 0
    %297 = vmatprep.subr.bf16.mxu0 0
    %298 = vmatpush1.bf16.msra.mxu0 0
    %299 = vmatprep.subr.bf16.mxu0 0
    %300 = vmatpush1.bf16.msra.mxu0 0
    %301 = vmatprep.subr.bf16.mxu0 0
    %302 = vmatpush1.bf16.msra.mxu0 0
    %303 = vmatprep.subr.bf16.mxu0 0
    %304 = vmatpush1.bf16.msra.mxu0 0
    %305 = vmatprep.subr.bf16.mxu0 0
    %306 = vmatpush1.bf16.msra.mxu0 0
    %307 = vmatprep.subr.bf16.mxu0 0
    %308 = vmatpush1.bf16.msra.mxu0 0
    %309 = vmatprep.subr.bf16.mxu0 0
    %310 = vmatpush1.bf16.msra.mxu0 0
    %311 = vmatprep.mubr.bf16.mxu0 0
    %312 = vmatmul.mubr.bf16.gmra.mrb[0].mxu0 %v203
    %v313 = vpop.f32.mrb[0].mxu0
    %v314 = vadd.f32 %v145, %v313
    %v315 = vpop.f32.mrb[0].mxu0
    %v316 = vpop.f32.mrb[0].mxu0
    %v317 = vadd.f32 %v145, %v316
    %v318 = vpop.f32.mrb[0].mxu0
    %319 = vmatprep.mubr.bf16.mxu0 0
    %320 = vmatmul.mubr.bf16.gmra.mrb[0].mxu0 %v204
    %v321 = vpop.f32.mrb[0].mxu0
    %v322 = vadd.f32 %v145, %v321
    %v323 = vpop.f32.mrb[0].mxu0
    %v324 = vpop.f32.mrb[0].mxu0
    %v325 = vadd.f32 %v145, %v324
    %v326 = vpop.f32.mrb[0].mxu0
    %327 = vmatprep.mubr.bf16.mxu0 0
    %328 = vmatmul.mubr.bf16.gmra.mrb[0].mxu0 %v205
    %v329 = vpop.f32.mrb[0].mxu0
    %v330 = vadd.f32 %v145, %v329
    %v331 = vpop.f32.mrb[0].mxu0
    %v332 = vpop.f32.mrb[0].mxu0
    %v333 = vadd.f32 %v145, %v332
    %v334 = vpop.f32.mrb[0].mxu0
    %335 = vmatprep.mubr.bf16.mxu0 0
    %336 = vmatmul.mubr.bf16.gmra.mrb[0].mxu0 %v206
    %v337 = vpop.f32.mrb[0].mxu0
    %v338 = vadd.f32 %v145, %v337
    %v339 = vpop.f32.mrb[0].mxu0
    %v340 = vpop.f32.mrb[0].mxu0
    %v341 = vadd.f32 %v145, %v340
    %v342 = vpop.f32.mrb[0].mxu0
    %343 = vmatprep.mubr.bf16.mxu0 0
    %344 = vmatmul.mubr.bf16.gmra.mrb[0].mxu0 %v207
    %v345 = vpop.f32.mrb[0].mxu0
    %v346 = vadd.f32 %v145, %v345
    %v347 = vpop.f32.mrb[0].mxu0
    %v348 = vpop.f32.mrb[0].mxu0
    %v349 = vadd.f32 %v145, %v348
    %v350 = vpop.f32.mrb[0].mxu0
    %351 = vmatprep.mubr.bf16.mxu0 0
    %352 = vmatmul.mubr.bf16.gmra.mrb[0].mxu0 %v208
    %v353 = vpop.f32.mrb[0].mxu0
    %v354 = vadd.f32 %v145, %v353
    %v355 = vpop.f32.mrb[0].mxu0
    %v356 = vpop.f32.mrb[0].mxu0
    %v357 = vadd.f32 %v145, %v356
    %v358 = vpop.f32.mrb[0].mxu0
    %359 = vmatprep.mubr.bf16.mxu0 0
    %360 = vmatmul.mubr.bf16.gmra.mrb[0].mxu0 %v209
    %v361 = vpop.f32.mrb[0].mxu0
    %v362 = vadd.f32 %v145, %v361
    %v363 = vpop.f32.mrb[0].mxu0
    %v364 = vpop.f32.mrb[0].mxu0
    %v365 = vadd.f32 %v145, %v364
    %v366 = vpop.f32.mrb[0].mxu0
    %367 = vmatprep.mubr.bf16.mxu0 0
    %368 = vmatmul.mubr.bf16.gmra.mrb[0].mxu0 %v210
    %v369 = vpop.f32.mrb[0].mxu0
    %v370 = vadd.f32 %v145, %v369
    %v371 = vpop.f32.mrb[0].mxu0
    %v372 = vpop.f32.mrb[0].mxu0
    %v373 = vadd.f32 %v145, %v372
    %v374 = vpop.f32.mrb[0].mxu0
    %375 = vmatprep.mubr.bf16.mxu0 0
    %376 = vmatmul.mubr.bf16.gmra.mrb[0].mxu0 %v211
    %v377 = vpop.f32.mrb[0].mxu0
    %v378 = vadd.f32 %v145, %v377
    %v379 = vpop.f32.mrb[0].mxu0
    %v380 = vpop.f32.mrb[0].mxu0
    %v381 = vadd.f32 %v145, %v380
    %v382 = vpop.f32.mrb[0].mxu0
    %383 = vmatprep.mubr.bf16.mxu0 0
    %384 = vmatmul.mubr.bf16.gmra.mrb[0].mxu0 %v212
    %v385 = vpop.f32.mrb[0].mxu0
    %v386 = vadd.f32 %v145, %v385
    %v387 = vpop.f32.mrb[0].mxu0
    %v388 = vpop.f32.mrb[0].mxu0
    %v389 = vadd.f32 %v145, %v388
    %v390 = vpop.f32.mrb[0].mxu0
    %391 = vmatprep.mubr.bf16.mxu0 0
    %392 = vmatmul.mubr.bf16.gmra.mrb[0].mxu0 %v213
    %v393 = vpop.f32.mrb[0].mxu0
    %v394 = vadd.f32 %v145, %v393
    %v395 = vpop.f32.mrb[0].mxu0
    %v396 = vpop.f32.mrb[0].mxu0
    %v397 = vadd.f32 %v145, %v396
    %v398 = vpop.f32.mrb[0].mxu0
    %399 = vmatprep.mubr.bf16.mxu0 0
    %400 = vmatmul.mubr.bf16.gmra.mrb[0].mxu0 %v214
    %v401 = vpop.f32.mrb[0].mxu0
    %v402 = vadd.f32 %v145, %v401
    %v403 = vpop.f32.mrb[0].mxu0
    %v404 = vpop.f32.mrb[0].mxu0
    %v405 = vadd.f32 %v145, %v404
    %v406 = vpop.f32.mrb[0].mxu0
    %407 = vmatprep.mubr.bf16.mxu0 0
    %408 = vmatmul.mubr.bf16.gmra.mrb[0].mxu0 %v215
    %v409 = vpop.f32.mrb[0].mxu0
    %v410 = vadd.f32 %v145, %v409
    %v411 = vpop.f32.mrb[0].mxu0
    %v412 = vpop.f32.mrb[0].mxu0
    %v413 = vadd.f32 %v145, %v412
    %v414 = vpop.f32.mrb[0].mxu0
    %415 = vmatprep.mubr.bf16.mxu0 0
    %416 = vmatmul.mubr.bf16.gmra.mrb[0].mxu0 %v216
    %v417 = vpop.f32.mrb[0].mxu0
    %v418 = vadd.f32 %v145, %v417
    %v419 = vpop.f32.mrb[0].mxu0
    %v420 = vpop.f32.mrb[0].mxu0
    %v421 = vadd.f32 %v145, %v420
    %v422 = vpop.f32.mrb[0].mxu0
    %423 = vdwg.mxu0
    %v424 = vmax.f32 %v314, 0.0
    %v425 = vmax.f32 %v317, 0.0
    %v426 = vmax.f32 %v322, 0.0
    %v427 = vmax.f32 %v325, 0.0
    %v428 = vmax.f32 %v330, 0.0
    %v429 = vmax.f32 %v333, 0.0
    %v430 = vmax.f32 %v338, 0.0
    %v431 = vmax.f32 %v341, 0.0
    %v432 = vmax.f32 %v346, 0.0
    %v433 = vmax.f32 %v349, 0.0
    %v434 = vmax.f32 %v354, 0.0
    %v435 = vmax.f32 %v357, 0.0
    %v436 = vmax.f32 %v362, 0.0
    %v437 = vmax.f32 %v365, 0.0
    %v438 = vmax.f32 %v370, 0.0
    %v439 = vmax.f32 %v373, 0.0
    %v440 = vmax.f32 %v378, 0.0
    %v441 = vmax.f32 %v381, 0.0
    %v442 = vmax.f32 %v386, 0.0
    %v443 = vmax.f32 %v389, 0.0
    %v444 = vmax.f32 %v394, 0.0
    %v445 = vmax.f32 %v397, 0.0
    %v446 = vmax.f32 %v402, 0.0
    %v447 = vmax.f32 %v405, 0.0
    %v448 = vmax.f32 %v410, 0.0
    %v449 = vmax.f32 %v413, 0.0
    %v450 = vmax.f32 %v418, 0.0
    %v451 = vmax.f32 %v421, 0.0
    %v452 = vpack.c.bf16 %v425, %v424
    %v453 = vpack.c.bf16 %v427, %v426
    %v454 = vpack.c.bf16 %v429, %v428
    %v455 = vpack.c.bf16 %v431, %v430
    %v456 = vpack.c.bf16 %v433, %v432
    %v457 = vpack.c.bf16 %v435, %v434
    %v458 = vpack.c.bf16 %v437, %v436
    %v459 = vpack.c.bf16 %v439, %v438
    %v460 = vpack.c.bf16 %v441, %v440
    %v461 = vpack.c.bf16 %v443, %v442
    %v462 = vpack.c.bf16 %v445, %v444
    %v463 = vpack.c.bf16 %v447, %v446
    %v464 = vpack.c.bf16 %v449, %v448
    %v465 = vpack.c.bf16 %v451, %v450
    %466 = vst [vmem:[#allocation2] sm:$0xff] %v452
    %467 = vst [vmem:[#allocation2 + $0x8] sm:$0xff] %v453
    %468 = vst [vmem:[#allocation2 + $0x10] sm:$0xff] %v454
    %469 = vst [vmem:[#allocation2 + $0x18] sm:$0xff] %v455
    %470 = vst [vmem:[#allocation2 + $0x20] sm:$0xff] %v456
    %471 = vst [vmem:[#allocation2 + $0x28] sm:$0xff] %v457
    %472 = vst [vmem:[#allocation2 + $0x30] sm:$0xff] %v458
    %473 = vst [vmem:[#allocation2 + $0x38] sm:$0xff] %v459
    %474 = vst [vmem:[#allocation2 + $0x40] sm:$0xff] %v460
    %475 = vst [vmem:[#allocation2 + $0x48] sm:$0xff] %v461
    %476 = vst [vmem:[#allocation2 + $0x50] sm:$0xff] %v462
    %477 = vst [vmem:[#allocation2 + $0x58] sm:$0xff] %v463
    %478 = vst [vmem:[#allocation2 + $0x60] sm:$0xff] %v464
    %479 = vst [vmem:[#allocation2 + $0x68] sm:$0xff] %v465
    %v480 = vrot.slane %v424, 1
    %v481 = vrot.slane %v425, 1
    %v482 = vrot.slane %v426, 1
    %v483 = vrot.slane %v427, 1
    %v484 = vrot.slane %v428, 1
    %v485 = vrot.slane %v429, 1
    %v486 = vrot.slane %v430, 1
    %v487 = vrot.slane %v431, 1
    %v488 = vrot.slane %v432, 1
    %v489 = vrot.slane %v433, 1
    %v490 = vrot.slane %v434, 1
    %v491 = vrot.slane %v435, 1
    %v492 = vrot.slane %v436, 1
    %v493 = vrot.slane %v437, 1
    %v494 = vrot.slane %v438, 1
    %v495 = vrot.slane %v439, 1
    %v496 = vrot.slane %v440, 1
    %v497 = vrot.slane %v441, 1
    %v498 = vrot.slane %v442, 1
    %v499 = vrot.slane %v443, 1
    %v500 = vrot.slane %v444, 1
    %v501 = vrot.slane %v445, 1
    %v502 = vrot.slane %v446, 1
    %v503 = vrot.slane %v447, 1
    %v504 = vrot.slane %v448, 1
    %v505 = vrot.slane %v449, 1
    %v506 = vrot.slane %v450, 1
    %v507 = vrot.slane %v451, 1
    %v508 = vlaneseq
    %v509 = vshrl.u32 %v508, 7
    %vm510 = vcmp.lt.s32.totalorder %v509, 7
    %v511 = vsel %vm510, %v506, %v507
    %v512 = vsel %vm510, %v505, %v506
    %v513 = vsel %vm510, %v504, %v505
    %v514 = vsel %vm510, %v503, %v504
    %v515 = vsel %vm510, %v502, %v503
    %v516 = vsel %vm510, %v501, %v502
    %v517 = vsel %vm510, %v500, %v501
    %v518 = vsel %vm510, %v499, %v500
    %v519 = vsel %vm510, %v498, %v499
    %v520 = vsel %vm510, %v497, %v498
    %v521 = vsel %vm510, %v496, %v497
    %v522 = vsel %vm510, %v495, %v496
    %v523 = vsel %vm510, %v494, %v495
    %v524 = vsel %vm510, %v493, %v494
    %v525 = vsel %vm510, %v492, %v493
    %v526 = vsel %vm510, %v491, %v492
    %v527 = vsel %vm510, %v490, %v491
    %v528 = vsel %vm510, %v489, %v490
    %v529 = vsel %vm510, %v488, %v489
    %v530 = vsel %vm510, %v487, %v488
    %v531 = vsel %vm510, %v486, %v487
    %v532 = vsel %vm510, %v485, %v486
    %v533 = vsel %vm510, %v484, %v485
    %v534 = vsel %vm510, %v483, %v484
    %v535 = vsel %vm510, %v482, %v483
    %v536 = vsel %vm510, %v481, %v482
    %v537 = vsel %vm510, %v480, %v481
    %v538 = vsel %vm510, %v507, %v480
    %v539 = vpack.c.bf16 %v536, %v537
    %v540 = vpack.c.bf16 %v534, %v535
    %v541 = vpack.c.bf16 %v532, %v533
    %v542 = vpack.c.bf16 %v530, %v531
    %v543 = vpack.c.bf16 %v528, %v529
    %v544 = vpack.c.bf16 %v526, %v527
    %v545 = vpack.c.bf16 %v524, %v525
    %v546 = vpack.c.bf16 %v522, %v523
    %v547 = vpack.c.bf16 %v520, %v521
    %v548 = vpack.c.bf16 %v518, %v519
    %v549 = vpack.c.bf16 %v516, %v517
    %v550 = vpack.c.bf16 %v514, %v515
    %v551 = vpack.c.bf16 %v512, %v513
    %v552 = vpack.c.bf16 %v538, %v511
    %s553 = scalar_lea.vmem [#allocation2], 112
    %554 = vst [vmem:[%s553] sm:$0xff] %v539
    %555 = vst [vmem:[%s553 + $0x8] sm:$0xff] %v540
    %556 = vst [vmem:[%s553 + $0x10] sm:$0xff] %v541
    %557 = vst [vmem:[%s553 + $0x18] sm:$0xff] %v542
    %558 = vst [vmem:[%s553 + $0x20] sm:$0xff] %v543
    %559 = vst [vmem:[%s553 + $0x28] sm:$0xff] %v544
    %560 = vst [vmem:[%s553 + $0x30] sm:$0xff] %v545
    %561 = vst [vmem:[%s553 + $0x38] sm:$0xff] %v546
    %562 = vst [vmem:[%s553 + $0x40] sm:$0xff] %v547
    %563 = vst [vmem:[%s553 + $0x48] sm:$0xff] %v548
    %564 = vst [vmem:[%s553 + $0x50] sm:$0xff] %v549
    %565 = vst [vmem:[%s553 + $0x58] sm:$0xff] %v550
    %566 = vst [vmem:[%s553 + $0x60] sm:$0xff] %v551
    %567 = vst [vmem:[%s553 + $0x68] sm:$0xff] %v552
    %v568 = vrot.slane %v424, 2
    %v569 = vrot.slane %v425, 2
    %v570 = vrot.slane %v426, 2
    %v571 = vrot.slane %v427, 2
    %v572 = vrot.slane %v428, 2
    %v573 = vrot.slane %v429, 2
    %v574 = vrot.slane %v430, 2
    %v575 = vrot.slane %v431, 2
    %v576 = vrot.slane %v432, 2
    %v577 = vrot.slane %v433, 2
    %v578 = vrot.slane %v434, 2
    %v579 = vrot.slane %v435, 2
    %v580 = vrot.slane %v436, 2
    %v581 = vrot.slane %v437, 2
    %v582 = vrot.slane %v438, 2
    %v583 = vrot.slane %v439, 2
    %v584 = vrot.slane %v440, 2
    %v585 = vrot.slane %v441, 2
    %v586 = vrot.slane %v442, 2
    %v587 = vrot.slane %v443, 2
    %v588 = vrot.slane %v444, 2
    %v589 = vrot.slane %v445, 2
    %v590 = vrot.slane %v446, 2
    %v591 = vrot.slane %v447, 2
    %v592 = vrot.slane %v448, 2
    %v593 = vrot.slane %v449, 2
    %v594 = vrot.slane %v450, 2
    %v595 = vrot.slane %v451, 2
    %vm596 = vcmp.lt.s32.totalorder %v509, 6
    %v597 = vsel %vm596, %v594, %v595
    %v598 = vsel %vm596, %v593, %v594
    %v599 = vsel %vm596, %v592, %v593
    %v600 = vsel %vm596, %v591, %v592
    %v601 = vsel %vm596, %v590, %v591
    %v602 = vsel %vm596, %v589, %v590
    %v603 = vsel %vm596, %v588, %v589
    %v604 = vsel %vm596, %v587, %v588
    %v605 = vsel %vm596, %v586, %v587
    %v606 = vsel %vm596, %v585, %v586
    %v607 = vsel %vm596, %v584, %v585
    %v608 = vsel %vm596, %v583, %v584
    %v609 = vsel %vm596, %v582, %v583
    %v610 = vsel %vm596, %v581, %v582
    %v611 = vsel %vm596, %v580, %v581
    %v612 = vsel %vm596, %v579, %v580
    %v613 = vsel %vm596, %v578, %v579
    %v614 = vsel %vm596, %v577, %v578
    %v615 = vsel %vm596, %v576, %v577
    %v616 = vsel %vm596, %v575, %v576
    %v617 = vsel %vm596, %v574, %v575
    %v618 = vsel %vm596, %v573, %v574
    %v619 = vsel %vm596, %v572, %v573
    %v620 = vsel %vm596, %v571, %v572
    %v621 = vsel %vm596, %v570, %v571
    %v622 = vsel %vm596, %v569, %v570
    %v623 = vsel %vm596, %v568, %v569
    %v624 = vsel %vm596, %v595, %v568
    %v625 = vpack.c.bf16 %v622, %v623
    %v626 = vpack.c.bf16 %v620, %v621
    %v627 = vpack.c.bf16 %v618, %v619
    %v628 = vpack.c.bf16 %v616, %v617
    %v629 = vpack.c.bf16 %v614, %v615
    %v630 = vpack.c.bf16 %v612, %v613
    %v631 = vpack.c.bf16 %v610, %v611
    %v632 = vpack.c.bf16 %v608, %v609
    %v633 = vpack.c.bf16 %v606, %v607
    %v634 = vpack.c.bf16 %v604, %v605
    %v635 = vpack.c.bf16 %v602, %v603
    %v636 = vpack.c.bf16 %v600, %v601
    %v637 = vpack.c.bf16 %v598, %v599
    %v638 = vpack.c.bf16 %v624, %v597
    %s639 = scalar_lea.vmem [#allocation2], 224
    %640 = vst [vmem:[%s639] sm:$0xff] %v625
    %641 = vst [vmem:[%s639 + $0x8] sm:$0xff] %v626
    %642 = vst [vmem:[%s639 + $0x10] sm:$0xff] %v627
    %643 = vst [vmem:[%s639 + $0x18] sm:$0xff] %v628
    %644 = vst [vmem:[%s639 + $0x20] sm:$0xff] %v629
    %645 = vst [vmem:[%s639 + $0x28] sm:$0xff] %v630
    %646 = vst [vmem:[%s639 + $0x30] sm:$0xff] %v631
    %647 = vst [vmem:[%s639 + $0x38] sm:$0xff] %v632
    %648 = vst [vmem:[%s639 + $0x40] sm:$0xff] %v633
    %649 = vst [vmem:[%s639 + $0x48] sm:$0xff] %v634
    %650 = vst [vmem:[%s639 + $0x50] sm:$0xff] %v635
    %651 = vst [vmem:[%s639 + $0x58] sm:$0xff] %v636
    %652 = vst [vmem:[%s639 + $0x60] sm:$0xff] %v637
    %653 = vst [vmem:[%s639 + $0x68] sm:$0xff] %v638
    %v654 = vld [vmem:[#allocation6] sm:$0xf]
    %v655 = vld [vmem:[#allocation6 + $0x4] sm:$0xf]
    %v656 = vld [vmem:[#allocation6 + $0x8] sm:$0xf]
    %v657 = vld [vmem:[#allocation6 + $0xc] sm:$0xf]
    %v658 = vld [vmem:[#allocation6 + $0x10] sm:$0xf]
    %v659 = vld [vmem:[#allocation6 + $0x14] sm:$0xf]
    %v660 = vld [vmem:[#allocation6 + $0x18] sm:$0xf]
    %v661 = vld [vmem:[#allocation6 + $0x1c] sm:$0xf]
    %v662 = vld [vmem:[#allocation6 + $0x20] sm:$0xf]
    %v663 = vld [vmem:[#allocation6 + $0x24] sm:$0xf]
    %v664 = vld [vmem:[#allocation6 + $0x28] sm:$0xf]
    %v665 = vld [vmem:[#allocation6 + $0x2c] sm:$0xf]
    %v666 = vld [vmem:[#allocation6 + $0x30] sm:$0xf]
    %v667 = vld [vmem:[#allocation6 + $0x34] sm:$0xf]
    %v668 = vld [vmem:[#allocation6 + $0x38] sm:$0xf]
    %v669 = vld [vmem:[#allocation6 + $0x3c] sm:$0xf]
    %v670 = vld [vmem:[#allocation6 + $0x40] sm:$0xf]
    %v671 = vld [vmem:[#allocation6 + $0x44] sm:$0xf]
    %v672 = vld [vmem:[#allocation6 + $0x48] sm:$0xf]
    %v673 = vld [vmem:[#allocation6 + $0x4c] sm:$0xf]
    %v674 = vld [vmem:[#allocation6 + $0x50] sm:$0xf]
    %v675 = vld [vmem:[#allocation6 + $0x54] sm:$0xf]
    %v676 = vld [vmem:[#allocation6 + $0x58] sm:$0xf]
    %v677 = vld [vmem:[#allocation6 + $0x5c] sm:$0xf]
    %v678 = vld [vmem:[#allocation11] sm:$0xf]
    %v679 = vld [vmem:[#allocation11 + $0x4] sm:$0xf]
    %v680 = vld [vmem:[#allocation11 + $0x8] sm:$0xf]
    %v681 = vld [vmem:[#allocation11 + $0xc] sm:$0xf]
    %v682 = vld [vmem:[#allocation11 + $0x10] sm:$0xf]
    %v683 = vld [vmem:[#allocation11 + $0x14] sm:$0xf]
    %v684 = vld [vmem:[#allocation11 + $0x18] sm:$0xf]
    %v685 = vld [vmem:[#allocation11 + $0x1c] sm:$0xf]
    %v686 = vld [vmem:[#allocation11 + $0x20] sm:$0xf]
    %v687 = vld [vmem:[#allocation11 + $0x24] sm:$0xf]
    %v688 = vld [vmem:[#allocation11 + $0x28] sm:$0xf]
    %v689 = vld [vmem:[#allocation11 + $0x2c] sm:$0xf]
    %v690 = vld [vmem:[#allocation11 + $0x30] sm:$0xf]
    %v691 = vld [vmem:[#allocation11 + $0x34] sm:$0xf]
    %v692 = vld [vmem:[#allocation11 + $0x38] sm:$0xf]
    %v693 = vld [vmem:[#allocation11 + $0x3c] sm:$0xf]
    %v694 = vld [vmem:[#allocation2] sm:$0xff]
    %v695 = vld [vmem:[#allocation2 + $0x8] sm:$0xff]
    %v696 = vld [vmem:[#allocation2 + $0x10] sm:$0xff]
    %v697 = vld [vmem:[#allocation2 + $0x18] sm:$0xff]
    %v698 = vld [vmem:[#allocation2 + $0x20] sm:$0xff]
    %v699 = vld [vmem:[#allocation2 + $0x28] sm:$0xff]
    %v700 = vld [vmem:[#allocation2 + $0x30] sm:$0xff]
    %v701 = vld [vmem:[#allocation2 + $0x38] sm:$0xff]
    %v702 = vld [vmem:[#allocation2 + $0x40] sm:$0xff]
    %v703 = vld [vmem:[#allocation2 + $0x48] sm:$0xff]
    %v704 = vld [vmem:[#allocation2 + $0x50] sm:$0xff]
    %v705 = vld [vmem:[#allocation2 + $0x58] sm:$0xff]
    %v706 = vld [vmem:[#allocation9] sm:$0xf]
    %v707 = vld [vmem:[#allocation9 + $0x4] sm:$0xf]
    %v708 = vld [vmem:[#allocation9 + $0x8] sm:$0xf]
    %v709 = vld [vmem:[#allocation9 + $0xc] sm:$0xf]
    %v710 = vld [vmem:[#allocation9 + $0x10] sm:$0xf]
    %v711 = vld [vmem:[#allocation9 + $0x14] sm:$0xf]
    %v712 = vld [vmem:[#allocation9 + $0x18] sm:$0xf]
    %v713 = vld [vmem:[#allocation9 + $0x1c] sm:$0xf]
    %v714 = vld [vmem:[#allocation9 + $0x20] sm:$0xf]
    %v715 = vld [vmem:[#allocation9 + $0x24] sm:$0xf]
    %v716 = vld [vmem:[#allocation9 + $0x28] sm:$0xf]
    %v717 = vld [vmem:[#allocation9 + $0x2c] sm:$0xf]
    %v718 = vld [vmem:[#allocation9 + $0x30] sm:$0xf]
    %v719 = vld [vmem:[#allocation9 + $0x34] sm:$0xf]
    %v720 = vld [vmem:[#allocation9 + $0x38] sm:$0xf]
    %v721 = vld [vmem:[#allocation9 + $0x3c] sm:$0xf]
    %v738 = vunpack.c.l.b16 %v706
    %v739 = vunpack.c.l.b16 %v707
    %v740 = vunpack.c.l.b16 %v708
    %v741 = vunpack.c.l.b16 %v709
    %v742 = vunpack.c.l.b16 %v710
    %v743 = vunpack.c.l.b16 %v711
    %v744 = vunpack.c.l.b16 %v712
    %v745 = vunpack.c.l.b16 %v713
    %v746 = vunpack.c.l.b16 %v714
    %v747 = vunpack.c.l.b16 %v715
    %v748 = vunpack.c.l.b16 %v716
    %v749 = vunpack.c.l.b16 %v717
    %v750 = vunpack.c.l.b16 %v718
    %v751 = vunpack.c.l.b16 %v719
    %v752 = vunpack.c.l.b16 %v720
    %v753 = vunpack.c.l.b16 %v721
    %v754 = vpack.c.b16 %v739, %v738
    %v755 = vpack.c.b16 %v741, %v740
    %v756 = vpack.c.b16 %v743, %v742
    %v757 = vpack.c.b16 %v745, %v744
    %v758 = vpack.c.b16 %v747, %v746
    %v759 = vpack.c.b16 %v749, %v748
    %v760 = vpack.c.b16 %v751, %v750
    %v761 = vpack.c.b16 %v753, %v752
    %770 = vmatprep.subr.bf16.mxu0 0
    %771 = vmatpush1.bf16.msra.mxu0 %v754
    %772 = vmatprep.subr.bf16.mxu0 0
    %773 = vmatpush1.bf16.msra.mxu0 %v755
    %774 = vmatprep.subr.bf16.mxu0 0
    %775 = vmatpush1.bf16.msra.mxu0 %v756
    %776 = vmatprep.subr.bf16.mxu0 0
    %777 = vmatpush1.bf16.msra.mxu0 %v757
    %778 = vmatprep.subr.bf16.mxu0 0
    %779 = vmatpush1.bf16.msra.mxu0 %v758
    %780 = vmatprep.subr.bf16.mxu0 0
    %781 = vmatpush1.bf16.msra.mxu0 %v759
    %782 = vmatprep.subr.bf16.mxu0 0
    %783 = vmatpush1.bf16.msra.mxu0 %v760
    %784 = vmatprep.subr.bf16.mxu0 0
    %785 = vmatpush1.bf16.msra.mxu0 %v761
    %786 = vmatprep.subr.bf16.mxu0 0
    %787 = vmatpush1.bf16.msra.mxu0 0
    %788 = vmatprep.subr.bf16.mxu0 0
    %789 = vmatpush1.bf16.msra.mxu0 0
    %790 = vmatprep.subr.bf16.mxu0 0
    %791 = vmatpush1.bf16.msra.mxu0 0
    %792 = vmatprep.subr.bf16.mxu0 0
    %793 = vmatpush1.bf16.msra.mxu0 0
    %794 = vmatprep.subr.bf16.mxu0 0
    %795 = vmatpush1.bf16.msra.mxu0 0
    %796 = vmatprep.subr.bf16.mxu0 0
    %797 = vmatpush1.bf16.msra.mxu0 0
    %798 = vmatprep.subr.bf16.mxu0 0
    %799 = vmatpush1.bf16.msra.mxu0 0
    %800 = vmatprep.subr.bf16.mxu0 0
    %801 = vmatpush1.bf16.msra.mxu0 0
    %802 = vmatprep.mubr.bf16.mxu0 0
    %803 = vmatmul.mubr.bf16.gmra.mrb[0].mxu0 %v694
    %v804 = vpop.f32.mrb[0].mxu0
    %v805 = vadd.f32 0.0, %v804
    %v806 = vpop.f32.mrb[0].mxu0
    %v807 = vpop.f32.mrb[0].mxu0
    %v808 = vadd.f32 0.0, %v807
    %v809 = vpop.f32.mrb[0].mxu0
    %810 = vmatprep.mubr.bf16.mxu0 0
    %811 = vmatmul.mubr.bf16.gmra.mrb[0].mxu0 %v695
    %v812 = vpop.f32.mrb[0].mxu0
    %v813 = vadd.f32 0.0, %v812
    %v814 = vpop.f32.mrb[0].mxu0
    %v815 = vpop.f32.mrb[0].mxu0
    %v816 = vadd.f32 0.0, %v815
    %v817 = vpop.f32.mrb[0].mxu0
    %818 = vmatprep.mubr.bf16.mxu0 0
    %819 = vmatmul.mubr.bf16.gmra.mrb[0].mxu0 %v696
    %v820 = vpop.f32.mrb[0].mxu0
    %v821 = vadd.f32 0.0, %v820
    %v822 = vpop.f32.mrb[0].mxu0
    %v823 = vpop.f32.mrb[0].mxu0
    %v824 = vadd.f32 0.0, %v823
    %v825 = vpop.f32.mrb[0].mxu0
    %826 = vmatprep.mubr.bf16.mxu0 0
    %827 = vmatmul.mubr.bf16.gmra.mrb[0].mxu0 %v697
    %v828 = vpop.f32.mrb[0].mxu0
    %v829 = vadd.f32 0.0, %v828
    %v830 = vpop.f32.mrb[0].mxu0
    %v831 = vpop.f32.mrb[0].mxu0
    %v832 = vadd.f32 0.0, %v831
    %v833 = vpop.f32.mrb[0].mxu0
    %834 = vmatprep.mubr.bf16.mxu0 0
    %835 = vmatmul.mubr.bf16.gmra.mrb[0].mxu0 %v698
    %v836 = vpop.f32.mrb[0].mxu0
    %v837 = vadd.f32 0.0, %v836
    %v838 = vpop.f32.mrb[0].mxu0
    %v839 = vpop.f32.mrb[0].mxu0
    %v840 = vadd.f32 0.0, %v839
    %v841 = vpop.f32.mrb[0].mxu0
    %842 = vmatprep.mubr.bf16.mxu0 0
    %843 = vmatmul.mubr.bf16.gmra.mrb[0].mxu0 %v699
    %v844 = vpop.f32.mrb[0].mxu0
    %v845 = vadd.f32 0.0, %v844
    %v846 = vpop.f32.mrb[0].mxu0
    %v847 = vpop.f32.mrb[0].mxu0
    %v848 = vadd.f32 0.0, %v847
    %v849 = vpop.f32.mrb[0].mxu0
    %850 = vmatprep.mubr.bf16.mxu0 0
    %851 = vmatmul.mubr.bf16.gmra.mrb[0].mxu0 %v700
    %v852 = vpop.f32.mrb[0].mxu0
    %v853 = vadd.f32 0.0, %v852
    %v854 = vpop.f32.mrb[0].mxu0
    %v855 = vpop.f32.mrb[0].mxu0
    %v856 = vadd.f32 0.0, %v855
    %v857 = vpop.f32.mrb[0].mxu0
    %858 = vmatprep.mubr.bf16.mxu0 0
    %859 = vmatmul.mubr.bf16.gmra.mrb[0].mxu0 %v701
    %v860 = vpop.f32.mrb[0].mxu0
    %v861 = vadd.f32 0.0, %v860
    %v862 = vpop.f32.mrb[0].mxu0
    %v863 = vpop.f32.mrb[0].mxu0
    %v864 = vadd.f32 0.0, %v863
    %v865 = vpop.f32.mrb[0].mxu0
    %866 = vmatprep.mubr.bf16.mxu0 0
    %867 = vmatmul.mubr.bf16.gmra.mrb[0].mxu0 %v702
    %v868 = vpop.f32.mrb[0].mxu0
    %v869 = vadd.f32 0.0, %v868
    %v870 = vpop.f32.mrb[0].mxu0
    %v871 = vpop.f32.mrb[0].mxu0
    %v872 = vadd.f32 0.0, %v871
    %v873 = vpop.f32.mrb[0].mxu0
    %874 = vmatprep.mubr.bf16.mxu0 0
    %875 = vmatmul.mubr.bf16.gmra.mrb[0].mxu0 %v703
    %v876 = vpop.f32.mrb[0].mxu0
    %v877 = vadd.f32 0.0, %v876
    %v878 = vpop.f32.mrb[0].mxu0
    %v879 = vpop.f32.mrb[0].mxu0
    %v880 = vadd.f32 0.0, %v879
    %v881 = vpop.f32.mrb[0].mxu0
    %882 = vmatprep.mubr.bf16.mxu0 0
    %883 = vmatmul.mubr.bf16.gmra.mrb[0].mxu0 %v704
    %v884 = vpop.f32.mrb[0].mxu0
    %v885 = vadd.f32 0.0, %v884
    %v886 = vpop.f32.mrb[0].mxu0
    %v887 = vpop.f32.mrb[0].mxu0
    %v888 = vadd.f32 0.0, %v887
    %v889 = vpop.f32.mrb[0].mxu0
    %890 = vmatprep.mubr.bf16.mxu0 0
    %891 = vmatmul.mubr.bf16.gmra.mrb[0].mxu0 %v705
    %v892 = vpop.f32.mrb[0].mxu0
    %v893 = vadd.f32 0.0, %v892
    %v894 = vpop.f32.mrb[0].mxu0
    %v895 = vpop.f32.mrb[0].mxu0
    %v896 = vadd.f32 0.0, %v895
    %v897 = vpop.f32.mrb[0].mxu0
    %898 = vdwg.mxu0
    %v923 = vunpack.c.l.b16 %v654
    %v924 = vunpack.c.l.b16 %v655
    %v925 = vunpack.c.l.b16 %v656
    %v926 = vunpack.c.l.b16 %v657
    %v927 = vunpack.c.l.b16 %v658
    %v928 = vunpack.c.l.b16 %v659
    %v929 = vunpack.c.l.b16 %v660
    %v930 = vunpack.c.l.b16 %v661
    %v931 = vunpack.c.l.b16 %v662
    %v932 = vunpack.c.l.b16 %v663
    %v933 = vunpack.c.l.b16 %v664
    %v934 = vunpack.c.l.b16 %v665
    %v935 = vunpack.c.l.b16 %v666
    %v936 = vunpack.c.l.b16 %v667
    %v937 = vunpack.c.l.b16 %v668
    %v938 = vunpack.c.l.b16 %v669
    %v939 = vunpack.c.l.b16 %v670
    %v940 = vunpack.c.l.b16 %v671
    %v941 = vunpack.c.l.b16 %v672
    %v942 = vunpack.c.l.b16 %v673
    %v943 = vunpack.c.l.b16 %v674
    %v944 = vunpack.c.l.b16 %v675
    %v945 = vunpack.c.l.b16 %v676
    %v946 = vunpack.c.l.b16 %v677
    %v947 = vpack.c.b16 %v924, %v923
    %v948 = vpack.c.b16 %v926, %v925
    %v949 = vpack.c.b16 %v928, %v927
    %v950 = vpack.c.b16 %v930, %v929
    %v951 = vpack.c.b16 %v932, %v931
    %v952 = vpack.c.b16 %v934, %v933
    %v953 = vpack.c.b16 %v936, %v935
    %v954 = vpack.c.b16 %v938, %v937
    %v955 = vpack.c.b16 %v940, %v939
    %v956 = vpack.c.b16 %v942, %v941
    %v957 = vpack.c.b16 %v944, %v943
    %v958 = vpack.c.b16 %v946, %v945
    %v987 = vunpack.c.l.b16 %v678
    %v988 = vunpack.c.l.b16 %v679
    %v989 = vunpack.c.l.b16 %v680
    %v990 = vunpack.c.l.b16 %v681
    %v991 = vunpack.c.l.b16 %v682
    %v992 = vunpack.c.l.b16 %v683
    %v993 = vunpack.c.l.b16 %v684
    %v994 = vunpack.c.l.b16 %v685
    %v995 = vunpack.c.l.b16 %v686
    %v996 = vunpack.c.l.b16 %v687
    %v997 = vunpack.c.l.b16 %v688
    %v998 = vunpack.c.l.b16 %v689
    %v999 = vunpack.c.l.b16 %v690
    %v1000 = vunpack.c.l.b16 %v691
    %v1001 = vunpack.c.l.b16 %v692
    %v1002 = vunpack.c.l.b16 %v693
    %v1003 = vpack.c.b16 %v988, %v987
    %v1004 = vpack.c.b16 %v990, %v989
    %v1005 = vpack.c.b16 %v992, %v991
    %v1006 = vpack.c.b16 %v994, %v993
    %v1007 = vpack.c.b16 %v996, %v995
    %v1008 = vpack.c.b16 %v998, %v997
    %v1009 = vpack.c.b16 %v1000, %v999
    %v1010 = vpack.c.b16 %v1002, %v1001
    %1019 = vmatprep.subr.bf16.mxu0 0
    %1020 = vmatpush1.bf16.msra.mxu0 %v1003
    %1021 = vmatprep.subr.bf16.mxu0 0
    %1022 = vmatpush1.bf16.msra.mxu0 %v1004
    %1023 = vmatprep.subr.bf16.mxu0 0
    %1024 = vmatpush1.bf16.msra.mxu0 %v1005
    %1025 = vmatprep.subr.bf16.mxu0 0
    %1026 = vmatpush1.bf16.msra.mxu0 %v1006
    %1027 = vmatprep.subr.bf16.mxu0 0
    %1028 = vmatpush1.bf16.msra.mxu0 %v1007
    %1029 = vmatprep.subr.bf16.mxu0 0
    %1030 = vmatpush1.bf16.msra.mxu0 %v1008
    %1031 = vmatprep.subr.bf16.mxu0 0
    %1032 = vmatpush1.bf16.msra.mxu0 %v1009
    %1033 = vmatprep.subr.bf16.mxu0 0
    %1034 = vmatpush1.bf16.msra.mxu0 %v1010
    %1035 = vmatprep.subr.bf16.mxu0 0
    %1036 = vmatpush1.bf16.msra.mxu0 0
    %1037 = vmatprep.subr.bf16.mxu0 0
    %1038 = vmatpush1.bf16.msra.mxu0 0
    %1039 = vmatprep.subr.bf16.mxu0 0
    %1040 = vmatpush1.bf16.msra.mxu0 0
    %1041 = vmatprep.subr.bf16.mxu0 0
    %1042 = vmatpush1.bf16.msra.mxu0 0
    %1043 = vmatprep.subr.bf16.mxu0 0
    %1044 = vmatpush1.bf16.msra.mxu0 0
    %1045 = vmatprep.subr.bf16.mxu0 0
    %1046 = vmatpush1.bf16.msra.mxu0 0
    %1047 = vmatprep.subr.bf16.mxu0 0
    %1048 = vmatpush1.bf16.msra.mxu0 0
    %1049 = vmatprep.subr.bf16.mxu0 0
    %1050 = vmatpush1.bf16.msra.mxu0 0
    %1051 = vmatprep.mubr.bf16.mxu0 0
    %1052 = vmatmul.mubr.bf16.gmra.mrb[0].mxu0 %v947
    %v1053 = vpop.f32.mrb[0].mxu0
    %v1054 = vadd.f32 %v805, %v1053
    %v1055 = vpop.f32.mrb[0].mxu0
    %v1056 = vpop.f32.mrb[0].mxu0
    %v1057 = vadd.f32 %v808, %v1056
    %v1058 = vpop.f32.mrb[0].mxu0
    %1059 = vmatprep.mubr.bf16.mxu0 0
    %1060 = vmatmul.mubr.bf16.gmra.mrb[0].mxu0 %v948
    %v1061 = vpop.f32.mrb[0].mxu0
    %v1062 = vadd.f32 %v813, %v1061
    %v1063 = vpop.f32.mrb[0].mxu0
    %v1064 = vpop.f32.mrb[0].mxu0
    %v1065 = vadd.f32 %v816, %v1064
    %v1066 = vpop.f32.mrb[0].mxu0
    %1067 = vmatprep.mubr.bf16.mxu0 0
    %1068 = vmatmul.mubr.bf16.gmra.mrb[0].mxu0 %v949
    %v1069 = vpop.f32.mrb[0].mxu0
    %v1070 = vadd.f32 %v821, %v1069
    %v1071 = vpop.f32.mrb[0].mxu0
    %v1072 = vpop.f32.mrb[0].mxu0
    %v1073 = vadd.f32 %v824, %v1072
    %v1074 = vpop.f32.mrb[0].mxu0
    %1075 = vmatprep.mubr.bf16.mxu0 0
    %1076 = vmatmul.mubr.bf16.gmra.mrb[0].mxu0 %v950
    %v1077 = vpop.f32.mrb[0].mxu0
    %v1078 = vadd.f32 %v829, %v1077
    %v1079 = vpop.f32.mrb[0].mxu0
    %v1080 = vpop.f32.mrb[0].mxu0
    %v1081 = vadd.f32 %v832, %v1080
    %v1082 = vpop.f32.mrb[0].mxu0
    %1083 = vmatprep.mubr.bf16.mxu0 0
    %1084 = vmatmul.mubr.bf16.gmra.mrb[0].mxu0 %v951
    %v1085 = vpop.f32.mrb[0].mxu0
    %v1086 = vadd.f32 %v837, %v1085
    %v1087 = vpop.f32.mrb[0].mxu0
    %v1088 = vpop.f32.mrb[0].mxu0
    %v1089 = vadd.f32 %v840, %v1088
    %v1090 = vpop.f32.mrb[0].mxu0
    %1091 = vmatprep.mubr.bf16.mxu0 0
    %1092 = vmatmul.mubr.bf16.gmra.mrb[0].mxu0 %v952
    %v1093 = vpop.f32.mrb[0].mxu0
    %v1094 = vadd.f32 %v845, %v1093
    %v1095 = vpop.f32.mrb[0].mxu0
    %v1096 = vpop.f32.mrb[0].mxu0
    %v1097 = vadd.f32 %v848, %v1096
    %v1098 = vpop.f32.mrb[0].mxu0
    %1099 = vmatprep.mubr.bf16.mxu0 0
    %1100 = vmatmul.mubr.bf16.gmra.mrb[0].mxu0 %v953
    %v1101 = vpop.f32.mrb[0].mxu0
    %v1102 = vadd.f32 %v853, %v1101
    %v1103 = vpop.f32.mrb[0].mxu0
    %v1104 = vpop.f32.mrb[0].mxu0
    %v1105 = vadd.f32 %v856, %v1104
    %v1106 = vpop.f32.mrb[0].mxu0
    %1107 = vmatprep.mubr.bf16.mxu0 0
    %1108 = vmatmul.mubr.bf16.gmra.mrb[0].mxu0 %v954
    %v1109 = vpop.f32.mrb[0].mxu0
    %v1110 = vadd.f32 %v861, %v1109
    %v1111 = vpop.f32.mrb[0].mxu0
    %v1112 = vpop.f32.mrb[0].mxu0
    %v1113 = vadd.f32 %v864, %v1112
    %v1114 = vpop.f32.mrb[0].mxu0
    %1115 = vmatprep.mubr.bf16.mxu0 0
    %1116 = vmatmul.mubr.bf16.gmra.mrb[0].mxu0 %v955
    %v1117 = vpop.f32.mrb[0].mxu0
    %v1118 = vadd.f32 %v869, %v1117
    %v1119 = vpop.f32.mrb[0].mxu0
    %v1120 = vpop.f32.mrb[0].mxu0
    %v1121 = vadd.f32 %v872, %v1120
    %v1122 = vpop.f32.mrb[0].mxu0
    %1123 = vmatprep.mubr.bf16.mxu0 0
    %1124 = vmatmul.mubr.bf16.gmra.mrb[0].mxu0 %v956
    %v1125 = vpop.f32.mrb[0].mxu0
    %v1126 = vadd.f32 %v877, %v1125
    %v1127 = vpop.f32.mrb[0].mxu0
    %v1128 = vpop.f32.mrb[0].mxu0
    %v1129 = vadd.f32 %v880, %v1128
    %v1130 = vpop.f32.mrb[0].mxu0
    %1131 = vmatprep.mubr.bf16.mxu0 0
    %1132 = vmatmul.mubr.bf16.gmra.mrb[0].mxu0 %v957
    %v1133 = vpop.f32.mrb[0].mxu0
    %v1134 = vadd.f32 %v885, %v1133
    %v1135 = vpop.f32.mrb[0].mxu0
    %v1136 = vpop.f32.mrb[0].mxu0
    %v1137 = vadd.f32 %v888, %v1136
    %v1138 = vpop.f32.mrb[0].mxu0
    %1139 = vmatprep.mubr.bf16.mxu0 0
    %1140 = vmatmul.mubr.bf16.gmra.mrb[0].mxu0 %v958
    %v1141 = vpop.f32.mrb[0].mxu0
    %v1142 = vadd.f32 %v893, %v1141
    %v1143 = vpop.f32.mrb[0].mxu0
    %v1144 = vpop.f32.mrb[0].mxu0
    %v1145 = vadd.f32 %v896, %v1144
    %v1146 = vpop.f32.mrb[0].mxu0
    %1147 = vdwg.mxu0
    %v1148 = vld [vmem:[%s553] sm:$0xff]
    %v1149 = vld [vmem:[%s553 + $0x8] sm:$0xff]
    %v1150 = vld [vmem:[%s553 + $0x10] sm:$0xff]
    %v1151 = vld [vmem:[%s553 + $0x18] sm:$0xff]
    %v1152 = vld [vmem:[%s553 + $0x20] sm:$0xff]
    %v1153 = vld [vmem:[%s553 + $0x28] sm:$0xff]
    %v1154 = vld [vmem:[%s553 + $0x30] sm:$0xff]
    %v1155 = vld [vmem:[%s553 + $0x38] sm:$0xff]
    %v1156 = vld [vmem:[%s553 + $0x40] sm:$0xff]
    %v1157 = vld [vmem:[%s553 + $0x48] sm:$0xff]
    %v1158 = vld [vmem:[%s553 + $0x50] sm:$0xff]
    %v1159 = vld [vmem:[%s553 + $0x58] sm:$0xff]
    %s1160 = scalar_lea.vmem [#allocation9], 64
    %v1161 = vld [vmem:[%s1160] sm:$0xf]
    %v1162 = vld [vmem:[%s1160 + $0x4] sm:$0xf]
    %v1163 = vld [vmem:[%s1160 + $0x8] sm:$0xf]
    %v1164 = vld [vmem:[%s1160 + $0xc] sm:$0xf]
    %v1165 = vld [vmem:[%s1160 + $0x10] sm:$0xf]
    %v1166 = vld [vmem:[%s1160 + $0x14] sm:$0xf]
    %v1167 = vld [vmem:[%s1160 + $0x18] sm:$0xf]
    %v1168 = vld [vmem:[%s1160 + $0x1c] sm:$0xf]
    %v1169 = vld [vmem:[%s1160 + $0x20] sm:$0xf]
    %v1170 = vld [vmem:[%s1160 + $0x24] sm:$0xf]
    %v1171 = vld [vmem:[%s1160 + $0x28] sm:$0xf]
    %v1172 = vld [vmem:[%s1160 + $0x2c] sm:$0xf]
    %v1173 = vld [vmem:[%s1160 + $0x30] sm:$0xf]
    %v1174 = vld [vmem:[%s1160 + $0x34] sm:$0xf]
    %v1175 = vld [vmem:[%s1160 + $0x38] sm:$0xf]
    %v1176 = vld [vmem:[%s1160 + $0x3c] sm:$0xf]
    %v1193 = vunpack.c.l.b16 %v1161
    %v1194 = vunpack.c.l.b16 %v1162
    %v1195 = vunpack.c.l.b16 %v1163
    %v1196 = vunpack.c.l.b16 %v1164
    %v1197 = vunpack.c.l.b16 %v1165
    %v1198 = vunpack.c.l.b16 %v1166
    %v1199 = vunpack.c.l.b16 %v1167
    %v1200 = vunpack.c.l.b16 %v1168
    %v1201 = vunpack.c.l.b16 %v1169
    %v1202 = vunpack.c.l.b16 %v1170
    %v1203 = vunpack.c.l.b16 %v1171
    %v1204 = vunpack.c.l.b16 %v1172
    %v1205 = vunpack.c.l.b16 %v1173
    %v1206 = vunpack.c.l.b16 %v1174
    %v1207 = vunpack.c.l.b16 %v1175
    %v1208 = vunpack.c.l.b16 %v1176
    %v1209 = vpack.c.b16 %v1194, %v1193
    %v1210 = vpack.c.b16 %v1196, %v1195
    %v1211 = vpack.c.b16 %v1198, %v1197
    %v1212 = vpack.c.b16 %v1200, %v1199
    %v1213 = vpack.c.b16 %v1202, %v1201
    %v1214 = vpack.c.b16 %v1204, %v1203
    %v1215 = vpack.c.b16 %v1206, %v1205
    %v1216 = vpack.c.b16 %v1208, %v1207
    %1225 = vmatprep.subr.bf16.mxu0 0
    %1226 = vmatpush1.bf16.msra.mxu0 %v1209
    %1227 = vmatprep.subr.bf16.mxu0 0
    %1228 = vmatpush1.bf16.msra.mxu0 %v1210
    %1229 = vmatprep.subr.bf16.mxu0 0
    %1230 = vmatpush1.bf16.msra.mxu0 %v1211
    %1231 = vmatprep.subr.bf16.mxu0 0
    %1232 = vmatpush1.bf16.msra.mxu0 %v1212
    %1233 = vmatprep.subr.bf16.mxu0 0
    %1234 = vmatpush1.bf16.msra.mxu0 %v1213
    %1235 = vmatprep.subr.bf16.mxu0 0
    %1236 = vmatpush1.bf16.msra.mxu0 %v1214
    %1237 = vmatprep.subr.bf16.mxu0 0
    %1238 = vmatpush1.bf16.msra.mxu0 %v1215
    %1239 = vmatprep.subr.bf16.mxu0 0
    %1240 = vmatpush1.bf16.msra.mxu0 %v1216
    %1241 = vmatprep.subr.bf16.mxu0 0
    %1242 = vmatpush1.bf16.msra.mxu0 0
    %1243 = vmatprep.subr.bf16.mxu0 0
    %1244 = vmatpush1.bf16.msra.mxu0 0
    %1245 = vmatprep.subr.bf16.mxu0 0
    %1246 = vmatpush1.bf16.msra.mxu0 0
    %1247 = vmatprep.subr.bf16.mxu0 0
    %1248 = vmatpush1.bf16.msra.mxu0 0
    %1249 = vmatprep.subr.bf16.mxu0 0
    %1250 = vmatpush1.bf16.msra.mxu0 0
    %1251 = vmatprep.subr.bf16.mxu0 0
    %1252 = vmatpush1.bf16.msra.mxu0 0
    %1253 = vmatprep.subr.bf16.mxu0 0
    %1254 = vmatpush1.bf16.msra.mxu0 0
    %1255 = vmatprep.subr.bf16.mxu0 0
    %1256 = vmatpush1.bf16.msra.mxu0 0
    %1257 = vmatprep.mubr.bf16.mxu0 0
    %1258 = vmatmul.mubr.bf16.gmra.mrb[0].mxu0 %v1148
    %v1259 = vpop.f32.mrb[0].mxu0
    %v1260 = vadd.f32 0.0, %v1259
    %v1261 = vpop.f32.mrb[0].mxu0
    %v1262 = vpop.f32.mrb[0].mxu0
    %v1263 = vadd.f32 0.0, %v1262
    %v1264 = vpop.f32.mrb[0].mxu0
    %1265 = vmatprep.mubr.bf16.mxu0 0
    %1266 = vmatmul.mubr.bf16.gmra.mrb[0].mxu0 %v1149
    %v1267 = vpop.f32.mrb[0].mxu0
    %v1268 = vadd.f32 0.0, %v1267
    %v1269 = vpop.f32.mrb[0].mxu0
    %v1270 = vpop.f32.mrb[0].mxu0
    %v1271 = vadd.f32 0.0, %v1270
    %v1272 = vpop.f32.mrb[0].mxu0
    %1273 = vmatprep.mubr.bf16.mxu0 0
    %1274 = vmatmul.mubr.bf16.gmra.mrb[0].mxu0 %v1150
    %v1275 = vpop.f32.mrb[0].mxu0
    %v1276 = vadd.f32 0.0, %v1275
    %v1277 = vpop.f32.mrb[0].mxu0
    %v1278 = vpop.f32.mrb[0].mxu0
    %v1279 = vadd.f32 0.0, %v1278
    %v1280 = vpop.f32.mrb[0].mxu0
    %1281 = vmatprep.mubr.bf16.mxu0 0
    %1282 = vmatmul.mubr.bf16.gmra.mrb[0].mxu0 %v1151
    %v1283 = vpop.f32.mrb[0].mxu0
    %v1284 = vadd.f32 0.0, %v1283
    %v1285 = vpop.f32.mrb[0].mxu0
    %v1286 = vpop.f32.mrb[0].mxu0
    %v1287 = vadd.f32 0.0, %v1286
    %v1288 = vpop.f32.mrb[0].mxu0
    %1289 = vmatprep.mubr.bf16.mxu0 0
    %1290 = vmatmul.mubr.bf16.gmra.mrb[0].mxu0 %v1152
    %v1291 = vpop.f32.mrb[0].mxu0
    %v1292 = vadd.f32 0.0, %v1291
    %v1293 = vpop.f32.mrb[0].mxu0
    %v1294 = vpop.f32.mrb[0].mxu0
    %v1295 = vadd.f32 0.0, %v1294
    %v1296 = vpop.f32.mrb[0].mxu0
    %1297 = vmatprep.mubr.bf16.mxu0 0
    %1298 = vmatmul.mubr.bf16.gmra.mrb[0].mxu0 %v1153
    %v1299 = vpop.f32.mrb[0].mxu0
    %v1300 = vadd.f32 0.0, %v1299
    %v1301 = vpop.f32.mrb[0].mxu0
    %v1302 = vpop.f32.mrb[0].mxu0
    %v1303 = vadd.f32 0.0, %v1302
    %v1304 = vpop.f32.mrb[0].mxu0
    %1305 = vmatprep.mubr.bf16.mxu0 0
    %1306 = vmatmul.mubr.bf16.gmra.mrb[0].mxu0 %v1154
    %v1307 = vpop.f32.mrb[0].mxu0
    %v1308 = vadd.f32 0.0, %v1307
    %v1309 = vpop.f32.mrb[0].mxu0
    %v1310 = vpop.f32.mrb[0].mxu0
    %v1311 = vadd.f32 0.0, %v1310
    %v1312 = vpop.f32.mrb[0].mxu0
    %1313 = vmatprep.mubr.bf16.mxu0 0
    %1314 = vmatmul.mubr.bf16.gmra.mrb[0].mxu0 %v1155
    %v1315 = vpop.f32.mrb[0].mxu0
    %v1316 = vadd.f32 0.0, %v1315
    %v1317 = vpop.f32.mrb[0].mxu0
    %v1318 = vpop.f32.mrb[0].mxu0
    %v1319 = vadd.f32 0.0, %v1318
    %v1320 = vpop.f32.mrb[0].mxu0
    %1321 = vmatprep.mubr.bf16.mxu0 0
    %1322 = vmatmul.mubr.bf16.gmra.mrb[0].mxu0 %v1156
    %v1323 = vpop.f32.mrb[0].mxu0
    %v1324 = vadd.f32 0.0, %v1323
    %v1325 = vpop.f32.mrb[0].mxu0
    %v1326 = vpop.f32.mrb[0].mxu0
    %v1327 = vadd.f32 0.0, %v1326
    %v1328 = vpop.f32.mrb[0].mxu0
    %1329 = vmatprep.mubr.bf16.mxu0 0
    %1330 = vmatmul.mubr.bf16.gmra.mrb[0].mxu0 %v1157
    %v1331 = vpop.f32.mrb[0].mxu0
    %v1332 = vadd.f32 0.0, %v1331
    %v1333 = vpop.f32.mrb[0].mxu0
    %v1334 = vpop.f32.mrb[0].mxu0
    %v1335 = vadd.f32 0.0, %v1334
    %v1336 = vpop.f32.mrb[0].mxu0
    %1337 = vmatprep.mubr.bf16.mxu0 0
    %1338 = vmatmul.mubr.bf16.gmra.mrb[0].mxu0 %v1158
    %v1339 = vpop.f32.mrb[0].mxu0
    %v1340 = vadd.f32 0.0, %v1339
    %v1341 = vpop.f32.mrb[0].mxu0
    %v1342 = vpop.f32.mrb[0].mxu0
    %v1343 = vadd.f32 0.0, %v1342
    %v1344 = vpop.f32.mrb[0].mxu0
    %1345 = vmatprep.mubr.bf16.mxu0 0
    %1346 = vmatmul.mubr.bf16.gmra.mrb[0].mxu0 %v1159
    %v1347 = vpop.f32.mrb[0].mxu0
    %v1348 = vadd.f32 0.0, %v1347
    %v1349 = vpop.f32.mrb[0].mxu0
    %v1350 = vpop.f32.mrb[0].mxu0
    %v1351 = vadd.f32 0.0, %v1350
    %v1352 = vpop.f32.mrb[0].mxu0
    %1353 = vdwg.mxu0
    %v1354 = vadd.f32 %v1054, %v1260
    %v1355 = vadd.f32 %v1057, %v1263
    %v1356 = vadd.f32 %v1062, %v1268
    %v1357 = vadd.f32 %v1065, %v1271
    %v1358 = vadd.f32 %v1070, %v1276
    %v1359 = vadd.f32 %v1073, %v1279
    %v1360 = vadd.f32 %v1078, %v1284
    %v1361 = vadd.f32 %v1081, %v1287
    %v1362 = vadd.f32 %v1086, %v1292
    %v1363 = vadd.f32 %v1089, %v1295
    %v1364 = vadd.f32 %v1094, %v1300
    %v1365 = vadd.f32 %v1097, %v1303
    %v1366 = vadd.f32 %v1102, %v1308
    %v1367 = vadd.f32 %v1105, %v1311
    %v1368 = vadd.f32 %v1110, %v1316
    %v1369 = vadd.f32 %v1113, %v1319
    %v1370 = vadd.f32 %v1118, %v1324
    %v1371 = vadd.f32 %v1121, %v1327
    %v1372 = vadd.f32 %v1126, %v1332
    %v1373 = vadd.f32 %v1129, %v1335
    %v1374 = vadd.f32 %v1134, %v1340
    %v1375 = vadd.f32 %v1137, %v1343
    %v1376 = vadd.f32 %v1142, %v1348
    %v1377 = vadd.f32 %v1145, %v1351
    %v1378 = vld [vmem:[%s639] sm:$0xff]
    %v1379 = vld [vmem:[%s639 + $0x8] sm:$0xff]
    %v1380 = vld [vmem:[%s639 + $0x10] sm:$0xff]
    %v1381 = vld [vmem:[%s639 + $0x18] sm:$0xff]
    %v1382 = vld [vmem:[%s639 + $0x20] sm:$0xff]
    %v1383 = vld [vmem:[%s639 + $0x28] sm:$0xff]
    %v1384 = vld [vmem:[%s639 + $0x30] sm:$0xff]
    %v1385 = vld [vmem:[%s639 + $0x38] sm:$0xff]
    %v1386 = vld [vmem:[%s639 + $0x40] sm:$0xff]
    %v1387 = vld [vmem:[%s639 + $0x48] sm:$0xff]
    %v1388 = vld [vmem:[%s639 + $0x50] sm:$0xff]
    %v1389 = vld [vmem:[%s639 + $0x58] sm:$0xff]
    %s1390 = scalar_lea.vmem [#allocation9], 128
    %v1391 = vld [vmem:[%s1390] sm:$0xf]
    %v1392 = vld [vmem:[%s1390 + $0x4] sm:$0xf]
    %v1393 = vld [vmem:[%s1390 + $0x8] sm:$0xf]
    %v1394 = vld [vmem:[%s1390 + $0xc] sm:$0xf]
    %v1395 = vld [vmem:[%s1390 + $0x10] sm:$0xf]
    %v1396 = vld [vmem:[%s1390 + $0x14] sm:$0xf]
    %v1397 = vld [vmem:[%s1390 + $0x18] sm:$0xf]
    %v1398 = vld [vmem:[%s1390 + $0x1c] sm:$0xf]
    %v1399 = vld [vmem:[%s1390 + $0x20] sm:$0xf]
    %v1400 = vld [vmem:[%s1390 + $0x24] sm:$0xf]
    %v1401 = vld [vmem:[%s1390 + $0x28] sm:$0xf]
    %v1402 = vld [vmem:[%s1390 + $0x2c] sm:$0xf]
    %v1403 = vld [vmem:[%s1390 + $0x30] sm:$0xf]
    %v1404 = vld [vmem:[%s1390 + $0x34] sm:$0xf]
    %v1405 = vld [vmem:[%s1390 + $0x38] sm:$0xf]
    %v1406 = vld [vmem:[%s1390 + $0x3c] sm:$0xf]
    %v1423 = vunpack.c.l.b16 %v1391
    %v1424 = vunpack.c.l.b16 %v1392
    %v1425 = vunpack.c.l.b16 %v1393
    %v1426 = vunpack.c.l.b16 %v1394
    %v1427 = vunpack.c.l.b16 %v1395
    %v1428 = vunpack.c.l.b16 %v1396
    %v1429 = vunpack.c.l.b16 %v1397
    %v1430 = vunpack.c.l.b16 %v1398
    %v1431 = vunpack.c.l.b16 %v1399
    %v1432 = vunpack.c.l.b16 %v1400
    %v1433 = vunpack.c.l.b16 %v1401
    %v1434 = vunpack.c.l.b16 %v1402
    %v1435 = vunpack.c.l.b16 %v1403
    %v1436 = vunpack.c.l.b16 %v1404
    %v1437 = vunpack.c.l.b16 %v1405
    %v1438 = vunpack.c.l.b16 %v1406
    %v1439 = vpack.c.b16 %v1424, %v1423
    %v1440 = vpack.c.b16 %v1426, %v1425
    %v1441 = vpack.c.b16 %v1428, %v1427
    %v1442 = vpack.c.b16 %v1430, %v1429
    %v1443 = vpack.c.b16 %v1432, %v1431
    %v1444 = vpack.c.b16 %v1434, %v1433
    %v1445 = vpack.c.b16 %v1436, %v1435
    %v1446 = vpack.c.b16 %v1438, %v1437
    %1455 = vmatprep.subr.bf16.mxu0 0
    %1456 = vmatpush1.bf16.msra.mxu0 %v1439
    %1457 = vmatprep.subr.bf16.mxu0 0
    %1458 = vmatpush1.bf16.msra.mxu0 %v1440
    %1459 = vmatprep.subr.bf16.mxu0 0
    %1460 = vmatpush1.bf16.msra.mxu0 %v1441
    %1461 = vmatprep.subr.bf16.mxu0 0
    %1462 = vmatpush1.bf16.msra.mxu0 %v1442
    %1463 = vmatprep.subr.bf16.mxu0 0
    %1464 = vmatpush1.bf16.msra.mxu0 %v1443
    %1465 = vmatprep.subr.bf16.mxu0 0
    %1466 = vmatpush1.bf16.msra.mxu0 %v1444
    %1467 = vmatprep.subr.bf16.mxu0 0
    %1468 = vmatpush1.bf16.msra.mxu0 %v1445
    %1469 = vmatprep.subr.bf16.mxu0 0
    %1470 = vmatpush1.bf16.msra.mxu0 %v1446
    %1471 = vmatprep.subr.bf16.mxu0 0
    %1472 = vmatpush1.bf16.msra.mxu0 0
    %1473 = vmatprep.subr.bf16.mxu0 0
    %1474 = vmatpush1.bf16.msra.mxu0 0
    %1475 = vmatprep.subr.bf16.mxu0 0
    %1476 = vmatpush1.bf16.msra.mxu0 0
    %1477 = vmatprep.subr.bf16.mxu0 0
    %1478 = vmatpush1.bf16.msra.mxu0 0
    %1479 = vmatprep.subr.bf16.mxu0 0
    %1480 = vmatpush1.bf16.msra.mxu0 0
    %1481 = vmatprep.subr.bf16.mxu0 0
    %1482 = vmatpush1.bf16.msra.mxu0 0
    %1483 = vmatprep.subr.bf16.mxu0 0
    %1484 = vmatpush1.bf16.msra.mxu0 0
    %1485 = vmatprep.subr.bf16.mxu0 0
    %1486 = vmatpush1.bf16.msra.mxu0 0
    %1487 = vmatprep.mubr.bf16.mxu0 0
    %1488 = vmatmul.mubr.bf16.gmra.mrb[0].mxu0 %v1378
    %v1489 = vpop.f32.mrb[0].mxu0
    %v1490 = vadd.f32 0.0, %v1489
    %v1491 = vpop.f32.mrb[0].mxu0
    %v1492 = vpop.f32.mrb[0].mxu0
    %v1493 = vadd.f32 0.0, %v1492
    %v1494 = vpop.f32.mrb[0].mxu0
    %1495 = vmatprep.mubr.bf16.mxu0 0
    %1496 = vmatmul.mubr.bf16.gmra.mrb[0].mxu0 %v1379
    %v1497 = vpop.f32.mrb[0].mxu0
    %v1498 = vadd.f32 0.0, %v1497
    %v1499 = vpop.f32.mrb[0].mxu0
    %v1500 = vpop.f32.mrb[0].mxu0
    %v1501 = vadd.f32 0.0, %v1500
    %v1502 = vpop.f32.mrb[0].mxu0
    %1503 = vmatprep.mubr.bf16.mxu0 0
    %1504 = vmatmul.mubr.bf16.gmra.mrb[0].mxu0 %v1380
    %v1505 = vpop.f32.mrb[0].mxu0
    %v1506 = vadd.f32 0.0, %v1505
    %v1507 = vpop.f32.mrb[0].mxu0
    %v1508 = vpop.f32.mrb[0].mxu0
    %v1509 = vadd.f32 0.0, %v1508
    %v1510 = vpop.f32.mrb[0].mxu0
    %1511 = vmatprep.mubr.bf16.mxu0 0
    %1512 = vmatmul.mubr.bf16.gmra.mrb[0].mxu0 %v1381
    %v1513 = vpop.f32.mrb[0].mxu0
    %v1514 = vadd.f32 0.0, %v1513
    %v1515 = vpop.f32.mrb[0].mxu0
    %v1516 = vpop.f32.mrb[0].mxu0
    %v1517 = vadd.f32 0.0, %v1516
    %v1518 = vpop.f32.mrb[0].mxu0
    %1519 = vmatprep.mubr.bf16.mxu0 0
    %1520 = vmatmul.mubr.bf16.gmra.mrb[0].mxu0 %v1382
    %v1521 = vpop.f32.mrb[0].mxu0
    %v1522 = vadd.f32 0.0, %v1521
    %v1523 = vpop.f32.mrb[0].mxu0
    %v1524 = vpop.f32.mrb[0].mxu0
    %v1525 = vadd.f32 0.0, %v1524
    %v1526 = vpop.f32.mrb[0].mxu0
    %1527 = vmatprep.mubr.bf16.mxu0 0
    %1528 = vmatmul.mubr.bf16.gmra.mrb[0].mxu0 %v1383
    %v1529 = vpop.f32.mrb[0].mxu0
    %v1530 = vadd.f32 0.0, %v1529
    %v1531 = vpop.f32.mrb[0].mxu0
    %v1532 = vpop.f32.mrb[0].mxu0
    %v1533 = vadd.f32 0.0, %v1532
    %v1534 = vpop.f32.mrb[0].mxu0
    %1535 = vmatprep.mubr.bf16.mxu0 0
    %1536 = vmatmul.mubr.bf16.gmra.mrb[0].mxu0 %v1384
    %v1537 = vpop.f32.mrb[0].mxu0
    %v1538 = vadd.f32 0.0, %v1537
    %v1539 = vpop.f32.mrb[0].mxu0
    %v1540 = vpop.f32.mrb[0].mxu0
    %v1541 = vadd.f32 0.0, %v1540
    %v1542 = vpop.f32.mrb[0].mxu0
    %1543 = vmatprep.mubr.bf16.mxu0 0
    %1544 = vmatmul.mubr.bf16.gmra.mrb[0].mxu0 %v1385
    %v1545 = vpop.f32.mrb[0].mxu0
    %v1546 = vadd.f32 0.0, %v1545
    %v1547 = vpop.f32.mrb[0].mxu0
    %v1548 = vpop.f32.mrb[0].mxu0
    %v1549 = vadd.f32 0.0, %v1548
    %v1550 = vpop.f32.mrb[0].mxu0
    %1551 = vmatprep.mubr.bf16.mxu0 0
    %1552 = vmatmul.mubr.bf16.gmra.mrb[0].mxu0 %v1386
    %v1553 = vpop.f32.mrb[0].mxu0
    %v1554 = vadd.f32 0.0, %v1553
    %v1555 = vpop.f32.mrb[0].mxu0
    %v1556 = vpop.f32.mrb[0].mxu0
    %v1557 = vadd.f32 0.0, %v1556
    %v1558 = vpop.f32.mrb[0].mxu0
    %1559 = vmatprep.mubr.bf16.mxu0 0
    %1560 = vmatmul.mubr.bf16.gmra.mrb[0].mxu0 %v1387
    %v1561 = vpop.f32.mrb[0].mxu0
    %v1562 = vadd.f32 0.0, %v1561
    %v1563 = vpop.f32.mrb[0].mxu0
    %v1564 = vpop.f32.mrb[0].mxu0
    %v1565 = vadd.f32 0.0, %v1564
    %v1566 = vpop.f32.mrb[0].mxu0
    %1567 = vmatprep.mubr.bf16.mxu0 0
    %1568 = vmatmul.mubr.bf16.gmra.mrb[0].mxu0 %v1388
    %v1569 = vpop.f32.mrb[0].mxu0
    %v1570 = vadd.f32 0.0, %v1569
    %v1571 = vpop.f32.mrb[0].mxu0
    %v1572 = vpop.f32.mrb[0].mxu0
    %v1573 = vadd.f32 0.0, %v1572
    %v1574 = vpop.f32.mrb[0].mxu0
    %1575 = vmatprep.mubr.bf16.mxu0 0
    %1576 = vmatmul.mubr.bf16.gmra.mrb[0].mxu0 %v1389
    %v1577 = vpop.f32.mrb[0].mxu0
    %v1578 = vadd.f32 0.0, %v1577
    %v1579 = vpop.f32.mrb[0].mxu0
    %v1580 = vpop.f32.mrb[0].mxu0
    %v1581 = vadd.f32 0.0, %v1580
    %v1582 = vpop.f32.mrb[0].mxu0
    %1583 = vdwg.mxu0
    %v1584 = vadd.f32 %v1354, %v1490
    %v1585 = vadd.f32 %v1355, %v1493
    %v1586 = vadd.f32 %v1356, %v1498
    %v1587 = vadd.f32 %v1357, %v1501
    %v1588 = vadd.f32 %v1358, %v1506
    %v1589 = vadd.f32 %v1359, %v1509
    %v1590 = vadd.f32 %v1360, %v1514
    %v1591 = vadd.f32 %v1361, %v1517
    %v1592 = vadd.f32 %v1362, %v1522
    %v1593 = vadd.f32 %v1363, %v1525
    %v1594 = vadd.f32 %v1364, %v1530
    %v1595 = vadd.f32 %v1365, %v1533
    %v1596 = vadd.f32 %v1366, %v1538
    %v1597 = vadd.f32 %v1367, %v1541
    %v1598 = vadd.f32 %v1368, %v1546
    %v1599 = vadd.f32 %v1369, %v1549
    %v1600 = vadd.f32 %v1370, %v1554
    %v1601 = vadd.f32 %v1371, %v1557
    %v1602 = vadd.f32 %v1372, %v1562
    %v1603 = vadd.f32 %v1373, %v1565
    %v1604 = vadd.f32 %v1374, %v1570
    %v1605 = vadd.f32 %v1375, %v1573
    %v1606 = vadd.f32 %v1376, %v1578
    %v1607 = vadd.f32 %v1377, %v1581
    %s1608 = scalar_lea.vmem [#allocation2], 8
    %v1609 = vld [vmem:[%s1608] sm:$0xff]
    %v1610 = vld [vmem:[%s1608 + $0x8] sm:$0xff]
    %v1611 = vld [vmem:[%s1608 + $0x10] sm:$0xff]
    %v1612 = vld [vmem:[%s1608 + $0x18] sm:$0xff]
    %v1613 = vld [vmem:[%s1608 + $0x20] sm:$0xff]
    %v1614 = vld [vmem:[%s1608 + $0x28] sm:$0xff]
    %v1615 = vld [vmem:[%s1608 + $0x30] sm:$0xff]
    %v1616 = vld [vmem:[%s1608 + $0x38] sm:$0xff]
    %v1617 = vld [vmem:[%s1608 + $0x40] sm:$0xff]
    %v1618 = vld [vmem:[%s1608 + $0x48] sm:$0xff]
    %v1619 = vld [vmem:[%s1608 + $0x50] sm:$0xff]
    %v1620 = vld [vmem:[%s1608 + $0x58] sm:$0xff]
    %s1621 = scalar_lea.vmem [#allocation9], 192
    %v1622 = vld [vmem:[%s1621] sm:$0xf]
    %v1623 = vld [vmem:[%s1621 + $0x4] sm:$0xf]
    %v1624 = vld [vmem:[%s1621 + $0x8] sm:$0xf]
    %v1625 = vld [vmem:[%s1621 + $0xc] sm:$0xf]
    %v1626 = vld [vmem:[%s1621 + $0x10] sm:$0xf]
    %v1627 = vld [vmem:[%s1621 + $0x14] sm:$0xf]
    %v1628 = vld [vmem:[%s1621 + $0x18] sm:$0xf]
    %v1629 = vld [vmem:[%s1621 + $0x1c] sm:$0xf]
    %v1630 = vld [vmem:[%s1621 + $0x20] sm:$0xf]
    %v1631 = vld [vmem:[%s1621 + $0x24] sm:$0xf]
    %v1632 = vld [vmem:[%s1621 + $0x28] sm:$0xf]
    %v1633 = vld [vmem:[%s1621 + $0x2c] sm:$0xf]
    %v1634 = vld [vmem:[%s1621 + $0x30] sm:$0xf]
    %v1635 = vld [vmem:[%s1621 + $0x34] sm:$0xf]
    %v1636 = vld [vmem:[%s1621 + $0x38] sm:$0xf]
    %v1637 = vld [vmem:[%s1621 + $0x3c] sm:$0xf]
    %v1654 = vunpack.c.l.b16 %v1622
    %v1655 = vunpack.c.l.b16 %v1623
    %v1656 = vunpack.c.l.b16 %v1624
    %v1657 = vunpack.c.l.b16 %v1625
    %v1658 = vunpack.c.l.b16 %v1626
    %v1659 = vunpack.c.l.b16 %v1627
    %v1660 = vunpack.c.l.b16 %v1628
    %v1661 = vunpack.c.l.b16 %v1629
    %v1662 = vunpack.c.l.b16 %v1630
    %v1663 = vunpack.c.l.b16 %v1631
    %v1664 = vunpack.c.l.b16 %v1632
    %v1665 = vunpack.c.l.b16 %v1633
    %v1666 = vunpack.c.l.b16 %v1634
    %v1667 = vunpack.c.l.b16 %v1635
    %v1668 = vunpack.c.l.b16 %v1636
    %v1669 = vunpack.c.l.b16 %v1637
    %v1670 = vpack.c.b16 %v1655, %v1654
    %v1671 = vpack.c.b16 %v1657, %v1656
    %v1672 = vpack.c.b16 %v1659, %v1658
    %v1673 = vpack.c.b16 %v1661, %v1660
    %v1674 = vpack.c.b16 %v1663, %v1662
    %v1675 = vpack.c.b16 %v1665, %v1664
    %v1676 = vpack.c.b16 %v1667, %v1666
    %v1677 = vpack.c.b16 %v1669, %v1668
    %1686 = vmatprep.subr.bf16.mxu0 0
    %1687 = vmatpush1.bf16.msra.mxu0 %v1670
    %1688 = vmatprep.subr.bf16.mxu0 0
    %1689 = vmatpush1.bf16.msra.mxu0 %v1671
    %1690 = vmatprep.subr.bf16.mxu0 0
    %1691 = vmatpush1.bf16.msra.mxu0 %v1672
    %1692 = vmatprep.subr.bf16.mxu0 0
    %1693 = vmatpush1.bf16.msra.mxu0 %v1673
    %1694 = vmatprep.subr.bf16.mxu0 0
    %1695 = vmatpush1.bf16.msra.mxu0 %v1674
    %1696 = vmatprep.subr.bf16.mxu0 0
    %1697 = vmatpush1.bf16.msra.mxu0 %v1675
    %1698 = vmatprep.subr.bf16.mxu0 0
    %1699 = vmatpush1.bf16.msra.mxu0 %v1676
    %1700 = vmatprep.subr.bf16.mxu0 0
    %1701 = vmatpush1.bf16.msra.mxu0 %v1677
    %1702 = vmatprep.subr.bf16.mxu0 0
    %1703 = vmatpush1.bf16.msra.mxu0 0
    %1704 = vmatprep.subr.bf16.mxu0 0
    %1705 = vmatpush1.bf16.msra.mxu0 0
    %1706 = vmatprep.subr.bf16.mxu0 0
    %1707 = vmatpush1.bf16.msra.mxu0 0
    %1708 = vmatprep.subr.bf16.mxu0 0
    %1709 = vmatpush1.bf16.msra.mxu0 0
    %1710 = vmatprep.subr.bf16.mxu0 0
    %1711 = vmatpush1.bf16.msra.mxu0 0
    %1712 = vmatprep.subr.bf16.mxu0 0
    %1713 = vmatpush1.bf16.msra.mxu0 0
    %1714 = vmatprep.subr.bf16.mxu0 0
    %1715 = vmatpush1.bf16.msra.mxu0 0
    %1716 = vmatprep.subr.bf16.mxu0 0
    %1717 = vmatpush1.bf16.msra.mxu0 0
    %1718 = vmatprep.mubr.bf16.mxu0 0
    %1719 = vmatmul.mubr.bf16.gmra.mrb[0].mxu0 %v1609
    %v1720 = vpop.f32.mrb[0].mxu0
    %v1721 = vadd.f32 0.0, %v1720
    %v1722 = vpop.f32.mrb[0].mxu0
    %v1723 = vpop.f32.mrb[0].mxu0
    %v1724 = vadd.f32 0.0, %v1723
    %v1725 = vpop.f32.mrb[0].mxu0
    %1726 = vmatprep.mubr.bf16.mxu0 0
    %1727 = vmatmul.mubr.bf16.gmra.mrb[0].mxu0 %v1610
    %v1728 = vpop.f32.mrb[0].mxu0
    %v1729 = vadd.f32 0.0, %v1728
    %v1730 = vpop.f32.mrb[0].mxu0
    %v1731 = vpop.f32.mrb[0].mxu0
    %v1732 = vadd.f32 0.0, %v1731
    %v1733 = vpop.f32.mrb[0].mxu0
    %1734 = vmatprep.mubr.bf16.mxu0 0
    %1735 = vmatmul.mubr.bf16.gmra.mrb[0].mxu0 %v1611
    %v1736 = vpop.f32.mrb[0].mxu0
    %v1737 = vadd.f32 0.0, %v1736
    %v1738 = vpop.f32.mrb[0].mxu0
    %v1739 = vpop.f32.mrb[0].mxu0
    %v1740 = vadd.f32 0.0, %v1739
    %v1741 = vpop.f32.mrb[0].mxu0
    %1742 = vmatprep.mubr.bf16.mxu0 0
    %1743 = vmatmul.mubr.bf16.gmra.mrb[0].mxu0 %v1612
    %v1744 = vpop.f32.mrb[0].mxu0
    %v1745 = vadd.f32 0.0, %v1744
    %v1746 = vpop.f32.mrb[0].mxu0
    %v1747 = vpop.f32.mrb[0].mxu0
    %v1748 = vadd.f32 0.0, %v1747
    %v1749 = vpop.f32.mrb[0].mxu0
    %1750 = vmatprep.mubr.bf16.mxu0 0
    %1751 = vmatmul.mubr.bf16.gmra.mrb[0].mxu0 %v1613
    %v1752 = vpop.f32.mrb[0].mxu0
    %v1753 = vadd.f32 0.0, %v1752
    %v1754 = vpop.f32.mrb[0].mxu0
    %v1755 = vpop.f32.mrb[0].mxu0
    %v1756 = vadd.f32 0.0, %v1755
    %v1757 = vpop.f32.mrb[0].mxu0
    %1758 = vmatprep.mubr.bf16.mxu0 0
    %1759 = vmatmul.mubr.bf16.gmra.mrb[0].mxu0 %v1614
    %v1760 = vpop.f32.mrb[0].mxu0
    %v1761 = vadd.f32 0.0, %v1760
    %v1762 = vpop.f32.mrb[0].mxu0
    %v1763 = vpop.f32.mrb[0].mxu0
    %v1764 = vadd.f32 0.0, %v1763
    %v1765 = vpop.f32.mrb[0].mxu0
    %1766 = vmatprep.mubr.bf16.mxu0 0
    %1767 = vmatmul.mubr.bf16.gmra.mrb[0].mxu0 %v1615
    %v1768 = vpop.f32.mrb[0].mxu0
    %v1769 = vadd.f32 0.0, %v1768
    %v1770 = vpop.f32.mrb[0].mxu0
    %v1771 = vpop.f32.mrb[0].mxu0
    %v1772 = vadd.f32 0.0, %v1771
    %v1773 = vpop.f32.mrb[0].mxu0
    %1774 = vmatprep.mubr.bf16.mxu0 0
    %1775 = vmatmul.mubr.bf16.gmra.mrb[0].mxu0 %v1616
    %v1776 = vpop.f32.mrb[0].mxu0
    %v1777 = vadd.f32 0.0, %v1776
    %v1778 = vpop.f32.mrb[0].mxu0
    %v1779 = vpop.f32.mrb[0].mxu0
    %v1780 = vadd.f32 0.0, %v1779
    %v1781 = vpop.f32.mrb[0].mxu0
    %1782 = vmatprep.mubr.bf16.mxu0 0
    %1783 = vmatmul.mubr.bf16.gmra.mrb[0].mxu0 %v1617
    %v1784 = vpop.f32.mrb[0].mxu0
    %v1785 = vadd.f32 0.0, %v1784
    %v1786 = vpop.f32.mrb[0].mxu0
    %v1787 = vpop.f32.mrb[0].mxu0
    %v1788 = vadd.f32 0.0, %v1787
    %v1789 = vpop.f32.mrb[0].mxu0
    %1790 = vmatprep.mubr.bf16.mxu0 0
    %1791 = vmatmul.mubr.bf16.gmra.mrb[0].mxu0 %v1618
    %v1792 = vpop.f32.mrb[0].mxu0
    %v1793 = vadd.f32 0.0, %v1792
    %v1794 = vpop.f32.mrb[0].mxu0
    %v1795 = vpop.f32.mrb[0].mxu0
    %v1796 = vadd.f32 0.0, %v1795
    %v1797 = vpop.f32.mrb[0].mxu0
    %1798 = vmatprep.mubr.bf16.mxu0 0
    %1799 = vmatmul.mubr.bf16.gmra.mrb[0].mxu0 %v1619
    %v1800 = vpop.f32.mrb[0].mxu0
    %v1801 = vadd.f32 0.0, %v1800
    %v1802 = vpop.f32.mrb[0].mxu0
    %v1803 = vpop.f32.mrb[0].mxu0
    %v1804 = vadd.f32 0.0, %v1803
    %v1805 = vpop.f32.mrb[0].mxu0
    %1806 = vmatprep.mubr.bf16.mxu0 0
    %1807 = vmatmul.mubr.bf16.gmra.mrb[0].mxu0 %v1620
    %v1808 = vpop.f32.mrb[0].mxu0
    %v1809 = vadd.f32 0.0, %v1808
    %v1810 = vpop.f32.mrb[0].mxu0
    %v1811 = vpop.f32.mrb[0].mxu0
    %v1812 = vadd.f32 0.0, %v1811
    %v1813 = vpop.f32.mrb[0].mxu0
    %1814 = vdwg.mxu0
    %v1815 = vadd.f32 %v1584, %v1721
    %v1816 = vadd.f32 %v1585, %v1724
    %v1817 = vadd.f32 %v1586, %v1729
    %v1818 = vadd.f32 %v1587, %v1732
    %v1819 = vadd.f32 %v1588, %v1737
    %v1820 = vadd.f32 %v1589, %v1740
    %v1821 = vadd.f32 %v1590, %v1745
    %v1822 = vadd.f32 %v1591, %v1748
    %v1823 = vadd.f32 %v1592, %v1753
    %v1824 = vadd.f32 %v1593, %v1756
    %v1825 = vadd.f32 %v1594, %v1761
    %v1826 = vadd.f32 %v1595, %v1764
    %v1827 = vadd.f32 %v1596, %v1769
    %v1828 = vadd.f32 %v1597, %v1772
    %v1829 = vadd.f32 %v1598, %v1777
    %v1830 = vadd.f32 %v1599, %v1780
    %v1831 = vadd.f32 %v1600, %v1785
    %v1832 = vadd.f32 %v1601, %v1788
    %v1833 = vadd.f32 %v1602, %v1793
    %v1834 = vadd.f32 %v1603, %v1796
    %v1835 = vadd.f32 %v1604, %v1801
    %v1836 = vadd.f32 %v1605, %v1804
    %v1837 = vadd.f32 %v1606, %v1809
    %v1838 = vadd.f32 %v1607, %v1812
    %s1839 = scalar_lea.vmem [#allocation2], 120
    %v1840 = vld [vmem:[%s1839] sm:$0xff]
    %v1841 = vld [vmem:[%s1839 + $0x8] sm:$0xff]
    %v1842 = vld [vmem:[%s1839 + $0x10] sm:$0xff]
    %v1843 = vld [vmem:[%s1839 + $0x18] sm:$0xff]
    %v1844 = vld [vmem:[%s1839 + $0x20] sm:$0xff]
    %v1845 = vld [vmem:[%s1839 + $0x28] sm:$0xff]
    %v1846 = vld [vmem:[%s1839 + $0x30] sm:$0xff]
    %v1847 = vld [vmem:[%s1839 + $0x38] sm:$0xff]
    %v1848 = vld [vmem:[%s1839 + $0x40] sm:$0xff]
    %v1849 = vld [vmem:[%s1839 + $0x48] sm:$0xff]
    %v1850 = vld [vmem:[%s1839 + $0x50] sm:$0xff]
    %v1851 = vld [vmem:[%s1839 + $0x58] sm:$0xff]
    %s1852 = scalar_lea.vmem [#allocation9], 256
    %v1853 = vld [vmem:[%s1852] sm:$0xf]
    %v1854 = vld [vmem:[%s1852 + $0x4] sm:$0xf]
    %v1855 = vld [vmem:[%s1852 + $0x8] sm:$0xf]
    %v1856 = vld [vmem:[%s1852 + $0xc] sm:$0xf]
    %v1857 = vld [vmem:[%s1852 + $0x10] sm:$0xf]
    %v1858 = vld [vmem:[%s1852 + $0x14] sm:$0xf]
    %v1859 = vld [vmem:[%s1852 + $0x18] sm:$0xf]
    %v1860 = vld [vmem:[%s1852 + $0x1c] sm:$0xf]
    %v1861 = vld [vmem:[%s1852 + $0x20] sm:$0xf]
    %v1862 = vld [vmem:[%s1852 + $0x24] sm:$0xf]
    %v1863 = vld [vmem:[%s1852 + $0x28] sm:$0xf]
    %v1864 = vld [vmem:[%s1852 + $0x2c] sm:$0xf]
    %v1865 = vld [vmem:[%s1852 + $0x30] sm:$0xf]
    %v1866 = vld [vmem:[%s1852 + $0x34] sm:$0xf]
    %v1867 = vld [vmem:[%s1852 + $0x38] sm:$0xf]
    %v1868 = vld [vmem:[%s1852 + $0x3c] sm:$0xf]
    %v1885 = vunpack.c.l.b16 %v1853
    %v1886 = vunpack.c.l.b16 %v1854
    %v1887 = vunpack.c.l.b16 %v1855
    %v1888 = vunpack.c.l.b16 %v1856
    %v1889 = vunpack.c.l.b16 %v1857
    %v1890 = vunpack.c.l.b16 %v1858
    %v1891 = vunpack.c.l.b16 %v1859
    %v1892 = vunpack.c.l.b16 %v1860
    %v1893 = vunpack.c.l.b16 %v1861
    %v1894 = vunpack.c.l.b16 %v1862
    %v1895 = vunpack.c.l.b16 %v1863
    %v1896 = vunpack.c.l.b16 %v1864
    %v1897 = vunpack.c.l.b16 %v1865
    %v1898 = vunpack.c.l.b16 %v1866
    %v1899 = vunpack.c.l.b16 %v1867
    %v1900 = vunpack.c.l.b16 %v1868
    %v1901 = vpack.c.b16 %v1886, %v1885
    %v1902 = vpack.c.b16 %v1888, %v1887
    %v1903 = vpack.c.b16 %v1890, %v1889
    %v1904 = vpack.c.b16 %v1892, %v1891
    %v1905 = vpack.c.b16 %v1894, %v1893
    %v1906 = vpack.c.b16 %v1896, %v1895
    %v1907 = vpack.c.b16 %v1898, %v1897
    %v1908 = vpack.c.b16 %v1900, %v1899
    %1917 = vmatprep.subr.bf16.mxu0 0
    %1918 = vmatpush1.bf16.msra.mxu0 %v1901
    %1919 = vmatprep.subr.bf16.mxu0 0
    %1920 = vmatpush1.bf16.msra.mxu0 %v1902
    %1921 = vmatprep.subr.bf16.mxu0 0
    %1922 = vmatpush1.bf16.msra.mxu0 %v1903
    %1923 = vmatprep.subr.bf16.mxu0 0
    %1924 = vmatpush1.bf16.msra.mxu0 %v1904
    %1925 = vmatprep.subr.bf16.mxu0 0
    %1926 = vmatpush1.bf16.msra.mxu0 %v1905
    %1927 = vmatprep.subr.bf16.mxu0 0
    %1928 = vmatpush1.bf16.msra.mxu0 %v1906
    %1929 = vmatprep.subr.bf16.mxu0 0
    %1930 = vmatpush1.bf16.msra.mxu0 %v1907
    %1931 = vmatprep.subr.bf16.mxu0 0
    %1932 = vmatpush1.bf16.msra.mxu0 %v1908
    %1933 = vmatprep.subr.bf16.mxu0 0
    %1934 = vmatpush1.bf16.msra.mxu0 0
    %1935 = vmatprep.subr.bf16.mxu0 0
    %1936 = vmatpush1.bf16.msra.mxu0 0
    %1937 = vmatprep.subr.bf16.mxu0 0
    %1938 = vmatpush1.bf16.msra.mxu0 0
    %1939 = vmatprep.subr.bf16.mxu0 0
    %1940 = vmatpush1.bf16.msra.mxu0 0
    %1941 = vmatprep.subr.bf16.mxu0 0
    %1942 = vmatpush1.bf16.msra.mxu0 0
    %1943 = vmatprep.subr.bf16.mxu0 0
    %1944 = vmatpush1.bf16.msra.mxu0 0
    %1945 = vmatprep.subr.bf16.mxu0 0
    %1946 = vmatpush1.bf16.msra.mxu0 0
    %1947 = vmatprep.subr.bf16.mxu0 0
    %1948 = vmatpush1.bf16.msra.mxu0 0
    %1949 = vmatprep.mubr.bf16.mxu0 0
    %1950 = vmatmul.mubr.bf16.gmra.mrb[0].mxu0 %v1840
    %v1951 = vpop.f32.mrb[0].mxu0
    %v1952 = vadd.f32 0.0, %v1951
    %v1953 = vpop.f32.mrb[0].mxu0
    %v1954 = vpop.f32.mrb[0].mxu0
    %v1955 = vadd.f32 0.0, %v1954
    %v1956 = vpop.f32.mrb[0].mxu0
    %1957 = vmatprep.mubr.bf16.mxu0 0
    %1958 = vmatmul.mubr.bf16.gmra.mrb[0].mxu0 %v1841
    %v1959 = vpop.f32.mrb[0].mxu0
    %v1960 = vadd.f32 0.0, %v1959
    %v1961 = vpop.f32.mrb[0].mxu0
    %v1962 = vpop.f32.mrb[0].mxu0
    %v1963 = vadd.f32 0.0, %v1962
    %v1964 = vpop.f32.mrb[0].mxu0
    %1965 = vmatprep.mubr.bf16.mxu0 0
    %1966 = vmatmul.mubr.bf16.gmra.mrb[0].mxu0 %v1842
    %v1967 = vpop.f32.mrb[0].mxu0
    %v1968 = vadd.f32 0.0, %v1967
    %v1969 = vpop.f32.mrb[0].mxu0
    %v1970 = vpop.f32.mrb[0].mxu0
    %v1971 = vadd.f32 0.0, %v1970
    %v1972 = vpop.f32.mrb[0].mxu0
    %1973 = vmatprep.mubr.bf16.mxu0 0
    %1974 = vmatmul.mubr.bf16.gmra.mrb[0].mxu0 %v1843
    %v1975 = vpop.f32.mrb[0].mxu0
    %v1976 = vadd.f32 0.0, %v1975
    %v1977 = vpop.f32.mrb[0].mxu0
    %v1978 = vpop.f32.mrb[0].mxu0
    %v1979 = vadd.f32 0.0, %v1978
    %v1980 = vpop.f32.mrb[0].mxu0
    %1981 = vmatprep.mubr.bf16.mxu0 0
    %1982 = vmatmul.mubr.bf16.gmra.mrb[0].mxu0 %v1844
    %v1983 = vpop.f32.mrb[0].mxu0
    %v1984 = vadd.f32 0.0, %v1983
    %v1985 = vpop.f32.mrb[0].mxu0
    %v1986 = vpop.f32.mrb[0].mxu0
    %v1987 = vadd.f32 0.0, %v1986
    %v1988 = vpop.f32.mrb[0].mxu0
    %1989 = vmatprep.mubr.bf16.mxu0 0
    %1990 = vmatmul.mubr.bf16.gmra.mrb[0].mxu0 %v1845
    %v1991 = vpop.f32.mrb[0].mxu0
    %v1992 = vadd.f32 0.0, %v1991
    %v1993 = vpop.f32.mrb[0].mxu0
    %v1994 = vpop.f32.mrb[0].mxu0
    %v1995 = vadd.f32 0.0, %v1994
    %v1996 = vpop.f32.mrb[0].mxu0
    %1997 = vmatprep.mubr.bf16.mxu0 0
    %1998 = vmatmul.mubr.bf16.gmra.mrb[0].mxu0 %v1846
    %v1999 = vpop.f32.mrb[0].mxu0
    %v2000 = vadd.f32 0.0, %v1999
    %v2001 = vpop.f32.mrb[0].mxu0
    %v2002 = vpop.f32.mrb[0].mxu0
    %v2003 = vadd.f32 0.0, %v2002
    %v2004 = vpop.f32.mrb[0].mxu0
    %2005 = vmatprep.mubr.bf16.mxu0 0
    %2006 = vmatmul.mubr.bf16.gmra.mrb[0].mxu0 %v1847
    %v2007 = vpop.f32.mrb[0].mxu0
    %v2008 = vadd.f32 0.0, %v2007
    %v2009 = vpop.f32.mrb[0].mxu0
    %v2010 = vpop.f32.mrb[0].mxu0
    %v2011 = vadd.f32 0.0, %v2010
    %v2012 = vpop.f32.mrb[0].mxu0
    %2013 = vmatprep.mubr.bf16.mxu0 0
    %2014 = vmatmul.mubr.bf16.gmra.mrb[0].mxu0 %v1848
    %v2015 = vpop.f32.mrb[0].mxu0
    %v2016 = vadd.f32 0.0, %v2015
    %v2017 = vpop.f32.mrb[0].mxu0
    %v2018 = vpop.f32.mrb[0].mxu0
    %v2019 = vadd.f32 0.0, %v2018
    %v2020 = vpop.f32.mrb[0].mxu0
    %2021 = vmatprep.mubr.bf16.mxu0 0
    %2022 = vmatmul.mubr.bf16.gmra.mrb[0].mxu0 %v1849
    %v2023 = vpop.f32.mrb[0].mxu0
    %v2024 = vadd.f32 0.0, %v2023
    %v2025 = vpop.f32.mrb[0].mxu0
    %v2026 = vpop.f32.mrb[0].mxu0
    %v2027 = vadd.f32 0.0, %v2026
    %v2028 = vpop.f32.mrb[0].mxu0
    %2029 = vmatprep.mubr.bf16.mxu0 0
    %2030 = vmatmul.mubr.bf16.gmra.mrb[0].mxu0 %v1850
    %v2031 = vpop.f32.mrb[0].mxu0
    %v2032 = vadd.f32 0.0, %v2031
    %v2033 = vpop.f32.mrb[0].mxu0
    %v2034 = vpop.f32.mrb[0].mxu0
    %v2035 = vadd.f32 0.0, %v2034
    %v2036 = vpop.f32.mrb[0].mxu0
    %2037 = vmatprep.mubr.bf16.mxu0 0
    %2038 = vmatmul.mubr.bf16.gmra.mrb[0].mxu0 %v1851
    %v2039 = vpop.f32.mrb[0].mxu0
    %v2040 = vadd.f32 0.0, %v2039
    %v2041 = vpop.f32.mrb[0].mxu0
    %v2042 = vpop.f32.mrb[0].mxu0
    %v2043 = vadd.f32 0.0, %v2042
    %v2044 = vpop.f32.mrb[0].mxu0
    %2045 = vdwg.mxu0
    %v2046 = vadd.f32 %v1815, %v1952
    %v2047 = vadd.f32 %v1816, %v1955
    %v2048 = vadd.f32 %v1817, %v1960
    %v2049 = vadd.f32 %v1818, %v1963
    %v2050 = vadd.f32 %v1819, %v1968
    %v2051 = vadd.f32 %v1820, %v1971
    %v2052 = vadd.f32 %v1821, %v1976
    %v2053 = vadd.f32 %v1822, %v1979
    %v2054 = vadd.f32 %v1823, %v1984
    %v2055 = vadd.f32 %v1824, %v1987
    %v2056 = vadd.f32 %v1825, %v1992
    %v2057 = vadd.f32 %v1826, %v1995
    %v2058 = vadd.f32 %v1827, %v2000
    %v2059 = vadd.f32 %v1828, %v2003
    %v2060 = vadd.f32 %v1829, %v2008
    %v2061 = vadd.f32 %v1830, %v2011
    %v2062 = vadd.f32 %v1831, %v2016
    %v2063 = vadd.f32 %v1832, %v2019
    %v2064 = vadd.f32 %v1833, %v2024
    %v2065 = vadd.f32 %v1834, %v2027
    %v2066 = vadd.f32 %v1835, %v2032
    %v2067 = vadd.f32 %v1836, %v2035
    %v2068 = vadd.f32 %v1837, %v2040
    %v2069 = vadd.f32 %v1838, %v2043
    %s2070 = scalar_lea.vmem [#allocation2], 232
    %v2071 = vld [vmem:[%s2070] sm:$0xff]
    %v2072 = vld [vmem:[%s2070 + $0x8] sm:$0xff]
    %v2073 = vld [vmem:[%s2070 + $0x10] sm:$0xff]
    %v2074 = vld [vmem:[%s2070 + $0x18] sm:$0xff]
    %v2075 = vld [vmem:[%s2070 + $0x20] sm:$0xff]
    %v2076 = vld [vmem:[%s2070 + $0x28] sm:$0xff]
    %v2077 = vld [vmem:[%s2070 + $0x30] sm:$0xff]
    %v2078 = vld [vmem:[%s2070 + $0x38] sm:$0xff]
    %v2079 = vld [vmem:[%s2070 + $0x40] sm:$0xff]
    %v2080 = vld [vmem:[%s2070 + $0x48] sm:$0xff]
    %v2081 = vld [vmem:[%s2070 + $0x50] sm:$0xff]
    %v2082 = vld [vmem:[%s2070 + $0x58] sm:$0xff]
    %s2083 = scalar_lea.vmem [#allocation9], 320
    %v2084 = vld [vmem:[%s2083] sm:$0xf]
    %v2085 = vld [vmem:[%s2083 + $0x4] sm:$0xf]
    %v2086 = vld [vmem:[%s2083 + $0x8] sm:$0xf]
    %v2087 = vld [vmem:[%s2083 + $0xc] sm:$0xf]
    %v2088 = vld [vmem:[%s2083 + $0x10] sm:$0xf]
    %v2089 = vld [vmem:[%s2083 + $0x14] sm:$0xf]
    %v2090 = vld [vmem:[%s2083 + $0x18] sm:$0xf]
    %v2091 = vld [vmem:[%s2083 + $0x1c] sm:$0xf]
    %v2092 = vld [vmem:[%s2083 + $0x20] sm:$0xf]
    %v2093 = vld [vmem:[%s2083 + $0x24] sm:$0xf]
    %v2094 = vld [vmem:[%s2083 + $0x28] sm:$0xf]
    %v2095 = vld [vmem:[%s2083 + $0x2c] sm:$0xf]
    %v2096 = vld [vmem:[%s2083 + $0x30] sm:$0xf]
    %v2097 = vld [vmem:[%s2083 + $0x34] sm:$0xf]
    %v2098 = vld [vmem:[%s2083 + $0x38] sm:$0xf]
    %v2099 = vld [vmem:[%s2083 + $0x3c] sm:$0xf]
    %v2116 = vunpack.c.l.b16 %v2084
    %v2117 = vunpack.c.l.b16 %v2085
    %v2118 = vunpack.c.l.b16 %v2086
    %v2119 = vunpack.c.l.b16 %v2087
    %v2120 = vunpack.c.l.b16 %v2088
    %v2121 = vunpack.c.l.b16 %v2089
    %v2122 = vunpack.c.l.b16 %v2090
    %v2123 = vunpack.c.l.b16 %v2091
    %v2124 = vunpack.c.l.b16 %v2092
    %v2125 = vunpack.c.l.b16 %v2093
    %v2126 = vunpack.c.l.b16 %v2094
    %v2127 = vunpack.c.l.b16 %v2095
    %v2128 = vunpack.c.l.b16 %v2096
    %v2129 = vunpack.c.l.b16 %v2097
    %v2130 = vunpack.c.l.b16 %v2098
    %v2131 = vunpack.c.l.b16 %v2099
    %v2132 = vpack.c.b16 %v2117, %v2116
    %v2133 = vpack.c.b16 %v2119, %v2118
    %v2134 = vpack.c.b16 %v2121, %v2120
    %v2135 = vpack.c.b16 %v2123, %v2122
    %v2136 = vpack.c.b16 %v2125, %v2124
    %v2137 = vpack.c.b16 %v2127, %v2126
    %v2138 = vpack.c.b16 %v2129, %v2128
    %v2139 = vpack.c.b16 %v2131, %v2130
    %2148 = vmatprep.subr.bf16.mxu0 0
    %2149 = vmatpush1.bf16.msra.mxu0 %v2132
    %2150 = vmatprep.subr.bf16.mxu0 0
    %2151 = vmatpush1.bf16.msra.mxu0 %v2133
    %2152 = vmatprep.subr.bf16.mxu0 0
    %2153 = vmatpush1.bf16.msra.mxu0 %v2134
    %2154 = vmatprep.subr.bf16.mxu0 0
    %2155 = vmatpush1.bf16.msra.mxu0 %v2135
    %2156 = vmatprep.subr.bf16.mxu0 0
    %2157 = vmatpush1.bf16.msra.mxu0 %v2136
    %2158 = vmatprep.subr.bf16.mxu0 0
    %2159 = vmatpush1.bf16.msra.mxu0 %v2137
    %2160 = vmatprep.subr.bf16.mxu0 0
    %2161 = vmatpush1.bf16.msra.mxu0 %v2138
    %2162 = vmatprep.subr.bf16.mxu0 0
    %2163 = vmatpush1.bf16.msra.mxu0 %v2139
    %2164 = vmatprep.subr.bf16.mxu0 0
    %2165 = vmatpush1.bf16.msra.mxu0 0
    %2166 = vmatprep.subr.bf16.mxu0 0
    %2167 = vmatpush1.bf16.msra.mxu0 0
    %2168 = vmatprep.subr.bf16.mxu0 0
    %2169 = vmatpush1.bf16.msra.mxu0 0
    %2170 = vmatprep.subr.bf16.mxu0 0
    %2171 = vmatpush1.bf16.msra.mxu0 0
    %2172 = vmatprep.subr.bf16.mxu0 0
    %2173 = vmatpush1.bf16.msra.mxu0 0
    %2174 = vmatprep.subr.bf16.mxu0 0
    %2175 = vmatpush1.bf16.msra.mxu0 0
    %2176 = vmatprep.subr.bf16.mxu0 0
    %2177 = vmatpush1.bf16.msra.mxu0 0
    %2178 = vmatprep.subr.bf16.mxu0 0
    %2179 = vmatpush1.bf16.msra.mxu0 0
    %2180 = vmatprep.mubr.bf16.mxu0 0
    %2181 = vmatmul.mubr.bf16.gmra.mrb[0].mxu0 %v2071
    %v2182 = vpop.f32.mrb[0].mxu0
    %v2183 = vadd.f32 0.0, %v2182
    %v2184 = vpop.f32.mrb[0].mxu0
    %v2185 = vpop.f32.mrb[0].mxu0
    %v2186 = vadd.f32 0.0, %v2185
    %v2187 = vpop.f32.mrb[0].mxu0
    %2188 = vmatprep.mubr.bf16.mxu0 0
    %2189 = vmatmul.mubr.bf16.gmra.mrb[0].mxu0 %v2072
    %v2190 = vpop.f32.mrb[0].mxu0
    %v2191 = vadd.f32 0.0, %v2190
    %v2192 = vpop.f32.mrb[0].mxu0
    %v2193 = vpop.f32.mrb[0].mxu0
    %v2194 = vadd.f32 0.0, %v2193
    %v2195 = vpop.f32.mrb[0].mxu0
    %2196 = vmatprep.mubr.bf16.mxu0 0
    %2197 = vmatmul.mubr.bf16.gmra.mrb[0].mxu0 %v2073
    %v2198 = vpop.f32.mrb[0].mxu0
    %v2199 = vadd.f32 0.0, %v2198
    %v2200 = vpop.f32.mrb[0].mxu0
    %v2201 = vpop.f32.mrb[0].mxu0
    %v2202 = vadd.f32 0.0, %v2201
    %v2203 = vpop.f32.mrb[0].mxu0
    %2204 = vmatprep.mubr.bf16.mxu0 0
    %2205 = vmatmul.mubr.bf16.gmra.mrb[0].mxu0 %v2074
    %v2206 = vpop.f32.mrb[0].mxu0
    %v2207 = vadd.f32 0.0, %v2206
    %v2208 = vpop.f32.mrb[0].mxu0
    %v2209 = vpop.f32.mrb[0].mxu0
    %v2210 = vadd.f32 0.0, %v2209
    %v2211 = vpop.f32.mrb[0].mxu0
    %2212 = vmatprep.mubr.bf16.mxu0 0
    %2213 = vmatmul.mubr.bf16.gmra.mrb[0].mxu0 %v2075
    %v2214 = vpop.f32.mrb[0].mxu0
    %v2215 = vadd.f32 0.0, %v2214
    %v2216 = vpop.f32.mrb[0].mxu0
    %v2217 = vpop.f32.mrb[0].mxu0
    %v2218 = vadd.f32 0.0, %v2217
    %v2219 = vpop.f32.mrb[0].mxu0
    %2220 = vmatprep.mubr.bf16.mxu0 0
    %2221 = vmatmul.mubr.bf16.gmra.mrb[0].mxu0 %v2076
    %v2222 = vpop.f32.mrb[0].mxu0
    %v2223 = vadd.f32 0.0, %v2222
    %v2224 = vpop.f32.mrb[0].mxu0
    %v2225 = vpop.f32.mrb[0].mxu0
    %v2226 = vadd.f32 0.0, %v2225
    %v2227 = vpop.f32.mrb[0].mxu0
    %2228 = vmatprep.mubr.bf16.mxu0 0
    %2229 = vmatmul.mubr.bf16.gmra.mrb[0].mxu0 %v2077
    %v2230 = vpop.f32.mrb[0].mxu0
    %v2231 = vadd.f32 0.0, %v2230
    %v2232 = vpop.f32.mrb[0].mxu0
    %v2233 = vpop.f32.mrb[0].mxu0
    %v2234 = vadd.f32 0.0, %v2233
    %v2235 = vpop.f32.mrb[0].mxu0
    %2236 = vmatprep.mubr.bf16.mxu0 0
    %2237 = vmatmul.mubr.bf16.gmra.mrb[0].mxu0 %v2078
    %v2238 = vpop.f32.mrb[0].mxu0
    %v2239 = vadd.f32 0.0, %v2238
    %v2240 = vpop.f32.mrb[0].mxu0
    %v2241 = vpop.f32.mrb[0].mxu0
    %v2242 = vadd.f32 0.0, %v2241
    %v2243 = vpop.f32.mrb[0].mxu0
    %2244 = vmatprep.mubr.bf16.mxu0 0
    %2245 = vmatmul.mubr.bf16.gmra.mrb[0].mxu0 %v2079
    %v2246 = vpop.f32.mrb[0].mxu0
    %v2247 = vadd.f32 0.0, %v2246
    %v2248 = vpop.f32.mrb[0].mxu0
    %v2249 = vpop.f32.mrb[0].mxu0
    %v2250 = vadd.f32 0.0, %v2249
    %v2251 = vpop.f32.mrb[0].mxu0
    %2252 = vmatprep.mubr.bf16.mxu0 0
    %2253 = vmatmul.mubr.bf16.gmra.mrb[0].mxu0 %v2080
    %v2254 = vpop.f32.mrb[0].mxu0
    %v2255 = vadd.f32 0.0, %v2254
    %v2256 = vpop.f32.mrb[0].mxu0
    %v2257 = vpop.f32.mrb[0].mxu0
    %v2258 = vadd.f32 0.0, %v2257
    %v2259 = vpop.f32.mrb[0].mxu0
    %2260 = vmatprep.mubr.bf16.mxu0 0
    %2261 = vmatmul.mubr.bf16.gmra.mrb[0].mxu0 %v2081
    %v2262 = vpop.f32.mrb[0].mxu0
    %v2263 = vadd.f32 0.0, %v2262
    %v2264 = vpop.f32.mrb[0].mxu0
    %v2265 = vpop.f32.mrb[0].mxu0
    %v2266 = vadd.f32 0.0, %v2265
    %v2267 = vpop.f32.mrb[0].mxu0
    %2268 = vmatprep.mubr.bf16.mxu0 0
    %2269 = vmatmul.mubr.bf16.gmra.mrb[0].mxu0 %v2082
    %v2270 = vpop.f32.mrb[0].mxu0
    %v2271 = vadd.f32 0.0, %v2270
    %v2272 = vpop.f32.mrb[0].mxu0
    %v2273 = vpop.f32.mrb[0].mxu0
    %v2274 = vadd.f32 0.0, %v2273
    %v2275 = vpop.f32.mrb[0].mxu0
    %2276 = vdwg.mxu0
    %v2277 = vadd.f32 %v2046, %v2183
    %v2278 = vadd.f32 %v2047, %v2186
    %v2279 = vadd.f32 %v2048, %v2191
    %v2280 = vadd.f32 %v2049, %v2194
    %v2281 = vadd.f32 %v2050, %v2199
    %v2282 = vadd.f32 %v2051, %v2202
    %v2283 = vadd.f32 %v2052, %v2207
    %v2284 = vadd.f32 %v2053, %v2210
    %v2285 = vadd.f32 %v2054, %v2215
    %v2286 = vadd.f32 %v2055, %v2218
    %v2287 = vadd.f32 %v2056, %v2223
    %v2288 = vadd.f32 %v2057, %v2226
    %v2289 = vadd.f32 %v2058, %v2231
    %v2290 = vadd.f32 %v2059, %v2234
    %v2291 = vadd.f32 %v2060, %v2239
    %v2292 = vadd.f32 %v2061, %v2242
    %v2293 = vadd.f32 %v2062, %v2247
    %v2294 = vadd.f32 %v2063, %v2250
    %v2295 = vadd.f32 %v2064, %v2255
    %v2296 = vadd.f32 %v2065, %v2258
    %v2297 = vadd.f32 %v2066, %v2263
    %v2298 = vadd.f32 %v2067, %v2266
    %v2299 = vadd.f32 %v2068, %v2271
    %v2300 = vadd.f32 %v2069, %v2274
    %s2301 = scalar_lea.vmem [#allocation2], 16
    %v2302 = vld [vmem:[%s2301] sm:$0xff]
    %v2303 = vld [vmem:[%s2301 + $0x8] sm:$0xff]
    %v2304 = vld [vmem:[%s2301 + $0x10] sm:$0xff]
    %v2305 = vld [vmem:[%s2301 + $0x18] sm:$0xff]
    %v2306 = vld [vmem:[%s2301 + $0x20] sm:$0xff]
    %v2307 = vld [vmem:[%s2301 + $0x28] sm:$0xff]
    %v2308 = vld [vmem:[%s2301 + $0x30] sm:$0xff]
    %v2309 = vld [vmem:[%s2301 + $0x38] sm:$0xff]
    %v2310 = vld [vmem:[%s2301 + $0x40] sm:$0xff]
    %v2311 = vld [vmem:[%s2301 + $0x48] sm:$0xff]
    %v2312 = vld [vmem:[%s2301 + $0x50] sm:$0xff]
    %v2313 = vld [vmem:[%s2301 + $0x58] sm:$0xff]
    %s2314 = scalar_lea.vmem [#allocation9], 384
    %v2315 = vld [vmem:[%s2314] sm:$0xf]
    %v2316 = vld [vmem:[%s2314 + $0x4] sm:$0xf]
    %v2317 = vld [vmem:[%s2314 + $0x8] sm:$0xf]
    %v2318 = vld [vmem:[%s2314 + $0xc] sm:$0xf]
    %v2319 = vld [vmem:[%s2314 + $0x10] sm:$0xf]
    %v2320 = vld [vmem:[%s2314 + $0x14] sm:$0xf]
    %v2321 = vld [vmem:[%s2314 + $0x18] sm:$0xf]
    %v2322 = vld [vmem:[%s2314 + $0x1c] sm:$0xf]
    %v2323 = vld [vmem:[%s2314 + $0x20] sm:$0xf]
    %v2324 = vld [vmem:[%s2314 + $0x24] sm:$0xf]
    %v2325 = vld [vmem:[%s2314 + $0x28] sm:$0xf]
    %v2326 = vld [vmem:[%s2314 + $0x2c] sm:$0xf]
    %v2327 = vld [vmem:[%s2314 + $0x30] sm:$0xf]
    %v2328 = vld [vmem:[%s2314 + $0x34] sm:$0xf]
    %v2329 = vld [vmem:[%s2314 + $0x38] sm:$0xf]
    %v2330 = vld [vmem:[%s2314 + $0x3c] sm:$0xf]
    %v2347 = vunpack.c.l.b16 %v2315
    %v2348 = vunpack.c.l.b16 %v2316
    %v2349 = vunpack.c.l.b16 %v2317
    %v2350 = vunpack.c.l.b16 %v2318
    %v2351 = vunpack.c.l.b16 %v2319
    %v2352 = vunpack.c.l.b16 %v2320
    %v2353 = vunpack.c.l.b16 %v2321
    %v2354 = vunpack.c.l.b16 %v2322
    %v2355 = vunpack.c.l.b16 %v2323
    %v2356 = vunpack.c.l.b16 %v2324
    %v2357 = vunpack.c.l.b16 %v2325
    %v2358 = vunpack.c.l.b16 %v2326
    %v2359 = vunpack.c.l.b16 %v2327
    %v2360 = vunpack.c.l.b16 %v2328
    %v2361 = vunpack.c.l.b16 %v2329
    %v2362 = vunpack.c.l.b16 %v2330
    %v2363 = vpack.c.b16 %v2348, %v2347
    %v2364 = vpack.c.b16 %v2350, %v2349
    %v2365 = vpack.c.b16 %v2352, %v2351
    %v2366 = vpack.c.b16 %v2354, %v2353
    %v2367 = vpack.c.b16 %v2356, %v2355
    %v2368 = vpack.c.b16 %v2358, %v2357
    %v2369 = vpack.c.b16 %v2360, %v2359
    %v2370 = vpack.c.b16 %v2362, %v2361
    %2379 = vmatprep.subr.bf16.mxu0 0
    %2380 = vmatpush1.bf16.msra.mxu0 %v2363
    %2381 = vmatprep.subr.bf16.mxu0 0
    %2382 = vmatpush1.bf16.msra.mxu0 %v2364
    %2383 = vmatprep.subr.bf16.mxu0 0
    %2384 = vmatpush1.bf16.msra.mxu0 %v2365
    %2385 = vmatprep.subr.bf16.mxu0 0
    %2386 = vmatpush1.bf16.msra.mxu0 %v2366
    %2387 = vmatprep.subr.bf16.mxu0 0
    %2388 = vmatpush1.bf16.msra.mxu0 %v2367
    %2389 = vmatprep.subr.bf16.mxu0 0
    %2390 = vmatpush1.bf16.msra.mxu0 %v2368
    %2391 = vmatprep.subr.bf16.mxu0 0
    %2392 = vmatpush1.bf16.msra.mxu0 %v2369
    %2393 = vmatprep.subr.bf16.mxu0 0
    %2394 = vmatpush1.bf16.msra.mxu0 %v2370
    %2395 = vmatprep.subr.bf16.mxu0 0
    %2396 = vmatpush1.bf16.msra.mxu0 0
    %2397 = vmatprep.subr.bf16.mxu0 0
    %2398 = vmatpush1.bf16.msra.mxu0 0
    %2399 = vmatprep.subr.bf16.mxu0 0
    %2400 = vmatpush1.bf16.msra.mxu0 0
    %2401 = vmatprep.subr.bf16.mxu0 0
    %2402 = vmatpush1.bf16.msra.mxu0 0
    %2403 = vmatprep.subr.bf16.mxu0 0
    %2404 = vmatpush1.bf16.msra.mxu0 0
    %2405 = vmatprep.subr.bf16.mxu0 0
    %2406 = vmatpush1.bf16.msra.mxu0 0
    %2407 = vmatprep.subr.bf16.mxu0 0
    %2408 = vmatpush1.bf16.msra.mxu0 0
    %2409 = vmatprep.subr.bf16.mxu0 0
    %2410 = vmatpush1.bf16.msra.mxu0 0
    %2411 = vmatprep.mubr.bf16.mxu0 0
    %2412 = vmatmul.mubr.bf16.gmra.mrb[0].mxu0 %v2302
    %v2413 = vpop.f32.mrb[0].mxu0
    %v2414 = vadd.f32 0.0, %v2413
    %v2415 = vpop.f32.mrb[0].mxu0
    %v2416 = vpop.f32.mrb[0].mxu0
    %v2417 = vadd.f32 0.0, %v2416
    %v2418 = vpop.f32.mrb[0].mxu0
    %2419 = vmatprep.mubr.bf16.mxu0 0
    %2420 = vmatmul.mubr.bf16.gmra.mrb[0].mxu0 %v2303
    %v2421 = vpop.f32.mrb[0].mxu0
    %v2422 = vadd.f32 0.0, %v2421
    %v2423 = vpop.f32.mrb[0].mxu0
    %v2424 = vpop.f32.mrb[0].mxu0
    %v2425 = vadd.f32 0.0, %v2424
    %v2426 = vpop.f32.mrb[0].mxu0
    %2427 = vmatprep.mubr.bf16.mxu0 0
    %2428 = vmatmul.mubr.bf16.gmra.mrb[0].mxu0 %v2304
    %v2429 = vpop.f32.mrb[0].mxu0
    %v2430 = vadd.f32 0.0, %v2429
    %v2431 = vpop.f32.mrb[0].mxu0
    %v2432 = vpop.f32.mrb[0].mxu0
    %v2433 = vadd.f32 0.0, %v2432
    %v2434 = vpop.f32.mrb[0].mxu0
    %2435 = vmatprep.mubr.bf16.mxu0 0
    %2436 = vmatmul.mubr.bf16.gmra.mrb[0].mxu0 %v2305
    %v2437 = vpop.f32.mrb[0].mxu0
    %v2438 = vadd.f32 0.0, %v2437
    %v2439 = vpop.f32.mrb[0].mxu0
    %v2440 = vpop.f32.mrb[0].mxu0
    %v2441 = vadd.f32 0.0, %v2440
    %v2442 = vpop.f32.mrb[0].mxu0
    %2443 = vmatprep.mubr.bf16.mxu0 0
    %2444 = vmatmul.mubr.bf16.gmra.mrb[0].mxu0 %v2306
    %v2445 = vpop.f32.mrb[0].mxu0
    %v2446 = vadd.f32 0.0, %v2445
    %v2447 = vpop.f32.mrb[0].mxu0
    %v2448 = vpop.f32.mrb[0].mxu0
    %v2449 = vadd.f32 0.0, %v2448
    %v2450 = vpop.f32.mrb[0].mxu0
    %2451 = vmatprep.mubr.bf16.mxu0 0
    %2452 = vmatmul.mubr.bf16.gmra.mrb[0].mxu0 %v2307
    %v2453 = vpop.f32.mrb[0].mxu0
    %v2454 = vadd.f32 0.0, %v2453
    %v2455 = vpop.f32.mrb[0].mxu0
    %v2456 = vpop.f32.mrb[0].mxu0
    %v2457 = vadd.f32 0.0, %v2456
    %v2458 = vpop.f32.mrb[0].mxu0
    %2459 = vmatprep.mubr.bf16.mxu0 0
    %2460 = vmatmul.mubr.bf16.gmra.mrb[0].mxu0 %v2308
    %v2461 = vpop.f32.mrb[0].mxu0
    %v2462 = vadd.f32 0.0, %v2461
    %v2463 = vpop.f32.mrb[0].mxu0
    %v2464 = vpop.f32.mrb[0].mxu0
    %v2465 = vadd.f32 0.0, %v2464
    %v2466 = vpop.f32.mrb[0].mxu0
    %2467 = vmatprep.mubr.bf16.mxu0 0
    %2468 = vmatmul.mubr.bf16.gmra.mrb[0].mxu0 %v2309
    %v2469 = vpop.f32.mrb[0].mxu0
    %v2470 = vadd.f32 0.0, %v2469
    %v2471 = vpop.f32.mrb[0].mxu0
    %v2472 = vpop.f32.mrb[0].mxu0
    %v2473 = vadd.f32 0.0, %v2472
    %v2474 = vpop.f32.mrb[0].mxu0
    %2475 = vmatprep.mubr.bf16.mxu0 0
    %2476 = vmatmul.mubr.bf16.gmra.mrb[0].mxu0 %v2310
    %v2477 = vpop.f32.mrb[0].mxu0
    %v2478 = vadd.f32 0.0, %v2477
    %v2479 = vpop.f32.mrb[0].mxu0
    %v2480 = vpop.f32.mrb[0].mxu0
    %v2481 = vadd.f32 0.0, %v2480
    %v2482 = vpop.f32.mrb[0].mxu0
    %2483 = vmatprep.mubr.bf16.mxu0 0
    %2484 = vmatmul.mubr.bf16.gmra.mrb[0].mxu0 %v2311
    %v2485 = vpop.f32.mrb[0].mxu0
    %v2486 = vadd.f32 0.0, %v2485
    %v2487 = vpop.f32.mrb[0].mxu0
    %v2488 = vpop.f32.mrb[0].mxu0
    %v2489 = vadd.f32 0.0, %v2488
    %v2490 = vpop.f32.mrb[0].mxu0
    %2491 = vmatprep.mubr.bf16.mxu0 0
    %2492 = vmatmul.mubr.bf16.gmra.mrb[0].mxu0 %v2312
    %v2493 = vpop.f32.mrb[0].mxu0
    %v2494 = vadd.f32 0.0, %v2493
    %v2495 = vpop.f32.mrb[0].mxu0
    %v2496 = vpop.f32.mrb[0].mxu0
    %v2497 = vadd.f32 0.0, %v2496
    %v2498 = vpop.f32.mrb[0].mxu0
    %2499 = vmatprep.mubr.bf16.mxu0 0
    %2500 = vmatmul.mubr.bf16.gmra.mrb[0].mxu0 %v2313
    %v2501 = vpop.f32.mrb[0].mxu0
    %v2502 = vadd.f32 0.0, %v2501
    %v2503 = vpop.f32.mrb[0].mxu0
    %v2504 = vpop.f32.mrb[0].mxu0
    %v2505 = vadd.f32 0.0, %v2504
    %v2506 = vpop.f32.mrb[0].mxu0
    %2507 = vdwg.mxu0
    %v2508 = vadd.f32 %v2277, %v2414
    %v2509 = vadd.f32 %v2278, %v2417
    %v2510 = vadd.f32 %v2279, %v2422
    %v2511 = vadd.f32 %v2280, %v2425
    %v2512 = vadd.f32 %v2281, %v2430
    %v2513 = vadd.f32 %v2282, %v2433
    %v2514 = vadd.f32 %v2283, %v2438
    %v2515 = vadd.f32 %v2284, %v2441
    %v2516 = vadd.f32 %v2285, %v2446
    %v2517 = vadd.f32 %v2286, %v2449
    %v2518 = vadd.f32 %v2287, %v2454
    %v2519 = vadd.f32 %v2288, %v2457
    %v2520 = vadd.f32 %v2289, %v2462
    %v2521 = vadd.f32 %v2290, %v2465
    %v2522 = vadd.f32 %v2291, %v2470
    %v2523 = vadd.f32 %v2292, %v2473
    %v2524 = vadd.f32 %v2293, %v2478
    %v2525 = vadd.f32 %v2294, %v2481
    %v2526 = vadd.f32 %v2295, %v2486
    %v2527 = vadd.f32 %v2296, %v2489
    %v2528 = vadd.f32 %v2297, %v2494
    %v2529 = vadd.f32 %v2298, %v2497
    %v2530 = vadd.f32 %v2299, %v2502
    %v2531 = vadd.f32 %v2300, %v2505
    %s2532 = scalar_lea.vmem [#allocation2], 128
    %v2533 = vld [vmem:[%s2532] sm:$0xff]
    %v2534 = vld [vmem:[%s2532 + $0x8] sm:$0xff]
    %v2535 = vld [vmem:[%s2532 + $0x10] sm:$0xff]
    %v2536 = vld [vmem:[%s2532 + $0x18] sm:$0xff]
    %v2537 = vld [vmem:[%s2532 + $0x20] sm:$0xff]
    %v2538 = vld [vmem:[%s2532 + $0x28] sm:$0xff]
    %v2539 = vld [vmem:[%s2532 + $0x30] sm:$0xff]
    %v2540 = vld [vmem:[%s2532 + $0x38] sm:$0xff]
    %v2541 = vld [vmem:[%s2532 + $0x40] sm:$0xff]
    %v2542 = vld [vmem:[%s2532 + $0x48] sm:$0xff]
    %v2543 = vld [vmem:[%s2532 + $0x50] sm:$0xff]
    %v2544 = vld [vmem:[%s2532 + $0x58] sm:$0xff]
    %s2545 = scalar_lea.vmem [#allocation9], 448
    %v2546 = vld [vmem:[%s2545] sm:$0xf]
    %v2547 = vld [vmem:[%s2545 + $0x4] sm:$0xf]
    %v2548 = vld [vmem:[%s2545 + $0x8] sm:$0xf]
    %v2549 = vld [vmem:[%s2545 + $0xc] sm:$0xf]
    %v2550 = vld [vmem:[%s2545 + $0x10] sm:$0xf]
    %v2551 = vld [vmem:[%s2545 + $0x14] sm:$0xf]
    %v2552 = vld [vmem:[%s2545 + $0x18] sm:$0xf]
    %v2553 = vld [vmem:[%s2545 + $0x1c] sm:$0xf]
    %v2554 = vld [vmem:[%s2545 + $0x20] sm:$0xf]
    %v2555 = vld [vmem:[%s2545 + $0x24] sm:$0xf]
    %v2556 = vld [vmem:[%s2545 + $0x28] sm:$0xf]
    %v2557 = vld [vmem:[%s2545 + $0x2c] sm:$0xf]
    %v2558 = vld [vmem:[%s2545 + $0x30] sm:$0xf]
    %v2559 = vld [vmem:[%s2545 + $0x34] sm:$0xf]
    %v2560 = vld [vmem:[%s2545 + $0x38] sm:$0xf]
    %v2561 = vld [vmem:[%s2545 + $0x3c] sm:$0xf]
    %v2578 = vunpack.c.l.b16 %v2546
    %v2579 = vunpack.c.l.b16 %v2547
    %v2580 = vunpack.c.l.b16 %v2548
    %v2581 = vunpack.c.l.b16 %v2549
    %v2582 = vunpack.c.l.b16 %v2550
    %v2583 = vunpack.c.l.b16 %v2551
    %v2584 = vunpack.c.l.b16 %v2552
    %v2585 = vunpack.c.l.b16 %v2553
    %v2586 = vunpack.c.l.b16 %v2554
    %v2587 = vunpack.c.l.b16 %v2555
    %v2588 = vunpack.c.l.b16 %v2556
    %v2589 = vunpack.c.l.b16 %v2557
    %v2590 = vunpack.c.l.b16 %v2558
    %v2591 = vunpack.c.l.b16 %v2559
    %v2592 = vunpack.c.l.b16 %v2560
    %v2593 = vunpack.c.l.b16 %v2561
    %v2594 = vpack.c.b16 %v2579, %v2578
    %v2595 = vpack.c.b16 %v2581, %v2580
    %v2596 = vpack.c.b16 %v2583, %v2582
    %v2597 = vpack.c.b16 %v2585, %v2584
    %v2598 = vpack.c.b16 %v2587, %v2586
    %v2599 = vpack.c.b16 %v2589, %v2588
    %v2600 = vpack.c.b16 %v2591, %v2590
    %v2601 = vpack.c.b16 %v2593, %v2592
    %2610 = vmatprep.subr.bf16.mxu0 0
    %2611 = vmatpush1.bf16.msra.mxu0 %v2594
    %2612 = vmatprep.subr.bf16.mxu0 0
    %2613 = vmatpush1.bf16.msra.mxu0 %v2595
    %2614 = vmatprep.subr.bf16.mxu0 0
    %2615 = vmatpush1.bf16.msra.mxu0 %v2596
    %2616 = vmatprep.subr.bf16.mxu0 0
    %2617 = vmatpush1.bf16.msra.mxu0 %v2597
    %2618 = vmatprep.subr.bf16.mxu0 0
    %2619 = vmatpush1.bf16.msra.mxu0 %v2598
    %2620 = vmatprep.subr.bf16.mxu0 0
    %2621 = vmatpush1.bf16.msra.mxu0 %v2599
    %2622 = vmatprep.subr.bf16.mxu0 0
    %2623 = vmatpush1.bf16.msra.mxu0 %v2600
    %2624 = vmatprep.subr.bf16.mxu0 0
    %2625 = vmatpush1.bf16.msra.mxu0 %v2601
    %2626 = vmatprep.subr.bf16.mxu0 0
    %2627 = vmatpush1.bf16.msra.mxu0 0
    %2628 = vmatprep.subr.bf16.mxu0 0
    %2629 = vmatpush1.bf16.msra.mxu0 0
    %2630 = vmatprep.subr.bf16.mxu0 0
    %2631 = vmatpush1.bf16.msra.mxu0 0
    %2632 = vmatprep.subr.bf16.mxu0 0
    %2633 = vmatpush1.bf16.msra.mxu0 0
    %2634 = vmatprep.subr.bf16.mxu0 0
    %2635 = vmatpush1.bf16.msra.mxu0 0
    %2636 = vmatprep.subr.bf16.mxu0 0
    %2637 = vmatpush1.bf16.msra.mxu0 0
    %2638 = vmatprep.subr.bf16.mxu0 0
    %2639 = vmatpush1.bf16.msra.mxu0 0
    %2640 = vmatprep.subr.bf16.mxu0 0
    %2641 = vmatpush1.bf16.msra.mxu0 0
    %2642 = vmatprep.mubr.bf16.mxu0 0
    %2643 = vmatmul.mubr.bf16.gmra.mrb[0].mxu0 %v2533
    %v2644 = vpop.f32.mrb[0].mxu0
    %v2645 = vadd.f32 0.0, %v2644
    %v2646 = vpop.f32.mrb[0].mxu0
    %v2647 = vpop.f32.mrb[0].mxu0
    %v2648 = vadd.f32 0.0, %v2647
    %v2649 = vpop.f32.mrb[0].mxu0
    %2650 = vmatprep.mubr.bf16.mxu0 0
    %2651 = vmatmul.mubr.bf16.gmra.mrb[0].mxu0 %v2534
    %v2652 = vpop.f32.mrb[0].mxu0
    %v2653 = vadd.f32 0.0, %v2652
    %v2654 = vpop.f32.mrb[0].mxu0
    %v2655 = vpop.f32.mrb[0].mxu0
    %v2656 = vadd.f32 0.0, %v2655
    %v2657 = vpop.f32.mrb[0].mxu0
    %2658 = vmatprep.mubr.bf16.mxu0 0
    %2659 = vmatmul.mubr.bf16.gmra.mrb[0].mxu0 %v2535
    %v2660 = vpop.f32.mrb[0].mxu0
    %v2661 = vadd.f32 0.0, %v2660
    %v2662 = vpop.f32.mrb[0].mxu0
    %v2663 = vpop.f32.mrb[0].mxu0
    %v2664 = vadd.f32 0.0, %v2663
    %v2665 = vpop.f32.mrb[0].mxu0
    %2666 = vmatprep.mubr.bf16.mxu0 0
    %2667 = vmatmul.mubr.bf16.gmra.mrb[0].mxu0 %v2536
    %v2668 = vpop.f32.mrb[0].mxu0
    %v2669 = vadd.f32 0.0, %v2668
    %v2670 = vpop.f32.mrb[0].mxu0
    %v2671 = vpop.f32.mrb[0].mxu0
    %v2672 = vadd.f32 0.0, %v2671
    %v2673 = vpop.f32.mrb[0].mxu0
    %2674 = vmatprep.mubr.bf16.mxu0 0
    %2675 = vmatmul.mubr.bf16.gmra.mrb[0].mxu0 %v2537
    %v2676 = vpop.f32.mrb[0].mxu0
    %v2677 = vadd.f32 0.0, %v2676
    %v2678 = vpop.f32.mrb[0].mxu0
    %v2679 = vpop.f32.mrb[0].mxu0
    %v2680 = vadd.f32 0.0, %v2679
    %v2681 = vpop.f32.mrb[0].mxu0
    %2682 = vmatprep.mubr.bf16.mxu0 0
    %2683 = vmatmul.mubr.bf16.gmra.mrb[0].mxu0 %v2538
    %v2684 = vpop.f32.mrb[0].mxu0
    %v2685 = vadd.f32 0.0, %v2684
    %v2686 = vpop.f32.mrb[0].mxu0
    %v2687 = vpop.f32.mrb[0].mxu0
    %v2688 = vadd.f32 0.0, %v2687
    %v2689 = vpop.f32.mrb[0].mxu0
    %2690 = vmatprep.mubr.bf16.mxu0 0
    %2691 = vmatmul.mubr.bf16.gmra.mrb[0].mxu0 %v2539
    %v2692 = vpop.f32.mrb[0].mxu0
    %v2693 = vadd.f32 0.0, %v2692
    %v2694 = vpop.f32.mrb[0].mxu0
    %v2695 = vpop.f32.mrb[0].mxu0
    %v2696 = vadd.f32 0.0, %v2695
    %v2697 = vpop.f32.mrb[0].mxu0
    %2698 = vmatprep.mubr.bf16.mxu0 0
    %2699 = vmatmul.mubr.bf16.gmra.mrb[0].mxu0 %v2540
    %v2700 = vpop.f32.mrb[0].mxu0
    %v2701 = vadd.f32 0.0, %v2700
    %v2702 = vpop.f32.mrb[0].mxu0
    %v2703 = vpop.f32.mrb[0].mxu0
    %v2704 = vadd.f32 0.0, %v2703
    %v2705 = vpop.f32.mrb[0].mxu0
    %2706 = vmatprep.mubr.bf16.mxu0 0
    %2707 = vmatmul.mubr.bf16.gmra.mrb[0].mxu0 %v2541
    %v2708 = vpop.f32.mrb[0].mxu0
    %v2709 = vadd.f32 0.0, %v2708
    %v2710 = vpop.f32.mrb[0].mxu0
    %v2711 = vpop.f32.mrb[0].mxu0
    %v2712 = vadd.f32 0.0, %v2711
    %v2713 = vpop.f32.mrb[0].mxu0
    %2714 = vmatprep.mubr.bf16.mxu0 0
    %2715 = vmatmul.mubr.bf16.gmra.mrb[0].mxu0 %v2542
    %v2716 = vpop.f32.mrb[0].mxu0
    %v2717 = vadd.f32 0.0, %v2716
    %v2718 = vpop.f32.mrb[0].mxu0
    %v2719 = vpop.f32.mrb[0].mxu0
    %v2720 = vadd.f32 0.0, %v2719
    %v2721 = vpop.f32.mrb[0].mxu0
    %2722 = vmatprep.mubr.bf16.mxu0 0
    %2723 = vmatmul.mubr.bf16.gmra.mrb[0].mxu0 %v2543
    %v2724 = vpop.f32.mrb[0].mxu0
    %v2725 = vadd.f32 0.0, %v2724
    %v2726 = vpop.f32.mrb[0].mxu0
    %v2727 = vpop.f32.mrb[0].mxu0
    %v2728 = vadd.f32 0.0, %v2727
    %v2729 = vpop.f32.mrb[0].mxu0
    %2730 = vmatprep.mubr.bf16.mxu0 0
    %2731 = vmatmul.mubr.bf16.gmra.mrb[0].mxu0 %v2544
    %v2732 = vpop.f32.mrb[0].mxu0
    %v2733 = vadd.f32 0.0, %v2732
    %v2734 = vpop.f32.mrb[0].mxu0
    %v2735 = vpop.f32.mrb[0].mxu0
    %v2736 = vadd.f32 0.0, %v2735
    %v2737 = vpop.f32.mrb[0].mxu0
    %2738 = vdwg.mxu0
    %v2739 = vadd.f32 %v2508, %v2645
    %v2740 = vadd.f32 %v2509, %v2648
    %v2741 = vadd.f32 %v2510, %v2653
    %v2742 = vadd.f32 %v2511, %v2656
    %v2743 = vadd.f32 %v2512, %v2661
    %v2744 = vadd.f32 %v2513, %v2664
    %v2745 = vadd.f32 %v2514, %v2669
    %v2746 = vadd.f32 %v2515, %v2672
    %v2747 = vadd.f32 %v2516, %v2677
    %v2748 = vadd.f32 %v2517, %v2680
    %v2749 = vadd.f32 %v2518, %v2685
    %v2750 = vadd.f32 %v2519, %v2688
    %v2751 = vadd.f32 %v2520, %v2693
    %v2752 = vadd.f32 %v2521, %v2696
    %v2753 = vadd.f32 %v2522, %v2701
    %v2754 = vadd.f32 %v2523, %v2704
    %v2755 = vadd.f32 %v2524, %v2709
    %v2756 = vadd.f32 %v2525, %v2712
    %v2757 = vadd.f32 %v2526, %v2717
    %v2758 = vadd.f32 %v2527, %v2720
    %v2759 = vadd.f32 %v2528, %v2725
    %v2760 = vadd.f32 %v2529, %v2728
    %v2761 = vadd.f32 %v2530, %v2733
    %v2762 = vadd.f32 %v2531, %v2736
    %s2763 = scalar_lea.vmem [#allocation2], 240
    %v2764 = vld [vmem:[%s2763] sm:$0xff]
    %v2765 = vld [vmem:[%s2763 + $0x8] sm:$0xff]
    %v2766 = vld [vmem:[%s2763 + $0x10] sm:$0xff]
    %v2767 = vld [vmem:[%s2763 + $0x18] sm:$0xff]
    %v2768 = vld [vmem:[%s2763 + $0x20] sm:$0xff]
    %v2769 = vld [vmem:[%s2763 + $0x28] sm:$0xff]
    %v2770 = vld [vmem:[%s2763 + $0x30] sm:$0xff]
    %v2771 = vld [vmem:[%s2763 + $0x38] sm:$0xff]
    %v2772 = vld [vmem:[%s2763 + $0x40] sm:$0xff]
    %v2773 = vld [vmem:[%s2763 + $0x48] sm:$0xff]
    %v2774 = vld [vmem:[%s2763 + $0x50] sm:$0xff]
    %v2775 = vld [vmem:[%s2763 + $0x58] sm:$0xff]
    %s2776 = scalar_lea.vmem [#allocation9], 512
    %v2777 = vld [vmem:[%s2776] sm:$0xf]
    %v2778 = vld [vmem:[%s2776 + $0x4] sm:$0xf]
    %v2779 = vld [vmem:[%s2776 + $0x8] sm:$0xf]
    %v2780 = vld [vmem:[%s2776 + $0xc] sm:$0xf]
    %v2781 = vld [vmem:[%s2776 + $0x10] sm:$0xf]
    %v2782 = vld [vmem:[%s2776 + $0x14] sm:$0xf]
    %v2783 = vld [vmem:[%s2776 + $0x18] sm:$0xf]
    %v2784 = vld [vmem:[%s2776 + $0x1c] sm:$0xf]
    %v2785 = vld [vmem:[%s2776 + $0x20] sm:$0xf]
    %v2786 = vld [vmem:[%s2776 + $0x24] sm:$0xf]
    %v2787 = vld [vmem:[%s2776 + $0x28] sm:$0xf]
    %v2788 = vld [vmem:[%s2776 + $0x2c] sm:$0xf]
    %v2789 = vld [vmem:[%s2776 + $0x30] sm:$0xf]
    %v2790 = vld [vmem:[%s2776 + $0x34] sm:$0xf]
    %v2791 = vld [vmem:[%s2776 + $0x38] sm:$0xf]
    %v2792 = vld [vmem:[%s2776 + $0x3c] sm:$0xf]
    %v2809 = vunpack.c.l.b16 %v2777
    %v2810 = vunpack.c.l.b16 %v2778
    %v2811 = vunpack.c.l.b16 %v2779
    %v2812 = vunpack.c.l.b16 %v2780
    %v2813 = vunpack.c.l.b16 %v2781
    %v2814 = vunpack.c.l.b16 %v2782
    %v2815 = vunpack.c.l.b16 %v2783
    %v2816 = vunpack.c.l.b16 %v2784
    %v2817 = vunpack.c.l.b16 %v2785
    %v2818 = vunpack.c.l.b16 %v2786
    %v2819 = vunpack.c.l.b16 %v2787
    %v2820 = vunpack.c.l.b16 %v2788
    %v2821 = vunpack.c.l.b16 %v2789
    %v2822 = vunpack.c.l.b16 %v2790
    %v2823 = vunpack.c.l.b16 %v2791
    %v2824 = vunpack.c.l.b16 %v2792
    %v2825 = vpack.c.b16 %v2810, %v2809
    %v2826 = vpack.c.b16 %v2812, %v2811
    %v2827 = vpack.c.b16 %v2814, %v2813
    %v2828 = vpack.c.b16 %v2816, %v2815
    %v2829 = vpack.c.b16 %v2818, %v2817
    %v2830 = vpack.c.b16 %v2820, %v2819
    %v2831 = vpack.c.b16 %v2822, %v2821
    %v2832 = vpack.c.b16 %v2824, %v2823
    %2841 = vmatprep.subr.bf16.mxu0 0
    %2842 = vmatpush1.bf16.msra.mxu0 %v2825
    %2843 = vmatprep.subr.bf16.mxu0 0
    %2844 = vmatpush1.bf16.msra.mxu0 %v2826
    %2845 = vmatprep.subr.bf16.mxu0 0
    %2846 = vmatpush1.bf16.msra.mxu0 %v2827
    %2847 = vmatprep.subr.bf16.mxu0 0
    %2848 = vmatpush1.bf16.msra.mxu0 %v2828
    %2849 = vmatprep.subr.bf16.mxu0 0
    %2850 = vmatpush1.bf16.msra.mxu0 %v2829
    %2851 = vmatprep.subr.bf16.mxu0 0
    %2852 = vmatpush1.bf16.msra.mxu0 %v2830
    %2853 = vmatprep.subr.bf16.mxu0 0
    %2854 = vmatpush1.bf16.msra.mxu0 %v2831
    %2855 = vmatprep.subr.bf16.mxu0 0
    %2856 = vmatpush1.bf16.msra.mxu0 %v2832
    %2857 = vmatprep.subr.bf16.mxu0 0
    %2858 = vmatpush1.bf16.msra.mxu0 0
    %2859 = vmatprep.subr.bf16.mxu0 0
    %2860 = vmatpush1.bf16.msra.mxu0 0
    %2861 = vmatprep.subr.bf16.mxu0 0
    %2862 = vmatpush1.bf16.msra.mxu0 0
    %2863 = vmatprep.subr.bf16.mxu0 0
    %2864 = vmatpush1.bf16.msra.mxu0 0
    %2865 = vmatprep.subr.bf16.mxu0 0
    %2866 = vmatpush1.bf16.msra.mxu0 0
    %2867 = vmatprep.subr.bf16.mxu0 0
    %2868 = vmatpush1.bf16.msra.mxu0 0
    %2869 = vmatprep.subr.bf16.mxu0 0
    %2870 = vmatpush1.bf16.msra.mxu0 0
    %2871 = vmatprep.subr.bf16.mxu0 0
    %2872 = vmatpush1.bf16.msra.mxu0 0
    %2873 = vmatprep.mubr.bf16.mxu0 0
    %2874 = vmatmul.mubr.bf16.gmra.mrb[0].mxu0 %v2764
    %v2875 = vpop.f32.mrb[0].mxu0
    %v2876 = vadd.f32 0.0, %v2875
    %v2877 = vpop.f32.mrb[0].mxu0
    %v2878 = vpop.f32.mrb[0].mxu0
    %v2879 = vadd.f32 0.0, %v2878
    %v2880 = vpop.f32.mrb[0].mxu0
    %2881 = vmatprep.mubr.bf16.mxu0 0
    %2882 = vmatmul.mubr.bf16.gmra.mrb[0].mxu0 %v2765
    %v2883 = vpop.f32.mrb[0].mxu0
    %v2884 = vadd.f32 0.0, %v2883
    %v2885 = vpop.f32.mrb[0].mxu0
    %v2886 = vpop.f32.mrb[0].mxu0
    %v2887 = vadd.f32 0.0, %v2886
    %v2888 = vpop.f32.mrb[0].mxu0
    %2889 = vmatprep.mubr.bf16.mxu0 0
    %2890 = vmatmul.mubr.bf16.gmra.mrb[0].mxu0 %v2766
    %v2891 = vpop.f32.mrb[0].mxu0
    %v2892 = vadd.f32 0.0, %v2891
    %v2893 = vpop.f32.mrb[0].mxu0
    %v2894 = vpop.f32.mrb[0].mxu0
    %v2895 = vadd.f32 0.0, %v2894
    %v2896 = vpop.f32.mrb[0].mxu0
    %2897 = vmatprep.mubr.bf16.mxu0 0
    %2898 = vmatmul.mubr.bf16.gmra.mrb[0].mxu0 %v2767
    %v2899 = vpop.f32.mrb[0].mxu0
    %v2900 = vadd.f32 0.0, %v2899
    %v2901 = vpop.f32.mrb[0].mxu0
    %v2902 = vpop.f32.mrb[0].mxu0
    %v2903 = vadd.f32 0.0, %v2902
    %v2904 = vpop.f32.mrb[0].mxu0
    %2905 = vmatprep.mubr.bf16.mxu0 0
    %2906 = vmatmul.mubr.bf16.gmra.mrb[0].mxu0 %v2768
    %v2907 = vpop.f32.mrb[0].mxu0
    %v2908 = vadd.f32 0.0, %v2907
    %v2909 = vpop.f32.mrb[0].mxu0
    %v2910 = vpop.f32.mrb[0].mxu0
    %v2911 = vadd.f32 0.0, %v2910
    %v2912 = vpop.f32.mrb[0].mxu0
    %2913 = vmatprep.mubr.bf16.mxu0 0
    %2914 = vmatmul.mubr.bf16.gmra.mrb[0].mxu0 %v2769
    %v2915 = vpop.f32.mrb[0].mxu0
    %v2916 = vadd.f32 0.0, %v2915
    %v2917 = vpop.f32.mrb[0].mxu0
    %v2918 = vpop.f32.mrb[0].mxu0
    %v2919 = vadd.f32 0.0, %v2918
    %v2920 = vpop.f32.mrb[0].mxu0
    %2921 = vmatprep.mubr.bf16.mxu0 0
    %2922 = vmatmul.mubr.bf16.gmra.mrb[0].mxu0 %v2770
    %v2923 = vpop.f32.mrb[0].mxu0
    %v2924 = vadd.f32 0.0, %v2923
    %v2925 = vpop.f32.mrb[0].mxu0
    %v2926 = vpop.f32.mrb[0].mxu0
    %v2927 = vadd.f32 0.0, %v2926
    %v2928 = vpop.f32.mrb[0].mxu0
    %2929 = vmatprep.mubr.bf16.mxu0 0
    %2930 = vmatmul.mubr.bf16.gmra.mrb[0].mxu0 %v2771
    %v2931 = vpop.f32.mrb[0].mxu0
    %v2932 = vadd.f32 0.0, %v2931
    %v2933 = vpop.f32.mrb[0].mxu0
    %v2934 = vpop.f32.mrb[0].mxu0
    %v2935 = vadd.f32 0.0, %v2934
    %v2936 = vpop.f32.mrb[0].mxu0
    %2937 = vmatprep.mubr.bf16.mxu0 0
    %2938 = vmatmul.mubr.bf16.gmra.mrb[0].mxu0 %v2772
    %v2939 = vpop.f32.mrb[0].mxu0
    %v2940 = vadd.f32 0.0, %v2939
    %v2941 = vpop.f32.mrb[0].mxu0
    %v2942 = vpop.f32.mrb[0].mxu0
    %v2943 = vadd.f32 0.0, %v2942
    %v2944 = vpop.f32.mrb[0].mxu0
    %2945 = vmatprep.mubr.bf16.mxu0 0
    %2946 = vmatmul.mubr.bf16.gmra.mrb[0].mxu0 %v2773
    %v2947 = vpop.f32.mrb[0].mxu0
    %v2948 = vadd.f32 0.0, %v2947
    %v2949 = vpop.f32.mrb[0].mxu0
    %v2950 = vpop.f32.mrb[0].mxu0
    %v2951 = vadd.f32 0.0, %v2950
    %v2952 = vpop.f32.mrb[0].mxu0
    %2953 = vmatprep.mubr.bf16.mxu0 0
    %2954 = vmatmul.mubr.bf16.gmra.mrb[0].mxu0 %v2774
    %v2955 = vpop.f32.mrb[0].mxu0
    %v2956 = vadd.f32 0.0, %v2955
    %v2957 = vpop.f32.mrb[0].mxu0
    %v2958 = vpop.f32.mrb[0].mxu0
    %v2959 = vadd.f32 0.0, %v2958
    %v2960 = vpop.f32.mrb[0].mxu0
    %2961 = vmatprep.mubr.bf16.mxu0 0
    %2962 = vmatmul.mubr.bf16.gmra.mrb[0].mxu0 %v2775
    %v2963 = vpop.f32.mrb[0].mxu0
    %v2964 = vadd.f32 0.0, %v2963
    %v2965 = vpop.f32.mrb[0].mxu0
    %v2966 = vpop.f32.mrb[0].mxu0
    %v2967 = vadd.f32 0.0, %v2966
    %v2968 = vpop.f32.mrb[0].mxu0
    %2969 = vdwg.mxu0
    %v2970 = vadd.f32 %v2739, %v2876
    %v2971 = vadd.f32 %v2740, %v2879
    %v2972 = vadd.f32 %v2741, %v2884
    %v2973 = vadd.f32 %v2742, %v2887
    %v2974 = vadd.f32 %v2743, %v2892
    %v2975 = vadd.f32 %v2744, %v2895
    %v2976 = vadd.f32 %v2745, %v2900
    %v2977 = vadd.f32 %v2746, %v2903
    %v2978 = vadd.f32 %v2747, %v2908
    %v2979 = vadd.f32 %v2748, %v2911
    %v2980 = vadd.f32 %v2749, %v2916
    %v2981 = vadd.f32 %v2750, %v2919
    %v2982 = vadd.f32 %v2751, %v2924
    %v2983 = vadd.f32 %v2752, %v2927
    %v2984 = vadd.f32 %v2753, %v2932
    %v2985 = vadd.f32 %v2754, %v2935
    %v2986 = vadd.f32 %v2755, %v2940
    %v2987 = vadd.f32 %v2756, %v2943
    %v2988 = vadd.f32 %v2757, %v2948
    %v2989 = vadd.f32 %v2758, %v2951
    %v2990 = vadd.f32 %v2759, %v2956
    %v2991 = vadd.f32 %v2760, %v2959
    %v2992 = vadd.f32 %v2761, %v2964
    %v2993 = vadd.f32 %v2762, %v2967
    %v2994 = vld [vmem:[%s6] sm:$0x1]
    %v2996 = vlaneseq
    %v2997 = vshrl.u32 %v2996, 7
    %v2998 = vsub.s32 0, %v2997
    %v2999 = vrot.slane %v2994, %v2998
    %v3001 = vadd.f32 %v2970, %v2999
    %v3002 = vadd.f32 %v2971, %v2999
    %v3003 = vadd.f32 %v2972, %v2999
    %v3004 = vadd.f32 %v2973, %v2999
    %v3005 = vadd.f32 %v2974, %v2999
    %v3006 = vadd.f32 %v2975, %v2999
    %v3007 = vadd.f32 %v2976, %v2999
    %v3008 = vadd.f32 %v2977, %v2999
    %v3009 = vadd.f32 %v2978, %v2999
    %v3010 = vadd.f32 %v2979, %v2999
    %v3011 = vadd.f32 %v2980, %v2999
    %v3012 = vadd.f32 %v2981, %v2999
    %v3013 = vadd.f32 %v2982, %v2999
    %v3014 = vadd.f32 %v2983, %v2999
    %v3015 = vadd.f32 %v2984, %v2999
    %v3016 = vadd.f32 %v2985, %v2999
    %v3017 = vadd.f32 %v2986, %v2999
    %v3018 = vadd.f32 %v2987, %v2999
    %v3019 = vadd.f32 %v2988, %v2999
    %v3020 = vadd.f32 %v2989, %v2999
    %v3021 = vadd.f32 %v2990, %v2999
    %v3022 = vadd.f32 %v2991, %v2999
    %v3023 = vadd.f32 %v2992, %v2999
    %v3024 = vadd.f32 %v2993, %v2999
    %v3025 = vmax.f32 %v3001, 0.0
    %v3026 = vmax.f32 %v3002, 0.0
    %v3027 = vmax.f32 %v3003, 0.0
    %v3028 = vmax.f32 %v3004, 0.0
    %v3029 = vmax.f32 %v3005, 0.0
    %v3030 = vmax.f32 %v3006, 0.0
    %v3031 = vmax.f32 %v3007, 0.0
    %v3032 = vmax.f32 %v3008, 0.0
    %v3033 = vmax.f32 %v3009, 0.0
    %v3034 = vmax.f32 %v3010, 0.0
    %v3035 = vmax.f32 %v3011, 0.0
    %v3036 = vmax.f32 %v3012, 0.0
    %v3037 = vmax.f32 %v3013, 0.0
    %v3038 = vmax.f32 %v3014, 0.0
    %v3039 = vmax.f32 %v3015, 0.0
    %v3040 = vmax.f32 %v3016, 0.0
    %v3041 = vmax.f32 %v3017, 0.0
    %v3042 = vmax.f32 %v3018, 0.0
    %v3043 = vmax.f32 %v3019, 0.0
    %v3044 = vmax.f32 %v3020, 0.0
    %v3045 = vmax.f32 %v3021, 0.0
    %v3046 = vmax.f32 %v3022, 0.0
    %v3047 = vmax.f32 %v3023, 0.0
    %v3048 = vmax.f32 %v3024, 0.0
    %v3049 = vpack.c.bf16 %v3026, %v3025
    %v3050 = vpack.c.bf16 %v3028, %v3027
    %v3051 = vpack.c.bf16 %v3030, %v3029
    %v3052 = vpack.c.bf16 %v3032, %v3031
    %v3053 = vpack.c.bf16 %v3034, %v3033
    %v3054 = vpack.c.bf16 %v3036, %v3035
    %v3055 = vpack.c.bf16 %v3038, %v3037
    %v3056 = vpack.c.bf16 %v3040, %v3039
    %v3057 = vpack.c.bf16 %v3042, %v3041
    %v3058 = vpack.c.bf16 %v3044, %v3043
    %v3059 = vpack.c.bf16 %v3046, %v3045
    %v3060 = vpack.c.bf16 %v3048, %v3047
    %v3073 = vunpack.c.l.b16 %v3049
    %v3074 = vunpack.c.h.b16 %v3049
    %v3075 = vunpack.c.l.b16 %v3050
    %v3076 = vunpack.c.h.b16 %v3050
    %v3077 = vunpack.c.l.b16 %v3051
    %v3078 = vunpack.c.h.b16 %v3051
    %v3079 = vunpack.c.l.b16 %v3052
    %v3080 = vunpack.c.h.b16 %v3052
    %v3081 = vunpack.c.l.b16 %v3053
    %v3082 = vunpack.c.h.b16 %v3053
    %v3083 = vunpack.c.l.b16 %v3054
    %v3084 = vunpack.c.h.b16 %v3054
    %v3085 = vunpack.c.l.b16 %v3055
    %v3086 = vunpack.c.h.b16 %v3055
    %v3087 = vunpack.c.l.b16 %v3056
    %v3088 = vunpack.c.h.b16 %v3056
    %v3089 = vunpack.c.l.b16 %v3057
    %v3090 = vunpack.c.h.b16 %v3057
    %v3091 = vunpack.c.l.b16 %v3058
    %v3092 = vunpack.c.h.b16 %v3058
    %v3093 = vunpack.c.l.b16 %v3059
    %v3094 = vunpack.c.h.b16 %v3059
    %v3095 = vunpack.c.l.b16 %v3060
    %v3096 = vunpack.c.h.b16 %v3060
    %v3097 = vpack.c.b16 %v3073, %v3073
    %v3098 = vpack.c.b16 %v3074, %v3074
    %v3099 = vpack.c.b16 %v3075, %v3075
    %v3100 = vpack.c.b16 %v3076, %v3076
    %v3101 = vpack.c.b16 %v3077, %v3077
    %v3102 = vpack.c.b16 %v3078, %v3078
    %v3103 = vpack.c.b16 %v3079, %v3079
    %v3104 = vpack.c.b16 %v3080, %v3080
    %v3105 = vpack.c.b16 %v3081, %v3081
    %v3106 = vpack.c.b16 %v3082, %v3082
    %v3107 = vpack.c.b16 %v3083, %v3083
    %v3108 = vpack.c.b16 %v3084, %v3084
    %v3109 = vpack.c.b16 %v3085, %v3085
    %v3110 = vpack.c.b16 %v3086, %v3086
    %v3111 = vpack.c.b16 %v3087, %v3087
    %v3112 = vpack.c.b16 %v3088, %v3088
    %v3113 = vpack.c.b16 %v3089, %v3089
    %v3114 = vpack.c.b16 %v3090, %v3090
    %v3115 = vpack.c.b16 %v3091, %v3091
    %v3116 = vpack.c.b16 %v3092, %v3092
    %v3117 = vpack.c.b16 %v3093, %v3093
    %v3118 = vpack.c.b16 %v3094, %v3094
    %v3119 = vpack.c.b16 %v3095, %v3095
    %v3120 = vpack.c.b16 %v3096, %v3096
    %3145 = vst [vmem:[#allocation12] sm:$0xf] %v3097
    %3146 = vst [vmem:[#allocation12 + $0x4] sm:$0xf] %v3098
    %3147 = vst [vmem:[#allocation12 + $0x8] sm:$0xf] %v3099
    %3148 = vst [vmem:[#allocation12 + $0xc] sm:$0xf] %v3100
    %3149 = vst [vmem:[#allocation12 + $0x10] sm:$0xf] %v3101
    %3150 = vst [vmem:[#allocation12 + $0x14] sm:$0xf] %v3102
    %3151 = vst [vmem:[#allocation12 + $0x18] sm:$0xf] %v3103
    %3152 = vst [vmem:[#allocation12 + $0x1c] sm:$0xf] %v3104
    %3153 = vst [vmem:[#allocation12 + $0x20] sm:$0xf] %v3105
    %3154 = vst [vmem:[#allocation12 + $0x24] sm:$0xf] %v3106
    %3155 = vst [vmem:[#allocation12 + $0x28] sm:$0xf] %v3107
    %3156 = vst [vmem:[#allocation12 + $0x2c] sm:$0xf] %v3108
    %3157 = vst [vmem:[#allocation12 + $0x30] sm:$0xf] %v3109
    %3158 = vst [vmem:[#allocation12 + $0x34] sm:$0xf] %v3110
    %3159 = vst [vmem:[#allocation12 + $0x38] sm:$0xf] %v3111
    %3160 = vst [vmem:[#allocation12 + $0x3c] sm:$0xf] %v3112
    %3161 = vst [vmem:[#allocation12 + $0x40] sm:$0xf] %v3113
    %3162 = vst [vmem:[#allocation12 + $0x44] sm:$0xf] %v3114
    %3163 = vst [vmem:[#allocation12 + $0x48] sm:$0xf] %v3115
    %3164 = vst [vmem:[#allocation12 + $0x4c] sm:$0xf] %v3116
    %3165 = vst [vmem:[#allocation12 + $0x50] sm:$0xf] %v3117
    %3166 = vst [vmem:[#allocation12 + $0x54] sm:$0xf] %v3118
    %3167 = vst [vmem:[#allocation12 + $0x58] sm:$0xf] %v3119
    %3168 = vst [vmem:[#allocation12 + $0x5c] sm:$0xf] %v3120
    %v3169 = vld [vmem:[#allocation3 + $0x70] sm:$0xf]
    %v3170 = vld [vmem:[#allocation3 + $0x74] sm:$0xf]
    %v3171 = vld [vmem:[#allocation3 + $0x78] sm:$0xf]
    %v3172 = vld [vmem:[#allocation3 + $0x7c] sm:$0xf]
    %v3173 = vld [vmem:[#allocation3 + $0x80] sm:$0xf]
    %v3174 = vld [vmem:[#allocation3 + $0x84] sm:$0xf]
    %v3175 = vld [vmem:[#allocation3 + $0x88] sm:$0xf]
    %v3176 = vld [vmem:[#allocation3 + $0x8c] sm:$0xf]
    %v3177 = vld [vmem:[#allocation3 + $0x90] sm:$0xf]
    %v3178 = vld [vmem:[#allocation3 + $0x94] sm:$0xf]
    %v3179 = vld [vmem:[#allocation3 + $0x98] sm:$0xf]
    %v3180 = vld [vmem:[#allocation3 + $0x9c] sm:$0xf]
    %v3181 = vld [vmem:[#allocation3 + $0xa0] sm:$0xf]
    %v3182 = vld [vmem:[#allocation3 + $0xa4] sm:$0xf]
    %v3183 = vld [vmem:[#allocation3 + $0xa8] sm:$0xf]
    %v3184 = vld [vmem:[#allocation3 + $0xac] sm:$0xf]
    %v3185 = vld [vmem:[#allocation3 + $0xb0] sm:$0xf]
    %v3186 = vld [vmem:[#allocation3 + $0xb4] sm:$0xf]
    %v3187 = vld [vmem:[#allocation3 + $0xb8] sm:$0xf]
    %v3188 = vld [vmem:[#allocation3 + $0xbc] sm:$0xf]
    %v3189 = vld [vmem:[#allocation3 + $0xc0] sm:$0xf]
    %v3190 = vld [vmem:[#allocation3 + $0xc4] sm:$0xf]
    %v3191 = vld [vmem:[#allocation3 + $0xc8] sm:$0xf]
    %v3192 = vld [vmem:[#allocation3 + $0xcc] sm:$0xf]
    %v3193 = vld [vmem:[#allocation3 + $0xd0] sm:$0xf]
    %v3194 = vld [vmem:[#allocation3 + $0xd4] sm:$0xf]
    %v3195 = vld [vmem:[#allocation3 + $0xd8] sm:$0xf]
    %v3196 = vld [vmem:[#allocation3 + $0xdc] sm:$0xf]
    %v3197 = vld [vmem:[#allocation8] sm:$0xf]
    %v3198 = vld [vmem:[#allocation8 + $0x4] sm:$0xf]
    %v3199 = vld [vmem:[#allocation8 + $0x8] sm:$0xf]
    %v3200 = vld [vmem:[#allocation8 + $0xc] sm:$0xf]
    %v3201 = vld [vmem:[#allocation8 + $0x10] sm:$0xf]
    %v3202 = vld [vmem:[#allocation8 + $0x14] sm:$0xf]
    %v3203 = vld [vmem:[#allocation8 + $0x18] sm:$0xf]
    %v3204 = vld [vmem:[#allocation8 + $0x1c] sm:$0xf]
    %v3205 = vld [vmem:[#allocation8 + $0x20] sm:$0xf]
    %v3206 = vld [vmem:[#allocation8 + $0x24] sm:$0xf]
    %v3207 = vld [vmem:[#allocation8 + $0x28] sm:$0xf]
    %v3208 = vld [vmem:[#allocation8 + $0x2c] sm:$0xf]
    %v3209 = vld [vmem:[#allocation8 + $0x30] sm:$0xf]
    %v3210 = vld [vmem:[#allocation8 + $0x34] sm:$0xf]
    %v3211 = vld [vmem:[#allocation8 + $0x38] sm:$0xf]
    %v3212 = vld [vmem:[#allocation8 + $0x3c] sm:$0xf]
    %v3213 = vld [vmem:[%s5] sm:$0x1]
    %v3215 = vlaneseq
    %v3216 = vshrl.u32 %v3215, 7
    %v3217 = vsub.s32 0, %v3216
    %v3218 = vrot.slane %v3213, %v3217
    %v3248 = vunpack.c.l.b16 %v3169
    %v3249 = vunpack.c.l.b16 %v3170
    %v3250 = vunpack.c.l.b16 %v3171
    %v3251 = vunpack.c.l.b16 %v3172
    %v3252 = vunpack.c.l.b16 %v3173
    %v3253 = vunpack.c.l.b16 %v3174
    %v3254 = vunpack.c.l.b16 %v3175
    %v3255 = vunpack.c.l.b16 %v3176
    %v3256 = vunpack.c.l.b16 %v3177
    %v3257 = vunpack.c.l.b16 %v3178
    %v3258 = vunpack.c.l.b16 %v3179
    %v3259 = vunpack.c.l.b16 %v3180
    %v3260 = vunpack.c.l.b16 %v3181
    %v3261 = vunpack.c.l.b16 %v3182
    %v3262 = vunpack.c.l.b16 %v3183
    %v3263 = vunpack.c.l.b16 %v3184
    %v3264 = vunpack.c.l.b16 %v3185
    %v3265 = vunpack.c.l.b16 %v3186
    %v3266 = vunpack.c.l.b16 %v3187
    %v3267 = vunpack.c.l.b16 %v3188
    %v3268 = vunpack.c.l.b16 %v3189
    %v3269 = vunpack.c.l.b16 %v3190
    %v3270 = vunpack.c.l.b16 %v3191
    %v3271 = vunpack.c.l.b16 %v3192
    %v3272 = vunpack.c.l.b16 %v3193
    %v3273 = vunpack.c.l.b16 %v3194
    %v3274 = vunpack.c.l.b16 %v3195
    %v3275 = vunpack.c.l.b16 %v3196
    %v3276 = vpack.c.b16 %v3249, %v3248
    %v3277 = vpack.c.b16 %v3251, %v3250
    %v3278 = vpack.c.b16 %v3253, %v3252
    %v3279 = vpack.c.b16 %v3255, %v3254
    %v3280 = vpack.c.b16 %v3257, %v3256
    %v3281 = vpack.c.b16 %v3259, %v3258
    %v3282 = vpack.c.b16 %v3261, %v3260
    %v3283 = vpack.c.b16 %v3263, %v3262
    %v3284 = vpack.c.b16 %v3265, %v3264
    %v3285 = vpack.c.b16 %v3267, %v3266
    %v3286 = vpack.c.b16 %v3269, %v3268
    %v3287 = vpack.c.b16 %v3271, %v3270
    %v3288 = vpack.c.b16 %v3273, %v3272
    %v3289 = vpack.c.b16 %v3275, %v3274
    %v3320 = vunpack.c.l.b16 %v3197
    %v3321 = vunpack.c.l.b16 %v3198
    %v3322 = vunpack.c.l.b16 %v3199
    %v3323 = vunpack.c.l.b16 %v3200
    %v3324 = vunpack.c.l.b16 %v3201
    %v3325 = vunpack.c.l.b16 %v3202
    %v3326 = vunpack.c.l.b16 %v3203
    %v3327 = vunpack.c.l.b16 %v3204
    %v3328 = vunpack.c.l.b16 %v3205
    %v3329 = vunpack.c.l.b16 %v3206
    %v3330 = vunpack.c.l.b16 %v3207
    %v3331 = vunpack.c.l.b16 %v3208
    %v3332 = vunpack.c.l.b16 %v3209
    %v3333 = vunpack.c.l.b16 %v3210
    %v3334 = vunpack.c.l.b16 %v3211
    %v3335 = vunpack.c.l.b16 %v3212
    %v3336 = vpack.c.b16 %v3321, %v3320
    %v3337 = vpack.c.b16 %v3323, %v3322
    %v3338 = vpack.c.b16 %v3325, %v3324
    %v3339 = vpack.c.b16 %v3327, %v3326
    %v3340 = vpack.c.b16 %v3329, %v3328
    %v3341 = vpack.c.b16 %v3331, %v3330
    %v3342 = vpack.c.b16 %v3333, %v3332
    %v3343 = vpack.c.b16 %v3335, %v3334
    %3352 = vmatprep.subr.bf16.mxu0 0
    %3353 = vmatpush1.bf16.msra.mxu0 %v3336
    %3354 = vmatprep.subr.bf16.mxu0 0
    %3355 = vmatpush1.bf16.msra.mxu0 %v3337
    %3356 = vmatprep.subr.bf16.mxu0 0
    %3357 = vmatpush1.bf16.msra.mxu0 %v3338
    %3358 = vmatprep.subr.bf16.mxu0 0
    %3359 = vmatpush1.bf16.msra.mxu0 %v3339
    %3360 = vmatprep.subr.bf16.mxu0 0
    %3361 = vmatpush1.bf16.msra.mxu0 %v3340
    %3362 = vmatprep.subr.bf16.mxu0 0
    %3363 = vmatpush1.bf16.msra.mxu0 %v3341
    %3364 = vmatprep.subr.bf16.mxu0 0
    %3365 = vmatpush1.bf16.msra.mxu0 %v3342
    %3366 = vmatprep.subr.bf16.mxu0 0
    %3367 = vmatpush1.bf16.msra.mxu0 %v3343
    %3368 = vmatprep.subr.bf16.mxu0 0
    %3369 = vmatpush1.bf16.msra.mxu0 0
    %3370 = vmatprep.subr.bf16.mxu0 0
    %3371 = vmatpush1.bf16.msra.mxu0 0
    %3372 = vmatprep.subr.bf16.mxu0 0
    %3373 = vmatpush1.bf16.msra.mxu0 0
    %3374 = vmatprep.subr.bf16.mxu0 0
    %3375 = vmatpush1.bf16.msra.mxu0 0
    %3376 = vmatprep.subr.bf16.mxu0 0
    %3377 = vmatpush1.bf16.msra.mxu0 0
    %3378 = vmatprep.subr.bf16.mxu0 0
    %3379 = vmatpush1.bf16.msra.mxu0 0
    %3380 = vmatprep.subr.bf16.mxu0 0
    %3381 = vmatpush1.bf16.msra.mxu0 0
    %3382 = vmatprep.subr.bf16.mxu0 0
    %3383 = vmatpush1.bf16.msra.mxu0 0
    %3384 = vmatprep.mubr.bf16.mxu0 0
    %3385 = vmatmul.mubr.bf16.gmra.mrb[0].mxu0 %v3276
    %v3386 = vpop.f32.mrb[0].mxu0
    %v3387 = vadd.f32 %v3218, %v3386
    %v3388 = vpop.f32.mrb[0].mxu0
    %v3389 = vpop.f32.mrb[0].mxu0
    %v3390 = vadd.f32 %v3218, %v3389
    %v3391 = vpop.f32.mrb[0].mxu0
    %3392 = vmatprep.mubr.bf16.mxu0 0
    %3393 = vmatmul.mubr.bf16.gmra.mrb[0].mxu0 %v3277
    %v3394 = vpop.f32.mrb[0].mxu0
    %v3395 = vadd.f32 %v3218, %v3394
    %v3396 = vpop.f32.mrb[0].mxu0
    %v3397 = vpop.f32.mrb[0].mxu0
    %v3398 = vadd.f32 %v3218, %v3397
    %v3399 = vpop.f32.mrb[0].mxu0
    %3400 = vmatprep.mubr.bf16.mxu0 0
    %3401 = vmatmul.mubr.bf16.gmra.mrb[0].mxu0 %v3278
    %v3402 = vpop.f32.mrb[0].mxu0
    %v3403 = vadd.f32 %v3218, %v3402
    %v3404 = vpop.f32.mrb[0].mxu0
    %v3405 = vpop.f32.mrb[0].mxu0
    %v3406 = vadd.f32 %v3218, %v3405
    %v3407 = vpop.f32.mrb[0].mxu0
    %3408 = vmatprep.mubr.bf16.mxu0 0
    %3409 = vmatmul.mubr.bf16.gmra.mrb[0].mxu0 %v3279
    %v3410 = vpop.f32.mrb[0].mxu0
    %v3411 = vadd.f32 %v3218, %v3410
    %v3412 = vpop.f32.mrb[0].mxu0
    %v3413 = vpop.f32.mrb[0].mxu0
    %v3414 = vadd.f32 %v3218, %v3413
    %v3415 = vpop.f32.mrb[0].mxu0
    %3416 = vmatprep.mubr.bf16.mxu0 0
    %3417 = vmatmul.mubr.bf16.gmra.mrb[0].mxu0 %v3280
    %v3418 = vpop.f32.mrb[0].mxu0
    %v3419 = vadd.f32 %v3218, %v3418
    %v3420 = vpop.f32.mrb[0].mxu0
    %v3421 = vpop.f32.mrb[0].mxu0
    %v3422 = vadd.f32 %v3218, %v3421
    %v3423 = vpop.f32.mrb[0].mxu0
    %3424 = vmatprep.mubr.bf16.mxu0 0
    %3425 = vmatmul.mubr.bf16.gmra.mrb[0].mxu0 %v3281
    %v3426 = vpop.f32.mrb[0].mxu0
    %v3427 = vadd.f32 %v3218, %v3426
    %v3428 = vpop.f32.mrb[0].mxu0
    %v3429 = vpop.f32.mrb[0].mxu0
    %v3430 = vadd.f32 %v3218, %v3429
    %v3431 = vpop.f32.mrb[0].mxu0
    %3432 = vmatprep.mubr.bf16.mxu0 0
    %3433 = vmatmul.mubr.bf16.gmra.mrb[0].mxu0 %v3282
    %v3434 = vpop.f32.mrb[0].mxu0
    %v3435 = vadd.f32 %v3218, %v3434
    %v3436 = vpop.f32.mrb[0].mxu0
    %v3437 = vpop.f32.mrb[0].mxu0
    %v3438 = vadd.f32 %v3218, %v3437
    %v3439 = vpop.f32.mrb[0].mxu0
    %3440 = vmatprep.mubr.bf16.mxu0 0
    %3441 = vmatmul.mubr.bf16.gmra.mrb[0].mxu0 %v3283
    %v3442 = vpop.f32.mrb[0].mxu0
    %v3443 = vadd.f32 %v3218, %v3442
    %v3444 = vpop.f32.mrb[0].mxu0
    %v3445 = vpop.f32.mrb[0].mxu0
    %v3446 = vadd.f32 %v3218, %v3445
    %v3447 = vpop.f32.mrb[0].mxu0
    %3448 = vmatprep.mubr.bf16.mxu0 0
    %3449 = vmatmul.mubr.bf16.gmra.mrb[0].mxu0 %v3284
    %v3450 = vpop.f32.mrb[0].mxu0
    %v3451 = vadd.f32 %v3218, %v3450
    %v3452 = vpop.f32.mrb[0].mxu0
    %v3453 = vpop.f32.mrb[0].mxu0
    %v3454 = vadd.f32 %v3218, %v3453
    %v3455 = vpop.f32.mrb[0].mxu0
    %3456 = vmatprep.mubr.bf16.mxu0 0
    %3457 = vmatmul.mubr.bf16.gmra.mrb[0].mxu0 %v3285
    %v3458 = vpop.f32.mrb[0].mxu0
    %v3459 = vadd.f32 %v3218, %v3458
    %v3460 = vpop.f32.mrb[0].mxu0
    %v3461 = vpop.f32.mrb[0].mxu0
    %v3462 = vadd.f32 %v3218, %v3461
    %v3463 = vpop.f32.mrb[0].mxu0
    %3464 = vmatprep.mubr.bf16.mxu0 0
    %3465 = vmatmul.mubr.bf16.gmra.mrb[0].mxu0 %v3286
    %v3466 = vpop.f32.mrb[0].mxu0
    %v3467 = vadd.f32 %v3218, %v3466
    %v3468 = vpop.f32.mrb[0].mxu0
    %v3469 = vpop.f32.mrb[0].mxu0
    %v3470 = vadd.f32 %v3218, %v3469
    %v3471 = vpop.f32.mrb[0].mxu0
    %3472 = vmatprep.mubr.bf16.mxu0 0
    %3473 = vmatmul.mubr.bf16.gmra.mrb[0].mxu0 %v3287
    %v3474 = vpop.f32.mrb[0].mxu0
    %v3475 = vadd.f32 %v3218, %v3474
    %v3476 = vpop.f32.mrb[0].mxu0
    %v3477 = vpop.f32.mrb[0].mxu0
    %v3478 = vadd.f32 %v3218, %v3477
    %v3479 = vpop.f32.mrb[0].mxu0
    %3480 = vmatprep.mubr.bf16.mxu0 0
    %3481 = vmatmul.mubr.bf16.gmra.mrb[0].mxu0 %v3288
    %v3482 = vpop.f32.mrb[0].mxu0
    %v3483 = vadd.f32 %v3218, %v3482
    %v3484 = vpop.f32.mrb[0].mxu0
    %v3485 = vpop.f32.mrb[0].mxu0
    %v3486 = vadd.f32 %v3218, %v3485
    %v3487 = vpop.f32.mrb[0].mxu0
    %3488 = vmatprep.mubr.bf16.mxu0 0
    %3489 = vmatmul.mubr.bf16.gmra.mrb[0].mxu0 %v3289
    %v3490 = vpop.f32.mrb[0].mxu0
    %v3491 = vadd.f32 %v3218, %v3490
    %v3492 = vpop.f32.mrb[0].mxu0
    %v3493 = vpop.f32.mrb[0].mxu0
    %v3494 = vadd.f32 %v3218, %v3493
    %v3495 = vpop.f32.mrb[0].mxu0
    %3496 = vdwg.mxu0
    %v3497 = vmax.f32 %v3387, 0.0
    %v3498 = vmax.f32 %v3390, 0.0
    %v3499 = vmax.f32 %v3395, 0.0
    %v3500 = vmax.f32 %v3398, 0.0
    %v3501 = vmax.f32 %v3403, 0.0
    %v3502 = vmax.f32 %v3406, 0.0
    %v3503 = vmax.f32 %v3411, 0.0
    %v3504 = vmax.f32 %v3414, 0.0
    %v3505 = vmax.f32 %v3419, 0.0
    %v3506 = vmax.f32 %v3422, 0.0
    %v3507 = vmax.f32 %v3427, 0.0
    %v3508 = vmax.f32 %v3430, 0.0
    %v3509 = vmax.f32 %v3435, 0.0
    %v3510 = vmax.f32 %v3438, 0.0
    %v3511 = vmax.f32 %v3443, 0.0
    %v3512 = vmax.f32 %v3446, 0.0
    %v3513 = vmax.f32 %v3451, 0.0
    %v3514 = vmax.f32 %v3454, 0.0
    %v3515 = vmax.f32 %v3459, 0.0
    %v3516 = vmax.f32 %v3462, 0.0
    %v3517 = vmax.f32 %v3467, 0.0
    %v3518 = vmax.f32 %v3470, 0.0
    %v3519 = vmax.f32 %v3475, 0.0
    %v3520 = vmax.f32 %v3478, 0.0
    %v3521 = vmax.f32 %v3483, 0.0
    %v3522 = vmax.f32 %v3486, 0.0
    %v3523 = vmax.f32 %v3491, 0.0
    %v3524 = vmax.f32 %v3494, 0.0
    %v3525 = vpack.c.bf16 %v3498, %v3497
    %v3526 = vpack.c.bf16 %v3500, %v3499
    %v3527 = vpack.c.bf16 %v3502, %v3501
    %v3528 = vpack.c.bf16 %v3504, %v3503
    %v3529 = vpack.c.bf16 %v3506, %v3505
    %v3530 = vpack.c.bf16 %v3508, %v3507
    %v3531 = vpack.c.bf16 %v3510, %v3509
    %v3532 = vpack.c.bf16 %v3512, %v3511
    %v3533 = vpack.c.bf16 %v3514, %v3513
    %v3534 = vpack.c.bf16 %v3516, %v3515
    %v3535 = vpack.c.bf16 %v3518, %v3517
    %v3536 = vpack.c.bf16 %v3520, %v3519
    %v3537 = vpack.c.bf16 %v3522, %v3521
    %v3538 = vpack.c.bf16 %v3524, %v3523
    %3539 = vst [vmem:[#allocation2] sm:$0xff] %v3525
    %3540 = vst [vmem:[#allocation2 + $0x8] sm:$0xff] %v3526
    %3541 = vst [vmem:[#allocation2 + $0x10] sm:$0xff] %v3527
    %3542 = vst [vmem:[#allocation2 + $0x18] sm:$0xff] %v3528
    %3543 = vst [vmem:[#allocation2 + $0x20] sm:$0xff] %v3529
    %3544 = vst [vmem:[#allocation2 + $0x28] sm:$0xff] %v3530
    %3545 = vst [vmem:[#allocation2 + $0x30] sm:$0xff] %v3531
    %3546 = vst [vmem:[#allocation2 + $0x38] sm:$0xff] %v3532
    %3547 = vst [vmem:[#allocation2 + $0x40] sm:$0xff] %v3533
    %3548 = vst [vmem:[#allocation2 + $0x48] sm:$0xff] %v3534
    %3549 = vst [vmem:[#allocation2 + $0x50] sm:$0xff] %v3535
    %3550 = vst [vmem:[#allocation2 + $0x58] sm:$0xff] %v3536
    %3551 = vst [vmem:[#allocation2 + $0x60] sm:$0xff] %v3537
    %3552 = vst [vmem:[#allocation2 + $0x68] sm:$0xff] %v3538
    %v3553 = vrot.slane %v3497, 1
    %v3554 = vrot.slane %v3498, 1
    %v3555 = vrot.slane %v3499, 1
    %v3556 = vrot.slane %v3500, 1
    %v3557 = vrot.slane %v3501, 1
    %v3558 = vrot.slane %v3502, 1
    %v3559 = vrot.slane %v3503, 1
    %v3560 = vrot.slane %v3504, 1
    %v3561 = vrot.slane %v3505, 1
    %v3562 = vrot.slane %v3506, 1
    %v3563 = vrot.slane %v3507, 1
    %v3564 = vrot.slane %v3508, 1
    %v3565 = vrot.slane %v3509, 1
    %v3566 = vrot.slane %v3510, 1
    %v3567 = vrot.slane %v3511, 1
    %v3568 = vrot.slane %v3512, 1
    %v3569 = vrot.slane %v3513, 1
    %v3570 = vrot.slane %v3514, 1
    %v3571 = vrot.slane %v3515, 1
    %v3572 = vrot.slane %v3516, 1
    %v3573 = vrot.slane %v3517, 1
    %v3574 = vrot.slane %v3518, 1
    %v3575 = vrot.slane %v3519, 1
    %v3576 = vrot.slane %v3520, 1
    %v3577 = vrot.slane %v3521, 1
    %v3578 = vrot.slane %v3522, 1
    %v3579 = vrot.slane %v3523, 1
    %v3580 = vrot.slane %v3524, 1
    %v3581 = vsel %vm510, %v3579, %v3580
    %v3582 = vsel %vm510, %v3578, %v3579
    %v3583 = vsel %vm510, %v3577, %v3578
    %v3584 = vsel %vm510, %v3576, %v3577
    %v3585 = vsel %vm510, %v3575, %v3576
    %v3586 = vsel %vm510, %v3574, %v3575
    %v3587 = vsel %vm510, %v3573, %v3574
    %v3588 = vsel %vm510, %v3572, %v3573
    %v3589 = vsel %vm510, %v3571, %v3572
    %v3590 = vsel %vm510, %v3570, %v3571
    %v3591 = vsel %vm510, %v3569, %v3570
    %v3592 = vsel %vm510, %v3568, %v3569
    %v3593 = vsel %vm510, %v3567, %v3568
    %v3594 = vsel %vm510, %v3566, %v3567
    %v3595 = vsel %vm510, %v3565, %v3566
    %v3596 = vsel %vm510, %v3564, %v3565
    %v3597 = vsel %vm510, %v3563, %v3564
    %v3598 = vsel %vm510, %v3562, %v3563
    %v3599 = vsel %vm510, %v3561, %v3562
    %v3600 = vsel %vm510, %v3560, %v3561
    %v3601 = vsel %vm510, %v3559, %v3560
    %v3602 = vsel %vm510, %v3558, %v3559
    %v3603 = vsel %vm510, %v3557, %v3558
    %v3604 = vsel %vm510, %v3556, %v3557
    %v3605 = vsel %vm510, %v3555, %v3556
    %v3606 = vsel %vm510, %v3554, %v3555
    %v3607 = vsel %vm510, %v3553, %v3554
    %v3608 = vsel %vm510, %v3580, %v3553
    %v3609 = vpack.c.bf16 %v3606, %v3607
    %v3610 = vpack.c.bf16 %v3604, %v3605
    %v3611 = vpack.c.bf16 %v3602, %v3603
    %v3612 = vpack.c.bf16 %v3600, %v3601
    %v3613 = vpack.c.bf16 %v3598, %v3599
    %v3614 = vpack.c.bf16 %v3596, %v3597
    %v3615 = vpack.c.bf16 %v3594, %v3595
    %v3616 = vpack.c.bf16 %v3592, %v3593
    %v3617 = vpack.c.bf16 %v3590, %v3591
    %v3618 = vpack.c.bf16 %v3588, %v3589
    %v3619 = vpack.c.bf16 %v3586, %v3587
    %v3620 = vpack.c.bf16 %v3584, %v3585
    %v3621 = vpack.c.bf16 %v3582, %v3583
    %v3622 = vpack.c.bf16 %v3608, %v3581
    %3623 = vst [vmem:[%s553] sm:$0xff] %v3609
    %3624 = vst [vmem:[%s553 + $0x8] sm:$0xff] %v3610
    %3625 = vst [vmem:[%s553 + $0x10] sm:$0xff] %v3611
    %3626 = vst [vmem:[%s553 + $0x18] sm:$0xff] %v3612
    %3627 = vst [vmem:[%s553 + $0x20] sm:$0xff] %v3613
    %3628 = vst [vmem:[%s553 + $0x28] sm:$0xff] %v3614
    %3629 = vst [vmem:[%s553 + $0x30] sm:$0xff] %v3615
    %3630 = vst [vmem:[%s553 + $0x38] sm:$0xff] %v3616
    %3631 = vst [vmem:[%s553 + $0x40] sm:$0xff] %v3617
    %3632 = vst [vmem:[%s553 + $0x48] sm:$0xff] %v3618
    %3633 = vst [vmem:[%s553 + $0x50] sm:$0xff] %v3619
    %3634 = vst [vmem:[%s553 + $0x58] sm:$0xff] %v3620
    %3635 = vst [vmem:[%s553 + $0x60] sm:$0xff] %v3621
    %3636 = vst [vmem:[%s553 + $0x68] sm:$0xff] %v3622
    %v3637 = vrot.slane %v3497, 2
    %v3638 = vrot.slane %v3498, 2
    %v3639 = vrot.slane %v3499, 2
    %v3640 = vrot.slane %v3500, 2
    %v3641 = vrot.slane %v3501, 2
    %v3642 = vrot.slane %v3502, 2
    %v3643 = vrot.slane %v3503, 2
    %v3644 = vrot.slane %v3504, 2
    %v3645 = vrot.slane %v3505, 2
    %v3646 = vrot.slane %v3506, 2
    %v3647 = vrot.slane %v3507, 2
    %v3648 = vrot.slane %v3508, 2
    %v3649 = vrot.slane %v3509, 2
    %v3650 = vrot.slane %v3510, 2
    %v3651 = vrot.slane %v3511, 2
    %v3652 = vrot.slane %v3512, 2
    %v3653 = vrot.slane %v3513, 2
    %v3654 = vrot.slane %v3514, 2
    %v3655 = vrot.slane %v3515, 2
    %v3656 = vrot.slane %v3516, 2
    %v3657 = vrot.slane %v3517, 2
    %v3658 = vrot.slane %v3518, 2
    %v3659 = vrot.slane %v3519, 2
    %v3660 = vrot.slane %v3520, 2
    %v3661 = vrot.slane %v3521, 2
    %v3662 = vrot.slane %v3522, 2
    %v3663 = vrot.slane %v3523, 2
    %v3664 = vrot.slane %v3524, 2
    %v3665 = vsel %vm596, %v3663, %v3664
    %v3666 = vsel %vm596, %v3662, %v3663
    %v3667 = vsel %vm596, %v3661, %v3662
    %v3668 = vsel %vm596, %v3660, %v3661
    %v3669 = vsel %vm596, %v3659, %v3660
    %v3670 = vsel %vm596, %v3658, %v3659
    %v3671 = vsel %vm596, %v3657, %v3658
    %v3672 = vsel %vm596, %v3656, %v3657
    %v3673 = vsel %vm596, %v3655, %v3656
    %v3674 = vsel %vm596, %v3654, %v3655
    %v3675 = vsel %vm596, %v3653, %v3654
    %v3676 = vsel %vm596, %v3652, %v3653
    %v3677 = vsel %vm596, %v3651, %v3652
    %v3678 = vsel %vm596, %v3650, %v3651
    %v3679 = vsel %vm596, %v3649, %v3650
    %v3680 = vsel %vm596, %v3648, %v3649
    %v3681 = vsel %vm596, %v3647, %v3648
    %v3682 = vsel %vm596, %v3646, %v3647
    %v3683 = vsel %vm596, %v3645, %v3646
    %v3684 = vsel %vm596, %v3644, %v3645
    %v3685 = vsel %vm596, %v3643, %v3644
    %v3686 = vsel %vm596, %v3642, %v3643
    %v3687 = vsel %vm596, %v3641, %v3642
    %v3688 = vsel %vm596, %v3640, %v3641
    %v3689 = vsel %vm596, %v3639, %v3640
    %v3690 = vsel %vm596, %v3638, %v3639
    %v3691 = vsel %vm596, %v3637, %v3638
    %v3692 = vsel %vm596, %v3664, %v3637
    %v3693 = vpack.c.bf16 %v3690, %v3691
    %v3694 = vpack.c.bf16 %v3688, %v3689
    %v3695 = vpack.c.bf16 %v3686, %v3687
    %v3696 = vpack.c.bf16 %v3684, %v3685
    %v3697 = vpack.c.bf16 %v3682, %v3683
    %v3698 = vpack.c.bf16 %v3680, %v3681
    %v3699 = vpack.c.bf16 %v3678, %v3679
    %v3700 = vpack.c.bf16 %v3676, %v3677
    %v3701 = vpack.c.bf16 %v3674, %v3675
    %v3702 = vpack.c.bf16 %v3672, %v3673
    %v3703 = vpack.c.bf16 %v3670, %v3671
    %v3704 = vpack.c.bf16 %v3668, %v3669
    %v3705 = vpack.c.bf16 %v3666, %v3667
    %v3706 = vpack.c.bf16 %v3692, %v3665
    %3707 = vst [vmem:[%s639] sm:$0xff] %v3693
    %3708 = vst [vmem:[%s639 + $0x8] sm:$0xff] %v3694
    %3709 = vst [vmem:[%s639 + $0x10] sm:$0xff] %v3695
    %3710 = vst [vmem:[%s639 + $0x18] sm:$0xff] %v3696
    %3711 = vst [vmem:[%s639 + $0x20] sm:$0xff] %v3697
    %3712 = vst [vmem:[%s639 + $0x28] sm:$0xff] %v3698
    %3713 = vst [vmem:[%s639 + $0x30] sm:$0xff] %v3699
    %3714 = vst [vmem:[%s639 + $0x38] sm:$0xff] %v3700
    %3715 = vst [vmem:[%s639 + $0x40] sm:$0xff] %v3701
    %3716 = vst [vmem:[%s639 + $0x48] sm:$0xff] %v3702
    %3717 = vst [vmem:[%s639 + $0x50] sm:$0xff] %v3703
    %3718 = vst [vmem:[%s639 + $0x58] sm:$0xff] %v3704
    %3719 = vst [vmem:[%s639 + $0x60] sm:$0xff] %v3705
    %3720 = vst [vmem:[%s639 + $0x68] sm:$0xff] %v3706
    %v3721 = vld [vmem:[#allocation6 + $0x60] sm:$0xf]
    %v3722 = vld [vmem:[#allocation6 + $0x64] sm:$0xf]
    %v3723 = vld [vmem:[#allocation6 + $0x68] sm:$0xf]
    %v3724 = vld [vmem:[#allocation6 + $0x6c] sm:$0xf]
    %v3725 = vld [vmem:[#allocation6 + $0x70] sm:$0xf]
    %v3726 = vld [vmem:[#allocation6 + $0x74] sm:$0xf]
    %v3727 = vld [vmem:[#allocation6 + $0x78] sm:$0xf]
    %v3728 = vld [vmem:[#allocation6 + $0x7c] sm:$0xf]
    %v3729 = vld [vmem:[#allocation6 + $0x80] sm:$0xf]
    %v3730 = vld [vmem:[#allocation6 + $0x84] sm:$0xf]
    %v3731 = vld [vmem:[#allocation6 + $0x88] sm:$0xf]
    %v3732 = vld [vmem:[#allocation6 + $0x8c] sm:$0xf]
    %v3733 = vld [vmem:[#allocation6 + $0x90] sm:$0xf]
    %v3734 = vld [vmem:[#allocation6 + $0x94] sm:$0xf]
    %v3735 = vld [vmem:[#allocation6 + $0x98] sm:$0xf]
    %v3736 = vld [vmem:[#allocation6 + $0x9c] sm:$0xf]
    %v3737 = vld [vmem:[#allocation6 + $0xa0] sm:$0xf]
    %v3738 = vld [vmem:[#allocation6 + $0xa4] sm:$0xf]
    %v3739 = vld [vmem:[#allocation6 + $0xa8] sm:$0xf]
    %v3740 = vld [vmem:[#allocation6 + $0xac] sm:$0xf]
    %v3741 = vld [vmem:[#allocation6 + $0xb0] sm:$0xf]
    %v3742 = vld [vmem:[#allocation6 + $0xb4] sm:$0xf]
    %v3743 = vld [vmem:[#allocation6 + $0xb8] sm:$0xf]
    %v3744 = vld [vmem:[#allocation6 + $0xbc] sm:$0xf]
    %v3745 = vld [vmem:[#allocation11] sm:$0xf]
    %v3746 = vld [vmem:[#allocation11 + $0x4] sm:$0xf]
    %v3747 = vld [vmem:[#allocation11 + $0x8] sm:$0xf]
    %v3748 = vld [vmem:[#allocation11 + $0xc] sm:$0xf]
    %v3749 = vld [vmem:[#allocation11 + $0x10] sm:$0xf]
    %v3750 = vld [vmem:[#allocation11 + $0x14] sm:$0xf]
    %v3751 = vld [vmem:[#allocation11 + $0x18] sm:$0xf]
    %v3752 = vld [vmem:[#allocation11 + $0x1c] sm:$0xf]
    %v3753 = vld [vmem:[#allocation11 + $0x20] sm:$0xf]
    %v3754 = vld [vmem:[#allocation11 + $0x24] sm:$0xf]
    %v3755 = vld [vmem:[#allocation11 + $0x28] sm:$0xf]
    %v3756 = vld [vmem:[#allocation11 + $0x2c] sm:$0xf]
    %v3757 = vld [vmem:[#allocation11 + $0x30] sm:$0xf]
    %v3758 = vld [vmem:[#allocation11 + $0x34] sm:$0xf]
    %v3759 = vld [vmem:[#allocation11 + $0x38] sm:$0xf]
    %v3760 = vld [vmem:[#allocation11 + $0x3c] sm:$0xf]
    %v3761 = vld [vmem:[#allocation2] sm:$0xff]
    %v3762 = vld [vmem:[#allocation2 + $0x8] sm:$0xff]
    %v3763 = vld [vmem:[#allocation2 + $0x10] sm:$0xff]
    %v3764 = vld [vmem:[#allocation2 + $0x18] sm:$0xff]
    %v3765 = vld [vmem:[#allocation2 + $0x20] sm:$0xff]
    %v3766 = vld [vmem:[#allocation2 + $0x28] sm:$0xff]
    %v3767 = vld [vmem:[#allocation2 + $0x30] sm:$0xff]
    %v3768 = vld [vmem:[#allocation2 + $0x38] sm:$0xff]
    %v3769 = vld [vmem:[#allocation2 + $0x40] sm:$0xff]
    %v3770 = vld [vmem:[#allocation2 + $0x48] sm:$0xff]
    %v3771 = vld [vmem:[#allocation2 + $0x50] sm:$0xff]
    %v3772 = vld [vmem:[#allocation2 + $0x58] sm:$0xff]
    %v3773 = vld [vmem:[#allocation9] sm:$0xf]
    %v3774 = vld [vmem:[#allocation9 + $0x4] sm:$0xf]
    %v3775 = vld [vmem:[#allocation9 + $0x8] sm:$0xf]
    %v3776 = vld [vmem:[#allocation9 + $0xc] sm:$0xf]
    %v3777 = vld [vmem:[#allocation9 + $0x10] sm:$0xf]
    %v3778 = vld [vmem:[#allocation9 + $0x14] sm:$0xf]
    %v3779 = vld [vmem:[#allocation9 + $0x18] sm:$0xf]
    %v3780 = vld [vmem:[#allocation9 + $0x1c] sm:$0xf]
    %v3781 = vld [vmem:[#allocation9 + $0x20] sm:$0xf]
    %v3782 = vld [vmem:[#allocation9 + $0x24] sm:$0xf]
    %v3783 = vld [vmem:[#allocation9 + $0x28] sm:$0xf]
    %v3784 = vld [vmem:[#allocation9 + $0x2c] sm:$0xf]
    %v3785 = vld [vmem:[#allocation9 + $0x30] sm:$0xf]
    %v3786 = vld [vmem:[#allocation9 + $0x34] sm:$0xf]
    %v3787 = vld [vmem:[#allocation9 + $0x38] sm:$0xf]
    %v3788 = vld [vmem:[#allocation9 + $0x3c] sm:$0xf]
    %v3805 = vunpack.c.l.b16 %v3773
    %v3806 = vunpack.c.l.b16 %v3774
    %v3807 = vunpack.c.l.b16 %v3775
    %v3808 = vunpack.c.l.b16 %v3776
    %v3809 = vunpack.c.l.b16 %v3777
    %v3810 = vunpack.c.l.b16 %v3778
    %v3811 = vunpack.c.l.b16 %v3779
    %v3812 = vunpack.c.l.b16 %v3780
    %v3813 = vunpack.c.l.b16 %v3781
    %v3814 = vunpack.c.l.b16 %v3782
    %v3815 = vunpack.c.l.b16 %v3783
    %v3816 = vunpack.c.l.b16 %v3784
    %v3817 = vunpack.c.l.b16 %v3785
    %v3818 = vunpack.c.l.b16 %v3786
    %v3819 = vunpack.c.l.b16 %v3787
    %v3820 = vunpack.c.l.b16 %v3788
    %v3821 = vpack.c.b16 %v3806, %v3805
    %v3822 = vpack.c.b16 %v3808, %v3807
    %v3823 = vpack.c.b16 %v3810, %v3809
    %v3824 = vpack.c.b16 %v3812, %v3811
    %v3825 = vpack.c.b16 %v3814, %v3813
    %v3826 = vpack.c.b16 %v3816, %v3815
    %v3827 = vpack.c.b16 %v3818, %v3817
    %v3828 = vpack.c.b16 %v3820, %v3819
    %3837 = vmatprep.subr.bf16.mxu0 0
    %3838 = vmatpush1.bf16.msra.mxu0 %v3821
    %3839 = vmatprep.subr.bf16.mxu0 0
    %3840 = vmatpush1.bf16.msra.mxu0 %v3822
    %3841 = vmatprep.subr.bf16.mxu0 0
    %3842 = vmatpush1.bf16.msra.mxu0 %v3823
    %3843 = vmatprep.subr.bf16.mxu0 0
    %3844 = vmatpush1.bf16.msra.mxu0 %v3824
    %3845 = vmatprep.subr.bf16.mxu0 0
    %3846 = vmatpush1.bf16.msra.mxu0 %v3825
    %3847 = vmatprep.subr.bf16.mxu0 0
    %3848 = vmatpush1.bf16.msra.mxu0 %v3826
    %3849 = vmatprep.subr.bf16.mxu0 0
    %3850 = vmatpush1.bf16.msra.mxu0 %v3827
    %3851 = vmatprep.subr.bf16.mxu0 0
    %3852 = vmatpush1.bf16.msra.mxu0 %v3828
    %3853 = vmatprep.subr.bf16.mxu0 0
    %3854 = vmatpush1.bf16.msra.mxu0 0
    %3855 = vmatprep.subr.bf16.mxu0 0
    %3856 = vmatpush1.bf16.msra.mxu0 0
    %3857 = vmatprep.subr.bf16.mxu0 0
    %3858 = vmatpush1.bf16.msra.mxu0 0
    %3859 = vmatprep.subr.bf16.mxu0 0
    %3860 = vmatpush1.bf16.msra.mxu0 0
    %3861 = vmatprep.subr.bf16.mxu0 0
    %3862 = vmatpush1.bf16.msra.mxu0 0
    %3863 = vmatprep.subr.bf16.mxu0 0
    %3864 = vmatpush1.bf16.msra.mxu0 0
    %3865 = vmatprep.subr.bf16.mxu0 0
    %3866 = vmatpush1.bf16.msra.mxu0 0
    %3867 = vmatprep.subr.bf16.mxu0 0
    %3868 = vmatpush1.bf16.msra.mxu0 0
    %3869 = vmatprep.mubr.bf16.mxu0 0
    %3870 = vmatmul.mubr.bf16.gmra.mrb[0].mxu0 %v3761
    %v3871 = vpop.f32.mrb[0].mxu0
    %v3872 = vadd.f32 0.0, %v3871
    %v3873 = vpop.f32.mrb[0].mxu0
    %v3874 = vpop.f32.mrb[0].mxu0
    %v3875 = vadd.f32 0.0, %v3874
    %v3876 = vpop.f32.mrb[0].mxu0
    %3877 = vmatprep.mubr.bf16.mxu0 0
    %3878 = vmatmul.mubr.bf16.gmra.mrb[0].mxu0 %v3762
    %v3879 = vpop.f32.mrb[0].mxu0
    %v3880 = vadd.f32 0.0, %v3879
    %v3881 = vpop.f32.mrb[0].mxu0
    %v3882 = vpop.f32.mrb[0].mxu0
    %v3883 = vadd.f32 0.0, %v3882
    %v3884 = vpop.f32.mrb[0].mxu0
    %3885 = vmatprep.mubr.bf16.mxu0 0
    %3886 = vmatmul.mubr.bf16.gmra.mrb[0].mxu0 %v3763
    %v3887 = vpop.f32.mrb[0].mxu0
    %v3888 = vadd.f32 0.0, %v3887
    %v3889 = vpop.f32.mrb[0].mxu0
    %v3890 = vpop.f32.mrb[0].mxu0
    %v3891 = vadd.f32 0.0, %v3890
    %v3892 = vpop.f32.mrb[0].mxu0
    %3893 = vmatprep.mubr.bf16.mxu0 0
    %3894 = vmatmul.mubr.bf16.gmra.mrb[0].mxu0 %v3764
    %v3895 = vpop.f32.mrb[0].mxu0
    %v3896 = vadd.f32 0.0, %v3895
    %v3897 = vpop.f32.mrb[0].mxu0
    %v3898 = vpop.f32.mrb[0].mxu0
    %v3899 = vadd.f32 0.0, %v3898
    %v3900 = vpop.f32.mrb[0].mxu0
    %3901 = vmatprep.mubr.bf16.mxu0 0
    %3902 = vmatmul.mubr.bf16.gmra.mrb[0].mxu0 %v3765
    %v3903 = vpop.f32.mrb[0].mxu0
    %v3904 = vadd.f32 0.0, %v3903
    %v3905 = vpop.f32.mrb[0].mxu0
    %v3906 = vpop.f32.mrb[0].mxu0
    %v3907 = vadd.f32 0.0, %v3906
    %v3908 = vpop.f32.mrb[0].mxu0
    %3909 = vmatprep.mubr.bf16.mxu0 0
    %3910 = vmatmul.mubr.bf16.gmra.mrb[0].mxu0 %v3766
    %v3911 = vpop.f32.mrb[0].mxu0
    %v3912 = vadd.f32 0.0, %v3911
    %v3913 = vpop.f32.mrb[0].mxu0
    %v3914 = vpop.f32.mrb[0].mxu0
    %v3915 = vadd.f32 0.0, %v3914
    %v3916 = vpop.f32.mrb[0].mxu0
    %3917 = vmatprep.mubr.bf16.mxu0 0
    %3918 = vmatmul.mubr.bf16.gmra.mrb[0].mxu0 %v3767
    %v3919 = vpop.f32.mrb[0].mxu0
    %v3920 = vadd.f32 0.0, %v3919
    %v3921 = vpop.f32.mrb[0].mxu0
    %v3922 = vpop.f32.mrb[0].mxu0
    %v3923 = vadd.f32 0.0, %v3922
    %v3924 = vpop.f32.mrb[0].mxu0
    %3925 = vmatprep.mubr.bf16.mxu0 0
    %3926 = vmatmul.mubr.bf16.gmra.mrb[0].mxu0 %v3768
    %v3927 = vpop.f32.mrb[0].mxu0
    %v3928 = vadd.f32 0.0, %v3927
    %v3929 = vpop.f32.mrb[0].mxu0
    %v3930 = vpop.f32.mrb[0].mxu0
    %v3931 = vadd.f32 0.0, %v3930
    %v3932 = vpop.f32.mrb[0].mxu0
    %3933 = vmatprep.mubr.bf16.mxu0 0
    %3934 = vmatmul.mubr.bf16.gmra.mrb[0].mxu0 %v3769
    %v3935 = vpop.f32.mrb[0].mxu0
    %v3936 = vadd.f32 0.0, %v3935
    %v3937 = vpop.f32.mrb[0].mxu0
    %v3938 = vpop.f32.mrb[0].mxu0
    %v3939 = vadd.f32 0.0, %v3938
    %v3940 = vpop.f32.mrb[0].mxu0
    %3941 = vmatprep.mubr.bf16.mxu0 0
    %3942 = vmatmul.mubr.bf16.gmra.mrb[0].mxu0 %v3770
    %v3943 = vpop.f32.mrb[0].mxu0
    %v3944 = vadd.f32 0.0, %v3943
    %v3945 = vpop.f32.mrb[0].mxu0
    %v3946 = vpop.f32.mrb[0].mxu0
    %v3947 = vadd.f32 0.0, %v3946
    %v3948 = vpop.f32.mrb[0].mxu0
    %3949 = vmatprep.mubr.bf16.mxu0 0
    %3950 = vmatmul.mubr.bf16.gmra.mrb[0].mxu0 %v3771
    %v3951 = vpop.f32.mrb[0].mxu0
    %v3952 = vadd.f32 0.0, %v3951
    %v3953 = vpop.f32.mrb[0].mxu0
    %v3954 = vpop.f32.mrb[0].mxu0
    %v3955 = vadd.f32 0.0, %v3954
    %v3956 = vpop.f32.mrb[0].mxu0
    %3957 = vmatprep.mubr.bf16.mxu0 0
    %3958 = vmatmul.mubr.bf16.gmra.mrb[0].mxu0 %v3772
    %v3959 = vpop.f32.mrb[0].mxu0
    %v3960 = vadd.f32 0.0, %v3959
    %v3961 = vpop.f32.mrb[0].mxu0
    %v3962 = vpop.f32.mrb[0].mxu0
    %v3963 = vadd.f32 0.0, %v3962
    %v3964 = vpop.f32.mrb[0].mxu0
    %3965 = vdwg.mxu0
    %v3990 = vunpack.c.l.b16 %v3721
    %v3991 = vunpack.c.l.b16 %v3722
    %v3992 = vunpack.c.l.b16 %v3723
    %v3993 = vunpack.c.l.b16 %v3724
    %v3994 = vunpack.c.l.b16 %v3725
    %v3995 = vunpack.c.l.b16 %v3726
    %v3996 = vunpack.c.l.b16 %v3727
    %v3997 = vunpack.c.l.b16 %v3728
    %v3998 = vunpack.c.l.b16 %v3729
    %v3999 = vunpack.c.l.b16 %v3730
    %v4000 = vunpack.c.l.b16 %v3731
    %v4001 = vunpack.c.l.b16 %v3732
    %v4002 = vunpack.c.l.b16 %v3733
    %v4003 = vunpack.c.l.b16 %v3734
    %v4004 = vunpack.c.l.b16 %v3735
    %v4005 = vunpack.c.l.b16 %v3736
    %v4006 = vunpack.c.l.b16 %v3737
    %v4007 = vunpack.c.l.b16 %v3738
    %v4008 = vunpack.c.l.b16 %v3739
    %v4009 = vunpack.c.l.b16 %v3740
    %v4010 = vunpack.c.l.b16 %v3741
    %v4011 = vunpack.c.l.b16 %v3742
    %v4012 = vunpack.c.l.b16 %v3743
    %v4013 = vunpack.c.l.b16 %v3744
    %v4014 = vpack.c.b16 %v3991, %v3990
    %v4015 = vpack.c.b16 %v3993, %v3992
    %v4016 = vpack.c.b16 %v3995, %v3994
    %v4017 = vpack.c.b16 %v3997, %v3996
    %v4018 = vpack.c.b16 %v3999, %v3998
    %v4019 = vpack.c.b16 %v4001, %v4000
    %v4020 = vpack.c.b16 %v4003, %v4002
    %v4021 = vpack.c.b16 %v4005, %v4004
    %v4022 = vpack.c.b16 %v4007, %v4006
    %v4023 = vpack.c.b16 %v4009, %v4008
    %v4024 = vpack.c.b16 %v4011, %v4010
    %v4025 = vpack.c.b16 %v4013, %v4012
    %v4054 = vunpack.c.l.b16 %v3745
    %v4055 = vunpack.c.l.b16 %v3746
    %v4056 = vunpack.c.l.b16 %v3747
    %v4057 = vunpack.c.l.b16 %v3748
    %v4058 = vunpack.c.l.b16 %v3749
    %v4059 = vunpack.c.l.b16 %v3750
    %v4060 = vunpack.c.l.b16 %v3751
    %v4061 = vunpack.c.l.b16 %v3752
    %v4062 = vunpack.c.l.b16 %v3753
    %v4063 = vunpack.c.l.b16 %v3754
    %v4064 = vunpack.c.l.b16 %v3755
    %v4065 = vunpack.c.l.b16 %v3756
    %v4066 = vunpack.c.l.b16 %v3757
    %v4067 = vunpack.c.l.b16 %v3758
    %v4068 = vunpack.c.l.b16 %v3759
    %v4069 = vunpack.c.l.b16 %v3760
    %v4070 = vpack.c.b16 %v4055, %v4054
    %v4071 = vpack.c.b16 %v4057, %v4056
    %v4072 = vpack.c.b16 %v4059, %v4058
    %v4073 = vpack.c.b16 %v4061, %v4060
    %v4074 = vpack.c.b16 %v4063, %v4062
    %v4075 = vpack.c.b16 %v4065, %v4064
    %v4076 = vpack.c.b16 %v4067, %v4066
    %v4077 = vpack.c.b16 %v4069, %v4068
    %4086 = vmatprep.subr.bf16.mxu0 0
    %4087 = vmatpush1.bf16.msra.mxu0 %v4070
    %4088 = vmatprep.subr.bf16.mxu0 0
    %4089 = vmatpush1.bf16.msra.mxu0 %v4071
    %4090 = vmatprep.subr.bf16.mxu0 0
    %4091 = vmatpush1.bf16.msra.mxu0 %v4072
    %4092 = vmatprep.subr.bf16.mxu0 0
    %4093 = vmatpush1.bf16.msra.mxu0 %v4073
    %4094 = vmatprep.subr.bf16.mxu0 0
    %4095 = vmatpush1.bf16.msra.mxu0 %v4074
    %4096 = vmatprep.subr.bf16.mxu0 0
    %4097 = vmatpush1.bf16.msra.mxu0 %v4075
    %4098 = vmatprep.subr.bf16.mxu0 0
    %4099 = vmatpush1.bf16.msra.mxu0 %v4076
    %4100 = vmatprep.subr.bf16.mxu0 0
    %4101 = vmatpush1.bf16.msra.mxu0 %v4077
    %4102 = vmatprep.subr.bf16.mxu0 0
    %4103 = vmatpush1.bf16.msra.mxu0 0
    %4104 = vmatprep.subr.bf16.mxu0 0
    %4105 = vmatpush1.bf16.msra.mxu0 0
    %4106 = vmatprep.subr.bf16.mxu0 0
    %4107 = vmatpush1.bf16.msra.mxu0 0
    %4108 = vmatprep.subr.bf16.mxu0 0
    %4109 = vmatpush1.bf16.msra.mxu0 0
    %4110 = vmatprep.subr.bf16.mxu0 0
    %4111 = vmatpush1.bf16.msra.mxu0 0
    %4112 = vmatprep.subr.bf16.mxu0 0
    %4113 = vmatpush1.bf16.msra.mxu0 0
    %4114 = vmatprep.subr.bf16.mxu0 0
    %4115 = vmatpush1.bf16.msra.mxu0 0
    %4116 = vmatprep.subr.bf16.mxu0 0
    %4117 = vmatpush1.bf16.msra.mxu0 0
    %4118 = vmatprep.mubr.bf16.mxu0 0
    %4119 = vmatmul.mubr.bf16.gmra.mrb[0].mxu0 %v4014
    %v4120 = vpop.f32.mrb[0].mxu0
    %v4121 = vadd.f32 %v3872, %v4120
    %v4122 = vpop.f32.mrb[0].mxu0
    %v4123 = vpop.f32.mrb[0].mxu0
    %v4124 = vadd.f32 %v3875, %v4123
    %v4125 = vpop.f32.mrb[0].mxu0
    %4126 = vmatprep.mubr.bf16.mxu0 0
    %4127 = vmatmul.mubr.bf16.gmra.mrb[0].mxu0 %v4015
    %v4128 = vpop.f32.mrb[0].mxu0
    %v4129 = vadd.f32 %v3880, %v4128
    %v4130 = vpop.f32.mrb[0].mxu0
    %v4131 = vpop.f32.mrb[0].mxu0
    %v4132 = vadd.f32 %v3883, %v4131
    %v4133 = vpop.f32.mrb[0].mxu0
    %4134 = vmatprep.mubr.bf16.mxu0 0
    %4135 = vmatmul.mubr.bf16.gmra.mrb[0].mxu0 %v4016
    %v4136 = vpop.f32.mrb[0].mxu0
    %v4137 = vadd.f32 %v3888, %v4136
    %v4138 = vpop.f32.mrb[0].mxu0
    %v4139 = vpop.f32.mrb[0].mxu0
    %v4140 = vadd.f32 %v3891, %v4139
    %v4141 = vpop.f32.mrb[0].mxu0
    %4142 = vmatprep.mubr.bf16.mxu0 0
    %4143 = vmatmul.mubr.bf16.gmra.mrb[0].mxu0 %v4017
    %v4144 = vpop.f32.mrb[0].mxu0
    %v4145 = vadd.f32 %v3896, %v4144
    %v4146 = vpop.f32.mrb[0].mxu0
    %v4147 = vpop.f32.mrb[0].mxu0
    %v4148 = vadd.f32 %v3899, %v4147
    %v4149 = vpop.f32.mrb[0].mxu0
    %4150 = vmatprep.mubr.bf16.mxu0 0
    %4151 = vmatmul.mubr.bf16.gmra.mrb[0].mxu0 %v4018
    %v4152 = vpop.f32.mrb[0].mxu0
    %v4153 = vadd.f32 %v3904, %v4152
    %v4154 = vpop.f32.mrb[0].mxu0
    %v4155 = vpop.f32.mrb[0].mxu0
    %v4156 = vadd.f32 %v3907, %v4155
    %v4157 = vpop.f32.mrb[0].mxu0
    %4158 = vmatprep.mubr.bf16.mxu0 0
    %4159 = vmatmul.mubr.bf16.gmra.mrb[0].mxu0 %v4019
    %v4160 = vpop.f32.mrb[0].mxu0
    %v4161 = vadd.f32 %v3912, %v4160
    %v4162 = vpop.f32.mrb[0].mxu0
    %v4163 = vpop.f32.mrb[0].mxu0
    %v4164 = vadd.f32 %v3915, %v4163
    %v4165 = vpop.f32.mrb[0].mxu0
    %4166 = vmatprep.mubr.bf16.mxu0 0
    %4167 = vmatmul.mubr.bf16.gmra.mrb[0].mxu0 %v4020
    %v4168 = vpop.f32.mrb[0].mxu0
    %v4169 = vadd.f32 %v3920, %v4168
    %v4170 = vpop.f32.mrb[0].mxu0
    %v4171 = vpop.f32.mrb[0].mxu0
    %v4172 = vadd.f32 %v3923, %v4171
    %v4173 = vpop.f32.mrb[0].mxu0
    %4174 = vmatprep.mubr.bf16.mxu0 0
    %4175 = vmatmul.mubr.bf16.gmra.mrb[0].mxu0 %v4021
    %v4176 = vpop.f32.mrb[0].mxu0
    %v4177 = vadd.f32 %v3928, %v4176
    %v4178 = vpop.f32.mrb[0].mxu0
    %v4179 = vpop.f32.mrb[0].mxu0
    %v4180 = vadd.f32 %v3931, %v4179
    %v4181 = vpop.f32.mrb[0].mxu0
    %4182 = vmatprep.mubr.bf16.mxu0 0
    %4183 = vmatmul.mubr.bf16.gmra.mrb[0].mxu0 %v4022
    %v4184 = vpop.f32.mrb[0].mxu0
    %v4185 = vadd.f32 %v3936, %v4184
    %v4186 = vpop.f32.mrb[0].mxu0
    %v4187 = vpop.f32.mrb[0].mxu0
    %v4188 = vadd.f32 %v3939, %v4187
    %v4189 = vpop.f32.mrb[0].mxu0
    %4190 = vmatprep.mubr.bf16.mxu0 0
    %4191 = vmatmul.mubr.bf16.gmra.mrb[0].mxu0 %v4023
    %v4192 = vpop.f32.mrb[0].mxu0
    %v4193 = vadd.f32 %v3944, %v4192
    %v4194 = vpop.f32.mrb[0].mxu0
    %v4195 = vpop.f32.mrb[0].mxu0
    %v4196 = vadd.f32 %v3947, %v4195
    %v4197 = vpop.f32.mrb[0].mxu0
    %4198 = vmatprep.mubr.bf16.mxu0 0
    %4199 = vmatmul.mubr.bf16.gmra.mrb[0].mxu0 %v4024
    %v4200 = vpop.f32.mrb[0].mxu0
    %v4201 = vadd.f32 %v3952, %v4200
    %v4202 = vpop.f32.mrb[0].mxu0
    %v4203 = vpop.f32.mrb[0].mxu0
    %v4204 = vadd.f32 %v3955, %v4203
    %v4205 = vpop.f32.mrb[0].mxu0
    %4206 = vmatprep.mubr.bf16.mxu0 0
    %4207 = vmatmul.mubr.bf16.gmra.mrb[0].mxu0 %v4025
    %v4208 = vpop.f32.mrb[0].mxu0
    %v4209 = vadd.f32 %v3960, %v4208
    %v4210 = vpop.f32.mrb[0].mxu0
    %v4211 = vpop.f32.mrb[0].mxu0
    %v4212 = vadd.f32 %v3963, %v4211
    %v4213 = vpop.f32.mrb[0].mxu0
    %4214 = vdwg.mxu0
    %v4215 = vld [vmem:[%s553] sm:$0xff]
    %v4216 = vld [vmem:[%s553 + $0x8] sm:$0xff]
    %v4217 = vld [vmem:[%s553 + $0x10] sm:$0xff]
    %v4218 = vld [vmem:[%s553 + $0x18] sm:$0xff]
    %v4219 = vld [vmem:[%s553 + $0x20] sm:$0xff]
    %v4220 = vld [vmem:[%s553 + $0x28] sm:$0xff]
    %v4221 = vld [vmem:[%s553 + $0x30] sm:$0xff]
    %v4222 = vld [vmem:[%s553 + $0x38] sm:$0xff]
    %v4223 = vld [vmem:[%s553 + $0x40] sm:$0xff]
    %v4224 = vld [vmem:[%s553 + $0x48] sm:$0xff]
    %v4225 = vld [vmem:[%s553 + $0x50] sm:$0xff]
    %v4226 = vld [vmem:[%s553 + $0x58] sm:$0xff]
    %v4227 = vld [vmem:[%s1160] sm:$0xf]
    %v4228 = vld [vmem:[%s1160 + $0x4] sm:$0xf]
    %v4229 = vld [vmem:[%s1160 + $0x8] sm:$0xf]
    %v4230 = vld [vmem:[%s1160 + $0xc] sm:$0xf]
    %v4231 = vld [vmem:[%s1160 + $0x10] sm:$0xf]
    %v4232 = vld [vmem:[%s1160 + $0x14] sm:$0xf]
    %v4233 = vld [vmem:[%s1160 + $0x18] sm:$0xf]
    %v4234 = vld [vmem:[%s1160 + $0x1c] sm:$0xf]
    %v4235 = vld [vmem:[%s1160 + $0x20] sm:$0xf]
    %v4236 = vld [vmem:[%s1160 + $0x24] sm:$0xf]
    %v4237 = vld [vmem:[%s1160 + $0x28] sm:$0xf]
    %v4238 = vld [vmem:[%s1160 + $0x2c] sm:$0xf]
    %v4239 = vld [vmem:[%s1160 + $0x30] sm:$0xf]
    %v4240 = vld [vmem:[%s1160 + $0x34] sm:$0xf]
    %v4241 = vld [vmem:[%s1160 + $0x38] sm:$0xf]
    %v4242 = vld [vmem:[%s1160 + $0x3c] sm:$0xf]
    %v4259 = vunpack.c.l.b16 %v4227
    %v4260 = vunpack.c.l.b16 %v4228
    %v4261 = vunpack.c.l.b16 %v4229
    %v4262 = vunpack.c.l.b16 %v4230
    %v4263 = vunpack.c.l.b16 %v4231
    %v4264 = vunpack.c.l.b16 %v4232
    %v4265 = vunpack.c.l.b16 %v4233
    %v4266 = vunpack.c.l.b16 %v4234
    %v4267 = vunpack.c.l.b16 %v4235
    %v4268 = vunpack.c.l.b16 %v4236
    %v4269 = vunpack.c.l.b16 %v4237
    %v4270 = vunpack.c.l.b16 %v4238
    %v4271 = vunpack.c.l.b16 %v4239
    %v4272 = vunpack.c.l.b16 %v4240
    %v4273 = vunpack.c.l.b16 %v4241
    %v4274 = vunpack.c.l.b16 %v4242
    %v4275 = vpack.c.b16 %v4260, %v4259
    %v4276 = vpack.c.b16 %v4262, %v4261
    %v4277 = vpack.c.b16 %v4264, %v4263
    %v4278 = vpack.c.b16 %v4266, %v4265
    %v4279 = vpack.c.b16 %v4268, %v4267
    %v4280 = vpack.c.b16 %v4270, %v4269
    %v4281 = vpack.c.b16 %v4272, %v4271
    %v4282 = vpack.c.b16 %v4274, %v4273
    %4291 = vmatprep.subr.bf16.mxu0 0
    %4292 = vmatpush1.bf16.msra.mxu0 %v4275
    %4293 = vmatprep.subr.bf16.mxu0 0
    %4294 = vmatpush1.bf16.msra.mxu0 %v4276
    %4295 = vmatprep.subr.bf16.mxu0 0
    %4296 = vmatpush1.bf16.msra.mxu0 %v4277
    %4297 = vmatprep.subr.bf16.mxu0 0
    %4298 = vmatpush1.bf16.msra.mxu0 %v4278
    %4299 = vmatprep.subr.bf16.mxu0 0
    %4300 = vmatpush1.bf16.msra.mxu0 %v4279
    %4301 = vmatprep.subr.bf16.mxu0 0
    %4302 = vmatpush1.bf16.msra.mxu0 %v4280
    %4303 = vmatprep.subr.bf16.mxu0 0
    %4304 = vmatpush1.bf16.msra.mxu0 %v4281
    %4305 = vmatprep.subr.bf16.mxu0 0
    %4306 = vmatpush1.bf16.msra.mxu0 %v4282
    %4307 = vmatprep.subr.bf16.mxu0 0
    %4308 = vmatpush1.bf16.msra.mxu0 0
    %4309 = vmatprep.subr.bf16.mxu0 0
    %4310 = vmatpush1.bf16.msra.mxu0 0
    %4311 = vmatprep.subr.bf16.mxu0 0
    %4312 = vmatpush1.bf16.msra.mxu0 0
    %4313 = vmatprep.subr.bf16.mxu0 0
    %4314 = vmatpush1.bf16.msra.mxu0 0
    %4315 = vmatprep.subr.bf16.mxu0 0
    %4316 = vmatpush1.bf16.msra.mxu0 0
    %4317 = vmatprep.subr.bf16.mxu0 0
    %4318 = vmatpush1.bf16.msra.mxu0 0
    %4319 = vmatprep.subr.bf16.mxu0 0
    %4320 = vmatpush1.bf16.msra.mxu0 0
    %4321 = vmatprep.subr.bf16.mxu0 0
    %4322 = vmatpush1.bf16.msra.mxu0 0
    %4323 = vmatprep.mubr.bf16.mxu0 0
    %4324 = vmatmul.mubr.bf16.gmra.mrb[0].mxu0 %v4215
    %v4325 = vpop.f32.mrb[0].mxu0
    %v4326 = vadd.f32 0.0, %v4325
    %v4327 = vpop.f32.mrb[0].mxu0
    %v4328 = vpop.f32.mrb[0].mxu0
    %v4329 = vadd.f32 0.0, %v4328
    %v4330 = vpop.f32.mrb[0].mxu0
    %4331 = vmatprep.mubr.bf16.mxu0 0
    %4332 = vmatmul.mubr.bf16.gmra.mrb[0].mxu0 %v4216
    %v4333 = vpop.f32.mrb[0].mxu0
    %v4334 = vadd.f32 0.0, %v4333
    %v4335 = vpop.f32.mrb[0].mxu0
    %v4336 = vpop.f32.mrb[0].mxu0
    %v4337 = vadd.f32 0.0, %v4336
    %v4338 = vpop.f32.mrb[0].mxu0
    %4339 = vmatprep.mubr.bf16.mxu0 0
    %4340 = vmatmul.mubr.bf16.gmra.mrb[0].mxu0 %v4217
    %v4341 = vpop.f32.mrb[0].mxu0
    %v4342 = vadd.f32 0.0, %v4341
    %v4343 = vpop.f32.mrb[0].mxu0
    %v4344 = vpop.f32.mrb[0].mxu0
    %v4345 = vadd.f32 0.0, %v4344
    %v4346 = vpop.f32.mrb[0].mxu0
    %4347 = vmatprep.mubr.bf16.mxu0 0
    %4348 = vmatmul.mubr.bf16.gmra.mrb[0].mxu0 %v4218
    %v4349 = vpop.f32.mrb[0].mxu0
    %v4350 = vadd.f32 0.0, %v4349
    %v4351 = vpop.f32.mrb[0].mxu0
    %v4352 = vpop.f32.mrb[0].mxu0
    %v4353 = vadd.f32 0.0, %v4352
    %v4354 = vpop.f32.mrb[0].mxu0
    %4355 = vmatprep.mubr.bf16.mxu0 0
    %4356 = vmatmul.mubr.bf16.gmra.mrb[0].mxu0 %v4219
    %v4357 = vpop.f32.mrb[0].mxu0
    %v4358 = vadd.f32 0.0, %v4357
    %v4359 = vpop.f32.mrb[0].mxu0
    %v4360 = vpop.f32.mrb[0].mxu0
    %v4361 = vadd.f32 0.0, %v4360
    %v4362 = vpop.f32.mrb[0].mxu0
    %4363 = vmatprep.mubr.bf16.mxu0 0
    %4364 = vmatmul.mubr.bf16.gmra.mrb[0].mxu0 %v4220
    %v4365 = vpop.f32.mrb[0].mxu0
    %v4366 = vadd.f32 0.0, %v4365
    %v4367 = vpop.f32.mrb[0].mxu0
    %v4368 = vpop.f32.mrb[0].mxu0
    %v4369 = vadd.f32 0.0, %v4368
    %v4370 = vpop.f32.mrb[0].mxu0
    %4371 = vmatprep.mubr.bf16.mxu0 0
    %4372 = vmatmul.mubr.bf16.gmra.mrb[0].mxu0 %v4221
    %v4373 = vpop.f32.mrb[0].mxu0
    %v4374 = vadd.f32 0.0, %v4373
    %v4375 = vpop.f32.mrb[0].mxu0
    %v4376 = vpop.f32.mrb[0].mxu0
    %v4377 = vadd.f32 0.0, %v4376
    %v4378 = vpop.f32.mrb[0].mxu0
    %4379 = vmatprep.mubr.bf16.mxu0 0
    %4380 = vmatmul.mubr.bf16.gmra.mrb[0].mxu0 %v4222
    %v4381 = vpop.f32.mrb[0].mxu0
    %v4382 = vadd.f32 0.0, %v4381
    %v4383 = vpop.f32.mrb[0].mxu0
    %v4384 = vpop.f32.mrb[0].mxu0
    %v4385 = vadd.f32 0.0, %v4384
    %v4386 = vpop.f32.mrb[0].mxu0
    %4387 = vmatprep.mubr.bf16.mxu0 0
    %4388 = vmatmul.mubr.bf16.gmra.mrb[0].mxu0 %v4223
    %v4389 = vpop.f32.mrb[0].mxu0
    %v4390 = vadd.f32 0.0, %v4389
    %v4391 = vpop.f32.mrb[0].mxu0
    %v4392 = vpop.f32.mrb[0].mxu0
    %v4393 = vadd.f32 0.0, %v4392
    %v4394 = vpop.f32.mrb[0].mxu0
    %4395 = vmatprep.mubr.bf16.mxu0 0
    %4396 = vmatmul.mubr.bf16.gmra.mrb[0].mxu0 %v4224
    %v4397 = vpop.f32.mrb[0].mxu0
    %v4398 = vadd.f32 0.0, %v4397
    %v4399 = vpop.f32.mrb[0].mxu0
    %v4400 = vpop.f32.mrb[0].mxu0
    %v4401 = vadd.f32 0.0, %v4400
    %v4402 = vpop.f32.mrb[0].mxu0
    %4403 = vmatprep.mubr.bf16.mxu0 0
    %4404 = vmatmul.mubr.bf16.gmra.mrb[0].mxu0 %v4225
    %v4405 = vpop.f32.mrb[0].mxu0
    %v4406 = vadd.f32 0.0, %v4405
    %v4407 = vpop.f32.mrb[0].mxu0
    %v4408 = vpop.f32.mrb[0].mxu0
    %v4409 = vadd.f32 0.0, %v4408
    %v4410 = vpop.f32.mrb[0].mxu0
    %4411 = vmatprep.mubr.bf16.mxu0 0
    %4412 = vmatmul.mubr.bf16.gmra.mrb[0].mxu0 %v4226
    %v4413 = vpop.f32.mrb[0].mxu0
    %v4414 = vadd.f32 0.0, %v4413
    %v4415 = vpop.f32.mrb[0].mxu0
    %v4416 = vpop.f32.mrb[0].mxu0
    %v4417 = vadd.f32 0.0, %v4416
    %v4418 = vpop.f32.mrb[0].mxu0
    %4419 = vdwg.mxu0
    %v4420 = vadd.f32 %v4121, %v4326
    %v4421 = vadd.f32 %v4124, %v4329
    %v4422 = vadd.f32 %v4129, %v4334
    %v4423 = vadd.f32 %v4132, %v4337
    %v4424 = vadd.f32 %v4137, %v4342
    %v4425 = vadd.f32 %v4140, %v4345
    %v4426 = vadd.f32 %v4145, %v4350
    %v4427 = vadd.f32 %v4148, %v4353
    %v4428 = vadd.f32 %v4153, %v4358
    %v4429 = vadd.f32 %v4156, %v4361
    %v4430 = vadd.f32 %v4161, %v4366
    %v4431 = vadd.f32 %v4164, %v4369
    %v4432 = vadd.f32 %v4169, %v4374
    %v4433 = vadd.f32 %v4172, %v4377
    %v4434 = vadd.f32 %v4177, %v4382
    %v4435 = vadd.f32 %v4180, %v4385
    %v4436 = vadd.f32 %v4185, %v4390
    %v4437 = vadd.f32 %v4188, %v4393
    %v4438 = vadd.f32 %v4193, %v4398
    %v4439 = vadd.f32 %v4196, %v4401
    %v4440 = vadd.f32 %v4201, %v4406
    %v4441 = vadd.f32 %v4204, %v4409
    %v4442 = vadd.f32 %v4209, %v4414
    %v4443 = vadd.f32 %v4212, %v4417
    %v4444 = vld [vmem:[%s639] sm:$0xff]
    %v4445 = vld [vmem:[%s639 + $0x8] sm:$0xff]
    %v4446 = vld [vmem:[%s639 + $0x10] sm:$0xff]
    %v4447 = vld [vmem:[%s639 + $0x18] sm:$0xff]
    %v4448 = vld [vmem:[%s639 + $0x20] sm:$0xff]
    %v4449 = vld [vmem:[%s639 + $0x28] sm:$0xff]
    %v4450 = vld [vmem:[%s639 + $0x30] sm:$0xff]
    %v4451 = vld [vmem:[%s639 + $0x38] sm:$0xff]
    %v4452 = vld [vmem:[%s639 + $0x40] sm:$0xff]
    %v4453 = vld [vmem:[%s639 + $0x48] sm:$0xff]
    %v4454 = vld [vmem:[%s639 + $0x50] sm:$0xff]
    %v4455 = vld [vmem:[%s639 + $0x58] sm:$0xff]
    %v4456 = vld [vmem:[%s1390] sm:$0xf]
    %v4457 = vld [vmem:[%s1390 + $0x4] sm:$0xf]
    %v4458 = vld [vmem:[%s1390 + $0x8] sm:$0xf]
    %v4459 = vld [vmem:[%s1390 + $0xc] sm:$0xf]
    %v4460 = vld [vmem:[%s1390 + $0x10] sm:$0xf]
    %v4461 = vld [vmem:[%s1390 + $0x14] sm:$0xf]
    %v4462 = vld [vmem:[%s1390 + $0x18] sm:$0xf]
    %v4463 = vld [vmem:[%s1390 + $0x1c] sm:$0xf]
    %v4464 = vld [vmem:[%s1390 + $0x20] sm:$0xf]
    %v4465 = vld [vmem:[%s1390 + $0x24] sm:$0xf]
    %v4466 = vld [vmem:[%s1390 + $0x28] sm:$0xf]
    %v4467 = vld [vmem:[%s1390 + $0x2c] sm:$0xf]
    %v4468 = vld [vmem:[%s1390 + $0x30] sm:$0xf]
    %v4469 = vld [vmem:[%s1390 + $0x34] sm:$0xf]
    %v4470 = vld [vmem:[%s1390 + $0x38] sm:$0xf]
    %v4471 = vld [vmem:[%s1390 + $0x3c] sm:$0xf]
    %v4488 = vunpack.c.l.b16 %v4456
    %v4489 = vunpack.c.l.b16 %v4457
    %v4490 = vunpack.c.l.b16 %v4458
    %v4491 = vunpack.c.l.b16 %v4459
    %v4492 = vunpack.c.l.b16 %v4460
    %v4493 = vunpack.c.l.b16 %v4461
    %v4494 = vunpack.c.l.b16 %v4462
    %v4495 = vunpack.c.l.b16 %v4463
    %v4496 = vunpack.c.l.b16 %v4464
    %v4497 = vunpack.c.l.b16 %v4465
    %v4498 = vunpack.c.l.b16 %v4466
    %v4499 = vunpack.c.l.b16 %v4467
    %v4500 = vunpack.c.l.b16 %v4468
    %v4501 = vunpack.c.l.b16 %v4469
    %v4502 = vunpack.c.l.b16 %v4470
    %v4503 = vunpack.c.l.b16 %v4471
    %v4504 = vpack.c.b16 %v4489, %v4488
    %v4505 = vpack.c.b16 %v4491, %v4490
    %v4506 = vpack.c.b16 %v4493, %v4492
    %v4507 = vpack.c.b16 %v4495, %v4494
    %v4508 = vpack.c.b16 %v4497, %v4496
    %v4509 = vpack.c.b16 %v4499, %v4498
    %v4510 = vpack.c.b16 %v4501, %v4500
    %v4511 = vpack.c.b16 %v4503, %v4502
    %4520 = vmatprep.subr.bf16.mxu0 0
    %4521 = vmatpush1.bf16.msra.mxu0 %v4504
    %4522 = vmatprep.subr.bf16.mxu0 0
    %4523 = vmatpush1.bf16.msra.mxu0 %v4505
    %4524 = vmatprep.subr.bf16.mxu0 0
    %4525 = vmatpush1.bf16.msra.mxu0 %v4506
    %4526 = vmatprep.subr.bf16.mxu0 0
    %4527 = vmatpush1.bf16.msra.mxu0 %v4507
    %4528 = vmatprep.subr.bf16.mxu0 0
    %4529 = vmatpush1.bf16.msra.mxu0 %v4508
    %4530 = vmatprep.subr.bf16.mxu0 0
    %4531 = vmatpush1.bf16.msra.mxu0 %v4509
    %4532 = vmatprep.subr.bf16.mxu0 0
    %4533 = vmatpush1.bf16.msra.mxu0 %v4510
    %4534 = vmatprep.subr.bf16.mxu0 0
    %4535 = vmatpush1.bf16.msra.mxu0 %v4511
    %4536 = vmatprep.subr.bf16.mxu0 0
    %4537 = vmatpush1.bf16.msra.mxu0 0
    %4538 = vmatprep.subr.bf16.mxu0 0
    %4539 = vmatpush1.bf16.msra.mxu0 0
    %4540 = vmatprep.subr.bf16.mxu0 0
    %4541 = vmatpush1.bf16.msra.mxu0 0
    %4542 = vmatprep.subr.bf16.mxu0 0
    %4543 = vmatpush1.bf16.msra.mxu0 0
    %4544 = vmatprep.subr.bf16.mxu0 0
    %4545 = vmatpush1.bf16.msra.mxu0 0
    %4546 = vmatprep.subr.bf16.mxu0 0
    %4547 = vmatpush1.bf16.msra.mxu0 0
    %4548 = vmatprep.subr.bf16.mxu0 0
    %4549 = vmatpush1.bf16.msra.mxu0 0
    %4550 = vmatprep.subr.bf16.mxu0 0
    %4551 = vmatpush1.bf16.msra.mxu0 0
    %4552 = vmatprep.mubr.bf16.mxu0 0
    %4553 = vmatmul.mubr.bf16.gmra.mrb[0].mxu0 %v4444
    %v4554 = vpop.f32.mrb[0].mxu0
    %v4555 = vadd.f32 0.0, %v4554
    %v4556 = vpop.f32.mrb[0].mxu0
    %v4557 = vpop.f32.mrb[0].mxu0
    %v4558 = vadd.f32 0.0, %v4557
    %v4559 = vpop.f32.mrb[0].mxu0
    %4560 = vmatprep.mubr.bf16.mxu0 0
    %4561 = vmatmul.mubr.bf16.gmra.mrb[0].mxu0 %v4445
    %v4562 = vpop.f32.mrb[0].mxu0
    %v4563 = vadd.f32 0.0, %v4562
    %v4564 = vpop.f32.mrb[0].mxu0
    %v4565 = vpop.f32.mrb[0].mxu0
    %v4566 = vadd.f32 0.0, %v4565
    %v4567 = vpop.f32.mrb[0].mxu0
    %4568 = vmatprep.mubr.bf16.mxu0 0
    %4569 = vmatmul.mubr.bf16.gmra.mrb[0].mxu0 %v4446
    %v4570 = vpop.f32.mrb[0].mxu0
    %v4571 = vadd.f32 0.0, %v4570
    %v4572 = vpop.f32.mrb[0].mxu0
    %v4573 = vpop.f32.mrb[0].mxu0
    %v4574 = vadd.f32 0.0, %v4573
    %v4575 = vpop.f32.mrb[0].mxu0
    %4576 = vmatprep.mubr.bf16.mxu0 0
    %4577 = vmatmul.mubr.bf16.gmra.mrb[0].mxu0 %v4447
    %v4578 = vpop.f32.mrb[0].mxu0
    %v4579 = vadd.f32 0.0, %v4578
    %v4580 = vpop.f32.mrb[0].mxu0
    %v4581 = vpop.f32.mrb[0].mxu0
    %v4582 = vadd.f32 0.0, %v4581
    %v4583 = vpop.f32.mrb[0].mxu0
    %4584 = vmatprep.mubr.bf16.mxu0 0
    %4585 = vmatmul.mubr.bf16.gmra.mrb[0].mxu0 %v4448
    %v4586 = vpop.f32.mrb[0].mxu0
    %v4587 = vadd.f32 0.0, %v4586
    %v4588 = vpop.f32.mrb[0].mxu0
    %v4589 = vpop.f32.mrb[0].mxu0
    %v4590 = vadd.f32 0.0, %v4589
    %v4591 = vpop.f32.mrb[0].mxu0
    %4592 = vmatprep.mubr.bf16.mxu0 0
    %4593 = vmatmul.mubr.bf16.gmra.mrb[0].mxu0 %v4449
    %v4594 = vpop.f32.mrb[0].mxu0
    %v4595 = vadd.f32 0.0, %v4594
    %v4596 = vpop.f32.mrb[0].mxu0
    %v4597 = vpop.f32.mrb[0].mxu0
    %v4598 = vadd.f32 0.0, %v4597
    %v4599 = vpop.f32.mrb[0].mxu0
    %4600 = vmatprep.mubr.bf16.mxu0 0
    %4601 = vmatmul.mubr.bf16.gmra.mrb[0].mxu0 %v4450
    %v4602 = vpop.f32.mrb[0].mxu0
    %v4603 = vadd.f32 0.0, %v4602
    %v4604 = vpop.f32.mrb[0].mxu0
    %v4605 = vpop.f32.mrb[0].mxu0
    %v4606 = vadd.f32 0.0, %v4605
    %v4607 = vpop.f32.mrb[0].mxu0
    %4608 = vmatprep.mubr.bf16.mxu0 0
    %4609 = vmatmul.mubr.bf16.gmra.mrb[0].mxu0 %v4451
    %v4610 = vpop.f32.mrb[0].mxu0
    %v4611 = vadd.f32 0.0, %v4610
    %v4612 = vpop.f32.mrb[0].mxu0
    %v4613 = vpop.f32.mrb[0].mxu0
    %v4614 = vadd.f32 0.0, %v4613
    %v4615 = vpop.f32.mrb[0].mxu0
    %4616 = vmatprep.mubr.bf16.mxu0 0
    %4617 = vmatmul.mubr.bf16.gmra.mrb[0].mxu0 %v4452
    %v4618 = vpop.f32.mrb[0].mxu0
    %v4619 = vadd.f32 0.0, %v4618
    %v4620 = vpop.f32.mrb[0].mxu0
    %v4621 = vpop.f32.mrb[0].mxu0
    %v4622 = vadd.f32 0.0, %v4621
    %v4623 = vpop.f32.mrb[0].mxu0
    %4624 = vmatprep.mubr.bf16.mxu0 0
    %4625 = vmatmul.mubr.bf16.gmra.mrb[0].mxu0 %v4453
    %v4626 = vpop.f32.mrb[0].mxu0
    %v4627 = vadd.f32 0.0, %v4626
    %v4628 = vpop.f32.mrb[0].mxu0
    %v4629 = vpop.f32.mrb[0].mxu0
    %v4630 = vadd.f32 0.0, %v4629
    %v4631 = vpop.f32.mrb[0].mxu0
    %4632 = vmatprep.mubr.bf16.mxu0 0
    %4633 = vmatmul.mubr.bf16.gmra.mrb[0].mxu0 %v4454
    %v4634 = vpop.f32.mrb[0].mxu0
    %v4635 = vadd.f32 0.0, %v4634
    %v4636 = vpop.f32.mrb[0].mxu0
    %v4637 = vpop.f32.mrb[0].mxu0
    %v4638 = vadd.f32 0.0, %v4637
    %v4639 = vpop.f32.mrb[0].mxu0
    %4640 = vmatprep.mubr.bf16.mxu0 0
    %4641 = vmatmul.mubr.bf16.gmra.mrb[0].mxu0 %v4455
    %v4642 = vpop.f32.mrb[0].mxu0
    %v4643 = vadd.f32 0.0, %v4642
    %v4644 = vpop.f32.mrb[0].mxu0
    %v4645 = vpop.f32.mrb[0].mxu0
    %v4646 = vadd.f32 0.0, %v4645
    %v4647 = vpop.f32.mrb[0].mxu0
    %4648 = vdwg.mxu0
    %v4649 = vadd.f32 %v4420, %v4555
    %v4650 = vadd.f32 %v4421, %v4558
    %v4651 = vadd.f32 %v4422, %v4563
    %v4652 = vadd.f32 %v4423, %v4566
    %v4653 = vadd.f32 %v4424, %v4571
    %v4654 = vadd.f32 %v4425, %v4574
    %v4655 = vadd.f32 %v4426, %v4579
    %v4656 = vadd.f32 %v4427, %v4582
    %v4657 = vadd.f32 %v4428, %v4587
    %v4658 = vadd.f32 %v4429, %v4590
    %v4659 = vadd.f32 %v4430, %v4595
    %v4660 = vadd.f32 %v4431, %v4598
    %v4661 = vadd.f32 %v4432, %v4603
    %v4662 = vadd.f32 %v4433, %v4606
    %v4663 = vadd.f32 %v4434, %v4611
    %v4664 = vadd.f32 %v4435, %v4614
    %v4665 = vadd.f32 %v4436, %v4619
    %v4666 = vadd.f32 %v4437, %v4622
    %v4667 = vadd.f32 %v4438, %v4627
    %v4668 = vadd.f32 %v4439, %v4630
    %v4669 = vadd.f32 %v4440, %v4635
    %v4670 = vadd.f32 %v4441, %v4638
    %v4671 = vadd.f32 %v4442, %v4643
    %v4672 = vadd.f32 %v4443, %v4646
    %v4673 = vld [vmem:[%s1608] sm:$0xff]
    %v4674 = vld [vmem:[%s1608 + $0x8] sm:$0xff]
    %v4675 = vld [vmem:[%s1608 + $0x10] sm:$0xff]
    %v4676 = vld [vmem:[%s1608 + $0x18] sm:$0xff]
    %v4677 = vld [vmem:[%s1608 + $0x20] sm:$0xff]
    %v4678 = vld [vmem:[%s1608 + $0x28] sm:$0xff]
    %v4679 = vld [vmem:[%s1608 + $0x30] sm:$0xff]
    %v4680 = vld [vmem:[%s1608 + $0x38] sm:$0xff]
    %v4681 = vld [vmem:[%s1608 + $0x40] sm:$0xff]
    %v4682 = vld [vmem:[%s1608 + $0x48] sm:$0xff]
    %v4683 = vld [vmem:[%s1608 + $0x50] sm:$0xff]
    %v4684 = vld [vmem:[%s1608 + $0x58] sm:$0xff]
    %v4685 = vld [vmem:[%s1621] sm:$0xf]
    %v4686 = vld [vmem:[%s1621 + $0x4] sm:$0xf]
    %v4687 = vld [vmem:[%s1621 + $0x8] sm:$0xf]
    %v4688 = vld [vmem:[%s1621 + $0xc] sm:$0xf]
    %v4689 = vld [vmem:[%s1621 + $0x10] sm:$0xf]
    %v4690 = vld [vmem:[%s1621 + $0x14] sm:$0xf]
    %v4691 = vld [vmem:[%s1621 + $0x18] sm:$0xf]
    %v4692 = vld [vmem:[%s1621 + $0x1c] sm:$0xf]
    %v4693 = vld [vmem:[%s1621 + $0x20] sm:$0xf]
    %v4694 = vld [vmem:[%s1621 + $0x24] sm:$0xf]
    %v4695 = vld [vmem:[%s1621 + $0x28] sm:$0xf]
    %v4696 = vld [vmem:[%s1621 + $0x2c] sm:$0xf]
    %v4697 = vld [vmem:[%s1621 + $0x30] sm:$0xf]
    %v4698 = vld [vmem:[%s1621 + $0x34] sm:$0xf]
    %v4699 = vld [vmem:[%s1621 + $0x38] sm:$0xf]
    %v4700 = vld [vmem:[%s1621 + $0x3c] sm:$0xf]
    %v4717 = vunpack.c.l.b16 %v4685
    %v4718 = vunpack.c.l.b16 %v4686
    %v4719 = vunpack.c.l.b16 %v4687
    %v4720 = vunpack.c.l.b16 %v4688
    %v4721 = vunpack.c.l.b16 %v4689
    %v4722 = vunpack.c.l.b16 %v4690
    %v4723 = vunpack.c.l.b16 %v4691
    %v4724 = vunpack.c.l.b16 %v4692
    %v4725 = vunpack.c.l.b16 %v4693
    %v4726 = vunpack.c.l.b16 %v4694
    %v4727 = vunpack.c.l.b16 %v4695
    %v4728 = vunpack.c.l.b16 %v4696
    %v4729 = vunpack.c.l.b16 %v4697
    %v4730 = vunpack.c.l.b16 %v4698
    %v4731 = vunpack.c.l.b16 %v4699
    %v4732 = vunpack.c.l.b16 %v4700
    %v4733 = vpack.c.b16 %v4718, %v4717
    %v4734 = vpack.c.b16 %v4720, %v4719
    %v4735 = vpack.c.b16 %v4722, %v4721
    %v4736 = vpack.c.b16 %v4724, %v4723
    %v4737 = vpack.c.b16 %v4726, %v4725
    %v4738 = vpack.c.b16 %v4728, %v4727
    %v4739 = vpack.c.b16 %v4730, %v4729
    %v4740 = vpack.c.b16 %v4732, %v4731
    %4749 = vmatprep.subr.bf16.mxu0 0
    %4750 = vmatpush1.bf16.msra.mxu0 %v4733
    %4751 = vmatprep.subr.bf16.mxu0 0
    %4752 = vmatpush1.bf16.msra.mxu0 %v4734
    %4753 = vmatprep.subr.bf16.mxu0 0
    %4754 = vmatpush1.bf16.msra.mxu0 %v4735
    %4755 = vmatprep.subr.bf16.mxu0 0
    %4756 = vmatpush1.bf16.msra.mxu0 %v4736
    %4757 = vmatprep.subr.bf16.mxu0 0
    %4758 = vmatpush1.bf16.msra.mxu0 %v4737
    %4759 = vmatprep.subr.bf16.mxu0 0
    %4760 = vmatpush1.bf16.msra.mxu0 %v4738
    %4761 = vmatprep.subr.bf16.mxu0 0
    %4762 = vmatpush1.bf16.msra.mxu0 %v4739
    %4763 = vmatprep.subr.bf16.mxu0 0
    %4764 = vmatpush1.bf16.msra.mxu0 %v4740
    %4765 = vmatprep.subr.bf16.mxu0 0
    %4766 = vmatpush1.bf16.msra.mxu0 0
    %4767 = vmatprep.subr.bf16.mxu0 0
    %4768 = vmatpush1.bf16.msra.mxu0 0
    %4769 = vmatprep.subr.bf16.mxu0 0
    %4770 = vmatpush1.bf16.msra.mxu0 0
    %4771 = vmatprep.subr.bf16.mxu0 0
    %4772 = vmatpush1.bf16.msra.mxu0 0
    %4773 = vmatprep.subr.bf16.mxu0 0
    %4774 = vmatpush1.bf16.msra.mxu0 0
    %4775 = vmatprep.subr.bf16.mxu0 0
    %4776 = vmatpush1.bf16.msra.mxu0 0
    %4777 = vmatprep.subr.bf16.mxu0 0
    %4778 = vmatpush1.bf16.msra.mxu0 0
    %4779 = vmatprep.subr.bf16.mxu0 0
    %4780 = vmatpush1.bf16.msra.mxu0 0
    %4781 = vmatprep.mubr.bf16.mxu0 0
    %4782 = vmatmul.mubr.bf16.gmra.mrb[0].mxu0 %v4673
    %v4783 = vpop.f32.mrb[0].mxu0
    %v4784 = vadd.f32 0.0, %v4783
    %v4785 = vpop.f32.mrb[0].mxu0
    %v4786 = vpop.f32.mrb[0].mxu0
    %v4787 = vadd.f32 0.0, %v4786
    %v4788 = vpop.f32.mrb[0].mxu0
    %4789 = vmatprep.mubr.bf16.mxu0 0
    %4790 = vmatmul.mubr.bf16.gmra.mrb[0].mxu0 %v4674
    %v4791 = vpop.f32.mrb[0].mxu0
    %v4792 = vadd.f32 0.0, %v4791
    %v4793 = vpop.f32.mrb[0].mxu0
    %v4794 = vpop.f32.mrb[0].mxu0
    %v4795 = vadd.f32 0.0, %v4794
    %v4796 = vpop.f32.mrb[0].mxu0
    %4797 = vmatprep.mubr.bf16.mxu0 0
    %4798 = vmatmul.mubr.bf16.gmra.mrb[0].mxu0 %v4675
    %v4799 = vpop.f32.mrb[0].mxu0
    %v4800 = vadd.f32 0.0, %v4799
    %v4801 = vpop.f32.mrb[0].mxu0
    %v4802 = vpop.f32.mrb[0].mxu0
    %v4803 = vadd.f32 0.0, %v4802
    %v4804 = vpop.f32.mrb[0].mxu0
    %4805 = vmatprep.mubr.bf16.mxu0 0
    %4806 = vmatmul.mubr.bf16.gmra.mrb[0].mxu0 %v4676
    %v4807 = vpop.f32.mrb[0].mxu0
    %v4808 = vadd.f32 0.0, %v4807
    %v4809 = vpop.f32.mrb[0].mxu0
    %v4810 = vpop.f32.mrb[0].mxu0
    %v4811 = vadd.f32 0.0, %v4810
    %v4812 = vpop.f32.mrb[0].mxu0
    %4813 = vmatprep.mubr.bf16.mxu0 0
    %4814 = vmatmul.mubr.bf16.gmra.mrb[0].mxu0 %v4677
    %v4815 = vpop.f32.mrb[0].mxu0
    %v4816 = vadd.f32 0.0, %v4815
    %v4817 = vpop.f32.mrb[0].mxu0
    %v4818 = vpop.f32.mrb[0].mxu0
    %v4819 = vadd.f32 0.0, %v4818
    %v4820 = vpop.f32.mrb[0].mxu0
    %4821 = vmatprep.mubr.bf16.mxu0 0
    %4822 = vmatmul.mubr.bf16.gmra.mrb[0].mxu0 %v4678
    %v4823 = vpop.f32.mrb[0].mxu0
    %v4824 = vadd.f32 0.0, %v4823
    %v4825 = vpop.f32.mrb[0].mxu0
    %v4826 = vpop.f32.mrb[0].mxu0
    %v4827 = vadd.f32 0.0, %v4826
    %v4828 = vpop.f32.mrb[0].mxu0
    %4829 = vmatprep.mubr.bf16.mxu0 0
    %4830 = vmatmul.mubr.bf16.gmra.mrb[0].mxu0 %v4679
    %v4831 = vpop.f32.mrb[0].mxu0
    %v4832 = vadd.f32 0.0, %v4831
    %v4833 = vpop.f32.mrb[0].mxu0
    %v4834 = vpop.f32.mrb[0].mxu0
    %v4835 = vadd.f32 0.0, %v4834
    %v4836 = vpop.f32.mrb[0].mxu0
    %4837 = vmatprep.mubr.bf16.mxu0 0
    %4838 = vmatmul.mubr.bf16.gmra.mrb[0].mxu0 %v4680
    %v4839 = vpop.f32.mrb[0].mxu0
    %v4840 = vadd.f32 0.0, %v4839
    %v4841 = vpop.f32.mrb[0].mxu0
    %v4842 = vpop.f32.mrb[0].mxu0
    %v4843 = vadd.f32 0.0, %v4842
    %v4844 = vpop.f32.mrb[0].mxu0
    %4845 = vmatprep.mubr.bf16.mxu0 0
    %4846 = vmatmul.mubr.bf16.gmra.mrb[0].mxu0 %v4681
    %v4847 = vpop.f32.mrb[0].mxu0
    %v4848 = vadd.f32 0.0, %v4847
    %v4849 = vpop.f32.mrb[0].mxu0
    %v4850 = vpop.f32.mrb[0].mxu0
    %v4851 = vadd.f32 0.0, %v4850
    %v4852 = vpop.f32.mrb[0].mxu0
    %4853 = vmatprep.mubr.bf16.mxu0 0
    %4854 = vmatmul.mubr.bf16.gmra.mrb[0].mxu0 %v4682
    %v4855 = vpop.f32.mrb[0].mxu0
    %v4856 = vadd.f32 0.0, %v4855
    %v4857 = vpop.f32.mrb[0].mxu0
    %v4858 = vpop.f32.mrb[0].mxu0
    %v4859 = vadd.f32 0.0, %v4858
    %v4860 = vpop.f32.mrb[0].mxu0
    %4861 = vmatprep.mubr.bf16.mxu0 0
    %4862 = vmatmul.mubr.bf16.gmra.mrb[0].mxu0 %v4683
    %v4863 = vpop.f32.mrb[0].mxu0
    %v4864 = vadd.f32 0.0, %v4863
    %v4865 = vpop.f32.mrb[0].mxu0
    %v4866 = vpop.f32.mrb[0].mxu0
    %v4867 = vadd.f32 0.0, %v4866
    %v4868 = vpop.f32.mrb[0].mxu0
    %4869 = vmatprep.mubr.bf16.mxu0 0
    %4870 = vmatmul.mubr.bf16.gmra.mrb[0].mxu0 %v4684
    %v4871 = vpop.f32.mrb[0].mxu0
    %v4872 = vadd.f32 0.0, %v4871
    %v4873 = vpop.f32.mrb[0].mxu0
    %v4874 = vpop.f32.mrb[0].mxu0
    %v4875 = vadd.f32 0.0, %v4874
    %v4876 = vpop.f32.mrb[0].mxu0
    %4877 = vdwg.mxu0
    %v4878 = vadd.f32 %v4649, %v4784
    %v4879 = vadd.f32 %v4650, %v4787
    %v4880 = vadd.f32 %v4651, %v4792
    %v4881 = vadd.f32 %v4652, %v4795
    %v4882 = vadd.f32 %v4653, %v4800
    %v4883 = vadd.f32 %v4654, %v4803
    %v4884 = vadd.f32 %v4655, %v4808
    %v4885 = vadd.f32 %v4656, %v4811
    %v4886 = vadd.f32 %v4657, %v4816
    %v4887 = vadd.f32 %v4658, %v4819
    %v4888 = vadd.f32 %v4659, %v4824
    %v4889 = vadd.f32 %v4660, %v4827
    %v4890 = vadd.f32 %v4661, %v4832
    %v4891 = vadd.f32 %v4662, %v4835
    %v4892 = vadd.f32 %v4663, %v4840
    %v4893 = vadd.f32 %v4664, %v4843
    %v4894 = vadd.f32 %v4665, %v4848
    %v4895 = vadd.f32 %v4666, %v4851
    %v4896 = vadd.f32 %v4667, %v4856
    %v4897 = vadd.f32 %v4668, %v4859
    %v4898 = vadd.f32 %v4669, %v4864
    %v4899 = vadd.f32 %v4670, %v4867
    %v4900 = vadd.f32 %v4671, %v4872
    %v4901 = vadd.f32 %v4672, %v4875
    %v4902 = vld [vmem:[%s1839] sm:$0xff]
    %v4903 = vld [vmem:[%s1839 + $0x8] sm:$0xff]
    %v4904 = vld [vmem:[%s1839 + $0x10] sm:$0xff]
    %v4905 = vld [vmem:[%s1839 + $0x18] sm:$0xff]
    %v4906 = vld [vmem:[%s1839 + $0x20] sm:$0xff]
    %v4907 = vld [vmem:[%s1839 + $0x28] sm:$0xff]
    %v4908 = vld [vmem:[%s1839 + $0x30] sm:$0xff]
    %v4909 = vld [vmem:[%s1839 + $0x38] sm:$0xff]
    %v4910 = vld [vmem:[%s1839 + $0x40] sm:$0xff]
    %v4911 = vld [vmem:[%s1839 + $0x48] sm:$0xff]
    %v4912 = vld [vmem:[%s1839 + $0x50] sm:$0xff]
    %v4913 = vld [vmem:[%s1839 + $0x58] sm:$0xff]
    %v4914 = vld [vmem:[%s1852] sm:$0xf]
    %v4915 = vld [vmem:[%s1852 + $0x4] sm:$0xf]
    %v4916 = vld [vmem:[%s1852 + $0x8] sm:$0xf]
    %v4917 = vld [vmem:[%s1852 + $0xc] sm:$0xf]
    %v4918 = vld [vmem:[%s1852 + $0x10] sm:$0xf]
    %v4919 = vld [vmem:[%s1852 + $0x14] sm:$0xf]
    %v4920 = vld [vmem:[%s1852 + $0x18] sm:$0xf]
    %v4921 = vld [vmem:[%s1852 + $0x1c] sm:$0xf]
    %v4922 = vld [vmem:[%s1852 + $0x20] sm:$0xf]
    %v4923 = vld [vmem:[%s1852 + $0x24] sm:$0xf]
    %v4924 = vld [vmem:[%s1852 + $0x28] sm:$0xf]
    %v4925 = vld [vmem:[%s1852 + $0x2c] sm:$0xf]
    %v4926 = vld [vmem:[%s1852 + $0x30] sm:$0xf]
    %v4927 = vld [vmem:[%s1852 + $0x34] sm:$0xf]
    %v4928 = vld [vmem:[%s1852 + $0x38] sm:$0xf]
    %v4929 = vld [vmem:[%s1852 + $0x3c] sm:$0xf]
    %v4946 = vunpack.c.l.b16 %v4914
    %v4947 = vunpack.c.l.b16 %v4915
    %v4948 = vunpack.c.l.b16 %v4916
    %v4949 = vunpack.c.l.b16 %v4917
    %v4950 = vunpack.c.l.b16 %v4918
    %v4951 = vunpack.c.l.b16 %v4919
    %v4952 = vunpack.c.l.b16 %v4920
    %v4953 = vunpack.c.l.b16 %v4921
    %v4954 = vunpack.c.l.b16 %v4922
    %v4955 = vunpack.c.l.b16 %v4923
    %v4956 = vunpack.c.l.b16 %v4924
    %v4957 = vunpack.c.l.b16 %v4925
    %v4958 = vunpack.c.l.b16 %v4926
    %v4959 = vunpack.c.l.b16 %v4927
    %v4960 = vunpack.c.l.b16 %v4928
    %v4961 = vunpack.c.l.b16 %v4929
    %v4962 = vpack.c.b16 %v4947, %v4946
    %v4963 = vpack.c.b16 %v4949, %v4948
    %v4964 = vpack.c.b16 %v4951, %v4950
    %v4965 = vpack.c.b16 %v4953, %v4952
    %v4966 = vpack.c.b16 %v4955, %v4954
    %v4967 = vpack.c.b16 %v4957, %v4956
    %v4968 = vpack.c.b16 %v4959, %v4958
    %v4969 = vpack.c.b16 %v4961, %v4960
    %4978 = vmatprep.subr.bf16.mxu0 0
    %4979 = vmatpush1.bf16.msra.mxu0 %v4962
    %4980 = vmatprep.subr.bf16.mxu0 0
    %4981 = vmatpush1.bf16.msra.mxu0 %v4963
    %4982 = vmatprep.subr.bf16.mxu0 0
    %4983 = vmatpush1.bf16.msra.mxu0 %v4964
    %4984 = vmatprep.subr.bf16.mxu0 0
    %4985 = vmatpush1.bf16.msra.mxu0 %v4965
    %4986 = vmatprep.subr.bf16.mxu0 0
    %4987 = vmatpush1.bf16.msra.mxu0 %v4966
    %4988 = vmatprep.subr.bf16.mxu0 0
    %4989 = vmatpush1.bf16.msra.mxu0 %v4967
    %4990 = vmatprep.subr.bf16.mxu0 0
    %4991 = vmatpush1.bf16.msra.mxu0 %v4968
    %4992 = vmatprep.subr.bf16.mxu0 0
    %4993 = vmatpush1.bf16.msra.mxu0 %v4969
    %4994 = vmatprep.subr.bf16.mxu0 0
    %4995 = vmatpush1.bf16.msra.mxu0 0
    %4996 = vmatprep.subr.bf16.mxu0 0
    %4997 = vmatpush1.bf16.msra.mxu0 0
    %4998 = vmatprep.subr.bf16.mxu0 0
    %4999 = vmatpush1.bf16.msra.mxu0 0
    %5000 = vmatprep.subr.bf16.mxu0 0
    %5001 = vmatpush1.bf16.msra.mxu0 0
    %5002 = vmatprep.subr.bf16.mxu0 0
    %5003 = vmatpush1.bf16.msra.mxu0 0
    %5004 = vmatprep.subr.bf16.mxu0 0
    %5005 = vmatpush1.bf16.msra.mxu0 0
    %5006 = vmatprep.subr.bf16.mxu0 0
    %5007 = vmatpush1.bf16.msra.mxu0 0
    %5008 = vmatprep.subr.bf16.mxu0 0
    %5009 = vmatpush1.bf16.msra.mxu0 0
    %5010 = vmatprep.mubr.bf16.mxu0 0
    %5011 = vmatmul.mubr.bf16.gmra.mrb[0].mxu0 %v4902
    %v5012 = vpop.f32.mrb[0].mxu0
    %v5013 = vadd.f32 0.0, %v5012
    %v5014 = vpop.f32.mrb[0].mxu0
    %v5015 = vpop.f32.mrb[0].mxu0
    %v5016 = vadd.f32 0.0, %v5015
    %v5017 = vpop.f32.mrb[0].mxu0
    %5018 = vmatprep.mubr.bf16.mxu0 0
    %5019 = vmatmul.mubr.bf16.gmra.mrb[0].mxu0 %v4903
    %v5020 = vpop.f32.mrb[0].mxu0
    %v5021 = vadd.f32 0.0, %v5020
    %v5022 = vpop.f32.mrb[0].mxu0
    %v5023 = vpop.f32.mrb[0].mxu0
    %v5024 = vadd.f32 0.0, %v5023
    %v5025 = vpop.f32.mrb[0].mxu0
    %5026 = vmatprep.mubr.bf16.mxu0 0
    %5027 = vmatmul.mubr.bf16.gmra.mrb[0].mxu0 %v4904
    %v5028 = vpop.f32.mrb[0].mxu0
    %v5029 = vadd.f32 0.0, %v5028
    %v5030 = vpop.f32.mrb[0].mxu0
    %v5031 = vpop.f32.mrb[0].mxu0
    %v5032 = vadd.f32 0.0, %v5031
    %v5033 = vpop.f32.mrb[0].mxu0
    %5034 = vmatprep.mubr.bf16.mxu0 0
    %5035 = vmatmul.mubr.bf16.gmra.mrb[0].mxu0 %v4905
    %v5036 = vpop.f32.mrb[0].mxu0
    %v5037 = vadd.f32 0.0, %v5036
    %v5038 = vpop.f32.mrb[0].mxu0
    %v5039 = vpop.f32.mrb[0].mxu0
    %v5040 = vadd.f32 0.0, %v5039
    %v5041 = vpop.f32.mrb[0].mxu0
    %5042 = vmatprep.mubr.bf16.mxu0 0
    %5043 = vmatmul.mubr.bf16.gmra.mrb[0].mxu0 %v4906
    %v5044 = vpop.f32.mrb[0].mxu0
    %v5045 = vadd.f32 0.0, %v5044
    %v5046 = vpop.f32.mrb[0].mxu0
    %v5047 = vpop.f32.mrb[0].mxu0
    %v5048 = vadd.f32 0.0, %v5047
    %v5049 = vpop.f32.mrb[0].mxu0
    %5050 = vmatprep.mubr.bf16.mxu0 0
    %5051 = vmatmul.mubr.bf16.gmra.mrb[0].mxu0 %v4907
    %v5052 = vpop.f32.mrb[0].mxu0
    %v5053 = vadd.f32 0.0, %v5052
    %v5054 = vpop.f32.mrb[0].mxu0
    %v5055 = vpop.f32.mrb[0].mxu0
    %v5056 = vadd.f32 0.0, %v5055
    %v5057 = vpop.f32.mrb[0].mxu0
    %5058 = vmatprep.mubr.bf16.mxu0 0
    %5059 = vmatmul.mubr.bf16.gmra.mrb[0].mxu0 %v4908
    %v5060 = vpop.f32.mrb[0].mxu0
    %v5061 = vadd.f32 0.0, %v5060
    %v5062 = vpop.f32.mrb[0].mxu0
    %v5063 = vpop.f32.mrb[0].mxu0
    %v5064 = vadd.f32 0.0, %v5063
    %v5065 = vpop.f32.mrb[0].mxu0
    %5066 = vmatprep.mubr.bf16.mxu0 0
    %5067 = vmatmul.mubr.bf16.gmra.mrb[0].mxu0 %v4909
    %v5068 = vpop.f32.mrb[0].mxu0
    %v5069 = vadd.f32 0.0, %v5068
    %v5070 = vpop.f32.mrb[0].mxu0
    %v5071 = vpop.f32.mrb[0].mxu0
    %v5072 = vadd.f32 0.0, %v5071
    %v5073 = vpop.f32.mrb[0].mxu0
    %5074 = vmatprep.mubr.bf16.mxu0 0
    %5075 = vmatmul.mubr.bf16.gmra.mrb[0].mxu0 %v4910
    %v5076 = vpop.f32.mrb[0].mxu0
    %v5077 = vadd.f32 0.0, %v5076
    %v5078 = vpop.f32.mrb[0].mxu0
    %v5079 = vpop.f32.mrb[0].mxu0
    %v5080 = vadd.f32 0.0, %v5079
    %v5081 = vpop.f32.mrb[0].mxu0
    %5082 = vmatprep.mubr.bf16.mxu0 0
    %5083 = vmatmul.mubr.bf16.gmra.mrb[0].mxu0 %v4911
    %v5084 = vpop.f32.mrb[0].mxu0
    %v5085 = vadd.f32 0.0, %v5084
    %v5086 = vpop.f32.mrb[0].mxu0
    %v5087 = vpop.f32.mrb[0].mxu0
    %v5088 = vadd.f32 0.0, %v5087
    %v5089 = vpop.f32.mrb[0].mxu0
    %5090 = vmatprep.mubr.bf16.mxu0 0
    %5091 = vmatmul.mubr.bf16.gmra.mrb[0].mxu0 %v4912
    %v5092 = vpop.f32.mrb[0].mxu0
    %v5093 = vadd.f32 0.0, %v5092
    %v5094 = vpop.f32.mrb[0].mxu0
    %v5095 = vpop.f32.mrb[0].mxu0
    %v5096 = vadd.f32 0.0, %v5095
    %v5097 = vpop.f32.mrb[0].mxu0
    %5098 = vmatprep.mubr.bf16.mxu0 0
    %5099 = vmatmul.mubr.bf16.gmra.mrb[0].mxu0 %v4913
    %v5100 = vpop.f32.mrb[0].mxu0
    %v5101 = vadd.f32 0.0, %v5100
    %v5102 = vpop.f32.mrb[0].mxu0
    %v5103 = vpop.f32.mrb[0].mxu0
    %v5104 = vadd.f32 0.0, %v5103
    %v5105 = vpop.f32.mrb[0].mxu0
    %5106 = vdwg.mxu0
    %v5107 = vadd.f32 %v4878, %v5013
    %v5108 = vadd.f32 %v4879, %v5016
    %v5109 = vadd.f32 %v4880, %v5021
    %v5110 = vadd.f32 %v4881, %v5024
    %v5111 = vadd.f32 %v4882, %v5029
    %v5112 = vadd.f32 %v4883, %v5032
    %v5113 = vadd.f32 %v4884, %v5037
    %v5114 = vadd.f32 %v4885, %v5040
    %v5115 = vadd.f32 %v4886, %v5045
    %v5116 = vadd.f32 %v4887, %v5048
    %v5117 = vadd.f32 %v4888, %v5053
    %v5118 = vadd.f32 %v4889, %v5056
    %v5119 = vadd.f32 %v4890, %v5061
    %v5120 = vadd.f32 %v4891, %v5064
    %v5121 = vadd.f32 %v4892, %v5069
    %v5122 = vadd.f32 %v4893, %v5072
    %v5123 = vadd.f32 %v4894, %v5077
    %v5124 = vadd.f32 %v4895, %v5080
    %v5125 = vadd.f32 %v4896, %v5085
    %v5126 = vadd.f32 %v4897, %v5088
    %v5127 = vadd.f32 %v4898, %v5093
    %v5128 = vadd.f32 %v4899, %v5096
    %v5129 = vadd.f32 %v4900, %v5101
    %v5130 = vadd.f32 %v4901, %v5104
    %v5131 = vld [vmem:[%s2070] sm:$0xff]
    %v5132 = vld [vmem:[%s2070 + $0x8] sm:$0xff]
    %v5133 = vld [vmem:[%s2070 + $0x10] sm:$0xff]
    %v5134 = vld [vmem:[%s2070 + $0x18] sm:$0xff]
    %v5135 = vld [vmem:[%s2070 + $0x20] sm:$0xff]
    %v5136 = vld [vmem:[%s2070 + $0x28] sm:$0xff]
    %v5137 = vld [vmem:[%s2070 + $0x30] sm:$0xff]
    %v5138 = vld [vmem:[%s2070 + $0x38] sm:$0xff]
    %v5139 = vld [vmem:[%s2070 + $0x40] sm:$0xff]
    %v5140 = vld [vmem:[%s2070 + $0x48] sm:$0xff]
    %v5141 = vld [vmem:[%s2070 + $0x50] sm:$0xff]
    %v5142 = vld [vmem:[%s2070 + $0x58] sm:$0xff]
    %v5143 = vld [vmem:[%s2083] sm:$0xf]
    %v5144 = vld [vmem:[%s2083 + $0x4] sm:$0xf]
    %v5145 = vld [vmem:[%s2083 + $0x8] sm:$0xf]
    %v5146 = vld [vmem:[%s2083 + $0xc] sm:$0xf]
    %v5147 = vld [vmem:[%s2083 + $0x10] sm:$0xf]
    %v5148 = vld [vmem:[%s2083 + $0x14] sm:$0xf]
    %v5149 = vld [vmem:[%s2083 + $0x18] sm:$0xf]
    %v5150 = vld [vmem:[%s2083 + $0x1c] sm:$0xf]
    %v5151 = vld [vmem:[%s2083 + $0x20] sm:$0xf]
    %v5152 = vld [vmem:[%s2083 + $0x24] sm:$0xf]
    %v5153 = vld [vmem:[%s2083 + $0x28] sm:$0xf]
    %v5154 = vld [vmem:[%s2083 + $0x2c] sm:$0xf]
    %v5155 = vld [vmem:[%s2083 + $0x30] sm:$0xf]
    %v5156 = vld [vmem:[%s2083 + $0x34] sm:$0xf]
    %v5157 = vld [vmem:[%s2083 + $0x38] sm:$0xf]
    %v5158 = vld [vmem:[%s2083 + $0x3c] sm:$0xf]
    %v5175 = vunpack.c.l.b16 %v5143
    %v5176 = vunpack.c.l.b16 %v5144
    %v5177 = vunpack.c.l.b16 %v5145
    %v5178 = vunpack.c.l.b16 %v5146
    %v5179 = vunpack.c.l.b16 %v5147
    %v5180 = vunpack.c.l.b16 %v5148
    %v5181 = vunpack.c.l.b16 %v5149
    %v5182 = vunpack.c.l.b16 %v5150
    %v5183 = vunpack.c.l.b16 %v5151
    %v5184 = vunpack.c.l.b16 %v5152
    %v5185 = vunpack.c.l.b16 %v5153
    %v5186 = vunpack.c.l.b16 %v5154
    %v5187 = vunpack.c.l.b16 %v5155
    %v5188 = vunpack.c.l.b16 %v5156
    %v5189 = vunpack.c.l.b16 %v5157
    %v5190 = vunpack.c.l.b16 %v5158
    %v5191 = vpack.c.b16 %v5176, %v5175
    %v5192 = vpack.c.b16 %v5178, %v5177
    %v5193 = vpack.c.b16 %v5180, %v5179
    %v5194 = vpack.c.b16 %v5182, %v5181
    %v5195 = vpack.c.b16 %v5184, %v5183
    %v5196 = vpack.c.b16 %v5186, %v5185
    %v5197 = vpack.c.b16 %v5188, %v5187
    %v5198 = vpack.c.b16 %v5190, %v5189
    %5207 = vmatprep.subr.bf16.mxu0 0
    %5208 = vmatpush1.bf16.msra.mxu0 %v5191
    %5209 = vmatprep.subr.bf16.mxu0 0
    %5210 = vmatpush1.bf16.msra.mxu0 %v5192
    %5211 = vmatprep.subr.bf16.mxu0 0
    %5212 = vmatpush1.bf16.msra.mxu0 %v5193
    %5213 = vmatprep.subr.bf16.mxu0 0
    %5214 = vmatpush1.bf16.msra.mxu0 %v5194
    %5215 = vmatprep.subr.bf16.mxu0 0
    %5216 = vmatpush1.bf16.msra.mxu0 %v5195
    %5217 = vmatprep.subr.bf16.mxu0 0
    %5218 = vmatpush1.bf16.msra.mxu0 %v5196
    %5219 = vmatprep.subr.bf16.mxu0 0
    %5220 = vmatpush1.bf16.msra.mxu0 %v5197
    %5221 = vmatprep.subr.bf16.mxu0 0
    %5222 = vmatpush1.bf16.msra.mxu0 %v5198
    %5223 = vmatprep.subr.bf16.mxu0 0
    %5224 = vmatpush1.bf16.msra.mxu0 0
    %5225 = vmatprep.subr.bf16.mxu0 0
    %5226 = vmatpush1.bf16.msra.mxu0 0
    %5227 = vmatprep.subr.bf16.mxu0 0
    %5228 = vmatpush1.bf16.msra.mxu0 0
    %5229 = vmatprep.subr.bf16.mxu0 0
    %5230 = vmatpush1.bf16.msra.mxu0 0
    %5231 = vmatprep.subr.bf16.mxu0 0
    %5232 = vmatpush1.bf16.msra.mxu0 0
    %5233 = vmatprep.subr.bf16.mxu0 0
    %5234 = vmatpush1.bf16.msra.mxu0 0
    %5235 = vmatprep.subr.bf16.mxu0 0
    %5236 = vmatpush1.bf16.msra.mxu0 0
    %5237 = vmatprep.subr.bf16.mxu0 0
    %5238 = vmatpush1.bf16.msra.mxu0 0
    %5239 = vmatprep.mubr.bf16.mxu0 0
    %5240 = vmatmul.mubr.bf16.gmra.mrb[0].mxu0 %v5131
    %v5241 = vpop.f32.mrb[0].mxu0
    %v5242 = vadd.f32 0.0, %v5241
    %v5243 = vpop.f32.mrb[0].mxu0
    %v5244 = vpop.f32.mrb[0].mxu0
    %v5245 = vadd.f32 0.0, %v5244
    %v5246 = vpop.f32.mrb[0].mxu0
    %5247 = vmatprep.mubr.bf16.mxu0 0
    %5248 = vmatmul.mubr.bf16.gmra.mrb[0].mxu0 %v5132
    %v5249 = vpop.f32.mrb[0].mxu0
    %v5250 = vadd.f32 0.0, %v5249
    %v5251 = vpop.f32.mrb[0].mxu0
    %v5252 = vpop.f32.mrb[0].mxu0
    %v5253 = vadd.f32 0.0, %v5252
    %v5254 = vpop.f32.mrb[0].mxu0
    %5255 = vmatprep.mubr.bf16.mxu0 0
    %5256 = vmatmul.mubr.bf16.gmra.mrb[0].mxu0 %v5133
    %v5257 = vpop.f32.mrb[0].mxu0
    %v5258 = vadd.f32 0.0, %v5257
    %v5259 = vpop.f32.mrb[0].mxu0
    %v5260 = vpop.f32.mrb[0].mxu0
    %v5261 = vadd.f32 0.0, %v5260
    %v5262 = vpop.f32.mrb[0].mxu0
    %5263 = vmatprep.mubr.bf16.mxu0 0
    %5264 = vmatmul.mubr.bf16.gmra.mrb[0].mxu0 %v5134
    %v5265 = vpop.f32.mrb[0].mxu0
    %v5266 = vadd.f32 0.0, %v5265
    %v5267 = vpop.f32.mrb[0].mxu0
    %v5268 = vpop.f32.mrb[0].mxu0
    %v5269 = vadd.f32 0.0, %v5268
    %v5270 = vpop.f32.mrb[0].mxu0
    %5271 = vmatprep.mubr.bf16.mxu0 0
    %5272 = vmatmul.mubr.bf16.gmra.mrb[0].mxu0 %v5135
    %v5273 = vpop.f32.mrb[0].mxu0
    %v5274 = vadd.f32 0.0, %v5273
    %v5275 = vpop.f32.mrb[0].mxu0
    %v5276 = vpop.f32.mrb[0].mxu0
    %v5277 = vadd.f32 0.0, %v5276
    %v5278 = vpop.f32.mrb[0].mxu0
    %5279 = vmatprep.mubr.bf16.mxu0 0
    %5280 = vmatmul.mubr.bf16.gmra.mrb[0].mxu0 %v5136
    %v5281 = vpop.f32.mrb[0].mxu0
    %v5282 = vadd.f32 0.0, %v5281
    %v5283 = vpop.f32.mrb[0].mxu0
    %v5284 = vpop.f32.mrb[0].mxu0
    %v5285 = vadd.f32 0.0, %v5284
    %v5286 = vpop.f32.mrb[0].mxu0
    %5287 = vmatprep.mubr.bf16.mxu0 0
    %5288 = vmatmul.mubr.bf16.gmra.mrb[0].mxu0 %v5137
    %v5289 = vpop.f32.mrb[0].mxu0
    %v5290 = vadd.f32 0.0, %v5289
    %v5291 = vpop.f32.mrb[0].mxu0
    %v5292 = vpop.f32.mrb[0].mxu0
    %v5293 = vadd.f32 0.0, %v5292
    %v5294 = vpop.f32.mrb[0].mxu0
    %5295 = vmatprep.mubr.bf16.mxu0 0
    %5296 = vmatmul.mubr.bf16.gmra.mrb[0].mxu0 %v5138
    %v5297 = vpop.f32.mrb[0].mxu0
    %v5298 = vadd.f32 0.0, %v5297
    %v5299 = vpop.f32.mrb[0].mxu0
    %v5300 = vpop.f32.mrb[0].mxu0
    %v5301 = vadd.f32 0.0, %v5300
    %v5302 = vpop.f32.mrb[0].mxu0
    %5303 = vmatprep.mubr.bf16.mxu0 0
    %5304 = vmatmul.mubr.bf16.gmra.mrb[0].mxu0 %v5139
    %v5305 = vpop.f32.mrb[0].mxu0
    %v5306 = vadd.f32 0.0, %v5305
    %v5307 = vpop.f32.mrb[0].mxu0
    %v5308 = vpop.f32.mrb[0].mxu0
    %v5309 = vadd.f32 0.0, %v5308
    %v5310 = vpop.f32.mrb[0].mxu0
    %5311 = vmatprep.mubr.bf16.mxu0 0
    %5312 = vmatmul.mubr.bf16.gmra.mrb[0].mxu0 %v5140
    %v5313 = vpop.f32.mrb[0].mxu0
    %v5314 = vadd.f32 0.0, %v5313
    %v5315 = vpop.f32.mrb[0].mxu0
    %v5316 = vpop.f32.mrb[0].mxu0
    %v5317 = vadd.f32 0.0, %v5316
    %v5318 = vpop.f32.mrb[0].mxu0
    %5319 = vmatprep.mubr.bf16.mxu0 0
    %5320 = vmatmul.mubr.bf16.gmra.mrb[0].mxu0 %v5141
    %v5321 = vpop.f32.mrb[0].mxu0
    %v5322 = vadd.f32 0.0, %v5321
    %v5323 = vpop.f32.mrb[0].mxu0
    %v5324 = vpop.f32.mrb[0].mxu0
    %v5325 = vadd.f32 0.0, %v5324
    %v5326 = vpop.f32.mrb[0].mxu0
    %5327 = vmatprep.mubr.bf16.mxu0 0
    %5328 = vmatmul.mubr.bf16.gmra.mrb[0].mxu0 %v5142
    %v5329 = vpop.f32.mrb[0].mxu0
    %v5330 = vadd.f32 0.0, %v5329
    %v5331 = vpop.f32.mrb[0].mxu0
    %v5332 = vpop.f32.mrb[0].mxu0
    %v5333 = vadd.f32 0.0, %v5332
    %v5334 = vpop.f32.mrb[0].mxu0
    %5335 = vdwg.mxu0
    %v5336 = vadd.f32 %v5107, %v5242
    %v5337 = vadd.f32 %v5108, %v5245
    %v5338 = vadd.f32 %v5109, %v5250
    %v5339 = vadd.f32 %v5110, %v5253
    %v5340 = vadd.f32 %v5111, %v5258
    %v5341 = vadd.f32 %v5112, %v5261
    %v5342 = vadd.f32 %v5113, %v5266
    %v5343 = vadd.f32 %v5114, %v5269
    %v5344 = vadd.f32 %v5115, %v5274
    %v5345 = vadd.f32 %v5116, %v5277
    %v5346 = vadd.f32 %v5117, %v5282
    %v5347 = vadd.f32 %v5118, %v5285
    %v5348 = vadd.f32 %v5119, %v5290
    %v5349 = vadd.f32 %v5120, %v5293
    %v5350 = vadd.f32 %v5121, %v5298
    %v5351 = vadd.f32 %v5122, %v5301
    %v5352 = vadd.f32 %v5123, %v5306
    %v5353 = vadd.f32 %v5124, %v5309
    %v5354 = vadd.f32 %v5125, %v5314
    %v5355 = vadd.f32 %v5126, %v5317
    %v5356 = vadd.f32 %v5127, %v5322
    %v5357 = vadd.f32 %v5128, %v5325
    %v5358 = vadd.f32 %v5129, %v5330
    %v5359 = vadd.f32 %v5130, %v5333
    %v5360 = vld [vmem:[%s2301] sm:$0xff]
    %v5361 = vld [vmem:[%s2301 + $0x8] sm:$0xff]
    %v5362 = vld [vmem:[%s2301 + $0x10] sm:$0xff]
    %v5363 = vld [vmem:[%s2301 + $0x18] sm:$0xff]
    %v5364 = vld [vmem:[%s2301 + $0x20] sm:$0xff]
    %v5365 = vld [vmem:[%s2301 + $0x28] sm:$0xff]
    %v5366 = vld [vmem:[%s2301 + $0x30] sm:$0xff]
    %v5367 = vld [vmem:[%s2301 + $0x38] sm:$0xff]
    %v5368 = vld [vmem:[%s2301 + $0x40] sm:$0xff]
    %v5369 = vld [vmem:[%s2301 + $0x48] sm:$0xff]
    %v5370 = vld [vmem:[%s2301 + $0x50] sm:$0xff]
    %v5371 = vld [vmem:[%s2301 + $0x58] sm:$0xff]
    %v5372 = vld [vmem:[%s2314] sm:$0xf]
    %v5373 = vld [vmem:[%s2314 + $0x4] sm:$0xf]
    %v5374 = vld [vmem:[%s2314 + $0x8] sm:$0xf]
    %v5375 = vld [vmem:[%s2314 + $0xc] sm:$0xf]
    %v5376 = vld [vmem:[%s2314 + $0x10] sm:$0xf]
    %v5377 = vld [vmem:[%s2314 + $0x14] sm:$0xf]
    %v5378 = vld [vmem:[%s2314 + $0x18] sm:$0xf]
    %v5379 = vld [vmem:[%s2314 + $0x1c] sm:$0xf]
    %v5380 = vld [vmem:[%s2314 + $0x20] sm:$0xf]
    %v5381 = vld [vmem:[%s2314 + $0x24] sm:$0xf]
    %v5382 = vld [vmem:[%s2314 + $0x28] sm:$0xf]
    %v5383 = vld [vmem:[%s2314 + $0x2c] sm:$0xf]
    %v5384 = vld [vmem:[%s2314 + $0x30] sm:$0xf]
    %v5385 = vld [vmem:[%s2314 + $0x34] sm:$0xf]
    %v5386 = vld [vmem:[%s2314 + $0x38] sm:$0xf]
    %v5387 = vld [vmem:[%s2314 + $0x3c] sm:$0xf]
    %v5404 = vunpack.c.l.b16 %v5372
    %v5405 = vunpack.c.l.b16 %v5373
    %v5406 = vunpack.c.l.b16 %v5374
    %v5407 = vunpack.c.l.b16 %v5375
    %v5408 = vunpack.c.l.b16 %v5376
    %v5409 = vunpack.c.l.b16 %v5377
    %v5410 = vunpack.c.l.b16 %v5378
    %v5411 = vunpack.c.l.b16 %v5379
    %v5412 = vunpack.c.l.b16 %v5380
    %v5413 = vunpack.c.l.b16 %v5381
    %v5414 = vunpack.c.l.b16 %v5382
    %v5415 = vunpack.c.l.b16 %v5383
    %v5416 = vunpack.c.l.b16 %v5384
    %v5417 = vunpack.c.l.b16 %v5385
    %v5418 = vunpack.c.l.b16 %v5386
    %v5419 = vunpack.c.l.b16 %v5387
    %v5420 = vpack.c.b16 %v5405, %v5404
    %v5421 = vpack.c.b16 %v5407, %v5406
    %v5422 = vpack.c.b16 %v5409, %v5408
    %v5423 = vpack.c.b16 %v5411, %v5410
    %v5424 = vpack.c.b16 %v5413, %v5412
    %v5425 = vpack.c.b16 %v5415, %v5414
    %v5426 = vpack.c.b16 %v5417, %v5416
    %v5427 = vpack.c.b16 %v5419, %v5418
    %5436 = vmatprep.subr.bf16.mxu0 0
    %5437 = vmatpush1.bf16.msra.mxu0 %v5420
    %5438 = vmatprep.subr.bf16.mxu0 0
    %5439 = vmatpush1.bf16.msra.mxu0 %v5421
    %5440 = vmatprep.subr.bf16.mxu0 0
    %5441 = vmatpush1.bf16.msra.mxu0 %v5422
    %5442 = vmatprep.subr.bf16.mxu0 0
    %5443 = vmatpush1.bf16.msra.mxu0 %v5423
    %5444 = vmatprep.subr.bf16.mxu0 0
    %5445 = vmatpush1.bf16.msra.mxu0 %v5424
    %5446 = vmatprep.subr.bf16.mxu0 0
    %5447 = vmatpush1.bf16.msra.mxu0 %v5425
    %5448 = vmatprep.subr.bf16.mxu0 0
    %5449 = vmatpush1.bf16.msra.mxu0 %v5426
    %5450 = vmatprep.subr.bf16.mxu0 0
    %5451 = vmatpush1.bf16.msra.mxu0 %v5427
    %5452 = vmatprep.subr.bf16.mxu0 0
    %5453 = vmatpush1.bf16.msra.mxu0 0
    %5454 = vmatprep.subr.bf16.mxu0 0
    %5455 = vmatpush1.bf16.msra.mxu0 0
    %5456 = vmatprep.subr.bf16.mxu0 0
    %5457 = vmatpush1.bf16.msra.mxu0 0
    %5458 = vmatprep.subr.bf16.mxu0 0
    %5459 = vmatpush1.bf16.msra.mxu0 0
    %5460 = vmatprep.subr.bf16.mxu0 0
    %5461 = vmatpush1.bf16.msra.mxu0 0
    %5462 = vmatprep.subr.bf16.mxu0 0
    %5463 = vmatpush1.bf16.msra.mxu0 0
    %5464 = vmatprep.subr.bf16.mxu0 0
    %5465 = vmatpush1.bf16.msra.mxu0 0
    %5466 = vmatprep.subr.bf16.mxu0 0
    %5467 = vmatpush1.bf16.msra.mxu0 0
    %5468 = vmatprep.mubr.bf16.mxu0 0
    %5469 = vmatmul.mubr.bf16.gmra.mrb[0].mxu0 %v5360
    %v5470 = vpop.f32.mrb[0].mxu0
    %v5471 = vadd.f32 0.0, %v5470
    %v5472 = vpop.f32.mrb[0].mxu0
    %v5473 = vpop.f32.mrb[0].mxu0
    %v5474 = vadd.f32 0.0, %v5473
    %v5475 = vpop.f32.mrb[0].mxu0
    %5476 = vmatprep.mubr.bf16.mxu0 0
    %5477 = vmatmul.mubr.bf16.gmra.mrb[0].mxu0 %v5361
    %v5478 = vpop.f32.mrb[0].mxu0
    %v5479 = vadd.f32 0.0, %v5478
    %v5480 = vpop.f32.mrb[0].mxu0
    %v5481 = vpop.f32.mrb[0].mxu0
    %v5482 = vadd.f32 0.0, %v5481
    %v5483 = vpop.f32.mrb[0].mxu0
    %5484 = vmatprep.mubr.bf16.mxu0 0
    %5485 = vmatmul.mubr.bf16.gmra.mrb[0].mxu0 %v5362
    %v5486 = vpop.f32.mrb[0].mxu0
    %v5487 = vadd.f32 0.0, %v5486
    %v5488 = vpop.f32.mrb[0].mxu0
    %v5489 = vpop.f32.mrb[0].mxu0
    %v5490 = vadd.f32 0.0, %v5489
    %v5491 = vpop.f32.mrb[0].mxu0
    %5492 = vmatprep.mubr.bf16.mxu0 0
    %5493 = vmatmul.mubr.bf16.gmra.mrb[0].mxu0 %v5363
    %v5494 = vpop.f32.mrb[0].mxu0
    %v5495 = vadd.f32 0.0, %v5494
    %v5496 = vpop.f32.mrb[0].mxu0
    %v5497 = vpop.f32.mrb[0].mxu0
    %v5498 = vadd.f32 0.0, %v5497
    %v5499 = vpop.f32.mrb[0].mxu0
    %5500 = vmatprep.mubr.bf16.mxu0 0
    %5501 = vmatmul.mubr.bf16.gmra.mrb[0].mxu0 %v5364
    %v5502 = vpop.f32.mrb[0].mxu0
    %v5503 = vadd.f32 0.0, %v5502
    %v5504 = vpop.f32.mrb[0].mxu0
    %v5505 = vpop.f32.mrb[0].mxu0
    %v5506 = vadd.f32 0.0, %v5505
    %v5507 = vpop.f32.mrb[0].mxu0
    %5508 = vmatprep.mubr.bf16.mxu0 0
    %5509 = vmatmul.mubr.bf16.gmra.mrb[0].mxu0 %v5365
    %v5510 = vpop.f32.mrb[0].mxu0
    %v5511 = vadd.f32 0.0, %v5510
    %v5512 = vpop.f32.mrb[0].mxu0
    %v5513 = vpop.f32.mrb[0].mxu0
    %v5514 = vadd.f32 0.0, %v5513
    %v5515 = vpop.f32.mrb[0].mxu0
    %5516 = vmatprep.mubr.bf16.mxu0 0
    %5517 = vmatmul.mubr.bf16.gmra.mrb[0].mxu0 %v5366
    %v5518 = vpop.f32.mrb[0].mxu0
    %v5519 = vadd.f32 0.0, %v5518
    %v5520 = vpop.f32.mrb[0].mxu0
    %v5521 = vpop.f32.mrb[0].mxu0
    %v5522 = vadd.f32 0.0, %v5521
    %v5523 = vpop.f32.mrb[0].mxu0
    %5524 = vmatprep.mubr.bf16.mxu0 0
    %5525 = vmatmul.mubr.bf16.gmra.mrb[0].mxu0 %v5367
    %v5526 = vpop.f32.mrb[0].mxu0
    %v5527 = vadd.f32 0.0, %v5526
    %v5528 = vpop.f32.mrb[0].mxu0
    %v5529 = vpop.f32.mrb[0].mxu0
    %v5530 = vadd.f32 0.0, %v5529
    %v5531 = vpop.f32.mrb[0].mxu0
    %5532 = vmatprep.mubr.bf16.mxu0 0
    %5533 = vmatmul.mubr.bf16.gmra.mrb[0].mxu0 %v5368
    %v5534 = vpop.f32.mrb[0].mxu0
    %v5535 = vadd.f32 0.0, %v5534
    %v5536 = vpop.f32.mrb[0].mxu0
    %v5537 = vpop.f32.mrb[0].mxu0
    %v5538 = vadd.f32 0.0, %v5537
    %v5539 = vpop.f32.mrb[0].mxu0
    %5540 = vmatprep.mubr.bf16.mxu0 0
    %5541 = vmatmul.mubr.bf16.gmra.mrb[0].mxu0 %v5369
    %v5542 = vpop.f32.mrb[0].mxu0
    %v5543 = vadd.f32 0.0, %v5542
    %v5544 = vpop.f32.mrb[0].mxu0
    %v5545 = vpop.f32.mrb[0].mxu0
    %v5546 = vadd.f32 0.0, %v5545
    %v5547 = vpop.f32.mrb[0].mxu0
    %5548 = vmatprep.mubr.bf16.mxu0 0
    %5549 = vmatmul.mubr.bf16.gmra.mrb[0].mxu0 %v5370
    %v5550 = vpop.f32.mrb[0].mxu0
    %v5551 = vadd.f32 0.0, %v5550
    %v5552 = vpop.f32.mrb[0].mxu0
    %v5553 = vpop.f32.mrb[0].mxu0
    %v5554 = vadd.f32 0.0, %v5553
    %v5555 = vpop.f32.mrb[0].mxu0
    %5556 = vmatprep.mubr.bf16.mxu0 0
    %5557 = vmatmul.mubr.bf16.gmra.mrb[0].mxu0 %v5371
    %v5558 = vpop.f32.mrb[0].mxu0
    %v5559 = vadd.f32 0.0, %v5558
    %v5560 = vpop.f32.mrb[0].mxu0
    %v5561 = vpop.f32.mrb[0].mxu0
    %v5562 = vadd.f32 0.0, %v5561
    %v5563 = vpop.f32.mrb[0].mxu0
    %5564 = vdwg.mxu0
    %v5565 = vadd.f32 %v5336, %v5471
    %v5566 = vadd.f32 %v5337, %v5474
    %v5567 = vadd.f32 %v5338, %v5479
    %v5568 = vadd.f32 %v5339, %v5482
    %v5569 = vadd.f32 %v5340, %v5487
    %v5570 = vadd.f32 %v5341, %v5490
    %v5571 = vadd.f32 %v5342, %v5495
    %v5572 = vadd.f32 %v5343, %v5498
    %v5573 = vadd.f32 %v5344, %v5503
    %v5574 = vadd.f32 %v5345, %v5506
    %v5575 = vadd.f32 %v5346, %v5511
    %v5576 = vadd.f32 %v5347, %v5514
    %v5577 = vadd.f32 %v5348, %v5519
    %v5578 = vadd.f32 %v5349, %v5522
    %v5579 = vadd.f32 %v5350, %v5527
    %v5580 = vadd.f32 %v5351, %v5530
    %v5581 = vadd.f32 %v5352, %v5535
    %v5582 = vadd.f32 %v5353, %v5538
    %v5583 = vadd.f32 %v5354, %v5543
    %v5584 = vadd.f32 %v5355, %v5546
    %v5585 = vadd.f32 %v5356, %v5551
    %v5586 = vadd.f32 %v5357, %v5554
    %v5587 = vadd.f32 %v5358, %v5559
    %v5588 = vadd.f32 %v5359, %v5562
    %v5589 = vld [vmem:[%s2532] sm:$0xff]
    %v5590 = vld [vmem:[%s2532 + $0x8] sm:$0xff]
    %v5591 = vld [vmem:[%s2532 + $0x10] sm:$0xff]
    %v5592 = vld [vmem:[%s2532 + $0x18] sm:$0xff]
    %v5593 = vld [vmem:[%s2532 + $0x20] sm:$0xff]
    %v5594 = vld [vmem:[%s2532 + $0x28] sm:$0xff]
    %v5595 = vld [vmem:[%s2532 + $0x30] sm:$0xff]
    %v5596 = vld [vmem:[%s2532 + $0x38] sm:$0xff]
    %v5597 = vld [vmem:[%s2532 + $0x40] sm:$0xff]
    %v5598 = vld [vmem:[%s2532 + $0x48] sm:$0xff]
    %v5599 = vld [vmem:[%s2532 + $0x50] sm:$0xff]
    %v5600 = vld [vmem:[%s2532 + $0x58] sm:$0xff]
    %v5601 = vld [vmem:[%s2545] sm:$0xf]
    %v5602 = vld [vmem:[%s2545 + $0x4] sm:$0xf]
    %v5603 = vld [vmem:[%s2545 + $0x8] sm:$0xf]
    %v5604 = vld [vmem:[%s2545 + $0xc] sm:$0xf]
    %v5605 = vld [vmem:[%s2545 + $0x10] sm:$0xf]
    %v5606 = vld [vmem:[%s2545 + $0x14] sm:$0xf]
    %v5607 = vld [vmem:[%s2545 + $0x18] sm:$0xf]
    %v5608 = vld [vmem:[%s2545 + $0x1c] sm:$0xf]
    %v5609 = vld [vmem:[%s2545 + $0x20] sm:$0xf]
    %v5610 = vld [vmem:[%s2545 + $0x24] sm:$0xf]
    %v5611 = vld [vmem:[%s2545 + $0x28] sm:$0xf]
    %v5612 = vld [vmem:[%s2545 + $0x2c] sm:$0xf]
    %v5613 = vld [vmem:[%s2545 + $0x30] sm:$0xf]
    %v5614 = vld [vmem:[%s2545 + $0x34] sm:$0xf]
    %v5615 = vld [vmem:[%s2545 + $0x38] sm:$0xf]
    %v5616 = vld [vmem:[%s2545 + $0x3c] sm:$0xf]
    %v5633 = vunpack.c.l.b16 %v5601
    %v5634 = vunpack.c.l.b16 %v5602
    %v5635 = vunpack.c.l.b16 %v5603
    %v5636 = vunpack.c.l.b16 %v5604
    %v5637 = vunpack.c.l.b16 %v5605
    %v5638 = vunpack.c.l.b16 %v5606
    %v5639 = vunpack.c.l.b16 %v5607
    %v5640 = vunpack.c.l.b16 %v5608
    %v5641 = vunpack.c.l.b16 %v5609
    %v5642 = vunpack.c.l.b16 %v5610
    %v5643 = vunpack.c.l.b16 %v5611
    %v5644 = vunpack.c.l.b16 %v5612
    %v5645 = vunpack.c.l.b16 %v5613
    %v5646 = vunpack.c.l.b16 %v5614
    %v5647 = vunpack.c.l.b16 %v5615
    %v5648 = vunpack.c.l.b16 %v5616
    %v5649 = vpack.c.b16 %v5634, %v5633
    %v5650 = vpack.c.b16 %v5636, %v5635
    %v5651 = vpack.c.b16 %v5638, %v5637
    %v5652 = vpack.c.b16 %v5640, %v5639
    %v5653 = vpack.c.b16 %v5642, %v5641
    %v5654 = vpack.c.b16 %v5644, %v5643
    %v5655 = vpack.c.b16 %v5646, %v5645
    %v5656 = vpack.c.b16 %v5648, %v5647
    %5665 = vmatprep.subr.bf16.mxu0 0
    %5666 = vmatpush1.bf16.msra.mxu0 %v5649
    %5667 = vmatprep.subr.bf16.mxu0 0
    %5668 = vmatpush1.bf16.msra.mxu0 %v5650
    %5669 = vmatprep.subr.bf16.mxu0 0
    %5670 = vmatpush1.bf16.msra.mxu0 %v5651
    %5671 = vmatprep.subr.bf16.mxu0 0
    %5672 = vmatpush1.bf16.msra.mxu0 %v5652
    %5673 = vmatprep.subr.bf16.mxu0 0
    %5674 = vmatpush1.bf16.msra.mxu0 %v5653
    %5675 = vmatprep.subr.bf16.mxu0 0
    %5676 = vmatpush1.bf16.msra.mxu0 %v5654
    %5677 = vmatprep.subr.bf16.mxu0 0
    %5678 = vmatpush1.bf16.msra.mxu0 %v5655
    %5679 = vmatprep.subr.bf16.mxu0 0
    %5680 = vmatpush1.bf16.msra.mxu0 %v5656
    %5681 = vmatprep.subr.bf16.mxu0 0
    %5682 = vmatpush1.bf16.msra.mxu0 0
    %5683 = vmatprep.subr.bf16.mxu0 0
    %5684 = vmatpush1.bf16.msra.mxu0 0
    %5685 = vmatprep.subr.bf16.mxu0 0
    %5686 = vmatpush1.bf16.msra.mxu0 0
    %5687 = vmatprep.subr.bf16.mxu0 0
    %5688 = vmatpush1.bf16.msra.mxu0 0
    %5689 = vmatprep.subr.bf16.mxu0 0
    %5690 = vmatpush1.bf16.msra.mxu0 0
    %5691 = vmatprep.subr.bf16.mxu0 0
    %5692 = vmatpush1.bf16.msra.mxu0 0
    %5693 = vmatprep.subr.bf16.mxu0 0
    %5694 = vmatpush1.bf16.msra.mxu0 0
    %5695 = vmatprep.subr.bf16.mxu0 0
    %5696 = vmatpush1.bf16.msra.mxu0 0
    %5697 = vmatprep.mubr.bf16.mxu0 0
    %5698 = vmatmul.mubr.bf16.gmra.mrb[0].mxu0 %v5589
    %v5699 = vpop.f32.mrb[0].mxu0
    %v5700 = vadd.f32 0.0, %v5699
    %v5701 = vpop.f32.mrb[0].mxu0
    %v5702 = vpop.f32.mrb[0].mxu0
    %v5703 = vadd.f32 0.0, %v5702
    %v5704 = vpop.f32.mrb[0].mxu0
    %5705 = vmatprep.mubr.bf16.mxu0 0
    %5706 = vmatmul.mubr.bf16.gmra.mrb[0].mxu0 %v5590
    %v5707 = vpop.f32.mrb[0].mxu0
    %v5708 = vadd.f32 0.0, %v5707
    %v5709 = vpop.f32.mrb[0].mxu0
    %v5710 = vpop.f32.mrb[0].mxu0
    %v5711 = vadd.f32 0.0, %v5710
    %v5712 = vpop.f32.mrb[0].mxu0
    %5713 = vmatprep.mubr.bf16.mxu0 0
    %5714 = vmatmul.mubr.bf16.gmra.mrb[0].mxu0 %v5591
    %v5715 = vpop.f32.mrb[0].mxu0
    %v5716 = vadd.f32 0.0, %v5715
    %v5717 = vpop.f32.mrb[0].mxu0
    %v5718 = vpop.f32.mrb[0].mxu0
    %v5719 = vadd.f32 0.0, %v5718
    %v5720 = vpop.f32.mrb[0].mxu0
    %5721 = vmatprep.mubr.bf16.mxu0 0
    %5722 = vmatmul.mubr.bf16.gmra.mrb[0].mxu0 %v5592
    %v5723 = vpop.f32.mrb[0].mxu0
    %v5724 = vadd.f32 0.0, %v5723
    %v5725 = vpop.f32.mrb[0].mxu0
    %v5726 = vpop.f32.mrb[0].mxu0
    %v5727 = vadd.f32 0.0, %v5726
    %v5728 = vpop.f32.mrb[0].mxu0
    %5729 = vmatprep.mubr.bf16.mxu0 0
    %5730 = vmatmul.mubr.bf16.gmra.mrb[0].mxu0 %v5593
    %v5731 = vpop.f32.mrb[0].mxu0
    %v5732 = vadd.f32 0.0, %v5731
    %v5733 = vpop.f32.mrb[0].mxu0
    %v5734 = vpop.f32.mrb[0].mxu0
    %v5735 = vadd.f32 0.0, %v5734
    %v5736 = vpop.f32.mrb[0].mxu0
    %5737 = vmatprep.mubr.bf16.mxu0 0
    %5738 = vmatmul.mubr.bf16.gmra.mrb[0].mxu0 %v5594
    %v5739 = vpop.f32.mrb[0].mxu0
    %v5740 = vadd.f32 0.0, %v5739
    %v5741 = vpop.f32.mrb[0].mxu0
    %v5742 = vpop.f32.mrb[0].mxu0
    %v5743 = vadd.f32 0.0, %v5742
    %v5744 = vpop.f32.mrb[0].mxu0
    %5745 = vmatprep.mubr.bf16.mxu0 0
    %5746 = vmatmul.mubr.bf16.gmra.mrb[0].mxu0 %v5595
    %v5747 = vpop.f32.mrb[0].mxu0
    %v5748 = vadd.f32 0.0, %v5747
    %v5749 = vpop.f32.mrb[0].mxu0
    %v5750 = vpop.f32.mrb[0].mxu0
    %v5751 = vadd.f32 0.0, %v5750
    %v5752 = vpop.f32.mrb[0].mxu0
    %5753 = vmatprep.mubr.bf16.mxu0 0
    %5754 = vmatmul.mubr.bf16.gmra.mrb[0].mxu0 %v5596
    %v5755 = vpop.f32.mrb[0].mxu0
    %v5756 = vadd.f32 0.0, %v5755
    %v5757 = vpop.f32.mrb[0].mxu0
    %v5758 = vpop.f32.mrb[0].mxu0
    %v5759 = vadd.f32 0.0, %v5758
    %v5760 = vpop.f32.mrb[0].mxu0
    %5761 = vmatprep.mubr.bf16.mxu0 0
    %5762 = vmatmul.mubr.bf16.gmra.mrb[0].mxu0 %v5597
    %v5763 = vpop.f32.mrb[0].mxu0
    %v5764 = vadd.f32 0.0, %v5763
    %v5765 = vpop.f32.mrb[0].mxu0
    %v5766 = vpop.f32.mrb[0].mxu0
    %v5767 = vadd.f32 0.0, %v5766
    %v5768 = vpop.f32.mrb[0].mxu0
    %5769 = vmatprep.mubr.bf16.mxu0 0
    %5770 = vmatmul.mubr.bf16.gmra.mrb[0].mxu0 %v5598
    %v5771 = vpop.f32.mrb[0].mxu0
    %v5772 = vadd.f32 0.0, %v5771
    %v5773 = vpop.f32.mrb[0].mxu0
    %v5774 = vpop.f32.mrb[0].mxu0
    %v5775 = vadd.f32 0.0, %v5774
    %v5776 = vpop.f32.mrb[0].mxu0
    %5777 = vmatprep.mubr.bf16.mxu0 0
    %5778 = vmatmul.mubr.bf16.gmra.mrb[0].mxu0 %v5599
    %v5779 = vpop.f32.mrb[0].mxu0
    %v5780 = vadd.f32 0.0, %v5779
    %v5781 = vpop.f32.mrb[0].mxu0
    %v5782 = vpop.f32.mrb[0].mxu0
    %v5783 = vadd.f32 0.0, %v5782
    %v5784 = vpop.f32.mrb[0].mxu0
    %5785 = vmatprep.mubr.bf16.mxu0 0
    %5786 = vmatmul.mubr.bf16.gmra.mrb[0].mxu0 %v5600
    %v5787 = vpop.f32.mrb[0].mxu0
    %v5788 = vadd.f32 0.0, %v5787
    %v5789 = vpop.f32.mrb[0].mxu0
    %v5790 = vpop.f32.mrb[0].mxu0
    %v5791 = vadd.f32 0.0, %v5790
    %v5792 = vpop.f32.mrb[0].mxu0
    %5793 = vdwg.mxu0
    %v5794 = vadd.f32 %v5565, %v5700
    %v5795 = vadd.f32 %v5566, %v5703
    %v5796 = vadd.f32 %v5567, %v5708
    %v5797 = vadd.f32 %v5568, %v5711
    %v5798 = vadd.f32 %v5569, %v5716
    %v5799 = vadd.f32 %v5570, %v5719
    %v5800 = vadd.f32 %v5571, %v5724
    %v5801 = vadd.f32 %v5572, %v5727
    %v5802 = vadd.f32 %v5573, %v5732
    %v5803 = vadd.f32 %v5574, %v5735
    %v5804 = vadd.f32 %v5575, %v5740
    %v5805 = vadd.f32 %v5576, %v5743
    %v5806 = vadd.f32 %v5577, %v5748
    %v5807 = vadd.f32 %v5578, %v5751
    %v5808 = vadd.f32 %v5579, %v5756
    %v5809 = vadd.f32 %v5580, %v5759
    %v5810 = vadd.f32 %v5581, %v5764
    %v5811 = vadd.f32 %v5582, %v5767
    %v5812 = vadd.f32 %v5583, %v5772
    %v5813 = vadd.f32 %v5584, %v5775
    %v5814 = vadd.f32 %v5585, %v5780
    %v5815 = vadd.f32 %v5586, %v5783
    %v5816 = vadd.f32 %v5587, %v5788
    %v5817 = vadd.f32 %v5588, %v5791
    %v5818 = vld [vmem:[%s2763] sm:$0xff]
    %v5819 = vld [vmem:[%s2763 + $0x8] sm:$0xff]
    %v5820 = vld [vmem:[%s2763 + $0x10] sm:$0xff]
    %v5821 = vld [vmem:[%s2763 + $0x18] sm:$0xff]
    %v5822 = vld [vmem:[%s2763 + $0x20] sm:$0xff]
    %v5823 = vld [vmem:[%s2763 + $0x28] sm:$0xff]
    %v5824 = vld [vmem:[%s2763 + $0x30] sm:$0xff]
    %v5825 = vld [vmem:[%s2763 + $0x38] sm:$0xff]
    %v5826 = vld [vmem:[%s2763 + $0x40] sm:$0xff]
    %v5827 = vld [vmem:[%s2763 + $0x48] sm:$0xff]
    %v5828 = vld [vmem:[%s2763 + $0x50] sm:$0xff]
    %v5829 = vld [vmem:[%s2763 + $0x58] sm:$0xff]
    %v5830 = vld [vmem:[%s2776] sm:$0xf]
    %v5831 = vld [vmem:[%s2776 + $0x4] sm:$0xf]
    %v5832 = vld [vmem:[%s2776 + $0x8] sm:$0xf]
    %v5833 = vld [vmem:[%s2776 + $0xc] sm:$0xf]
    %v5834 = vld [vmem:[%s2776 + $0x10] sm:$0xf]
    %v5835 = vld [vmem:[%s2776 + $0x14] sm:$0xf]
    %v5836 = vld [vmem:[%s2776 + $0x18] sm:$0xf]
    %v5837 = vld [vmem:[%s2776 + $0x1c] sm:$0xf]
    %v5838 = vld [vmem:[%s2776 + $0x20] sm:$0xf]
    %v5839 = vld [vmem:[%s2776 + $0x24] sm:$0xf]
    %v5840 = vld [vmem:[%s2776 + $0x28] sm:$0xf]
    %v5841 = vld [vmem:[%s2776 + $0x2c] sm:$0xf]
    %v5842 = vld [vmem:[%s2776 + $0x30] sm:$0xf]
    %v5843 = vld [vmem:[%s2776 + $0x34] sm:$0xf]
    %v5844 = vld [vmem:[%s2776 + $0x38] sm:$0xf]
    %v5845 = vld [vmem:[%s2776 + $0x3c] sm:$0xf]
    %v5862 = vunpack.c.l.b16 %v5830
    %v5863 = vunpack.c.l.b16 %v5831
    %v5864 = vunpack.c.l.b16 %v5832
    %v5865 = vunpack.c.l.b16 %v5833
    %v5866 = vunpack.c.l.b16 %v5834
    %v5867 = vunpack.c.l.b16 %v5835
    %v5868 = vunpack.c.l.b16 %v5836
    %v5869 = vunpack.c.l.b16 %v5837
    %v5870 = vunpack.c.l.b16 %v5838
    %v5871 = vunpack.c.l.b16 %v5839
    %v5872 = vunpack.c.l.b16 %v5840
    %v5873 = vunpack.c.l.b16 %v5841
    %v5874 = vunpack.c.l.b16 %v5842
    %v5875 = vunpack.c.l.b16 %v5843
    %v5876 = vunpack.c.l.b16 %v5844
    %v5877 = vunpack.c.l.b16 %v5845
    %v5878 = vpack.c.b16 %v5863, %v5862
    %v5879 = vpack.c.b16 %v5865, %v5864
    %v5880 = vpack.c.b16 %v5867, %v5866
    %v5881 = vpack.c.b16 %v5869, %v5868
    %v5882 = vpack.c.b16 %v5871, %v5870
    %v5883 = vpack.c.b16 %v5873, %v5872
    %v5884 = vpack.c.b16 %v5875, %v5874
    %v5885 = vpack.c.b16 %v5877, %v5876
    %5894 = vmatprep.subr.bf16.mxu0 0
    %5895 = vmatpush1.bf16.msra.mxu0 %v5878
    %5896 = vmatprep.subr.bf16.mxu0 0
    %5897 = vmatpush1.bf16.msra.mxu0 %v5879
    %5898 = vmatprep.subr.bf16.mxu0 0
    %5899 = vmatpush1.bf16.msra.mxu0 %v5880
    %5900 = vmatprep.subr.bf16.mxu0 0
    %5901 = vmatpush1.bf16.msra.mxu0 %v5881
    %5902 = vmatprep.subr.bf16.mxu0 0
    %5903 = vmatpush1.bf16.msra.mxu0 %v5882
    %5904 = vmatprep.subr.bf16.mxu0 0
    %5905 = vmatpush1.bf16.msra.mxu0 %v5883
    %5906 = vmatprep.subr.bf16.mxu0 0
    %5907 = vmatpush1.bf16.msra.mxu0 %v5884
    %5908 = vmatprep.subr.bf16.mxu0 0
    %5909 = vmatpush1.bf16.msra.mxu0 %v5885
    %5910 = vmatprep.subr.bf16.mxu0 0
    %5911 = vmatpush1.bf16.msra.mxu0 0
    %5912 = vmatprep.subr.bf16.mxu0 0
    %5913 = vmatpush1.bf16.msra.mxu0 0
    %5914 = vmatprep.subr.bf16.mxu0 0
    %5915 = vmatpush1.bf16.msra.mxu0 0
    %5916 = vmatprep.subr.bf16.mxu0 0
    %5917 = vmatpush1.bf16.msra.mxu0 0
    %5918 = vmatprep.subr.bf16.mxu0 0
    %5919 = vmatpush1.bf16.msra.mxu0 0
    %5920 = vmatprep.subr.bf16.mxu0 0
    %5921 = vmatpush1.bf16.msra.mxu0 0
    %5922 = vmatprep.subr.bf16.mxu0 0
    %5923 = vmatpush1.bf16.msra.mxu0 0
    %5924 = vmatprep.subr.bf16.mxu0 0
    %5925 = vmatpush1.bf16.msra.mxu0 0
    %5926 = vmatprep.mubr.bf16.mxu0 0
    %5927 = vmatmul.mubr.bf16.gmra.mrb[0].mxu0 %v5818
    %v5928 = vpop.f32.mrb[0].mxu0
    %v5929 = vadd.f32 0.0, %v5928
    %v5930 = vpop.f32.mrb[0].mxu0
    %v5931 = vpop.f32.mrb[0].mxu0
    %v5932 = vadd.f32 0.0, %v5931
    %v5933 = vpop.f32.mrb[0].mxu0
    %5934 = vmatprep.mubr.bf16.mxu0 0
    %5935 = vmatmul.mubr.bf16.gmra.mrb[0].mxu0 %v5819
    %v5936 = vpop.f32.mrb[0].mxu0
    %v5937 = vadd.f32 0.0, %v5936
    %v5938 = vpop.f32.mrb[0].mxu0
    %v5939 = vpop.f32.mrb[0].mxu0
    %v5940 = vadd.f32 0.0, %v5939
    %v5941 = vpop.f32.mrb[0].mxu0
    %5942 = vmatprep.mubr.bf16.mxu0 0
    %5943 = vmatmul.mubr.bf16.gmra.mrb[0].mxu0 %v5820
    %v5944 = vpop.f32.mrb[0].mxu0
    %v5945 = vadd.f32 0.0, %v5944
    %v5946 = vpop.f32.mrb[0].mxu0
    %v5947 = vpop.f32.mrb[0].mxu0
    %v5948 = vadd.f32 0.0, %v5947
    %v5949 = vpop.f32.mrb[0].mxu0
    %5950 = vmatprep.mubr.bf16.mxu0 0
    %5951 = vmatmul.mubr.bf16.gmra.mrb[0].mxu0 %v5821
    %v5952 = vpop.f32.mrb[0].mxu0
    %v5953 = vadd.f32 0.0, %v5952
    %v5954 = vpop.f32.mrb[0].mxu0
    %v5955 = vpop.f32.mrb[0].mxu0
    %v5956 = vadd.f32 0.0, %v5955
    %v5957 = vpop.f32.mrb[0].mxu0
    %5958 = vmatprep.mubr.bf16.mxu0 0
    %5959 = vmatmul.mubr.bf16.gmra.mrb[0].mxu0 %v5822
    %v5960 = vpop.f32.mrb[0].mxu0
    %v5961 = vadd.f32 0.0, %v5960
    %v5962 = vpop.f32.mrb[0].mxu0
    %v5963 = vpop.f32.mrb[0].mxu0
    %v5964 = vadd.f32 0.0, %v5963
    %v5965 = vpop.f32.mrb[0].mxu0
    %5966 = vmatprep.mubr.bf16.mxu0 0
    %5967 = vmatmul.mubr.bf16.gmra.mrb[0].mxu0 %v5823
    %v5968 = vpop.f32.mrb[0].mxu0
    %v5969 = vadd.f32 0.0, %v5968
    %v5970 = vpop.f32.mrb[0].mxu0
    %v5971 = vpop.f32.mrb[0].mxu0
    %v5972 = vadd.f32 0.0, %v5971
    %v5973 = vpop.f32.mrb[0].mxu0
    %5974 = vmatprep.mubr.bf16.mxu0 0
    %5975 = vmatmul.mubr.bf16.gmra.mrb[0].mxu0 %v5824
    %v5976 = vpop.f32.mrb[0].mxu0
    %v5977 = vadd.f32 0.0, %v5976
    %v5978 = vpop.f32.mrb[0].mxu0
    %v5979 = vpop.f32.mrb[0].mxu0
    %v5980 = vadd.f32 0.0, %v5979
    %v5981 = vpop.f32.mrb[0].mxu0
    %5982 = vmatprep.mubr.bf16.mxu0 0
    %5983 = vmatmul.mubr.bf16.gmra.mrb[0].mxu0 %v5825
    %v5984 = vpop.f32.mrb[0].mxu0
    %v5985 = vadd.f32 0.0, %v5984
    %v5986 = vpop.f32.mrb[0].mxu0
    %v5987 = vpop.f32.mrb[0].mxu0
    %v5988 = vadd.f32 0.0, %v5987
    %v5989 = vpop.f32.mrb[0].mxu0
    %5990 = vmatprep.mubr.bf16.mxu0 0
    %5991 = vmatmul.mubr.bf16.gmra.mrb[0].mxu0 %v5826
    %v5992 = vpop.f32.mrb[0].mxu0
    %v5993 = vadd.f32 0.0, %v5992
    %v5994 = vpop.f32.mrb[0].mxu0
    %v5995 = vpop.f32.mrb[0].mxu0
    %v5996 = vadd.f32 0.0, %v5995
    %v5997 = vpop.f32.mrb[0].mxu0
    %5998 = vmatprep.mubr.bf16.mxu0 0
    %5999 = vmatmul.mubr.bf16.gmra.mrb[0].mxu0 %v5827
    %v6000 = vpop.f32.mrb[0].mxu0
    %v6001 = vadd.f32 0.0, %v6000
    %v6002 = vpop.f32.mrb[0].mxu0
    %v6003 = vpop.f32.mrb[0].mxu0
    %v6004 = vadd.f32 0.0, %v6003
    %v6005 = vpop.f32.mrb[0].mxu0
    %6006 = vmatprep.mubr.bf16.mxu0 0
    %6007 = vmatmul.mubr.bf16.gmra.mrb[0].mxu0 %v5828
    %v6008 = vpop.f32.mrb[0].mxu0
    %v6009 = vadd.f32 0.0, %v6008
    %v6010 = vpop.f32.mrb[0].mxu0
    %v6011 = vpop.f32.mrb[0].mxu0
    %v6012 = vadd.f32 0.0, %v6011
    %v6013 = vpop.f32.mrb[0].mxu0
    %6014 = vmatprep.mubr.bf16.mxu0 0
    %6015 = vmatmul.mubr.bf16.gmra.mrb[0].mxu0 %v5829
    %v6016 = vpop.f32.mrb[0].mxu0
    %v6017 = vadd.f32 0.0, %v6016
    %v6018 = vpop.f32.mrb[0].mxu0
    %v6019 = vpop.f32.mrb[0].mxu0
    %v6020 = vadd.f32 0.0, %v6019
    %v6021 = vpop.f32.mrb[0].mxu0
    %6022 = vdwg.mxu0
    %v6023 = vadd.f32 %v5794, %v5929
    %v6024 = vadd.f32 %v5795, %v5932
    %v6025 = vadd.f32 %v5796, %v5937
    %v6026 = vadd.f32 %v5797, %v5940
    %v6027 = vadd.f32 %v5798, %v5945
    %v6028 = vadd.f32 %v5799, %v5948
    %v6029 = vadd.f32 %v5800, %v5953
    %v6030 = vadd.f32 %v5801, %v5956
    %v6031 = vadd.f32 %v5802, %v5961
    %v6032 = vadd.f32 %v5803, %v5964
    %v6033 = vadd.f32 %v5804, %v5969
    %v6034 = vadd.f32 %v5805, %v5972
    %v6035 = vadd.f32 %v5806, %v5977
    %v6036 = vadd.f32 %v5807, %v5980
    %v6037 = vadd.f32 %v5808, %v5985
    %v6038 = vadd.f32 %v5809, %v5988
    %v6039 = vadd.f32 %v5810, %v5993
    %v6040 = vadd.f32 %v5811, %v5996
    %v6041 = vadd.f32 %v5812, %v6001
    %v6042 = vadd.f32 %v5813, %v6004
    %v6043 = vadd.f32 %v5814, %v6009
    %v6044 = vadd.f32 %v5815, %v6012
    %v6045 = vadd.f32 %v5816, %v6017
    %v6046 = vadd.f32 %v5817, %v6020
    %v6047 = vld [vmem:[%s6] sm:$0x1]
    %v6049 = vlaneseq
    %v6050 = vshrl.u32 %v6049, 7
    %v6051 = vsub.s32 0, %v6050
    %v6052 = vrot.slane %v6047, %v6051
    %v6054 = vadd.f32 %v6023, %v6052
    %v6055 = vadd.f32 %v6024, %v6052
    %v6056 = vadd.f32 %v6025, %v6052
    %v6057 = vadd.f32 %v6026, %v6052
    %v6058 = vadd.f32 %v6027, %v6052
    %v6059 = vadd.f32 %v6028, %v6052
    %v6060 = vadd.f32 %v6029, %v6052
    %v6061 = vadd.f32 %v6030, %v6052
    %v6062 = vadd.f32 %v6031, %v6052
    %v6063 = vadd.f32 %v6032, %v6052
    %v6064 = vadd.f32 %v6033, %v6052
    %v6065 = vadd.f32 %v6034, %v6052
    %v6066 = vadd.f32 %v6035, %v6052
    %v6067 = vadd.f32 %v6036, %v6052
    %v6068 = vadd.f32 %v6037, %v6052
    %v6069 = vadd.f32 %v6038, %v6052
    %v6070 = vadd.f32 %v6039, %v6052
    %v6071 = vadd.f32 %v6040, %v6052
    %v6072 = vadd.f32 %v6041, %v6052
    %v6073 = vadd.f32 %v6042, %v6052
    %v6074 = vadd.f32 %v6043, %v6052
    %v6075 = vadd.f32 %v6044, %v6052
    %v6076 = vadd.f32 %v6045, %v6052
    %v6077 = vadd.f32 %v6046, %v6052
    %v6078 = vmax.f32 %v6054, 0.0
    %v6079 = vmax.f32 %v6055, 0.0
    %v6080 = vmax.f32 %v6056, 0.0
    %v6081 = vmax.f32 %v6057, 0.0
    %v6082 = vmax.f32 %v6058, 0.0
    %v6083 = vmax.f32 %v6059, 0.0
    %v6084 = vmax.f32 %v6060, 0.0
    %v6085 = vmax.f32 %v6061, 0.0
    %v6086 = vmax.f32 %v6062, 0.0
    %v6087 = vmax.f32 %v6063, 0.0
    %v6088 = vmax.f32 %v6064, 0.0
    %v6089 = vmax.f32 %v6065, 0.0
    %v6090 = vmax.f32 %v6066, 0.0
    %v6091 = vmax.f32 %v6067, 0.0
    %v6092 = vmax.f32 %v6068, 0.0
    %v6093 = vmax.f32 %v6069, 0.0
    %v6094 = vmax.f32 %v6070, 0.0
    %v6095 = vmax.f32 %v6071, 0.0
    %v6096 = vmax.f32 %v6072, 0.0
    %v6097 = vmax.f32 %v6073, 0.0
    %v6098 = vmax.f32 %v6074, 0.0
    %v6099 = vmax.f32 %v6075, 0.0
    %v6100 = vmax.f32 %v6076, 0.0
    %v6101 = vmax.f32 %v6077, 0.0
    %v6102 = vpack.c.bf16 %v6079, %v6078
    %v6103 = vpack.c.bf16 %v6081, %v6080
    %v6104 = vpack.c.bf16 %v6083, %v6082
    %v6105 = vpack.c.bf16 %v6085, %v6084
    %v6106 = vpack.c.bf16 %v6087, %v6086
    %v6107 = vpack.c.bf16 %v6089, %v6088
    %v6108 = vpack.c.bf16 %v6091, %v6090
    %v6109 = vpack.c.bf16 %v6093, %v6092
    %v6110 = vpack.c.bf16 %v6095, %v6094
    %v6111 = vpack.c.bf16 %v6097, %v6096
    %v6112 = vpack.c.bf16 %v6099, %v6098
    %v6113 = vpack.c.bf16 %v6101, %v6100
    %v6126 = vunpack.c.l.b16 %v6102
    %v6127 = vunpack.c.h.b16 %v6102
    %v6128 = vunpack.c.l.b16 %v6103
    %v6129 = vunpack.c.h.b16 %v6103
    %v6130 = vunpack.c.l.b16 %v6104
    %v6131 = vunpack.c.h.b16 %v6104
    %v6132 = vunpack.c.l.b16 %v6105
    %v6133 = vunpack.c.h.b16 %v6105
    %v6134 = vunpack.c.l.b16 %v6106
    %v6135 = vunpack.c.h.b16 %v6106
    %v6136 = vunpack.c.l.b16 %v6107
    %v6137 = vunpack.c.h.b16 %v6107
    %v6138 = vunpack.c.l.b16 %v6108
    %v6139 = vunpack.c.h.b16 %v6108
    %v6140 = vunpack.c.l.b16 %v6109
    %v6141 = vunpack.c.h.b16 %v6109
    %v6142 = vunpack.c.l.b16 %v6110
    %v6143 = vunpack.c.h.b16 %v6110
    %v6144 = vunpack.c.l.b16 %v6111
    %v6145 = vunpack.c.h.b16 %v6111
    %v6146 = vunpack.c.l.b16 %v6112
    %v6147 = vunpack.c.h.b16 %v6112
    %v6148 = vunpack.c.l.b16 %v6113
    %v6149 = vunpack.c.h.b16 %v6113
    %v6150 = vpack.c.b16 %v6126, %v6126
    %v6151 = vpack.c.b16 %v6127, %v6127
    %v6152 = vpack.c.b16 %v6128, %v6128
    %v6153 = vpack.c.b16 %v6129, %v6129
    %v6154 = vpack.c.b16 %v6130, %v6130
    %v6155 = vpack.c.b16 %v6131, %v6131
    %v6156 = vpack.c.b16 %v6132, %v6132
    %v6157 = vpack.c.b16 %v6133, %v6133
    %v6158 = vpack.c.b16 %v6134, %v6134
    %v6159 = vpack.c.b16 %v6135, %v6135
    %v6160 = vpack.c.b16 %v6136, %v6136
    %v6161 = vpack.c.b16 %v6137, %v6137
    %v6162 = vpack.c.b16 %v6138, %v6138
    %v6163 = vpack.c.b16 %v6139, %v6139
    %v6164 = vpack.c.b16 %v6140, %v6140
    %v6165 = vpack.c.b16 %v6141, %v6141
    %v6166 = vpack.c.b16 %v6142, %v6142
    %v6167 = vpack.c.b16 %v6143, %v6143
    %v6168 = vpack.c.b16 %v6144, %v6144
    %v6169 = vpack.c.b16 %v6145, %v6145
    %v6170 = vpack.c.b16 %v6146, %v6146
    %v6171 = vpack.c.b16 %v6147, %v6147
    %v6172 = vpack.c.b16 %v6148, %v6148
    %v6173 = vpack.c.b16 %v6149, %v6149
    %6198 = vst [vmem:[#allocation12 + $0x60] sm:$0xf] %v6150
    %6199 = vst [vmem:[#allocation12 + $0x64] sm:$0xf] %v6151
    %6200 = vst [vmem:[#allocation12 + $0x68] sm:$0xf] %v6152
    %6201 = vst [vmem:[#allocation12 + $0x6c] sm:$0xf] %v6153
    %6202 = vst [vmem:[#allocation12 + $0x70] sm:$0xf] %v6154
    %6203 = vst [vmem:[#allocation12 + $0x74] sm:$0xf] %v6155
    %6204 = vst [vmem:[#allocation12 + $0x78] sm:$0xf] %v6156
    %6205 = vst [vmem:[#allocation12 + $0x7c] sm:$0xf] %v6157
    %6206 = vst [vmem:[#allocation12 + $0x80] sm:$0xf] %v6158
    %6207 = vst [vmem:[#allocation12 + $0x84] sm:$0xf] %v6159
    %6208 = vst [vmem:[#allocation12 + $0x88] sm:$0xf] %v6160
    %6209 = vst [vmem:[#allocation12 + $0x8c] sm:$0xf] %v6161
    %6210 = vst [vmem:[#allocation12 + $0x90] sm:$0xf] %v6162
    %6211 = vst [vmem:[#allocation12 + $0x94] sm:$0xf] %v6163
    %6212 = vst [vmem:[#allocation12 + $0x98] sm:$0xf] %v6164
    %6213 = vst [vmem:[#allocation12 + $0x9c] sm:$0xf] %v6165
    %6214 = vst [vmem:[#allocation12 + $0xa0] sm:$0xf] %v6166
    %6215 = vst [vmem:[#allocation12 + $0xa4] sm:$0xf] %v6167
    %6216 = vst [vmem:[#allocation12 + $0xa8] sm:$0xf] %v6168
    %6217 = vst [vmem:[#allocation12 + $0xac] sm:$0xf] %v6169
    %6218 = vst [vmem:[#allocation12 + $0xb0] sm:$0xf] %v6170
    %6219 = vst [vmem:[#allocation12 + $0xb4] sm:$0xf] %v6171
    %6220 = vst [vmem:[#allocation12 + $0xb8] sm:$0xf] %v6172
    %6221 = vst [vmem:[#allocation12 + $0xbc] sm:$0xf] %v6173
    // Predicated region
    $region50: #{tpu_custom_call.1} parent=1 // pred_check
      _
    $region51: #{tpu_custom_call.1} parent=1 // pred_check_branch
      %6223 = sbr.rel (0) target = $region53
    $region52: #{tpu_custom_call.1} parent=1 // pred_region
      %s6225 = ssub.s32 3072, 3072
      %6226 = vsyncadd [#allocation5], %s6225
      %s6227 = sshll.u32 [#allocation12], 4
      %s6228 = int_to_ptr.vmem [resolvable:$true] %s6227
      %6233 = dma.vmem_to_hbm [thread:$0]  %s6228, 3072, %s7, [#allocation5], 64, 64, 4
    $region53: #{tpu_custom_call.1} parent=1 // pred_fallthru
      _
    // Predicated region
    $region54: #{tpu_custom_call.1} parent=1 // pred_check
      _
    $region55: #{tpu_custom_call.1} parent=1 // pred_check_branch
      %6235 = sbr.rel (0) target = $region57
    $region56: #{tpu_custom_call.1} parent=1 // pred_region
      %6236 = dma.done [#allocation5], 3072
    $region57: #{tpu_custom_call.1} parent=1 // pred_fallthru
      _
    %6237 = vsyncpa [#allocation4], 1
    %6238 = vsyncpa [#allocation7], 1
    %6239 = vsyncpa [#allocation10], 1
    %6240 = vsyncpa [#allocation5], 1

</llo_original>
